<compile_context>
chip_gen: v7x
topology: tpu7x:2x2x1
jax: 0.10.0
libtpu: 0.0.40
codegen_flags: <defaults>
</compile_context>

<pallas_src>
import math
import numpy as np

import jax
import jax.numpy as jnp
from jax.experimental import pallas as pl
from jax.experimental.pallas import tpu as pltpu

_VMEM_LIMIT = 64 * 1024 * 1024


def _round_up(x: int, m: int) -> int:
    return (x + m - 1) // m * m


# ----------------------------------------------------------------------------
# Bicubic interpolation matrix (PyTorch-compatible: a=-0.75, align_corners=False,
# half-pixel centers, border clamping).  scale_factor = 2.
# ----------------------------------------------------------------------------
def bicubic_upsample_matrix(in_size: int, scale: int = 2, a: float = -0.75) -> np.ndarray:
    out_size = in_size * scale

    def cubic(x):
        x = abs(x)
        if x <= 1.0:
            return (a + 2.0) * x ** 3 - (a + 3.0) * x ** 2 + 1.0
        if x < 2.0:
            return a * x ** 3 - 5.0 * a * x ** 2 + 8.0 * a * x - 4.0 * a
        return 0.0

    m = np.zeros((out_size, in_size), dtype=np.float64)
    for i in range(out_size):
        src = (i + 0.5) / scale - 0.5
        x0 = math.floor(src)
        t = src - x0
        for k in range(-1, 3):
            idx = min(max(x0 + k, 0), in_size - 1)
            m[i, idx] += cubic(k - t)
    return m.astype(np.float32)


# ----------------------------------------------------------------------------
# Upsample kernel, pass 1: fused 1x1 channel mix + bicubic along W.
# Tiled over input H rows (neither op mixes across H -> no halo).
# ----------------------------------------------------------------------------
def _upsample_wpass_kernel(x_ref, w_ref, aw_ref, o_ref):
    # x_ref : (1, th, W, C)    bf16 channels-last rows
    # w_ref : (C, C2)          bf16 1x1-conv weight (transposed)
    # aw_ref: (W2, W)          bf16 bicubic matrix along W
    # o_ref : (1, th, W2, C2)  bf16
    th, w, c = x_ref.shape[1], x_ref.shape[2], x_ref.shape[3]
    # 1x1 conv == one MXU GEMM over every pixel of the tile (bf16 in, f32 acc).
    z = jnp.dot(x_ref[0].reshape(th * w, c), w_ref[...],
                preferred_element_type=jnp.float32)
    z = z.astype(jnp.bfloat16)
    aw = aw_ref[...]
    # W-axis bicubic: one plain (W2, W) @ (W, C2) GEMM per row of the tile.
    for t in range(th):
        zr = z[t * w:(t + 1) * w, :]
        zu = jnp.dot(aw, zr, preferred_element_type=jnp.float32)
        o_ref[0, t] = zu.astype(o_ref.dtype)


# ----------------------------------------------------------------------------
# Upsample kernel, pass 2: bicubic along H as one 2D GEMM per tile of the
# flattened (W2*C2) lane axis (lane-dense output); conv bias fused (exact,
# because the bicubic rows sum to 1).
# ----------------------------------------------------------------------------
def _upsample_hpass_kernel(x_ref, ah_ref, b_ref, o_ref):
    # x_ref : (1, H, T)   bf16, T = tile of the flattened (W2*C2) axis
    # ah_ref: (H2, H)     bf16 bicubic matrix along H
    # b_ref : (1, T)      f32 bias, tiled over (w2, c2)
    # o_ref : (1, H2, T)  bf16
    y = jnp.dot(ah_ref[...], x_ref[0], preferred_element_type=jnp.float32)
    o_ref[0] = (y + b_ref[...]).astype(o_ref.dtype)


def _pick_tile_h(h, w, c, c2, w2, budget=8 << 20):
    best = 1
    for t in range(1, h + 1):
        if h % t:
            continue
        byt = 2 * t * w * c * 2 + 2 * t * w2 * c2 * 2 + t * w * c2 * 4
        if byt <= budget:
            best = t
    return best


def _pick_tile_wc(wc, h, h2, budget=8 << 20):
    if wc % 128:                     # cannot form lane-aligned tiles -> take it whole
        return wc
    cand = [d for d in range(128, wc + 1, 128)
            if wc % d == 0 and 2 * (h + h2) * d * 2 <= budget]
    return max(cand) if cand else 128


def upsample_conv1x1(x1_cl, wt_up, b_up, aw, ah, *, tile_h=None, tile_wc=None):
    """x1 (N,H,W,C) channels-last -> bicubic x2 upsample + 1x1 conv -> (N,2H,2W,C//2) bf16."""
    n, h, w, c = x1_cl.shape
    c2 = int(wt_up.shape[1])
    w2, h2 = int(aw.shape[0]), int(ah.shape[0])
    if tile_h is None:
        tile_h = _pick_tile_h(h, w, c, c2, w2)
    assert h % tile_h == 0, (h, tile_h)

    zw = pl.pallas_call(
        _upsample_wpass_kernel,
        out_shape=jax.ShapeDtypeStruct((n, h, w2, c2), jnp.bfloat16),
        grid=(n, h // tile_h),
        in_specs=[pl.BlockSpec((1, tile_h, w, c), lambda b, i: (b, i, 0, 0)),
                  pl.BlockSpec((c, c2), lambda b, i: (0, 0)),
                  pl.BlockSpec((w2, w), lambda b, i: (0, 0))],
        out_specs=pl.BlockSpec((1, tile_h, w2, c2), lambda b, i: (b, i, 0, 0)),
        compiler_params=pltpu.CompilerParams(
            dimension_semantics=("parallel", "parallel"),
            vmem_limit_bytes=_VMEM_LIMIT),
    )(x1_cl.astype(jnp.bfloat16), wt_up.astype(jnp.bfloat16),
      aw.astype(jnp.bfloat16))

    wc = w2 * c2
    if tile_wc is None:
        tile_wc = _pick_tile_wc(wc, h, h2)
    assert wc % tile_wc == 0 and (tile_wc % 128 == 0 or tile_wc == wc)
    b_flat = jnp.tile(b_up.reshape(-1), w2).reshape(1, wc).astype(jnp.float32)

    up_flat = pl.pallas_call(
        _upsample_hpass_kernel,
        out_shape=jax.ShapeDtypeStruct((n, h2, wc), jnp.bfloat16),
        grid=(n, wc // tile_wc),
        in_specs=[pl.BlockSpec((1, h, tile_wc), lambda b, j: (b, 0, j)),
                  pl.BlockSpec((h2, h), lambda b, j: (0, 0)),
                  pl.BlockSpec((1, tile_wc), lambda b, j: (0, j))],
        out_specs=pl.BlockSpec((1, h2, tile_wc), lambda b, j: (b, 0, j)),
        compiler_params=pltpu.CompilerParams(
            dimension_semantics=("parallel", "parallel"),
            vmem_limit_bytes=_VMEM_LIMIT),
    )(zw.reshape(n, h, wc), ah.astype(jnp.bfloat16), b_flat)
    # Row-major trailing-dim reshape: free at the XLA level.
    return up_flat.reshape(n, h2, w2, c2)


# ----------------------------------------------------------------------------
# 3x3 conv (stride 1, pad 1) + folded BatchNorm(eval) + ReLU.
# Channels-last, spatial order (H, W); tiled over rows (halo rows fetched via
# extra 1-row BlockSpecs, zero-padded in-kernel at the image border) and over
# output channels.  Multiple input tensors supported (weights split along Cin)
# so torch.cat is never materialized.
# ----------------------------------------------------------------------------
def _make_conv3x3_kernel(n_in, cins, tp0, p1, p1s):
    def kernel(*refs):
        xrefs = refs[:3 * n_in]
        wrefs = refs[3 * n_in:4 * n_in]
        scale_ref = refs[4 * n_in]
        shift_ref = refs[4 * n_in + 1]
        o_ref = refs[4 * n_in + 2]
        xs_refs = refs[4 * n_in + 3:]

        i = pl.program_id(1)
        j = pl.program_id(2)
        n_i = pl.num_programs(1)
        toc = o_ref.shape[3]

        # --------------------------------------------------------------
        # Assemble (once per (batch, row-tile); reused across OC tiles) the
        # zero-padded, kw-shift-packed window:
        #   xs[r, q, kw*cin + c] = x_padded(row r, col q + kw, c)
        # so every tap GEMM below only reads contiguous leading-dim slices
        # (no per-tap strided-slice relayout copies).
        # --------------------------------------------------------------
        @pl.when(j == 0)
        def _assemble():
            for t in range(n_in):
                cin = cins[t]
                xm_ref, xa_ref, xb_ref = xrefs[3 * t], xrefs[3 * t + 1], xrefs[3 * t + 2]
                xs_ref = xs_refs[t]
                main = xm_ref[0]                               # (tp0, p1, cin) bf16
                zrow = jnp.zeros((p1, cin), main.dtype)
                top = jnp.where(i > 0, xa_ref[0, 0], zrow)     # global row i*tp0-1 (zero at border)
                bot = jnp.where(i < n_i - 1, xb_ref[0, 0], zrow)
                zcol = jnp.zeros((tp0 + 2, 1, cin), main.dtype)
                for d1 in range(3):                            # d1 == kw
                    ks, ke = d1 * cin, (d1 + 1) * cin
                    if d1 == 0:
                        xs_ref[0, 1:p1 + 1, ks:ke] = top
                        xs_ref[1:tp0 + 1, 1:p1 + 1, ks:ke] = main
                        xs_ref[tp0 + 1, 1:p1 + 1, ks:ke] = bot
                        xs_ref[:, 0:1, ks:ke] = zcol           # left zero pad
                    elif d1 == 1:
                        xs_ref[0, 0:p1, ks:ke] = top
                        xs_ref[1:tp0 + 1, 0:p1, ks:ke] = main
                        xs_ref[tp0 + 1, 0:p1, ks:ke] = bot
                    else:
                        xs_ref[0, 0:p1 - 1, ks:ke] = top[1:p1, :]
                        xs_ref[1:tp0 + 1, 0:p1 - 1, ks:ke] = main[:, 1:p1, :]
                        xs_ref[tp0 + 1, 0:p1 - 1, ks:ke] = bot[1:p1, :]
                        xs_ref[:, p1 - 1:p1, ks:ke] = zcol     # right zero pad
                # Columns >= p1 of the scratch only feed output columns that are
                # discarded below, so they are intentionally left untouched.

        # --------------------------------------------------------------
        # 3 GEMMs per input tensor (K = 3*cin packs the kw taps),
        # bf16 operands, f32 accumulation.
        # --------------------------------------------------------------
        acc = jnp.zeros((tp0 * p1s, toc), jnp.float32)
        for t in range(n_in):
            cin = cins[t]
            xs_ref = xs_refs[t]
            wp = wrefs[t]
            for d0 in range(3):                                # d0 == kh
                xt = xs_ref[d0:d0 + tp0].reshape(tp0 * p1s, 3 * cin)
                acc = acc + jnp.dot(xt, wp[d0], preferred_element_type=jnp.float32)

        # Fused BatchNorm(eval) affine + ReLU epilogue in f32, single cast at store.
        y = jnp.maximum(acc * scale_ref[...] + shift_ref[...], 0.0)
        y = y.reshape(tp0, p1s, toc)[:, :p1, :]
        o_ref[0] = y.astype(o_ref.dtype)

    return kernel


def _conv_vmem_bytes(tp0, p1, cins, toc, out_bytes):
    p1s = _round_up(p1 + 2, 8)
    total = 0
    for c in cins:
        total += 2 * tp0 * p1 * c * 2            # main input block (x2 pipeline buffers)
        total += 2 * 2 * p1 * c * 2 * 2          # above + below halo rows (x2 buffers)
        total += (tp0 + 2) * p1s * 3 * c * 2     # kw-packed bf16 scratch window
        total += 2 * 9 * c * toc * 2             # packed weights (x2 buffers)
    total += 2 * tp0 * p1 * toc * out_bytes      # output block (x2 buffers)
    total += tp0 * p1s * toc * 4                 # f32 accumulator
    return total


def _pick_conv_tiles(p0, p1, cins, oc, out_bytes, budget=20 << 20):
    if oc <= 256:
        toc = oc
    elif oc % 256 == 0:
        toc = 256
    elif oc % 128 == 0:
        toc = 128
    else:
        toc = oc
    tp0 = 1
    for t in range(1, p0 + 1):
        if p0 % t == 0 and _conv_vmem_bytes(t, p1, cins, toc, out_bytes) <= budget:
            tp0 = t
    return tp0, toc


def conv3x3_bn_relu(xs, ws, scale, shift, *, tile_p0=None, tile_oc=None,
                    out_dtype=jnp.bfloat16):
    """Fused 3x3 conv (stride 1, pad 1) + BatchNorm(eval) + ReLU.

    xs : list of unpadded channels-last inputs (N, P0, P1, Cin_i); torch.cat is
         fused away by passing the concat operands separately.
    ws : matching packed GEMM weights (3, 3*Cin_i, OC): wp[kh, kw*Cin + c, o].
    scale, shift: (1, OC) folded BatchNorm affine (includes the conv bias).
    Returns (N, P0, P1, OC) in out_dtype.
    """
    n, p0, p1, _ = xs[0].shape
    cins = [int(x.shape[3]) for x in xs]
    oc = int(ws[0].shape[2])
    out_bytes = jnp.dtype(out_dtype).itemsize
    auto_p0, auto_oc = _pick_conv_tiles(p0, p1, cins, oc, out_bytes)
    tile_p0 = auto_p0 if tile_p0 is None else tile_p0
    tile_oc = auto_oc if tile_oc is None else tile_oc
    assert p0 % tile_p0 == 0, (p0, tile_p0)
    assert oc % tile_oc == 0 and (tile_oc % 128 == 0 or tile_oc == oc), (oc, tile_oc)
    p1s = _round_up(p1 + 2, 8)

    in_specs, args = [], []
    for x in xs:
        cin = int(x.shape[3])
        xb = x.astype(jnp.bfloat16)
        in_specs += [
            # main rows of the window ...
            pl.BlockSpec((1, tile_p0, p1, cin), lambda b, i, j: (b, i, 0, 0)),
            # ... plus single halo rows above / below (clamped at the border,
            # zeroed in-kernel for the first / last tile).
            pl.BlockSpec((1, 1, p1, cin),
                         lambda b, i, j, _t=tile_p0: (b, jnp.maximum(i * _t - 1, 0), 0, 0)),
            pl.BlockSpec((1, 1, p1, cin),
                         lambda b, i, j, _t=tile_p0, _p=p0:
                             (b, jnp.minimum((i + 1) * _t, _p - 1), 0, 0)),
        ]
        args += [xb, xb, xb]
    for w in ws:
        in_specs.append(pl.BlockSpec((3, int(w.shape[1]), tile_oc),
                                     lambda b, i, j: (0, 0, j)))
        args.append(w.astype(jnp.bfloat16))
    in_specs += [pl.BlockSpec((1, tile_oc), lambda b, i, j: (0, j)),
                 pl.BlockSpec((1, tile_oc), lambda b, i, j: (0, j))]
    args += [scale, shift]

    scratch = [pltpu.VMEM((tile_p0 + 2, p1s, 3 * c), jnp.bfloat16) for c in cins]
    kernel = _make_conv3x3_kernel(len(xs), tuple(cins), tile_p0, p1, p1s)

    return pl.pallas_call(
        kernel,
        out_shape=jax.ShapeDtypeStruct((n, p0, p1, oc), out_dtype),
        grid=(n, p0 // tile_p0, oc // tile_oc),
        in_specs=in_specs,
        out_specs=pl.BlockSpec((1, tile_p0, p1, tile_oc), lambda b, i, j: (b, i, 0, j)),
        scratch_shapes=scratch,
        compiler_params=pltpu.CompilerParams(
            dimension_semantics=("parallel", "parallel", "arbitrary"),
            vmem_limit_bytes=_VMEM_LIMIT),
    )(*args)


# ----------------------------------------------------------------------------
# Forward pass (NCHW in / NCHW out).
# ----------------------------------------------------------------------------
def upconv_forward(x1, x2, params, ah, aw, *, tile_p0=None, tile_h=None):
    """UpConv.forward: x1 (N,C,H,W), x2 (N,C//2,2H,2W) -> (N,OUT,2H,2W)."""
    x1_cl = jnp.transpose(x1, (0, 2, 3, 1))           # (N, H, W, C)
    x2_cl = jnp.transpose(x2, (0, 2, 3, 1))           # (N, 2H, 2W, C//2)

    # 1) bicubic x2 upsample + 1x1 conv, fused, bf16, unpadded channels-last.
    xup = upsample_conv1x1(x1_cl, params["wt_up"], params["b_up"], aw, ah,
                           tile_h=tile_h)
    # 2)+3) DoubleConv.  torch.cat fused away via Cin-split packed weights;
    # zero padding handled inside the conv kernels (no jnp.pad HBM passes).
    y1 = conv3x3_bn_relu([x2_cl, xup], [params["w1a"], params["w1b"]],
                         params["scale1"], params["shift1"],
                         tile_p0=tile_p0, out_dtype=jnp.bfloat16)
    y2 = conv3x3_bn_relu([y1], [params["w2"]],
                         params["scale2"], params["shift2"],
                         tile_p0=tile_p0, out_dtype=jnp.float32)
    return jnp.transpose(y2, (0, 3, 1, 2))            # back to NCHW


# ----------------------------------------------------------------------------
# Weight preparation + pure-JAX reference (PyTorch op order, f32/HIGHEST).
# ----------------------------------------------------------------------------
def prepare_params(raw, c2, eps=1e-5):
    def pack(w):   # torch (OC, IC, 3, 3) -> (3, 3*IC, OC): wp[kh, kw*IC + ic, oc]
        oc, ic = int(w.shape[0]), int(w.shape[1])
        return jnp.transpose(w, (2, 3, 1, 0)).reshape(3, 3 * ic, oc).astype(jnp.bfloat16)

    def fold_bn(b_conv, g, be, m, v):
        s = g / jnp.sqrt(v + eps)
        return (s.reshape(1, -1).astype(jnp.float32),
                (be + (b_conv - m) * s).reshape(1, -1).astype(jnp.float32))

    scale1, shift1 = fold_bn(raw["b_c1"], raw["g1"], raw["be1"], raw["m1"], raw["v1"])
    scale2, shift2 = fold_bn(raw["b_c2"], raw["g2"], raw["be2"], raw["m2"], raw["v2"])
    return dict(
        wt_up=jnp.transpose(raw["w_up"]).astype(jnp.bfloat16),   # (C, C//2)
        b_up=raw["b_up"].astype(jnp.float32),
        w1a=pack(raw["w_c1"][:, :c2]),    # taps for the x2 half of torch.cat
        w1b=pack(raw["w_c1"][:, c2:]),    # taps for the upsampled half
        scale1=scale1, shift1=shift1,
        w2=pack(raw["w_c2"]), scale2=scale2, shift2=shift2,
    )


def reference_forward(x1, x2, raw, ah, aw):
    eps = 1e-5
    prec = jax.lax.Precision.HIGHEST
    up = jnp.einsum("ph,nchw->ncpw", ah, x1, precision=prec)
    up = jnp.einsum("qw,ncpw->ncpq", aw, up, precision=prec)
    xu = jnp.einsum("oc,ncpq->nopq", raw["w_up"], up, precision=prec)
    xu = xu + raw["b_up"][None, :, None, None]
    feat = jnp.concatenate([x2, xu], axis=1)

    def conv_bn_relu(x, w, b, g, be, m, v):
        y = jax.lax.conv_general_dilated(
            x, w, window_strides=(1, 1), padding=((1, 1), (1, 1)),
            dimension_numbers=("NCHW", "OIHW", "NCHW"), precision=prec)
        y = y + b[None, :, None, None]
        y = (y - m[None, :, None, None]) / jnp.sqrt(v[None, :, None, None] + eps)
        y = y * g[None, :, None, None] + be[None, :, None, None]
        return jnp.maximum(y, 0.0)

    y = conv_bn_relu(feat, raw["w_c1"], raw["b_c1"], raw["g1"], raw["be1"],
                     raw["m1"], raw["v1"])
    y = conv_bn_relu(y, raw["w_c2"], raw["b_c2"], raw["g2"], raw["be2"],
                     raw["m2"], raw["v2"])
    return y


if __name__ == "__main__":
    N, C, H, W = 2, 8, 8, 8          # x1: (N, C, H, W); x2: (N, C//2, 2H, 2W)
    OUT = 4
    C2 = C // 2

    def bf16_round(a):               # leaf operands rounded identically for both paths
        return jnp.asarray(a).astype(jnp.bfloat16).astype(jnp.float32)

    ks = jax.random.split(jax.random.PRNGKey(0), 16)
    x1 = bf16_round(jax.random.normal(ks[0], (N, C, H, W), jnp.float32))
    x2 = bf16_round(jax.random.normal(ks[1], (N, C2, 2 * H, 2 * W), jnp.float32))

    raw = dict(
        w_up=bf16_round(0.2 * jax.random.normal(ks[2], (C2, C), jnp.float32)),
        b_up=0.1 * jax.random.normal(ks[3], (C2,), jnp.float32),
        w_c1=bf16_round(0.2 * jax.random.normal(ks[4], (OUT, C, 3, 3), jnp.float32)),
        b_c1=0.1 * jax.random.normal(ks[5], (OUT,), jnp.float32),
        g1=1.0 + 0.1 * jax.random.normal(ks[6], (OUT,), jnp.float32),
        be1=0.1 * jax.random.normal(ks[7], (OUT,), jnp.float32),
        m1=0.1 * jax.random.normal(ks[8], (OUT,), jnp.float32),
        v1=1.0 + 0.5 * jax.random.uniform(ks[9], (OUT,), jnp.float32),
        w_c2=bf16_round(0.2 * jax.random.normal(ks[10], (OUT, OUT, 3, 3), jnp.float32)),
        b_c2=0.1 * jax.random.normal(ks[11], (OUT,), jnp.float32),
        g2=1.0 + 0.1 * jax.random.normal(ks[12], (OUT,), jnp.float32),
        be2=0.1 * jax.random.normal(ks[13], (OUT,), jnp.float32),
        m2=0.1 * jax.random.normal(ks[14], (OUT,), jnp.float32),
        v2=1.0 + 0.5 * jax.random.uniform(ks[15], (OUT,), jnp.float32),
    )

    ah = bf16_round(bicubic_upsample_matrix(H))   # (2H, H)
    aw = bf16_round(bicubic_upsample_matrix(W))   # (2W, W)

    params = prepare_params(raw, C2)

    # tile_p0=8 -> two row tiles per image (exercises the halo + border zeroing);
    # tile_h=4  -> two tiles in the upsample W-pass.
    fwd = jax.jit(upconv_forward, static_argnames=("tile_p0", "tile_h"))
    out = fwd(x1, x2, params, ah, aw, tile_p0=8, tile_h=4)
    out = jax.block_until_ready(out)

    ref = reference_forward(x1, x2, raw, ah, aw)
    assert out.shape == (N, OUT, 2 * H, 2 * W), out.shape
    # Kernel uses bf16 MXU operands / bf16 intermediates with f32 accumulation;
    # the reference is f32/HIGHEST, so the tolerance is widened accordingly.
    np.testing.assert_allclose(np.asarray(out), np.asarray(ref), rtol=7.5e-2, atol=7.5e-2)

    print("KERNEL_OK")
</pallas_src>

<mosaic_0001>
module attributes {stable_mosaic.version = 11 : i64} {
  func.func @_upsample_wpass_kernel(%arg0: i32, %arg1: i32, %arg2: memref<1x4x8x8xbf16, #tpu.memory_space<vmem>>, %arg3: memref<8x4xbf16, #tpu.memory_space<vmem>>, %arg4: memref<16x8xbf16, #tpu.memory_space<vmem>>, %arg5: memref<1x4x16x4xbf16, #tpu.memory_space<vmem>>) attributes {dimension_semantics = [#tpu.dimension_semantics<parallel>, #tpu.dimension_semantics<parallel>], iteration_bounds = array<i64: 2, 2>, scalar_prefetch = 0 : i64, scratch_operands = 0 : i64, tpu.core_type = #tpu.core_type<tc>, window_params = [{transform_indices = @transform_0, window_bounds = array<i64: 1, 4, 8, 8>}, {pipeline_mode = #tpu.pipeline_mode<synchronous>, transform_indices = @transform_1, window_bounds = array<i64: 8, 4>}, {pipeline_mode = #tpu.pipeline_mode<synchronous>, transform_indices = @transform_2, window_bounds = array<i64: 16, 8>}, {transform_indices = @transform_3, window_bounds = array<i64: 1, 4, 16, 4>}]} {
    %c0 = arith.constant 0 : index
    %c0_0 = arith.constant 0 : index
    %c0_1 = arith.constant 0 : index
    %c0_2 = arith.constant 0 : index
    %0 = vector.load %arg2[%c0, %c0_0, %c0_1, %c0_2] : memref<1x4x8x8xbf16, #tpu.memory_space<vmem>>, vector<1x4x8x8xbf16>
    %1 = vector.shape_cast %0 : vector<1x4x8x8xbf16> to vector<4x8x8xbf16>
    %2 = vector.shape_cast %1 : vector<4x8x8xbf16> to vector<32x8xbf16>
    %c0_3 = arith.constant 0 : index
    %c0_4 = arith.constant 0 : index
    %3 = vector.load %arg3[%c0_3, %c0_4] : memref<8x4xbf16, #tpu.memory_space<vmem>>, vector<8x4xbf16>
    %cst = arith.constant dense<0.000000e+00> : vector<32x4xf32>
    %4 = tpu.matmul %2, %3, %cst {dimension_numbers = #tpu.dot_dimension_numbers<[1], [0], [0], [1], [0, 0, 1, 1], [], []>} : vector<32x8xbf16>, vector<8x4xbf16>, vector<32x4xf32> -> vector<32x4xf32>
    %5 = arith.truncf %4 : vector<32x4xf32> to vector<32x4xbf16>
    %c0_5 = arith.constant 0 : index
    %c0_6 = arith.constant 0 : index
    %6 = vector.load %arg4[%c0_5, %c0_6] : memref<16x8xbf16, #tpu.memory_space<vmem>>, vector<16x8xbf16>
    %7 = vector.extract_strided_slice %5 {offsets = [0, 0], sizes = [8, 4], strides = [1, 1]} : vector<32x4xbf16> to vector<8x4xbf16>
    %cst_7 = arith.constant dense<0.000000e+00> : vector<16x4xf32>
    %8 = tpu.matmul %6, %7, %cst_7 {dimension_numbers = #tpu.dot_dimension_numbers<[1], [0], [0], [1], [0, 0, 1, 1], [], []>} : vector<16x8xbf16>, vector<8x4xbf16>, vector<16x4xf32> -> vector<16x4xf32>
    %9 = arith.truncf %8 : vector<16x4xf32> to vector<16x4xbf16>
    %c0_8 = arith.constant 0 : index
    %c0_9 = arith.constant 0 : index
    %c0_10 = arith.constant 0 : index
    %c0_11 = arith.constant 0 : index
    %10 = vector.load %arg5[%c0_8, %c0_9, %c0_10, %c0_11] : memref<1x4x16x4xbf16, #tpu.memory_space<vmem>>, vector<1x1x16x4xbf16>
    %11 = vector.shape_cast %10 : vector<1x1x16x4xbf16> to vector<16x4xbf16>
    %12 = vector.shape_cast %9 : vector<16x4xbf16> to vector<1x1x16x4xbf16>
    tpu.vector_store %arg5[%c0_8, %c0_9, %c0_10, %c0_11], %12 {strides = array<i32>} : memref<1x4x16x4xbf16, #tpu.memory_space<vmem>>, vector<1x1x16x4xbf16>,
    %13 = vector.extract_strided_slice %5 {offsets = [8, 0], sizes = [8, 4], strides = [1, 1]} : vector<32x4xbf16> to vector<8x4xbf16>
    %cst_12 = arith.constant dense<0.000000e+00> : vector<16x4xf32>
    %14 = tpu.matmul %6, %13, %cst_12 {dimension_numbers = #tpu.dot_dimension_numbers<[1], [0], [0], [1], [0, 0, 1, 1], [], []>} : vector<16x8xbf16>, vector<8x4xbf16>, vector<16x4xf32> -> vector<16x4xf32>
    %15 = arith.truncf %14 : vector<16x4xf32> to vector<16x4xbf16>
    %c0_13 = arith.constant 0 : index
    %c1 = arith.constant 1 : index
    %c0_14 = arith.constant 0 : index
    %c0_15 = arith.constant 0 : index
    %16 = vector.load %arg5[%c0_13, %c1, %c0_14, %c0_15] : memref<1x4x16x4xbf16, #tpu.memory_space<vmem>>, vector<1x1x16x4xbf16>
    %17 = vector.shape_cast %16 : vector<1x1x16x4xbf16> to vector<16x4xbf16>
    %18 = vector.shape_cast %15 : vector<16x4xbf16> to vector<1x1x16x4xbf16>
    tpu.vector_store %arg5[%c0_13, %c1, %c0_14, %c0_15], %18 {strides = array<i32>} : memref<1x4x16x4xbf16, #tpu.memory_space<vmem>>, vector<1x1x16x4xbf16>,
    %19 = vector.extract_strided_slice %5 {offsets = [16, 0], sizes = [8, 4], strides = [1, 1]} : vector<32x4xbf16> to vector<8x4xbf16>
    %cst_16 = arith.constant dense<0.000000e+00> : vector<16x4xf32>
    %20 = tpu.matmul %6, %19, %cst_16 {dimension_numbers = #tpu.dot_dimension_numbers<[1], [0], [0], [1], [0, 0, 1, 1], [], []>} : vector<16x8xbf16>, vector<8x4xbf16>, vector<16x4xf32> -> vector<16x4xf32>
    %21 = arith.truncf %20 : vector<16x4xf32> to vector<16x4xbf16>
    %c0_17 = arith.constant 0 : index
    %c2 = arith.constant 2 : index
    %c0_18 = arith.constant 0 : index
    %c0_19 = arith.constant 0 : index
    %22 = vector.load %arg5[%c0_17, %c2, %c0_18, %c0_19] : memref<1x4x16x4xbf16, #tpu.memory_space<vmem>>, vector<1x1x16x4xbf16>
    %23 = vector.shape_cast %22 : vector<1x1x16x4xbf16> to vector<16x4xbf16>
    %24 = vector.shape_cast %21 : vector<16x4xbf16> to vector<1x1x16x4xbf16>
    tpu.vector_store %arg5[%c0_17, %c2, %c0_18, %c0_19], %24 {strides = array<i32>} : memref<1x4x16x4xbf16, #tpu.memory_space<vmem>>, vector<1x1x16x4xbf16>,
    %25 = vector.extract_strided_slice %5 {offsets = [24, 0], sizes = [8, 4], strides = [1, 1]} : vector<32x4xbf16> to vector<8x4xbf16>
    %cst_20 = arith.constant dense<0.000000e+00> : vector<16x4xf32>
    %26 = tpu.matmul %6, %25, %cst_20 {dimension_numbers = #tpu.dot_dimension_numbers<[1], [0], [0], [1], [0, 0, 1, 1], [], []>} : vector<16x8xbf16>, vector<8x4xbf16>, vector<16x4xf32> -> vector<16x4xf32>
    %27 = arith.truncf %26 : vector<16x4xf32> to vector<16x4xbf16>
    %c0_21 = arith.constant 0 : index
    %c3 = arith.constant 3 : index
    %c0_22 = arith.constant 0 : index
    %c0_23 = arith.constant 0 : index
    %28 = vector.load %arg5[%c0_21, %c3, %c0_22, %c0_23] : memref<1x4x16x4xbf16, #tpu.memory_space<vmem>>, vector<1x1x16x4xbf16>
    %29 = vector.shape_cast %28 : vector<1x1x16x4xbf16> to vector<16x4xbf16>
    %30 = vector.shape_cast %27 : vector<16x4xbf16> to vector<1x1x16x4xbf16>
    tpu.vector_store %arg5[%c0_21, %c3, %c0_22, %c0_23], %30 {strides = array<i32>} : memref<1x4x16x4xbf16, #tpu.memory_space<vmem>>, vector<1x1x16x4xbf16>,
    return
  }
  func.func @transform_0(%arg0: i32, %arg1: i32) -> (i32, i32, i32, i32) {
    %c0_i32 = arith.constant 0 : i32
    %c0_i32_0 = arith.constant 0 : i32
    %c0_i32_1 = arith.constant 0 : i32
    return %arg0, %arg1, %c0_i32, %c0_i32_0 : i32, i32, i32, i32
  }
  func.func @transform_1(%arg0: i32, %arg1: i32) -> (i32, i32) {
    %c0_i32 = arith.constant 0 : i32
    %c0_i32_0 = arith.constant 0 : i32
    %c0_i32_1 = arith.constant 0 : i32
    return %c0_i32, %c0_i32_0 : i32, i32
  }
  func.func @transform_2(%arg0: i32, %arg1: i32) -> (i32, i32) {
    %c0_i32 = arith.constant 0 : i32
    %c0_i32_0 = arith.constant 0 : i32
    %c0_i32_1 = arith.constant 0 : i32
    return %c0_i32, %c0_i32_0 : i32, i32
  }
  func.func @transform_3(%arg0: i32, %arg1: i32) -> (i32, i32, i32, i32) {
    %c0_i32 = arith.constant 0 : i32
    %c0_i32_0 = arith.constant 0 : i32
    %c0_i32_1 = arith.constant 0 : i32
    return %arg0, %arg1, %c0_i32, %c0_i32_0 : i32, i32, i32, i32
  }
}

module attributes {stable_mosaic.version = 11 : i64} {
  func.func @_upsample_hpass_kernel(%arg0: i32, %arg1: i32, %arg2: memref<1x8x64xbf16, #tpu.memory_space<vmem>>, %arg3: memref<16x8xbf16, #tpu.memory_space<vmem>>, %arg4: memref<1x64xf32, #tpu.memory_space<vmem>>, %arg5: memref<1x16x64xbf16, #tpu.memory_space<vmem>>) attributes {dimension_semantics = [#tpu.dimension_semantics<parallel>, #tpu.dimension_semantics<parallel>], iteration_bounds = array<i64: 2, 1>, scalar_prefetch = 0 : i64, scratch_operands = 0 : i64, tpu.core_type = #tpu.core_type<tc>, window_params = [{transform_indices = @transform_0, window_bounds = array<i64: 1, 8, 64>}, {pipeline_mode = #tpu.pipeline_mode<synchronous>, transform_indices = @transform_1, window_bounds = array<i64: 16, 8>}, {transform_indices = @transform_2, window_bounds = array<i64: 1, 64>}, {transform_indices = @transform_3, window_bounds = array<i64: 1, 16, 64>}]} {
    %c0 = arith.constant 0 : index
    %c0_0 = arith.constant 0 : index
    %0 = vector.load %arg3[%c0, %c0_0] : memref<16x8xbf16, #tpu.memory_space<vmem>>, vector<16x8xbf16>
    %c0_1 = arith.constant 0 : index
    %c0_2 = arith.constant 0 : index
    %c0_3 = arith.constant 0 : index
    %1 = vector.load %arg2[%c0_1, %c0_2, %c0_3] : memref<1x8x64xbf16, #tpu.memory_space<vmem>>, vector<1x8x64xbf16>
    %2 = vector.shape_cast %1 : vector<1x8x64xbf16> to vector<8x64xbf16>
    %cst = arith.constant dense<0.000000e+00> : vector<16x64xf32>
    %3 = tpu.matmul %0, %2, %cst {dimension_numbers = #tpu.dot_dimension_numbers<[1], [0], [0], [1], [0, 0, 1, 1], [], []>} : vector<16x8xbf16>, vector<8x64xbf16>, vector<16x64xf32> -> vector<16x64xf32>
    %c0_4 = arith.constant 0 : index
    %c0_5 = arith.constant 0 : index
    %4 = vector.load %arg4[%c0_4, %c0_5] : memref<1x64xf32, #tpu.memory_space<vmem>>, vector<1x64xf32>
    %5 = vector.broadcast %4 : vector<1x64xf32> to vector<16x64xf32>
    %6 = arith.addf %3, %5 : vector<16x64xf32>
    %7 = arith.truncf %6 : vector<16x64xf32> to vector<16x64xbf16>
    %c0_6 = arith.constant 0 : index
    %c0_7 = arith.constant 0 : index
    %c0_8 = arith.constant 0 : index
    %8 = vector.load %arg5[%c0_6, %c0_7, %c0_8] : memref<1x16x64xbf16, #tpu.memory_space<vmem>>, vector<1x16x64xbf16>
    %9 = vector.shape_cast %8 : vector<1x16x64xbf16> to vector<16x64xbf16>
    %10 = vector.shape_cast %7 : vector<16x64xbf16> to vector<1x16x64xbf16>
    tpu.vector_store %arg5[%c0_6, %c0_7, %c0_8], %10 {strides = array<i32>} : memref<1x16x64xbf16, #tpu.memory_space<vmem>>, vector<1x16x64xbf16>,
    return
  }
  func.func @transform_0(%arg0: i32, %arg1: i32) -> (i32, i32, i32) {
    %c0_i32 = arith.constant 0 : i32
    %c0_i32_0 = arith.constant 0 : i32
    return %arg0, %c0_i32, %arg1 : i32, i32, i32
  }
  func.func @transform_1(%arg0: i32, %arg1: i32) -> (i32, i32) {
    %c0_i32 = arith.constant 0 : i32
    %c0_i32_0 = arith.constant 0 : i32
    %c0_i32_1 = arith.constant 0 : i32
    return %c0_i32, %c0_i32_0 : i32, i32
  }
  func.func @transform_2(%arg0: i32, %arg1: i32) -> (i32, i32) {
    %c0_i32 = arith.constant 0 : i32
    %c0_i32_0 = arith.constant 0 : i32
    return %c0_i32, %arg1 : i32, i32
  }
  func.func @transform_3(%arg0: i32, %arg1: i32) -> (i32, i32, i32) {
    %c0_i32 = arith.constant 0 : i32
    %c0_i32_0 = arith.constant 0 : i32
    return %arg0, %c0_i32, %arg1 : i32, i32, i32
  }
}

module attributes {stable_mosaic.version = 11 : i64} {
  func.func @kernel(%arg0: i32, %arg1: i32, %arg2: i32, %arg3: memref<1x8x16x4xbf16, #tpu.memory_space<vmem>>, %arg4: memref<1x1x16x4xbf16, #tpu.memory_space<vmem>>, %arg5: memref<1x1x16x4xbf16, #tpu.memory_space<vmem>>, %arg6: memref<3x12x4xbf16, #tpu.memory_space<vmem>>, %arg7: memref<1x4xf32, #tpu.memory_space<vmem>>, %arg8: memref<1x4xf32, #tpu.memory_space<vmem>>, %arg9: memref<1x8x16x4xf32, #tpu.memory_space<vmem>>, %arg10: memref<10x24x12xbf16, #tpu.memory_space<vmem>>) attributes {dimension_semantics = [#tpu.dimension_semantics<parallel>, #tpu.dimension_semantics<parallel>, #tpu.dimension_semantics<arbitrary>], iteration_bounds = array<i64: 2, 2, 1>, scalar_prefetch = 0 : i64, scratch_operands = 1 : i64, tpu.core_type = #tpu.core_type<tc>, window_params = [{transform_indices = @transform_0, window_bounds = array<i64: 1, 8, 16, 4>}, {transform_indices = @transform_1, window_bounds = array<i64: 1, 1, 16, 4>}, {transform_indices = @transform_2, window_bounds = array<i64: 1, 1, 16, 4>}, {transform_indices = @transform_3, window_bounds = array<i64: 3, 12, 4>}, {transform_indices = @transform_4, window_bounds = array<i64: 1, 4>}, {transform_indices = @transform_5, window_bounds = array<i64: 1, 4>}, {transform_indices = @transform_6, window_bounds = array<i64: 1, 8, 16, 4>}]} {
    %c0_i32 = arith.constant 0 : i32
    %0 = arith.cmpi eq, %arg2, %c0_i32 : i32
    %1 = arith.extui %0 : i1 to i32
    %c0_i32_0 = arith.constant 0 : i32
    %2 = arith.cmpi ne, %1, %c0_i32_0 : i32
    scf.if %2 {
      %c0_28 = arith.constant 0 : index
      %c0_29 = arith.constant 0 : index
      %c0_30 = arith.constant 0 : index
      %c0_31 = arith.constant 0 : index
      %35 = vector.load %arg3[%c0_28, %c0_29, %c0_30, %c0_31] : memref<1x8x16x4xbf16, #tpu.memory_space<vmem>>, vector<1x8x16x4xbf16>
      %36 = vector.shape_cast %35 : vector<1x8x16x4xbf16> to vector<8x16x4xbf16>
      %cst_32 = arith.constant 0.000000e+00 : bf16
      %37 = vector.broadcast %cst_32 : bf16 to vector<16x4xbf16>
      %c0_i32_33 = arith.constant 0 : i32
      %38 = arith.cmpi sgt, %arg1, %c0_i32_33 : i32
      %c0_34 = arith.constant 0 : index
      %c0_35 = arith.constant 0 : index
      %c0_36 = arith.constant 0 : index
      %c0_37 = arith.constant 0 : index
      %39 = vector.load %arg4[%c0_34, %c0_35, %c0_36, %c0_37] : memref<1x1x16x4xbf16, #tpu.memory_space<vmem>>, vector<1x1x16x4xbf16>
      %40 = vector.shape_cast %39 : vector<1x1x16x4xbf16> to vector<16x4xbf16>
      %41 = arith.select %38, %40, %37 : vector<16x4xbf16>
      %c1_i32 = arith.constant 1 : i32
      %42 = arith.cmpi slt, %arg1, %c1_i32 : i32
      %c0_38 = arith.constant 0 : index
      %c0_39 = arith.constant 0 : index
      %c0_40 = arith.constant 0 : index
      %c0_41 = arith.constant 0 : index
      %43 = vector.load %arg5[%c0_38, %c0_39, %c0_40, %c0_41] : memref<1x1x16x4xbf16, #tpu.memory_space<vmem>>, vector<1x1x16x4xbf16>
      %44 = vector.shape_cast %43 : vector<1x1x16x4xbf16> to vector<16x4xbf16>
      %45 = arith.select %42, %44, %37 : vector<16x4xbf16>
      %cst_42 = arith.constant 0.000000e+00 : bf16
      %46 = vector.broadcast %cst_42 : bf16 to vector<10x1x4xbf16>
      %c0_43 = arith.constant 0 : index
      %c1_44 = arith.constant 1 : index
      %c0_45 = arith.constant 0 : index
      %47 = vector.load %arg10[%c0_43, %c1_44, %c0_45] : memref<10x24x12xbf16, #tpu.memory_space<vmem>>, vector<1x16x4xbf16>
      %48 = vector.shape_cast %47 : vector<1x16x4xbf16> to vector<16x4xbf16>
      %49 = vector.shape_cast %41 : vector<16x4xbf16> to vector<1x16x4xbf16>
      tpu.vector_store %arg10[%c0_43, %c1_44, %c0_45], %49 {strides = array<i32>} : memref<10x24x12xbf16, #tpu.memory_space<vmem>>, vector<1x16x4xbf16>,
      %c1_46 = arith.constant 1 : index
      %c1_47 = arith.constant 1 : index
      %c0_48 = arith.constant 0 : index
      %50 = vector.load %arg10[%c1_46, %c1_47, %c0_48] : memref<10x24x12xbf16, #tpu.memory_space<vmem>>, vector<8x16x4xbf16>
      tpu.vector_store %arg10[%c1_46, %c1_47, %c0_48], %36 {strides = array<i32>} : memref<10x24x12xbf16, #tpu.memory_space<vmem>>, vector<8x16x4xbf16>,
      %c9 = arith.constant 9 : index
      %c1_49 = arith.constant 1 : index
      %c0_50 = arith.constant 0 : index
      %51 = vector.load %arg10[%c9, %c1_49, %c0_50] : memref<10x24x12xbf16, #tpu.memory_space<vmem>>, vector<1x16x4xbf16>
      %52 = vector.shape_cast %51 : vector<1x16x4xbf16> to vector<16x4xbf16>
      %53 = vector.shape_cast %45 : vector<16x4xbf16> to vector<1x16x4xbf16>
      tpu.vector_store %arg10[%c9, %c1_49, %c0_50], %53 {strides = array<i32>} : memref<10x24x12xbf16, #tpu.memory_space<vmem>>, vector<1x16x4xbf16>,
      %c0_51 = arith.constant 0 : index
      %c0_52 = arith.constant 0 : index
      %c0_53 = arith.constant 0 : index
      %54 = vector.load %arg10[%c0_51, %c0_52, %c0_53] : memref<10x24x12xbf16, #tpu.memory_space<vmem>>, vector<10x1x4xbf16>
      tpu.vector_store %arg10[%c0_51, %c0_52, %c0_53], %46 {strides = array<i32>} : memref<10x24x12xbf16, #tpu.memory_space<vmem>>, vector<10x1x4xbf16>,
      %c0_54 = arith.constant 0 : index
      %c0_55 = arith.constant 0 : index
      %c4 = arith.constant 4 : index
      %55 = vector.load %arg10[%c0_54, %c0_55, %c4] : memref<10x24x12xbf16, #tpu.memory_space<vmem>>, vector<1x16x4xbf16>
      %56 = vector.shape_cast %55 : vector<1x16x4xbf16> to vector<16x4xbf16>
      %57 = vector.shape_cast %41 : vector<16x4xbf16> to vector<1x16x4xbf16>
      tpu.vector_store %arg10[%c0_54, %c0_55, %c4], %57 {strides = array<i32>} : memref<10x24x12xbf16, #tpu.memory_space<vmem>>, vector<1x16x4xbf16>,
      %c1_56 = arith.constant 1 : index
      %c0_57 = arith.constant 0 : index
      %c4_58 = arith.constant 4 : index
      %58 = vector.load %arg10[%c1_56, %c0_57, %c4_58] : memref<10x24x12xbf16, #tpu.memory_space<vmem>>, vector<8x16x4xbf16>
      tpu.vector_store %arg10[%c1_56, %c0_57, %c4_58], %36 {strides = array<i32>} : memref<10x24x12xbf16, #tpu.memory_space<vmem>>, vector<8x16x4xbf16>,
      %c9_59 = arith.constant 9 : index
      %c0_60 = arith.constant 0 : index
      %c4_61 = arith.constant 4 : index
      %59 = vector.load %arg10[%c9_59, %c0_60, %c4_61] : memref<10x24x12xbf16, #tpu.memory_space<vmem>>, vector<1x16x4xbf16>
      %60 = vector.shape_cast %59 : vector<1x16x4xbf16> to vector<16x4xbf16>
      %61 = vector.shape_cast %45 : vector<16x4xbf16> to vector<1x16x4xbf16>
      tpu.vector_store %arg10[%c9_59, %c0_60, %c4_61], %61 {strides = array<i32>} : memref<10x24x12xbf16, #tpu.memory_space<vmem>>, vector<1x16x4xbf16>,
      %62 = vector.extract_strided_slice %41 {offsets = [1, 0], sizes = [15, 4], strides = [1, 1]} : vector<16x4xbf16> to vector<15x4xbf16>
      %c0_62 = arith.constant 0 : index
      %c0_63 = arith.constant 0 : index
      %c8 = arith.constant 8 : index
      %63 = vector.load %arg10[%c0_62, %c0_63, %c8] : memref<10x24x12xbf16, #tpu.memory_space<vmem>>, vector<1x15x4xbf16>
      %64 = vector.shape_cast %63 : vector<1x15x4xbf16> to vector<15x4xbf16>
      %65 = vector.shape_cast %62 : vector<15x4xbf16> to vector<1x15x4xbf16>
      tpu.vector_store %arg10[%c0_62, %c0_63, %c8], %65 {strides = array<i32>} : memref<10x24x12xbf16, #tpu.memory_space<vmem>>, vector<1x15x4xbf16>,
      %66 = vector.extract_strided_slice %36 {offsets = [0, 1, 0], sizes = [8, 15, 4], strides = [1, 1, 1]} : vector<8x16x4xbf16> to vector<8x15x4xbf16>
      %c1_64 = arith.constant 1 : index
      %c0_65 = arith.constant 0 : index
      %c8_66 = arith.constant 8 : index
      %67 = vector.load %arg10[%c1_64, %c0_65, %c8_66] : memref<10x24x12xbf16, #tpu.memory_space<vmem>>, vector<8x15x4xbf16>
      tpu.vector_store %arg10[%c1_64, %c0_65, %c8_66], %66 {strides = array<i32>} : memref<10x24x12xbf16, #tpu.memory_space<vmem>>, vector<8x15x4xbf16>,
      %68 = vector.extract_strided_slice %45 {offsets = [1, 0], sizes = [15, 4], strides = [1, 1]} : vector<16x4xbf16> to vector<15x4xbf16>
      %c9_67 = arith.constant 9 : index
      %c0_68 = arith.constant 0 : index
      %c8_69 = arith.constant 8 : index
      %69 = vector.load %arg10[%c9_67, %c0_68, %c8_69] : memref<10x24x12xbf16, #tpu.memory_space<vmem>>, vector<1x15x4xbf16>
      %70 = vector.shape_cast %69 : vector<1x15x4xbf16> to vector<15x4xbf16>
      %71 = vector.shape_cast %68 : vector<15x4xbf16> to vector<1x15x4xbf16>
      tpu.vector_store %arg10[%c9_67, %c0_68, %c8_69], %71 {strides = array<i32>} : memref<10x24x12xbf16, #tpu.memory_space<vmem>>, vector<1x15x4xbf16>,
      %c0_70 = arith.constant 0 : index
      %c15 = arith.constant 15 : index
      %c8_71 = arith.constant 8 : index
      %72 = vector.load %arg10[%c0_70, %c15, %c8_71] : memref<10x24x12xbf16, #tpu.memory_space<vmem>>, vector<10x1x4xbf16>
      tpu.vector_store %arg10[%c0_70, %c15, %c8_71], %46 {strides = array<i32>} : memref<10x24x12xbf16, #tpu.memory_space<vmem>>, vector<10x1x4xbf16>,
    } else {
    }
    %cst = arith.constant 0.000000e+00 : f32
    %3 = vector.broadcast %cst : f32 to vector<192x4xf32>
    %c0 = arith.constant 0 : index
    %c0_1 = arith.constant 0 : index
    %c0_2 = arith.constant 0 : index
    %4 = vector.load %arg10[%c0, %c0_1, %c0_2] : memref<10x24x12xbf16, #tpu.memory_space<vmem>>, vector<8x24x12xbf16>
    %5 = vector.shape_cast %4 : vector<8x24x12xbf16> to vector<192x12xbf16>
    %c0_3 = arith.constant 0 : index
    %c0_4 = arith.constant 0 : index
    %c0_5 = arith.constant 0 : index
    %6 = vector.load %arg6[%c0_3, %c0_4, %c0_5] : memref<3x12x4xbf16, #tpu.memory_space<vmem>>, vector<1x12x4xbf16>
    %7 = vector.shape_cast %6 : vector<1x12x4xbf16> to vector<12x4xbf16>
    %cst_6 = arith.constant dense<0.000000e+00> : vector<192x4xf32>
    %8 = tpu.matmul %5, %7, %cst_6 {dimension_numbers = #tpu.dot_dimension_numbers<[1], [0], [0], [1], [0, 0, 1, 1], [], []>} : vector<192x12xbf16>, vector<12x4xbf16>, vector<192x4xf32> -> vector<192x4xf32>
    %9 = arith.addf %3, %8 : vector<192x4xf32>
    %c1 = arith.constant 1 : index
    %c0_7 = arith.constant 0 : index
    %c0_8 = arith.constant 0 : index
    %10 = vector.load %arg10[%c1, %c0_7, %c0_8] : memref<10x24x12xbf16, #tpu.memory_space<vmem>>, vector<8x24x12xbf16>
    %11 = vector.shape_cast %10 : vector<8x24x12xbf16> to vector<192x12xbf16>
    %c1_9 = arith.constant 1 : index
    %c0_10 = arith.constant 0 : index
    %c0_11 = arith.constant 0 : index
    %12 = vector.load %arg6[%c1_9, %c0_10, %c0_11] : memref<3x12x4xbf16, #tpu.memory_space<vmem>>, vector<1x12x4xbf16>
    %13 = vector.shape_cast %12 : vector<1x12x4xbf16> to vector<12x4xbf16>
    %cst_12 = arith.constant dense<0.000000e+00> : vector<192x4xf32>
    %14 = tpu.matmul %11, %13, %cst_12 {dimension_numbers = #tpu.dot_dimension_numbers<[1], [0], [0], [1], [0, 0, 1, 1], [], []>} : vector<192x12xbf16>, vector<12x4xbf16>, vector<192x4xf32> -> vector<192x4xf32>
    %15 = arith.addf %9, %14 : vector<192x4xf32>
    %c2 = arith.constant 2 : index
    %c0_13 = arith.constant 0 : index
    %c0_14 = arith.constant 0 : index
    %16 = vector.load %arg10[%c2, %c0_13, %c0_14] : memref<10x24x12xbf16, #tpu.memory_space<vmem>>, vector<8x24x12xbf16>
    %17 = vector.shape_cast %16 : vector<8x24x12xbf16> to vector<192x12xbf16>
    %c2_15 = arith.constant 2 : index
    %c0_16 = arith.constant 0 : index
    %c0_17 = arith.constant 0 : index
    %18 = vector.load %arg6[%c2_15, %c0_16, %c0_17] : memref<3x12x4xbf16, #tpu.memory_space<vmem>>, vector<1x12x4xbf16>
    %19 = vector.shape_cast %18 : vector<1x12x4xbf16> to vector<12x4xbf16>
    %cst_18 = arith.constant dense<0.000000e+00> : vector<192x4xf32>
    %20 = tpu.matmul %17, %19, %cst_18 {dimension_numbers = #tpu.dot_dimension_numbers<[1], [0], [0], [1], [0, 0, 1, 1], [], []>} : vector<192x12xbf16>, vector<12x4xbf16>, vector<192x4xf32> -> vector<192x4xf32>
    %21 = arith.addf %15, %20 : vector<192x4xf32>
    %c0_19 = arith.constant 0 : index
    %c0_20 = arith.constant 0 : index
    %22 = vector.load %arg7[%c0_19, %c0_20] : memref<1x4xf32, #tpu.memory_space<vmem>>, vector<1x4xf32>
    %23 = vector.broadcast %22 : vector<1x4xf32> to vector<192x4xf32>
    %24 = arith.mulf %21, %23 : vector<192x4xf32>
    %c0_21 = arith.constant 0 : index
    %c0_22 = arith.constant 0 : index
    %25 = vector.load %arg8[%c0_21, %c0_22] : memref<1x4xf32, #tpu.memory_space<vmem>>, vector<1x4xf32>
    %26 = vector.broadcast %25 : vector<1x4xf32> to vector<192x4xf32>
    %27 = arith.addf %24, %26 : vector<192x4xf32>
    %cst_23 = arith.constant 0.000000e+00 : f32
    %28 = vector.broadcast %cst_23 : f32 to vector<192x4xf32>
    %29 = arith.maximumf %27, %28 : vector<192x4xf32>
    %30 = vector.shape_cast %29 : vector<192x4xf32> to vector<8x24x4xf32>
    %31 = vector.extract_strided_slice %30 {offsets = [0, 0, 0], sizes = [8, 16, 4], strides = [1, 1, 1]} : vector<8x24x4xf32> to vector<8x16x4xf32>
    %c0_24 = arith.constant 0 : index
    %c0_25 = arith.constant 0 : index
    %c0_26 = arith.constant 0 : index
    %c0_27 = arith.constant 0 : index
    %32 = vector.load %arg9[%c0_24, %c0_25, %c0_26, %c0_27] : memref<1x8x16x4xf32, #tpu.memory_space<vmem>>, vector<1x8x16x4xf32>
    %33 = vector.shape_cast %32 : vector<1x8x16x4xf32> to vector<8x16x4xf32>
    %34 = vector.shape_cast %31 : vector<8x16x4xf32> to vector<1x8x16x4xf32>
    tpu.vector_store %arg9[%c0_24, %c0_25, %c0_26, %c0_27], %34 {strides = array<i32>} : memref<1x8x16x4xf32, #tpu.memory_space<vmem>>, vector<1x8x16x4xf32>,
    return
  }
  func.func @transform_0(%arg0: i32, %arg1: i32, %arg2: i32) -> (i32, i32, i32, i32) {
    %c0_i32 = arith.constant 0 : i32
    %c0_i32_0 = arith.constant 0 : i32
    %c0_i32_1 = arith.constant 0 : i32
    return %arg0, %arg1, %c0_i32, %c0_i32_0 : i32, i32, i32, i32
  }
  func.func @transform_1(%arg0: i32, %arg1: i32, %arg2: i32) -> (i32, i32, i32, i32) {
    %c8_i32 = arith.constant 8 : i32
    %0 = arith.muli %arg1, %c8_i32 : i32
    %c1_i32 = arith.constant 1 : i32
    %1 = arith.subi %0, %c1_i32 : i32
    %c0_i32 = arith.constant 0 : i32
    %2 = arith.maxsi %1, %c0_i32 : i32
    %c0_i32_0 = arith.constant 0 : i32
    %c0_i32_1 = arith.constant 0 : i32
    %c0_i32_2 = arith.constant 0 : i32
    return %arg0, %2, %c0_i32_0, %c0_i32_1 : i32, i32, i32, i32
  }
  func.func @transform_2(%arg0: i32, %arg1: i32, %arg2: i32) -> (i32, i32, i32, i32) {
    %c1_i32 = arith.constant 1 : i32
    %0 = arith.addi %arg1, %c1_i32 : i32
    %c8_i32 = arith.constant 8 : i32
    %1 = arith.muli %0, %c8_i32 : i32
    %c15_i32 = arith.constant 15 : i32
    %2 = arith.minsi %1, %c15_i32 : i32
    %c0_i32 = arith.constant 0 : i32
    %c0_i32_0 = arith.constant 0 : i32
    %c0_i32_1 = arith.constant 0 : i32
    return %arg0, %2, %c0_i32, %c0_i32_0 : i32, i32, i32, i32
  }
  func.func @transform_3(%arg0: i32, %arg1: i32, %arg2: i32) -> (i32, i32, i32) {
    %c0_i32 = arith.constant 0 : i32
    %c0_i32_0 = arith.constant 0 : i32
    %c0_i32_1 = arith.constant 0 : i32
    return %c0_i32, %c0_i32_0, %arg2 : i32, i32, i32
  }
  func.func @transform_4(%arg0: i32, %arg1: i32, %arg2: i32) -> (i32, i32) {
    %c0_i32 = arith.constant 0 : i32
    %c0_i32_0 = arith.constant 0 : i32
    return %c0_i32, %arg2 : i32, i32
  }
  func.func @transform_5(%arg0: i32, %arg1: i32, %arg2: i32) -> (i32, i32) {
    %c0_i32 = arith.constant 0 : i32
    %c0_i32_0 = arith.constant 0 : i32
    return %c0_i32, %arg2 : i32, i32
  }
  func.func @transform_6(%arg0: i32, %arg1: i32, %arg2: i32) -> (i32, i32, i32, i32) {
    %c0_i32 = arith.constant 0 : i32
    %c0_i32_0 = arith.constant 0 : i32
    return %arg0, %arg1, %c0_i32, %arg2 : i32, i32, i32, i32
  }
}

module attributes {stable_mosaic.version = 11 : i64} {
  func.func @kernel(%arg0: i32, %arg1: i32, %arg2: i32, %arg3: memref<1x8x16x4xbf16, #tpu.memory_space<vmem>>, %arg4: memref<1x1x16x4xbf16, #tpu.memory_space<vmem>>, %arg5: memref<1x1x16x4xbf16, #tpu.memory_space<vmem>>, %arg6: memref<1x8x16x4xbf16, #tpu.memory_space<vmem>>, %arg7: memref<1x1x16x4xbf16, #tpu.memory_space<vmem>>, %arg8: memref<1x1x16x4xbf16, #tpu.memory_space<vmem>>, %arg9: memref<3x12x4xbf16, #tpu.memory_space<vmem>>, %arg10: memref<3x12x4xbf16, #tpu.memory_space<vmem>>, %arg11: memref<1x4xf32, #tpu.memory_space<vmem>>, %arg12: memref<1x4xf32, #tpu.memory_space<vmem>>, %arg13: memref<1x8x16x4xbf16, #tpu.memory_space<vmem>>, %arg14: memref<10x24x12xbf16, #tpu.memory_space<vmem>>, %arg15: memref<10x24x12xbf16, #tpu.memory_space<vmem>>) attributes {dimension_semantics = [#tpu.dimension_semantics<parallel>, #tpu.dimension_semantics<parallel>, #tpu.dimension_semantics<arbitrary>], iteration_bounds = array<i64: 2, 2, 1>, scalar_prefetch = 0 : i64, scratch_operands = 2 : i64, tpu.core_type = #tpu.core_type<tc>, window_params = [{transform_indices = @transform_0, window_bounds = array<i64: 1, 8, 16, 4>}, {transform_indices = @transform_1, window_bounds = array<i64: 1, 1, 16, 4>}, {transform_indices = @transform_2, window_bounds = array<i64: 1, 1, 16, 4>}, {transform_indices = @transform_3, window_bounds = array<i64: 1, 8, 16, 4>}, {transform_indices = @transform_4, window_bounds = array<i64: 1, 1, 16, 4>}, {transform_indices = @transform_5, window_bounds = array<i64: 1, 1, 16, 4>}, {transform_indices = @transform_6, window_bounds = array<i64: 3, 12, 4>}, {transform_indices = @transform_7, window_bounds = array<i64: 3, 12, 4>}, {transform_indices = @transform_8, window_bounds = array<i64: 1, 4>}, {transform_indices = @transform_9, window_bounds = array<i64: 1, 4>}, {transform_indices = @transform_10, window_bounds = array<i64: 1, 8, 16, 4>}]} {
    %c0_i32 = arith.constant 0 : i32
    %0 = arith.cmpi eq, %arg2, %c0_i32 : i32
    %1 = arith.extui %0 : i1 to i32
    %c0_i32_0 = arith.constant 0 : i32
    %2 = arith.cmpi ne, %1, %c0_i32_0 : i32
    scf.if %2 {
      %c0_49 = arith.constant 0 : index
      %c0_50 = arith.constant 0 : index
      %c0_51 = arith.constant 0 : index
      %c0_52 = arith.constant 0 : index
      %54 = vector.load %arg3[%c0_49, %c0_50, %c0_51, %c0_52] : memref<1x8x16x4xbf16, #tpu.memory_space<vmem>>, vector<1x8x16x4xbf16>
      %55 = vector.shape_cast %54 : vector<1x8x16x4xbf16> to vector<8x16x4xbf16>
      %cst_53 = arith.constant 0.000000e+00 : bf16
      %56 = vector.broadcast %cst_53 : bf16 to vector<16x4xbf16>
      %c0_i32_54 = arith.constant 0 : i32
      %57 = arith.cmpi sgt, %arg1, %c0_i32_54 : i32
      %c0_55 = arith.constant 0 : index
      %c0_56 = arith.constant 0 : index
      %c0_57 = arith.constant 0 : index
      %c0_58 = arith.constant 0 : index
      %58 = vector.load %arg4[%c0_55, %c0_56, %c0_57, %c0_58] : memref<1x1x16x4xbf16, #tpu.memory_space<vmem>>, vector<1x1x16x4xbf16>
      %59 = vector.shape_cast %58 : vector<1x1x16x4xbf16> to vector<16x4xbf16>
      %60 = arith.select %57, %59, %56 : vector<16x4xbf16>
      %c1_i32 = arith.constant 1 : i32
      %61 = arith.cmpi slt, %arg1, %c1_i32 : i32
      %c0_59 = arith.constant 0 : index
      %c0_60 = arith.constant 0 : index
      %c0_61 = arith.constant 0 : index
      %c0_62 = arith.constant 0 : index
      %62 = vector.load %arg5[%c0_59, %c0_60, %c0_61, %c0_62] : memref<1x1x16x4xbf16, #tpu.memory_space<vmem>>, vector<1x1x16x4xbf16>
      %63 = vector.shape_cast %62 : vector<1x1x16x4xbf16> to vector<16x4xbf16>
      %64 = arith.select %61, %63, %56 : vector<16x4xbf16>
      %cst_63 = arith.constant 0.000000e+00 : bf16
      %65 = vector.broadcast %cst_63 : bf16 to vector<10x1x4xbf16>
      %c0_64 = arith.constant 0 : index
      %c1_65 = arith.constant 1 : index
      %c0_66 = arith.constant 0 : index
      %66 = vector.load %arg14[%c0_64, %c1_65, %c0_66] : memref<10x24x12xbf16, #tpu.memory_space<vmem>>, vector<1x16x4xbf16>
      %67 = vector.shape_cast %66 : vector<1x16x4xbf16> to vector<16x4xbf16>
      %68 = vector.shape_cast %60 : vector<16x4xbf16> to vector<1x16x4xbf16>
      tpu.vector_store %arg14[%c0_64, %c1_65, %c0_66], %68 {strides = array<i32>} : memref<10x24x12xbf16, #tpu.memory_space<vmem>>, vector<1x16x4xbf16>,
      %c1_67 = arith.constant 1 : index
      %c1_68 = arith.constant 1 : index
      %c0_69 = arith.constant 0 : index
      %69 = vector.load %arg14[%c1_67, %c1_68, %c0_69] : memref<10x24x12xbf16, #tpu.memory_space<vmem>>, vector<8x16x4xbf16>
      tpu.vector_store %arg14[%c1_67, %c1_68, %c0_69], %55 {strides = array<i32>} : memref<10x24x12xbf16, #tpu.memory_space<vmem>>, vector<8x16x4xbf16>,
      %c9 = arith.constant 9 : index
      %c1_70 = arith.constant 1 : index
      %c0_71 = arith.constant 0 : index
      %70 = vector.load %arg14[%c9, %c1_70, %c0_71] : memref<10x24x12xbf16, #tpu.memory_space<vmem>>, vector<1x16x4xbf16>
      %71 = vector.shape_cast %70 : vector<1x16x4xbf16> to vector<16x4xbf16>
      %72 = vector.shape_cast %64 : vector<16x4xbf16> to vector<1x16x4xbf16>
      tpu.vector_store %arg14[%c9, %c1_70, %c0_71], %72 {strides = array<i32>} : memref<10x24x12xbf16, #tpu.memory_space<vmem>>, vector<1x16x4xbf16>,
      %c0_72 = arith.constant 0 : index
      %c0_73 = arith.constant 0 : index
      %c0_74 = arith.constant 0 : index
      %73 = vector.load %arg14[%c0_72, %c0_73, %c0_74] : memref<10x24x12xbf16, #tpu.memory_space<vmem>>, vector<10x1x4xbf16>
      tpu.vector_store %arg14[%c0_72, %c0_73, %c0_74], %65 {strides = array<i32>} : memref<10x24x12xbf16, #tpu.memory_space<vmem>>, vector<10x1x4xbf16>,
      %c0_75 = arith.constant 0 : index
      %c0_76 = arith.constant 0 : index
      %c4 = arith.constant 4 : index
      %74 = vector.load %arg14[%c0_75, %c0_76, %c4] : memref<10x24x12xbf16, #tpu.memory_space<vmem>>, vector<1x16x4xbf16>
      %75 = vector.shape_cast %74 : vector<1x16x4xbf16> to vector<16x4xbf16>
      %76 = vector.shape_cast %60 : vector<16x4xbf16> to vector<1x16x4xbf16>
      tpu.vector_store %arg14[%c0_75, %c0_76, %c4], %76 {strides = array<i32>} : memref<10x24x12xbf16, #tpu.memory_space<vmem>>, vector<1x16x4xbf16>,
      %c1_77 = arith.constant 1 : index
      %c0_78 = arith.constant 0 : index
      %c4_79 = arith.constant 4 : index
      %77 = vector.load %arg14[%c1_77, %c0_78, %c4_79] : memref<10x24x12xbf16, #tpu.memory_space<vmem>>, vector<8x16x4xbf16>
      tpu.vector_store %arg14[%c1_77, %c0_78, %c4_79], %55 {strides = array<i32>} : memref<10x24x12xbf16, #tpu.memory_space<vmem>>, vector<8x16x4xbf16>,
      %c9_80 = arith.constant 9 : index
      %c0_81 = arith.constant 0 : index
      %c4_82 = arith.constant 4 : index
      %78 = vector.load %arg14[%c9_80, %c0_81, %c4_82] : memref<10x24x12xbf16, #tpu.memory_space<vmem>>, vector<1x16x4xbf16>
      %79 = vector.shape_cast %78 : vector<1x16x4xbf16> to vector<16x4xbf16>
      %80 = vector.shape_cast %64 : vector<16x4xbf16> to vector<1x16x4xbf16>
      tpu.vector_store %arg14[%c9_80, %c0_81, %c4_82], %80 {strides = array<i32>} : memref<10x24x12xbf16, #tpu.memory_space<vmem>>, vector<1x16x4xbf16>,
      %81 = vector.extract_strided_slice %60 {offsets = [1, 0], sizes = [15, 4], strides = [1, 1]} : vector<16x4xbf16> to vector<15x4xbf16>
      %c0_83 = arith.constant 0 : index
      %c0_84 = arith.constant 0 : index
      %c8 = arith.constant 8 : index
      %82 = vector.load %arg14[%c0_83, %c0_84, %c8] : memref<10x24x12xbf16, #tpu.memory_space<vmem>>, vector<1x15x4xbf16>
      %83 = vector.shape_cast %82 : vector<1x15x4xbf16> to vector<15x4xbf16>
      %84 = vector.shape_cast %81 : vector<15x4xbf16> to vector<1x15x4xbf16>
      tpu.vector_store %arg14[%c0_83, %c0_84, %c8], %84 {strides = array<i32>} : memref<10x24x12xbf16, #tpu.memory_space<vmem>>, vector<1x15x4xbf16>,
      %85 = vector.extract_strided_slice %55 {offsets = [0, 1, 0], sizes = [8, 15, 4], strides = [1, 1, 1]} : vector<8x16x4xbf16> to vector<8x15x4xbf16>
      %c1_85 = arith.constant 1 : index
      %c0_86 = arith.constant 0 : index
      %c8_87 = arith.constant 8 : index
      %86 = vector.load %arg14[%c1_85, %c0_86, %c8_87] : memref<10x24x12xbf16, #tpu.memory_space<vmem>>, vector<8x15x4xbf16>
      tpu.vector_store %arg14[%c1_85, %c0_86, %c8_87], %85 {strides = array<i32>} : memref<10x24x12xbf16, #tpu.memory_space<vmem>>, vector<8x15x4xbf16>,
      %87 = vector.extract_strided_slice %64 {offsets = [1, 0], sizes = [15, 4], strides = [1, 1]} : vector<16x4xbf16> to vector<15x4xbf16>
      %c9_88 = arith.constant 9 : index
      %c0_89 = arith.constant 0 : index
      %c8_90 = arith.constant 8 : index
      %88 = vector.load %arg14[%c9_88, %c0_89, %c8_90] : memref<10x24x12xbf16, #tpu.memory_space<vmem>>, vector<1x15x4xbf16>
      %89 = vector.shape_cast %88 : vector<1x15x4xbf16> to vector<15x4xbf16>
      %90 = vector.shape_cast %87 : vector<15x4xbf16> to vector<1x15x4xbf16>
      tpu.vector_store %arg14[%c9_88, %c0_89, %c8_90], %90 {strides = array<i32>} : memref<10x24x12xbf16, #tpu.memory_space<vmem>>, vector<1x15x4xbf16>,
      %c0_91 = arith.constant 0 : index
      %c15 = arith.constant 15 : index
      %c8_92 = arith.constant 8 : index
      %91 = vector.load %arg14[%c0_91, %c15, %c8_92] : memref<10x24x12xbf16, #tpu.memory_space<vmem>>, vector<10x1x4xbf16>
      tpu.vector_store %arg14[%c0_91, %c15, %c8_92], %65 {strides = array<i32>} : memref<10x24x12xbf16, #tpu.memory_space<vmem>>, vector<10x1x4xbf16>,
      %c0_93 = arith.constant 0 : index
      %c0_94 = arith.constant 0 : index
      %c0_95 = arith.constant 0 : index
      %c0_96 = arith.constant 0 : index
      %92 = vector.load %arg6[%c0_93, %c0_94, %c0_95, %c0_96] : memref<1x8x16x4xbf16, #tpu.memory_space<vmem>>, vector<1x8x16x4xbf16>
      %93 = vector.shape_cast %92 : vector<1x8x16x4xbf16> to vector<8x16x4xbf16>
      %cst_97 = arith.constant 0.000000e+00 : bf16
      %94 = vector.broadcast %cst_97 : bf16 to vector<16x4xbf16>
      %c0_i32_98 = arith.constant 0 : i32
      %95 = arith.cmpi sgt, %arg1, %c0_i32_98 : i32
      %c0_99 = arith.constant 0 : index
      %c0_100 = arith.constant 0 : index
      %c0_101 = arith.constant 0 : index
      %c0_102 = arith.constant 0 : index
      %96 = vector.load %arg7[%c0_99, %c0_100, %c0_101, %c0_102] : memref<1x1x16x4xbf16, #tpu.memory_space<vmem>>, vector<1x1x16x4xbf16>
      %97 = vector.shape_cast %96 : vector<1x1x16x4xbf16> to vector<16x4xbf16>
      %98 = arith.select %95, %97, %94 : vector<16x4xbf16>
      %c1_i32_103 = arith.constant 1 : i32
      %99 = arith.cmpi slt, %arg1, %c1_i32_103 : i32
      %c0_104 = arith.constant 0 : index
      %c0_105 = arith.constant 0 : index
      %c0_106 = arith.constant 0 : index
      %c0_107 = arith.constant 0 : index
      %100 = vector.load %arg8[%c0_104, %c0_105, %c0_106, %c0_107] : memref<1x1x16x4xbf16, #tpu.memory_space<vmem>>, vector<1x1x16x4xbf16>
      %101 = vector.shape_cast %100 : vector<1x1x16x4xbf16> to vector<16x4xbf16>
      %102 = arith.select %99, %101, %94 : vector<16x4xbf16>
      %cst_108 = arith.constant 0.000000e+00 : bf16
      %103 = vector.broadcast %cst_108 : bf16 to vector<10x1x4xbf16>
      %c0_109 = arith.constant 0 : index
      %c1_110 = arith.constant 1 : index
      %c0_111 = arith.constant 0 : index
      %104 = vector.load %arg15[%c0_109, %c1_110, %c0_111] : memref<10x24x12xbf16, #tpu.memory_space<vmem>>, vector<1x16x4xbf16>
      %105 = vector.shape_cast %104 : vector<1x16x4xbf16> to vector<16x4xbf16>
      %106 = vector.shape_cast %98 : vector<16x4xbf16> to vector<1x16x4xbf16>
      tpu.vector_store %arg15[%c0_109, %c1_110, %c0_111], %106 {strides = array<i32>} : memref<10x24x12xbf16, #tpu.memory_space<vmem>>, vector<1x16x4xbf16>,
      %c1_112 = arith.constant 1 : index
      %c1_113 = arith.constant 1 : index
      %c0_114 = arith.constant 0 : index
      %107 = vector.load %arg15[%c1_112, %c1_113, %c0_114] : memref<10x24x12xbf16, #tpu.memory_space<vmem>>, vector<8x16x4xbf16>
      tpu.vector_store %arg15[%c1_112, %c1_113, %c0_114], %93 {strides = array<i32>} : memref<10x24x12xbf16, #tpu.memory_space<vmem>>, vector<8x16x4xbf16>,
      %c9_115 = arith.constant 9 : index
      %c1_116 = arith.constant 1 : index
      %c0_117 = arith.constant 0 : index
      %108 = vector.load %arg15[%c9_115, %c1_116, %c0_117] : memref<10x24x12xbf16, #tpu.memory_space<vmem>>, vector<1x16x4xbf16>
      %109 = vector.shape_cast %108 : vector<1x16x4xbf16> to vector<16x4xbf16>
      %110 = vector.shape_cast %102 : vector<16x4xbf16> to vector<1x16x4xbf16>
      tpu.vector_store %arg15[%c9_115, %c1_116, %c0_117], %110 {strides = array<i32>} : memref<10x24x12xbf16, #tpu.memory_space<vmem>>, vector<1x16x4xbf16>,
      %c0_118 = arith.constant 0 : index
      %c0_119 = arith.constant 0 : index
      %c0_120 = arith.constant 0 : index
      %111 = vector.load %arg15[%c0_118, %c0_119, %c0_120] : memref<10x24x12xbf16, #tpu.memory_space<vmem>>, vector<10x1x4xbf16>
      tpu.vector_store %arg15[%c0_118, %c0_119, %c0_120], %103 {strides = array<i32>} : memref<10x24x12xbf16, #tpu.memory_space<vmem>>, vector<10x1x4xbf16>,
      %c0_121 = arith.constant 0 : index
      %c0_122 = arith.constant 0 : index
      %c4_123 = arith.constant 4 : index
      %112 = vector.load %arg15[%c0_121, %c0_122, %c4_123] : memref<10x24x12xbf16, #tpu.memory_space<vmem>>, vector<1x16x4xbf16>
      %113 = vector.shape_cast %112 : vector<1x16x4xbf16> to vector<16x4xbf16>
      %114 = vector.shape_cast %98 : vector<16x4xbf16> to vector<1x16x4xbf16>
      tpu.vector_store %arg15[%c0_121, %c0_122, %c4_123], %114 {strides = array<i32>} : memref<10x24x12xbf16, #tpu.memory_space<vmem>>, vector<1x16x4xbf16>,
      %c1_124 = arith.constant 1 : index
      %c0_125 = arith.constant 0 : index
      %c4_126 = arith.constant 4 : index
      %115 = vector.load %arg15[%c1_124, %c0_125, %c4_126] : memref<10x24x12xbf16, #tpu.memory_space<vmem>>, vector<8x16x4xbf16>
      tpu.vector_store %arg15[%c1_124, %c0_125, %c4_126], %93 {strides = array<i32>} : memref<10x24x12xbf16, #tpu.memory_space<vmem>>, vector<8x16x4xbf16>,
      %c9_127 = arith.constant 9 : index
      %c0_128 = arith.constant 0 : index
      %c4_129 = arith.constant 4 : index
      %116 = vector.load %arg15[%c9_127, %c0_128, %c4_129] : memref<10x24x12xbf16, #tpu.memory_space<vmem>>, vector<1x16x4xbf16>
      %117 = vector.shape_cast %116 : vector<1x16x4xbf16> to vector<16x4xbf16>
      %118 = vector.shape_cast %102 : vector<16x4xbf16> to vector<1x16x4xbf16>
      tpu.vector_store %arg15[%c9_127, %c0_128, %c4_129], %118 {strides = array<i32>} : memref<10x24x12xbf16, #tpu.memory_space<vmem>>, vector<1x16x4xbf16>,
      %119 = vector.extract_strided_slice %98 {offsets = [1, 0], sizes = [15, 4], strides = [1, 1]} : vector<16x4xbf16> to vector<15x4xbf16>
      %c0_130 = arith.constant 0 : index
      %c0_131 = arith.constant 0 : index
      %c8_132 = arith.constant 8 : index
      %120 = vector.load %arg15[%c0_130, %c0_131, %c8_132] : memref<10x24x12xbf16, #tpu.memory_space<vmem>>, vector<1x15x4xbf16>
      %121 = vector.shape_cast %120 : vector<1x15x4xbf16> to vector<15x4xbf16>
      %122 = vector.shape_cast %119 : vector<15x4xbf16> to vector<1x15x4xbf16>
      tpu.vector_store %arg15[%c0_130, %c0_131, %c8_132], %122 {strides = array<i32>} : memref<10x24x12xbf16, #tpu.memory_space<vmem>>, vector<1x15x4xbf16>,
      %123 = vector.extract_strided_slice %93 {offsets = [0, 1, 0], sizes = [8, 15, 4], strides = [1, 1, 1]} : vector<8x16x4xbf16> to vector<8x15x4xbf16>
      %c1_133 = arith.constant 1 : index
      %c0_134 = arith.constant 0 : index
      %c8_135 = arith.constant 8 : index
      %124 = vector.load %arg15[%c1_133, %c0_134, %c8_135] : memref<10x24x12xbf16, #tpu.memory_space<vmem>>, vector<8x15x4xbf16>
      tpu.vector_store %arg15[%c1_133, %c0_134, %c8_135], %123 {strides = array<i32>} : memref<10x24x12xbf16, #tpu.memory_space<vmem>>, vector<8x15x4xbf16>,
      %125 = vector.extract_strided_slice %102 {offsets = [1, 0], sizes = [15, 4], strides = [1, 1]} : vector<16x4xbf16> to vector<15x4xbf16>
      %c9_136 = arith.constant 9 : index
      %c0_137 = arith.constant 0 : index
      %c8_138 = arith.constant 8 : index
      %126 = vector.load %arg15[%c9_136, %c0_137, %c8_138] : memref<10x24x12xbf16, #tpu.memory_space<vmem>>, vector<1x15x4xbf16>
      %127 = vector.shape_cast %126 : vector<1x15x4xbf16> to vector<15x4xbf16>
      %128 = vector.shape_cast %125 : vector<15x4xbf16> to vector<1x15x4xbf16>
      tpu.vector_store %arg15[%c9_136, %c0_137, %c8_138], %128 {strides = array<i32>} : memref<10x24x12xbf16, #tpu.memory_space<vmem>>, vector<1x15x4xbf16>,
      %c0_139 = arith.constant 0 : index
      %c15_140 = arith.constant 15 : index
      %c8_141 = arith.constant 8 : index
      %129 = vector.load %arg15[%c0_139, %c15_140, %c8_141] : memref<10x24x12xbf16, #tpu.memory_space<vmem>>, vector<10x1x4xbf16>
      tpu.vector_store %arg15[%c0_139, %c15_140, %c8_141], %103 {strides = array<i32>} : memref<10x24x12xbf16, #tpu.memory_space<vmem>>, vector<10x1x4xbf16>,
    } else {
    }
    %cst = arith.constant 0.000000e+00 : f32
    %3 = vector.broadcast %cst : f32 to vector<192x4xf32>
    %c0 = arith.constant 0 : index
    %c0_1 = arith.constant 0 : index
    %c0_2 = arith.constant 0 : index
    %4 = vector.load %arg14[%c0, %c0_1, %c0_2] : memref<10x24x12xbf16, #tpu.memory_space<vmem>>, vector<8x24x12xbf16>
    %5 = vector.shape_cast %4 : vector<8x24x12xbf16> to vector<192x12xbf16>
    %c0_3 = arith.constant 0 : index
    %c0_4 = arith.constant 0 : index
    %c0_5 = arith.constant 0 : index
    %6 = vector.load %arg9[%c0_3, %c0_4, %c0_5] : memref<3x12x4xbf16, #tpu.memory_space<vmem>>, vector<1x12x4xbf16>
    %7 = vector.shape_cast %6 : vector<1x12x4xbf16> to vector<12x4xbf16>
    %cst_6 = arith.constant dense<0.000000e+00> : vector<192x4xf32>
    %8 = tpu.matmul %5, %7, %cst_6 {dimension_numbers = #tpu.dot_dimension_numbers<[1], [0], [0], [1], [0, 0, 1, 1], [], []>} : vector<192x12xbf16>, vector<12x4xbf16>, vector<192x4xf32> -> vector<192x4xf32>
    %9 = arith.addf %3, %8 : vector<192x4xf32>
    %c1 = arith.constant 1 : index
    %c0_7 = arith.constant 0 : index
    %c0_8 = arith.constant 0 : index
    %10 = vector.load %arg14[%c1, %c0_7, %c0_8] : memref<10x24x12xbf16, #tpu.memory_space<vmem>>, vector<8x24x12xbf16>
    %11 = vector.shape_cast %10 : vector<8x24x12xbf16> to vector<192x12xbf16>
    %c1_9 = arith.constant 1 : index
    %c0_10 = arith.constant 0 : index
    %c0_11 = arith.constant 0 : index
    %12 = vector.load %arg9[%c1_9, %c0_10, %c0_11] : memref<3x12x4xbf16, #tpu.memory_space<vmem>>, vector<1x12x4xbf16>
    %13 = vector.shape_cast %12 : vector<1x12x4xbf16> to vector<12x4xbf16>
    %cst_12 = arith.constant dense<0.000000e+00> : vector<192x4xf32>
    %14 = tpu.matmul %11, %13, %cst_12 {dimension_numbers = #tpu.dot_dimension_numbers<[1], [0], [0], [1], [0, 0, 1, 1], [], []>} : vector<192x12xbf16>, vector<12x4xbf16>, vector<192x4xf32> -> vector<192x4xf32>
    %15 = arith.addf %9, %14 : vector<192x4xf32>
    %c2 = arith.constant 2 : index
    %c0_13 = arith.constant 0 : index
    %c0_14 = arith.constant 0 : index
    %16 = vector.load %arg14[%c2, %c0_13, %c0_14] : memref<10x24x12xbf16, #tpu.memory_space<vmem>>, vector<8x24x12xbf16>
    %17 = vector.shape_cast %16 : vector<8x24x12xbf16> to vector<192x12xbf16>
    %c2_15 = arith.constant 2 : index
    %c0_16 = arith.constant 0 : index
    %c0_17 = arith.constant 0 : index
    %18 = vector.load %arg9[%c2_15, %c0_16, %c0_17] : memref<3x12x4xbf16, #tpu.memory_space<vmem>>, vector<1x12x4xbf16>
    %19 = vector.shape_cast %18 : vector<1x12x4xbf16> to vector<12x4xbf16>
    %cst_18 = arith.constant dense<0.000000e+00> : vector<192x4xf32>
    %20 = tpu.matmul %17, %19, %cst_18 {dimension_numbers = #tpu.dot_dimension_numbers<[1], [0], [0], [1], [0, 0, 1, 1], [], []>} : vector<192x12xbf16>, vector<12x4xbf16>, vector<192x4xf32> -> vector<192x4xf32>
    %21 = arith.addf %15, %20 : vector<192x4xf32>
    %c0_19 = arith.constant 0 : index
    %c0_20 = arith.constant 0 : index
    %c0_21 = arith.constant 0 : index
    %22 = vector.load %arg15[%c0_19, %c0_20, %c0_21] : memref<10x24x12xbf16, #tpu.memory_space<vmem>>, vector<8x24x12xbf16>
    %23 = vector.shape_cast %22 : vector<8x24x12xbf16> to vector<192x12xbf16>
    %c0_22 = arith.constant 0 : index
    %c0_23 = arith.constant 0 : index
    %c0_24 = arith.constant 0 : index
    %24 = vector.load %arg10[%c0_22, %c0_23, %c0_24] : memref<3x12x4xbf16, #tpu.memory_space<vmem>>, vector<1x12x4xbf16>
    %25 = vector.shape_cast %24 : vector<1x12x4xbf16> to vector<12x4xbf16>
    %cst_25 = arith.constant dense<0.000000e+00> : vector<192x4xf32>
    %26 = tpu.matmul %23, %25, %cst_25 {dimension_numbers = #tpu.dot_dimension_numbers<[1], [0], [0], [1], [0, 0, 1, 1], [], []>} : vector<192x12xbf16>, vector<12x4xbf16>, vector<192x4xf32> -> vector<192x4xf32>
    %27 = arith.addf %21, %26 : vector<192x4xf32>
    %c1_26 = arith.constant 1 : index
    %c0_27 = arith.constant 0 : index
    %c0_28 = arith.constant 0 : index
    %28 = vector.load %arg15[%c1_26, %c0_27, %c0_28] : memref<10x24x12xbf16, #tpu.memory_space<vmem>>, vector<8x24x12xbf16>
    %29 = vector.shape_cast %28 : vector<8x24x12xbf16> to vector<192x12xbf16>
    %c1_29 = arith.constant 1 : index
    %c0_30 = arith.constant 0 : index
    %c0_31 = arith.constant 0 : index
    %30 = vector.load %arg10[%c1_29, %c0_30, %c0_31] : memref<3x12x4xbf16, #tpu.memory_space<vmem>>, vector<1x12x4xbf16>
    %31 = vector.shape_cast %30 : vector<1x12x4xbf16> to vector<12x4xbf16>
    %cst_32 = arith.constant dense<0.000000e+00> : vector<192x4xf32>
    %32 = tpu.matmul %29, %31, %cst_32 {dimension_numbers = #tpu.dot_dimension_numbers<[1], [0], [0], [1], [0, 0, 1, 1], [], []>} : vector<192x12xbf16>, vector<12x4xbf16>, vector<192x4xf32> -> vector<192x4xf32>
    %33 = arith.addf %27, %32 : vector<192x4xf32>
    %c2_33 = arith.constant 2 : index
    %c0_34 = arith.constant 0 : index
    %c0_35 = arith.constant 0 : index
    %34 = vector.load %arg15[%c2_33, %c0_34, %c0_35] : memref<10x24x12xbf16, #tpu.memory_space<vmem>>, vector<8x24x12xbf16>
    %35 = vector.shape_cast %34 : vector<8x24x12xbf16> to vector<192x12xbf16>
    %c2_36 = arith.constant 2 : index
    %c0_37 = arith.constant 0 : index
    %c0_38 = arith.constant 0 : index
    %36 = vector.load %arg10[%c2_36, %c0_37, %c0_38] : memref<3x12x4xbf16, #tpu.memory_space<vmem>>, vector<1x12x4xbf16>
    %37 = vector.shape_cast %36 : vector<1x12x4xbf16> to vector<12x4xbf16>
    %cst_39 = arith.constant dense<0.000000e+00> : vector<192x4xf32>
    %38 = tpu.matmul %35, %37, %cst_39 {dimension_numbers = #tpu.dot_dimension_numbers<[1], [0], [0], [1], [0, 0, 1, 1], [], []>} : vector<192x12xbf16>, vector<12x4xbf16>, vector<192x4xf32> -> vector<192x4xf32>
    %39 = arith.addf %33, %38 : vector<192x4xf32>
    %c0_40 = arith.constant 0 : index
    %c0_41 = arith.constant 0 : index
    %40 = vector.load %arg11[%c0_40, %c0_41] : memref<1x4xf32, #tpu.memory_space<vmem>>, vector<1x4xf32>
    %41 = vector.broadcast %40 : vector<1x4xf32> to vector<192x4xf32>
    %42 = arith.mulf %39, %41 : vector<192x4xf32>
    %c0_42 = arith.constant 0 : index
    %c0_43 = arith.constant 0 : index
    %43 = vector.load %arg12[%c0_42, %c0_43] : memref<1x4xf32, #tpu.memory_space<vmem>>, vector<1x4xf32>
    %44 = vector.broadcast %43 : vector<1x4xf32> to vector<192x4xf32>
    %45 = arith.addf %42, %44 : vector<192x4xf32>
    %cst_44 = arith.constant 0.000000e+00 : f32
    %46 = vector.broadcast %cst_44 : f32 to vector<192x4xf32>
    %47 = arith.maximumf %45, %46 : vector<192x4xf32>
    %48 = vector.shape_cast %47 : vector<192x4xf32> to vector<8x24x4xf32>
    %49 = vector.extract_strided_slice %48 {offsets = [0, 0, 0], sizes = [8, 16, 4], strides = [1, 1, 1]} : vector<8x24x4xf32> to vector<8x16x4xf32>
    %50 = arith.truncf %49 : vector<8x16x4xf32> to vector<8x16x4xbf16>
    %c0_45 = arith.constant 0 : index
    %c0_46 = arith.constant 0 : index
    %c0_47 = arith.constant 0 : index
    %c0_48 = arith.constant 0 : index
    %51 = vector.load %arg13[%c0_45, %c0_46, %c0_47, %c0_48] : memref<1x8x16x4xbf16, #tpu.memory_space<vmem>>, vector<1x8x16x4xbf16>
    %52 = vector.shape_cast %51 : vector<1x8x16x4xbf16> to vector<8x16x4xbf16>
    %53 = vector.shape_cast %50 : vector<8x16x4xbf16> to vector<1x8x16x4xbf16>
    tpu.vector_store %arg13[%c0_45, %c0_46, %c0_47, %c0_48], %53 {strides = array<i32>} : memref<1x8x16x4xbf16, #tpu.memory_space<vmem>>, vector<1x8x16x4xbf16>,
    return
  }
  func.func @transform_0(%arg0: i32, %arg1: i32, %arg2: i32) -> (i32, i32, i32, i32) {
    %c0_i32 = arith.constant 0 : i32
    %c0_i32_0 = arith.constant 0 : i32
    %c0_i32_1 = arith.constant 0 : i32
    return %arg0, %arg1, %c0_i32, %c0_i32_0 : i32, i32, i32, i32
  }
  func.func @transform_1(%arg0: i32, %arg1: i32, %arg2: i32) -> (i32, i32, i32, i32) {
    %c8_i32 = arith.constant 8 : i32
    %0 = arith.muli %arg1, %c8_i32 : i32
    %c1_i32 = arith.constant 1 : i32
    %1 = arith.subi %0, %c1_i32 : i32
    %c0_i32 = arith.constant 0 : i32
    %2 = arith.maxsi %1, %c0_i32 : i32
    %c0_i32_0 = arith.constant 0 : i32
    %c0_i32_1 = arith.constant 0 : i32
    %c0_i32_2 = arith.constant 0 : i32
    return %arg0, %2, %c0_i32_0, %c0_i32_1 : i32, i32, i32, i32
  }
  func.func @transform_2(%arg0: i32, %arg1: i32, %arg2: i32) -> (i32, i32, i32, i32) {
    %c1_i32 = arith.constant 1 : i32
    %0 = arith.addi %arg1, %c1_i32 : i32
    %c8_i32 = arith.constant 8 : i32
    %1 = arith.muli %0, %c8_i32 : i32
    %c15_i32 = arith.constant 15 : i32
    %2 = arith.minsi %1, %c15_i32 : i32
    %c0_i32 = arith.constant 0 : i32
    %c0_i32_0 = arith.constant 0 : i32
    %c0_i32_1 = arith.constant 0 : i32
    return %arg0, %2, %c0_i32, %c0_i32_0 : i32, i32, i32, i32
  }
  func.func @transform_3(%arg0: i32, %arg1: i32, %arg2: i32) -> (i32, i32, i32, i32) {
    %c0_i32 = arith.constant 0 : i32
    %c0_i32_0 = arith.constant 0 : i32
    %c0_i32_1 = arith.constant 0 : i32
    return %arg0, %arg1, %c0_i32, %c0_i32_0 : i32, i32, i32, i32
  }
  func.func @transform_4(%arg0: i32, %arg1: i32, %arg2: i32) -> (i32, i32, i32, i32) {
    %c8_i32 = arith.constant 8 : i32
    %0 = arith.muli %arg1, %c8_i32 : i32
    %c1_i32 = arith.constant 1 : i32
    %1 = arith.subi %0, %c1_i32 : i32
    %c0_i32 = arith.constant 0 : i32
    %2 = arith.maxsi %1, %c0_i32 : i32
    %c0_i32_0 = arith.constant 0 : i32
    %c0_i32_1 = arith.constant 0 : i32
    %c0_i32_2 = arith.constant 0 : i32
    return %arg0, %2, %c0_i32_0, %c0_i32_1 : i32, i32, i32, i32
  }
  func.func @transform_5(%arg0: i32, %arg1: i32, %arg2: i32) -> (i32, i32, i32, i32) {
    %c1_i32 = arith.constant 1 : i32
    %0 = arith.addi %arg1, %c1_i32 : i32
    %c8_i32 = arith.constant 8 : i32
    %1 = arith.muli %0, %c8_i32 : i32
    %c15_i32 = arith.constant 15 : i32
    %2 = arith.minsi %1, %c15_i32 : i32
    %c0_i32 = arith.constant 0 : i32
    %c0_i32_0 = arith.constant 0 : i32
    %c0_i32_1 = arith.constant 0 : i32
    return %arg0, %2, %c0_i32, %c0_i32_0 : i32, i32, i32, i32
  }
  func.func @transform_6(%arg0: i32, %arg1: i32, %arg2: i32) -> (i32, i32, i32) {
    %c0_i32 = arith.constant 0 : i32
    %c0_i32_0 = arith.constant 0 : i32
    %c0_i32_1 = arith.constant 0 : i32
    return %c0_i32, %c0_i32_0, %arg2 : i32, i32, i32
  }
  func.func @transform_7(%arg0: i32, %arg1: i32, %arg2: i32) -> (i32, i32, i32) {
    %c0_i32 = arith.constant 0 : i32
    %c0_i32_0 = arith.constant 0 : i32
    %c0_i32_1 = arith.constant 0 : i32
    return %c0_i32, %c0_i32_0, %arg2 : i32, i32, i32
  }
  func.func @transform_8(%arg0: i32, %arg1: i32, %arg2: i32) -> (i32, i32) {
    %c0_i32 = arith.constant 0 : i32
    %c0_i32_0 = arith.constant 0 : i32
    return %c0_i32, %arg2 : i32, i32
  }
  func.func @transform_9(%arg0: i32, %arg1: i32, %arg2: i32) -> (i32, i32) {
    %c0_i32 = arith.constant 0 : i32
    %c0_i32_0 = arith.constant 0 : i32
    return %c0_i32, %arg2 : i32, i32
  }
  func.func @transform_10(%arg0: i32, %arg1: i32, %arg2: i32) -> (i32, i32, i32, i32) {
    %c0_i32 = arith.constant 0 : i32
    %c0_i32_0 = arith.constant 0 : i32
    return %arg0, %arg1, %c0_i32, %arg2 : i32, i32, i32, i32
  }
}

</mosaic_0001>

<llo_original>
// kernel: tile.8
$region0: #{tile.8}
  #allocation0 [shape = 's32[1]{0}', space=sflag, size = 0x4, scoped, tag = 'scoped memory for tile.8']
  %s0 = inlined_call_operand.vmem [shape: f32[4], index: 0, kind: input, shape index: {}]
  %s1 = inlined_call_operand.vmem [shape: f32[16,4], index: 1, kind: output, shape index: {}]
  // Predicated region
  $region2: #{tile.8} parent=0 // pred_check
    _
  $region3: #{tile.8} parent=0 // pred_check_branch
    %3 = sbr.rel (0) target = $region5
  $region4: #{tile.8} parent=0 // pred_region
    _
  $region5: #{tile.8} parent=0 // pred_fallthru
    _
  %v4 = vld [vmem:[%s0] ss:$0 sm:$0xff]
  %5 = vst [vmem:[%s1] sm:$0xff] %v4
  %s6 = scalar_lea.vmem %s1, 8
  %7 = vst [vmem:[%s6] sm:$0xff] %v4

// kernel: tile.9
$region0: #{tile.9}
  %s0 = inlined_call_operand.vmem [shape: f32[16,4], index: 0, kind: input, shape index: {}]
  %s1 = inlined_call_operand.hbm [shape: f32[1,64], index: 1, kind: output, shape index: {}]
  $region1: #{tile.9} parent=0
    #allocation0 [shape = 'u8[512]{0}', space=vmem, size = 0x400, scoped, tag = 'operand span for operand 1']
    #allocation1 [shape = 's32[1]{0}', space=sflag, size = 0x4, scoped, tag = 'scoped memory for tile.9']
    #allocation2 [shape = 'u8[4096]{0}', space=vmem, size = 0x1000, scoped, tag = 'scoped mem for output reshape']
    %2 = vsyncpa [#allocation1], 0
    %v3 = vld [vmem:[%s0] sm:$0x1]
    %vm4 = vcmask 31744
    %5 = vst.msk [vmem:[#allocation2] sm:$0x1] %vm4, %v3
    %s6 = scalar_lea.vmem %s0, 15
    %v7 = vld [vmem:[%s6] sm:$0x1]
    %8 = vrot.lane.b32.xlu0 %v7, 60
    %v9 = vpop.permute.xlu0 %8
    %vm10 = vcmask 523744
    %11 = vst.msk [vmem:[#allocation2] sm:$0x1] %vm10, %v9
    %s12 = scalar_lea.vmem %s0, 14
    %v13 = vld [vmem:[%s12] sm:$0x1]
    %14 = vrot.lane.b32.xlu0 %v13, 56
    %v15 = vpop.permute.xlu0 %14
    %vm16 = vcmask 490944
    %17 = vst.msk [vmem:[#allocation2] sm:$0x1] %vm16, %v15
    %s18 = scalar_lea.vmem %s0, 13
    %v19 = vld [vmem:[%s18] sm:$0x1]
    %20 = vrot.lane.b32.xlu0 %v19, 52
    %v21 = vpop.permute.xlu0 %20
    %vm22 = vcmask 458144
    %23 = vst.msk [vmem:[#allocation2] sm:$0x1] %vm22, %v21
    %s24 = scalar_lea.vmem %s0, 12
    %v25 = vld [vmem:[%s24] sm:$0x1]
    %26 = vrot.lane.b32.xlu0 %v25, 48
    %v27 = vpop.permute.xlu0 %26
    %vm28 = vcmask 425344
    %29 = vst.msk [vmem:[#allocation2] sm:$0x1] %vm28, %v27
    %s30 = scalar_lea.vmem %s0, 11
    %v31 = vld [vmem:[%s30] sm:$0x1]
    %32 = vrot.lane.b32.xlu0 %v31, 44
    %v33 = vpop.permute.xlu0 %32
    %vm34 = vcmask 392544
    %35 = vst.msk [vmem:[#allocation2] sm:$0x1] %vm34, %v33
    %s36 = scalar_lea.vmem %s0, 10
    %v37 = vld [vmem:[%s36] sm:$0x1]
    %38 = vrot.lane.b32.xlu0 %v37, 40
    %v39 = vpop.permute.xlu0 %38
    %vm40 = vcmask 359744
    %41 = vst.msk [vmem:[#allocation2] sm:$0x1] %vm40, %v39
    %s42 = scalar_lea.vmem %s0, 9
    %v43 = vld [vmem:[%s42] sm:$0x1]
    %44 = vrot.lane.b32.xlu0 %v43, 36
    %v45 = vpop.permute.xlu0 %44
    %vm46 = vcmask 326944
    %47 = vst.msk [vmem:[#allocation2] sm:$0x1] %vm46, %v45
    %s48 = scalar_lea.vmem %s0, 8
    %v49 = vld [vmem:[%s48] sm:$0x1]
    %50 = vrot.lane.b32.xlu0 %v49, 32
    %v51 = vpop.permute.xlu0 %50
    %vm52 = vcmask 294144
    %53 = vst.msk [vmem:[#allocation2] sm:$0x1] %vm52, %v51
    %s54 = scalar_lea.vmem %s0, 7
    %v55 = vld [vmem:[%s54] sm:$0x1]
    %56 = vrot.lane.b32.xlu0 %v55, 28
    %v57 = vpop.permute.xlu0 %56
    %vm58 = vcmask 261344
    %59 = vst.msk [vmem:[#allocation2] sm:$0x1] %vm58, %v57
    %s60 = scalar_lea.vmem %s0, 6
    %v61 = vld [vmem:[%s60] sm:$0x1]
    %62 = vrot.lane.b32.xlu0 %v61, 24
    %v63 = vpop.permute.xlu0 %62
    %vm64 = vcmask 228544
    %65 = vst.msk [vmem:[#allocation2] sm:$0x1] %vm64, %v63
    %s66 = scalar_lea.vmem %s0, 5
    %v67 = vld [vmem:[%s66] sm:$0x1]
    %68 = vrot.lane.b32.xlu0 %v67, 20
    %v69 = vpop.permute.xlu0 %68
    %vm70 = vcmask 195744
    %71 = vst.msk [vmem:[#allocation2] sm:$0x1] %vm70, %v69
    %s72 = scalar_lea.vmem %s0, 4
    %v73 = vld [vmem:[%s72] sm:$0x1]
    %74 = vrot.lane.b32.xlu0 %v73, 16
    %v75 = vpop.permute.xlu0 %74
    %vm76 = vcmask 162944
    %77 = vst.msk [vmem:[#allocation2] sm:$0x1] %vm76, %v75
    %s78 = scalar_lea.vmem %s0, 3
    %v79 = vld [vmem:[%s78] sm:$0x1]
    %80 = vrot.lane.b32.xlu0 %v79, 12
    %v81 = vpop.permute.xlu0 %80
    %vm82 = vcmask 130144
    %83 = vst.msk [vmem:[#allocation2] sm:$0x1] %vm82, %v81
    %s84 = scalar_lea.vmem %s0, 2
    %v85 = vld [vmem:[%s84] sm:$0x1]
    %86 = vrot.lane.b32.xlu0 %v85, 8
    %v87 = vpop.permute.xlu0 %86
    %vm88 = vcmask 97344
    %89 = vst.msk [vmem:[#allocation2] sm:$0x1] %vm88, %v87
    %s90 = scalar_lea.vmem %s0, 1
    %v91 = vld [vmem:[%s90] sm:$0x1]
    %92 = vrot.lane.b32.xlu0 %v91, 4
    %v93 = vpop.permute.xlu0 %92
    %vm94 = vcmask 64544
    %95 = vst.msk [vmem:[#allocation2] sm:$0x1] %vm94, %v93
    %s97 = sshllo.u32 0, 1
    %v99 = vld [vmem:[#allocation2] sm:%s97]
    %s100 = sshllo.u32 0, 1
    %101 = vst [vmem:[#allocation0] sm:%s100] %v99
    %s103 = ssub.s32 16, 16
    %104 = vsyncadd [#allocation1], %s103
    %s106 = sshll.u32 [#allocation0], 4
    %s107 = int_to_ptr.vmem [resolvable:$true] %s106
    %109 = dma.vmem_to_hbm [thread:$0]  %s107, 16, %s1, [#allocation1]
    %110 = dma.done [#allocation1], 16
    %111 = vsyncpa [#allocation1], 1

// kernel: upconv_forward.5
$region0: #{upconv_forward.5}
  #allocation0 [shape = 'u32[]', space=smem, size = 0x4, offset = 0x4, fixed_abs, tag = 'smem constant byte address 0x4 - core index']
  #allocation1 [shape = 'u32[144,128]{1,0:T(1,128)}', space=vmem, size = 0x12000, scoped, tag = 'internal scratch']
  %s0 = inlined_call_operand.hbm [shape: bf16[2,8,64], index: 0, kind: input, shape index: {}]
  %s1 = inlined_call_operand.hbm [shape: bf16[16,8], index: 1, kind: input, shape index: {}]
  %s2 = inlined_call_operand.hbm [shape: f32[1,64], index: 2, kind: input, shape index: {}]
  %s3 = inlined_call_operand.hbm [shape: bf16[2,16,64], index: 3, kind: output, shape index: {}]
  %s4 = sld [smem:[#allocation0]]
  $region57: #{upconv_forward.5} parent=0
    _
  %s6 = ssub.s32 1, %s4
  %s7 = scalar_select 0, %s6, %s4
  $region1: #{upconv_forward.5} parent=0
    #allocation2 [shape = 'u8[4096]{0}', space=vmem, size = 0x1000, scoped, tag = 'input window, operand 0']
    #allocation3 [shape = 's32[2]{0}', space=sflag, size = 0x8, scoped, tag = 'scoped memory for upconv_forward.5']
    #allocation4 [shape = 's32[2]{0}', space=sflag, size = 0x8, scoped, tag = 'scoped memory for upconv_forward.5']
    #allocation5 [shape = 'u8[4096]{0}', space=vmem, size = 0x1000, scoped, tag = 'input window, operand 1, single buffered']
    #allocation6 [shape = 's32[1]{0}', space=sflag, size = 0x4, scoped, tag = 'scoped memory for upconv_forward.5']
    #allocation7 [shape = 'u8[512]{0}', space=vmem, size = 0x400, scoped, tag = 'input window, operand 2, single buffered']
    #allocation8 [shape = 'u8[8192]{0}', space=vmem, size = 0x2000, scoped, tag = 'output window, operand 0']
    %8 = vsyncpa [#allocation3], 0
    %s9 = scalar_lea.sflag [#allocation3], 1
    %10 = vsyncpa %s9, 0
    %11 = vsyncpa [#allocation6], 0
    %12 = vsyncpa [#allocation4], 0
    %s13 = scalar_lea.sflag [#allocation4], 1
    %14 = vsyncpa %s13, 0
    loop: start=0, step=1, limit=4
    $region2: #{upconv_forward.5} parent=1 // loop_pre_header
      _
    $region3: #{upconv_forward.5} parent=1 // loop_header
      %s16 = sphi 0, %s20
      %p17 = scmp.ge.s32.totalorder %s16, 4
      %s23 = sphi 0, %s35
      %s24 = sphi 0, %s31
      %s25 = sphi 0, %s23
      %s26 = sphi 0, %s24
      %s27 = sphi 0, %s25
      %s28 = sphi 0, %s26
      %s40 = sphi 0, %s42
      %s43 = sphi 0, %s40
      %s44 = sphi 0, %s43
      %s60 = sphi 0, %s44
      %s64 = sphi 0, %s64
      %s66 = sphi 0, %s64
      %s67 = sphi 0, %s66
      %s81 = sphi 0, %s67
      %s87 = sphi 0, %s89
      %s90 = sphi 0, %s87
      %s91 = sphi 0, %s90
      %s107 = sphi 0, %s91
      %s115 = sphi 0, %s117
      %s118 = sphi 0, %s115
      %s119 = sphi 0, %s118
      %s135 = sphi 0, %s119
    $region4: #{upconv_forward.5} parent=1 // loop_header_branch
      %19 = sbr.rel (%p17) target = $region8
    $region5: #{upconv_forward.5} parent=1 // loop_body
      %s21 = ssub.s32 %s16, 1
      %s22 = ssub.s32 %s16, 2
      %s29 = sadd.s32 1, %s24
      %p30 = scmp.ge.s32.totalorder %s29, 1
      %s31 = scalar_select %p30, 0, %s29
      %s32 = sadd.s32 1, %s23
      %s33 = scalar_select %p30, %s32, %s23
      %p34 = scmp.ge.s32.totalorder %s33, 2
      %s35 = scalar_select %p34, 0, %s33
      %s36 = ssub.s32 %s23, %s35
      %s37 = ssub.s32 %s24, %s31
      %s38 = sor.u32 %s36, %s37
      %p39 = scmp.eq.s32.totalorder %s38, 0
      %s41 = sadd.s32 %s40, 1
      %s42 = scalar_select %p39, %s40, %s41
      %p45 = pneg %p39
      %p46 = scmp.eq.s32.totalorder %s16, 1
      %p47 = por %p45, %p46
      %p48 = scmp.ne.s32.totalorder %s40, %s43
      %p49 = scmp.eq.s32.totalorder %s16, 0
      %p50 = por %p48, %p49
      %p51 = scmp.ne.s32.totalorder %s40, %s43
      %p52 = scmp.eq.s32.totalorder %s21, 1
      %p53 = por %p51, %p52
      %p54 = scmp.ne.s32.totalorder %s43, %s44
      %p55 = scmp.eq.s32.totalorder %s21, 0
      %p56 = por %p54, %p55
      %p57 = scmp.ne.s32.totalorder %s43, %s44
      %p58 = scmp.eq.s32.totalorder %s22, 1
      %p59 = por %p57, %p58
      %p61 = scmp.ne.s32.totalorder %s44, %s60
      %p62 = scmp.eq.s32.totalorder %s22, 0
      %p63 = por %p61, %p62
      %s65 = sadd.s32 %s64, 1
      %p68 = scmp.eq.s32.totalorder %s16, 1
      %p69 = scmp.ne.s32.totalorder %s64, %s66
      %p70 = scmp.eq.s32.totalorder %s16, 0
      %p71 = por %p69, %p70
      %p72 = scmp.ne.s32.totalorder %s64, %s66
      %p73 = scmp.eq.s32.totalorder %s21, 1
      %p74 = por %p72, %p73
      %p75 = scmp.ne.s32.totalorder %s66, %s67
      %p76 = scmp.eq.s32.totalorder %s21, 0
      %p77 = por %p75, %p76
      %p78 = scmp.ne.s32.totalorder %s66, %s67
      %p79 = scmp.eq.s32.totalorder %s22, 1
      %p80 = por %p78, %p79
      %p82 = scmp.ne.s32.totalorder %s67, %s81
      %p83 = scmp.eq.s32.totalorder %s22, 0
      %p84 = por %p82, %p83
      %s85 = ssub.s32 %s24, %s31
      %p86 = scmp.eq.s32.totalorder %s85, 0
      %s88 = sadd.s32 %s87, 1
      %s89 = scalar_select %p86, %s87, %s88
      %p92 = pneg %p86
      %p93 = scmp.eq.s32.totalorder %s16, 1
      %p94 = por %p92, %p93
      %p95 = scmp.ne.s32.totalorder %s87, %s90
      %p96 = scmp.eq.s32.totalorder %s16, 0
      %p97 = por %p95, %p96
      %p98 = scmp.ne.s32.totalorder %s87, %s90
      %p99 = scmp.eq.s32.totalorder %s21, 1
      %p100 = por %p98, %p99
      %p101 = scmp.ne.s32.totalorder %s90, %s91
      %p102 = scmp.eq.s32.totalorder %s21, 0
      %p103 = por %p101, %p102
      %p104 = scmp.ne.s32.totalorder %s90, %s91
      %p105 = scmp.eq.s32.totalorder %s22, 1
      %p106 = por %p104, %p105
      %p108 = scmp.ne.s32.totalorder %s91, %s107
      %p109 = scmp.eq.s32.totalorder %s22, 0
      %p110 = por %p108, %p109
      %s111 = ssub.s32 %s23, %s35
      %s112 = ssub.s32 %s24, %s31
      %s113 = sor.u32 %s111, %s112
      %p114 = scmp.eq.s32.totalorder %s113, 0
      %s116 = sadd.s32 %s115, 1
      %s117 = scalar_select %p114, %s115, %s116
      %p120 = pneg %p114
      %p121 = scmp.eq.s32.totalorder %s16, 1
      %p122 = por %p120, %p121
      %p123 = scmp.ne.s32.totalorder %s115, %s118
      %p124 = scmp.eq.s32.totalorder %s16, 0
      %p125 = por %p123, %p124
      %p126 = scmp.ne.s32.totalorder %s115, %s118
      %p127 = scmp.eq.s32.totalorder %s21, 1
      %p128 = por %p126, %p127
      %p129 = scmp.ne.s32.totalorder %s118, %s119
      %p130 = scmp.eq.s32.totalorder %s21, 0
      %p131 = por %p129, %p130
      %p132 = scmp.ne.s32.totalorder %s118, %s119
      %p133 = scmp.eq.s32.totalorder %s22, 1
      %p134 = por %p132, %p133
      %p136 = scmp.ne.s32.totalorder %s119, %s135
      %p137 = scmp.eq.s32.totalorder %s22, 0
      %p138 = por %p136, %p137
      %p139 = scmp.le.s32.totalorder 1, %s16
      %p140 = scmp.lt.s32.totalorder %s16, 3
      %p141 = pnand %p139, %p140
      %p142 = pneg %p141
      // Predicated region
      $region9: #{upconv_forward.5} parent=5 // pred_check
        _
      $region10: #{upconv_forward.5} parent=5 // pred_check_branch
        %144 = sbr.rel (%p141) target = $region12
      $region11: #{upconv_forward.5} parent=5 // pred_region
        %s145 = ssub.s32 %s16, 1
        // Predicated region
        $region13: #{upconv_forward.5} parent=11 // pred_check
          %p146 = pneg %p77
        $region14: #{upconv_forward.5} parent=11 // pred_check_branch
          %148 = sbr.rel (%p146) target = $region16
        $region15: #{upconv_forward.5} parent=11 // pred_region
          %s150 = ssub.s32 128, 128
          %151 = vsyncadd [#allocation6], %s150
          %s152 = sshll.u32 [#allocation5], 4
          %s153 = int_to_ptr.vmem [resolvable:$true] %s152
          %158 = dma.hbm_to_vmem [thread:$0]  %s1, 128, %s153, [#allocation6], 64, 64, 4
        $region16: #{upconv_forward.5} parent=11 // pred_fallthru
          _
        // Predicated region
        $region17: #{upconv_forward.5} parent=11 // pred_check
          %p159 = pneg %p103
        $region18: #{upconv_forward.5} parent=11 // pred_check_branch
          %161 = sbr.rel (%p159) target = $region20
        $region19: #{upconv_forward.5} parent=11 // pred_region
          %s163 = ssub.s32 16, 16
          %164 = vsyncadd [#allocation6], %s163
          %s165 = smul.addr %s26, 16
          %s166 = scalar_lea.hbm %s2, %s165
          %s168 = sshll.u32 [#allocation7], 4
          %s169 = int_to_ptr.vmem [resolvable:$true] %s168
          %171 = dma.hbm_to_vmem [thread:$0]  %s166, 16, %s169, [#allocation6]
        $region20: #{upconv_forward.5} parent=11 // pred_fallthru
          _
      $region12: #{upconv_forward.5} parent=5 // pred_fallthru
        _
      %p172 = scmp.lt.s32.totalorder %s16, 2
      // Predicated region
      $region21: #{upconv_forward.5} parent=5 // pred_check
        %p173 = pneg %p172
      $region22: #{upconv_forward.5} parent=5 // pred_check_branch
        %175 = sbr.rel (%p173) target = $region24
      $region23: #{upconv_forward.5} parent=5 // pred_region
        // Predicated region
        $region25: #{upconv_forward.5} parent=23 // pred_check
          %p176 = pneg %p50
        $region26: #{upconv_forward.5} parent=23 // pred_check_branch
          %178 = sbr.rel (%p176) target = $region28
        $region27: #{upconv_forward.5} parent=23 // pred_region
          %s179 = sand.u32 %s40, 1
          %s180 = scalar_lea.sflag [#allocation3], %s179
          %s181 = sand.u32 %s40, 1
          %s182 = smul.addr %s181, 4
          %s183 = scalar_lea.vmem [#allocation2], %s182
          %s185 = ssub.s32 64, 64
          %186 = vsyncadd %s180, %s185
          %s187 = sadd.s32 %s24, %s23
          %s188 = smul.addr %s187, 64
          %s189 = scalar_lea.hbm %s0, %s188
          %s191 = sshll.u32 %s183, 4
          %s192 = int_to_ptr.vmem [resolvable:$true] %s191
          %194 = dma.hbm_to_vmem [thread:$0]  %s189, 64, %s192, %s180
        $region28: #{upconv_forward.5} parent=23 // pred_fallthru
          _
      $region24: #{upconv_forward.5} parent=5 // pred_fallthru
        _
      %p195 = scmp.le.s32.totalorder 1, %s16
      %p196 = scmp.lt.s32.totalorder %s16, 3
      %p197 = pnand %p195, %p196
      %p198 = pneg %p197
      // Predicated region
      $region29: #{upconv_forward.5} parent=5 // pred_check
        _
      $region30: #{upconv_forward.5} parent=5 // pred_check_branch
        %200 = sbr.rel (%p197) target = $region32
      $region31: #{upconv_forward.5} parent=5 // pred_region
        %s201 = ssub.s32 %s16, 1
        %s202 = sand.u32 %s43, 1
        %s203 = scalar_lea.sflag [#allocation3], %s202
        %s204 = sand.u32 %s43, 1
        %s205 = smul.addr %s204, 4
        %s206 = scalar_lea.vmem [#allocation2], %s205
        // Predicated region
        $region33: #{upconv_forward.5} parent=31 // pred_check
          %p207 = pneg %p56
        $region34: #{upconv_forward.5} parent=31 // pred_check_branch
          %209 = sbr.rel (%p207) target = $region36
        $region35: #{upconv_forward.5} parent=31 // pred_region
          %210 = dma.done %s203, 64
        $region36: #{upconv_forward.5} parent=31 // pred_fallthru
          _
        // Predicated region
        $region37: #{upconv_forward.5} parent=31 // pred_check
          %p211 = pneg %p77
        $region38: #{upconv_forward.5} parent=31 // pred_check_branch
          %213 = sbr.rel (%p211) target = $region40
        $region39: #{upconv_forward.5} parent=31 // pred_region
          %214 = dma.done [#allocation6], 128
        $region40: #{upconv_forward.5} parent=31 // pred_fallthru
          _
        // Predicated region
        $region41: #{upconv_forward.5} parent=31 // pred_check
          %p215 = pneg %p103
        $region42: #{upconv_forward.5} parent=31 // pred_check_branch
          %217 = sbr.rel (%p215) target = $region44
        $region43: #{upconv_forward.5} parent=31 // pred_region
          %218 = dma.done [#allocation6], 16
        $region44: #{upconv_forward.5} parent=31 // pred_fallthru
          _
        %s219 = sand.u32 %s43, 1
        %s220 = scalar_lea.sflag [#allocation3], %s219
        %s221 = sand.u32 %s43, 1
        %s222 = smul.addr %s221, 4
        %s223 = scalar_lea.vmem [#allocation2], %s222
        %p224 = pneg %p56
        %p225 = pneg %p53
        %p226 = pneg %p77
        %p227 = pneg %p74
        %p228 = pneg %p103
        %p229 = pneg %p100
        %p230 = pneg %p131
        %p231 = pneg %p128
        %s232 = sand.u32 %s118, 1
        %s233 = scalar_lea.sflag [#allocation4], %s232
        %s234 = sand.u32 %s118, 1
        %s235 = smul.addr %s234, 8
        %s236 = scalar_lea.vmem [#allocation8], %s235
        %v238 = vld [vmem:[#allocation5] sm:$0xf]
        %v239 = vld [vmem:[#allocation5 + $0x4] sm:$0xf]
        %v240 = vld [vmem:[%s206] sm:$0xf]
        %v241 = vld [vmem:[#allocation7] sm:$0x1]
        %v243 = vlaneseq
        %v244 = vshrl.u32 %v243, 7
        %v245 = vsub.s32 0, %v244
        %v246 = vrot.slane %v241, %v245
        %v250 = vunpack.c.l.b16 %v238
        %v251 = vunpack.c.l.b16 %v239
        %v252 = vpack.c.b16 %v251, %v250
        %vm253 = vcmask 64512
        %v255 = vsel %vm253, %v252, 0
        %vm257 = vcmask 1043456
        %v259 = vsel %vm257, %v240, 0
        %261 = vmatprep.subr.bf16.mxu0 0
        %262 = vmatpush1.bf16.msra.mxu0 %v259
        %263 = vmatprep.subr.bf16.mxu0 0
        %264 = vmatpush1.bf16.msra.mxu0 0
        %265 = vmatprep.subr.bf16.mxu0 0
        %266 = vmatpush1.bf16.msra.mxu0 0
        %267 = vmatprep.subr.bf16.mxu0 0
        %268 = vmatpush1.bf16.msra.mxu0 0
        %269 = vmatprep.subr.bf16.mxu0 0
        %270 = vmatpush1.bf16.msra.mxu0 0
        %271 = vmatprep.subr.bf16.mxu0 0
        %272 = vmatpush1.bf16.msra.mxu0 0
        %273 = vmatprep.subr.bf16.mxu0 0
        %274 = vmatpush1.bf16.msra.mxu0 0
        %275 = vmatprep.subr.bf16.mxu0 0
        %276 = vmatpush1.bf16.msra.mxu0 0
        %277 = vmatprep.subr.bf16.mxu0 0
        %278 = vmatpush1.bf16.msra.mxu0 0
        %279 = vmatprep.subr.bf16.mxu0 0
        %280 = vmatpush1.bf16.msra.mxu0 0
        %281 = vmatprep.subr.bf16.mxu0 0
        %282 = vmatpush1.bf16.msra.mxu0 0
        %283 = vmatprep.subr.bf16.mxu0 0
        %284 = vmatpush1.bf16.msra.mxu0 0
        %285 = vmatprep.subr.bf16.mxu0 0
        %286 = vmatpush1.bf16.msra.mxu0 0
        %287 = vmatprep.subr.bf16.mxu0 0
        %288 = vmatpush1.bf16.msra.mxu0 0
        %289 = vmatprep.subr.bf16.mxu0 0
        %290 = vmatpush1.bf16.msra.mxu0 0
        %291 = vmatprep.subr.bf16.mxu0 0
        %292 = vmatpush1.bf16.msra.mxu0 0
        %293 = vmatprep.mubr.bf16.mxu0 0
        %294 = vmatmul.mubr.bf16.gmra.mrb[0].mxu0 %v255
        %v295 = vpop.f32.mrb[0].mxu0
        %v296 = vadd.f32 %v246, %v295
        %v297 = vpop.f32.mrb[0].mxu0
        %v298 = vpop.f32.mrb[0].mxu0
        %v299 = vadd.f32 %v246, %v298
        %v300 = vpop.f32.mrb[0].mxu0
        %301 = vdwg.mxu0
        %v302 = vpack.c.bf16 %v299, %v296
        %v304 = vunpack.c.l.b16 %v302
        %v305 = vunpack.c.h.b16 %v302
        %v306 = vpack.c.b16 %v304, %v304
        %v307 = vpack.c.b16 %v305, %v305
        %vm310 = vcmask 519168
        %311 = vst.msk [vmem:[%s236] sm:$0xf] %vm310, %v306
        %312 = vst.msk [vmem:[%s236 + $0x4] sm:$0xf] %vm310, %v307
        %s313 = sand.u32 %s118, 1
        %s314 = scalar_lea.sflag [#allocation4], %s313
        %s315 = sand.u32 %s118, 1
        %s316 = smul.addr %s315, 8
        %s317 = scalar_lea.vmem [#allocation8], %s316
        // Predicated region
        $region45: #{upconv_forward.5} parent=31 // pred_check
          %p318 = pneg %p128
        $region46: #{upconv_forward.5} parent=31 // pred_check_branch
          %320 = sbr.rel (%p318) target = $region48
        $region47: #{upconv_forward.5} parent=31 // pred_region
          %s322 = ssub.s32 128, 128
          %323 = vsyncadd %s314, %s322
          %s324 = smul.addr %s25, 2
          %s325 = sadd.s32 %s26, %s324
          %s326 = smul.addr %s325, 64
          %s327 = scalar_lea.hbm %s3, %s326
          %s328 = sshll.u32 %s317, 4
          %s329 = int_to_ptr.vmem [resolvable:$true] %s328
          %334 = dma.vmem_to_hbm [thread:$0]  %s329, 128, %s327, %s314, 64, 64, 4
        $region48: #{upconv_forward.5} parent=31 // pred_fallthru
          _
      $region32: #{upconv_forward.5} parent=5 // pred_fallthru
        _
      %p335 = scmp.le.s32.totalorder 2, %s16
      // Predicated region
      $region49: #{upconv_forward.5} parent=5 // pred_check
        %p336 = pneg %p335
      $region50: #{upconv_forward.5} parent=5 // pred_check_branch
        %338 = sbr.rel (%p336) target = $region52
      $region51: #{upconv_forward.5} parent=5 // pred_region
        %s339 = ssub.s32 %s16, 2
        // Predicated region
        $region53: #{upconv_forward.5} parent=51 // pred_check
          %p340 = pneg %p134
        $region54: #{upconv_forward.5} parent=51 // pred_check_branch
          %342 = sbr.rel (%p340) target = $region56
        $region55: #{upconv_forward.5} parent=51 // pred_region
          %s343 = sand.u32 %s119, 1
          %s344 = scalar_lea.sflag [#allocation4], %s343
          %s345 = sand.u32 %s119, 1
          %s346 = smul.addr %s345, 8
          %s347 = scalar_lea.vmem [#allocation8], %s346
          %348 = dma.done %s344, 128
        $region56: #{upconv_forward.5} parent=51 // pred_fallthru
          _
      $region52: #{upconv_forward.5} parent=5 // pred_fallthru
        _
    $region6: #{upconv_forward.5} parent=1 // loop_footer
      %s20 = sadd.s32 1, %s16
    $region7: #{upconv_forward.5} parent=1 // loop_footer_branch
      %15 = sbr.rel target = $region3
    $region8: #{upconv_forward.5} parent=1 // loop_exit
      _
    %349 = vsyncpa [#allocation3], 1
    %s350 = scalar_lea.sflag [#allocation3], 1
    %351 = vsyncpa %s350, 1
    %352 = vsyncpa [#allocation6], 1
    %353 = vsyncpa [#allocation4], 1
    %s354 = scalar_lea.sflag [#allocation4], 1
    %355 = vsyncpa %s354, 1

// kernel: upconv_forward.4
$region0: #{upconv_forward.4}
  #allocation0 [shape = 'u32[]', space=smem, size = 0x4, offset = 0x4, fixed_abs, tag = 'smem constant byte address 0x4 - core index']
  #allocation1 [shape = 'u32[144,128]{1,0:T(1,128)}', space=vmem, size = 0x12000, scoped, tag = 'internal scratch']
  %s0 = inlined_call_operand.hbm [shape: bf16[2,8,8,8], index: 0, kind: input, shape index: {}]
  %s1 = inlined_call_operand.hbm [shape: bf16[8,4], index: 1, kind: input, shape index: {}]
  %s2 = inlined_call_operand.hbm [shape: bf16[16,8], index: 2, kind: input, shape index: {}]
  %s3 = inlined_call_operand.hbm [shape: bf16[2,8,16,4], index: 3, kind: output, shape index: {}]
  %s4 = sld [smem:[#allocation0]]
  $region57: #{upconv_forward.4} parent=0
    _
  %s6 = ssub.s32 1, %s4
  %s7 = scalar_select 0, %s6, %s4
  $region1: #{upconv_forward.4} parent=0
    #allocation2 [shape = 'u8[16384]{0}', space=vmem, size = 0x4000, scoped, tag = 'input window, operand 0']
    #allocation3 [shape = 's32[2]{0}', space=sflag, size = 0x8, scoped, tag = 'scoped memory for upconv_forward.4']
    #allocation4 [shape = 's32[2]{0}', space=sflag, size = 0x8, scoped, tag = 'scoped memory for upconv_forward.4']
    #allocation5 [shape = 'u8[2048]{0}', space=vmem, size = 0x800, scoped, tag = 'input window, operand 1, single buffered']
    #allocation6 [shape = 's32[1]{0}', space=sflag, size = 0x4, scoped, tag = 'scoped memory for upconv_forward.4']
    #allocation7 [shape = 'u8[4096]{0}', space=vmem, size = 0x1000, scoped, tag = 'input window, operand 2, single buffered']
    #allocation8 [shape = 'u8[32768]{0}', space=vmem, size = 0x8000, scoped, tag = 'output window, operand 0']
    %8 = vsyncpa [#allocation3], 0
    %s9 = scalar_lea.sflag [#allocation3], 1
    %10 = vsyncpa %s9, 0
    %11 = vsyncpa [#allocation6], 0
    %12 = vsyncpa [#allocation4], 0
    %s13 = scalar_lea.sflag [#allocation4], 1
    %14 = vsyncpa %s13, 0
    loop: start=0, step=1, limit=6
    $region2: #{upconv_forward.4} parent=1 // loop_pre_header
      _
    $region3: #{upconv_forward.4} parent=1 // loop_header
      %s16 = sphi 0, %s20
      %p17 = scmp.ge.s32.totalorder %s16, 6
      %s23 = sphi 0, %s35
      %s24 = sphi 0, %s31
      %s25 = sphi 0, %s23
      %s26 = sphi 0, %s24
      %s27 = sphi 0, %s25
      %s28 = sphi 0, %s26
      %s40 = sphi 0, %s42
      %s43 = sphi 0, %s40
      %s44 = sphi 0, %s43
      %s60 = sphi 0, %s44
      %s64 = sphi 0, %s64
      %s66 = sphi 0, %s64
      %s67 = sphi 0, %s66
      %s81 = sphi 0, %s67
      %s85 = sphi 0, %s85
      %s87 = sphi 0, %s85
      %s88 = sphi 0, %s87
      %s102 = sphi 0, %s88
      %s110 = sphi 0, %s112
      %s113 = sphi 0, %s110
      %s114 = sphi 0, %s113
      %s130 = sphi 0, %s114
    $region4: #{upconv_forward.4} parent=1 // loop_header_branch
      %19 = sbr.rel (%p17) target = $region8
    $region5: #{upconv_forward.4} parent=1 // loop_body
      %s21 = ssub.s32 %s16, 1
      %s22 = ssub.s32 %s16, 2
      %s29 = sadd.s32 1, %s24
      %p30 = scmp.ge.s32.totalorder %s29, 2
      %s31 = scalar_select %p30, 0, %s29
      %s32 = sadd.s32 1, %s23
      %s33 = scalar_select %p30, %s32, %s23
      %p34 = scmp.ge.s32.totalorder %s33, 2
      %s35 = scalar_select %p34, 0, %s33
      %s36 = ssub.s32 %s23, %s35
      %s37 = ssub.s32 %s24, %s31
      %s38 = sor.u32 %s36, %s37
      %p39 = scmp.eq.s32.totalorder %s38, 0
      %s41 = sadd.s32 %s40, 1
      %s42 = scalar_select %p39, %s40, %s41
      %p45 = pneg %p39
      %p46 = scmp.eq.s32.totalorder %s16, 3
      %p47 = por %p45, %p46
      %p48 = scmp.ne.s32.totalorder %s40, %s43
      %p49 = scmp.eq.s32.totalorder %s16, 0
      %p50 = por %p48, %p49
      %p51 = scmp.ne.s32.totalorder %s40, %s43
      %p52 = scmp.eq.s32.totalorder %s21, 3
      %p53 = por %p51, %p52
      %p54 = scmp.ne.s32.totalorder %s43, %s44
      %p55 = scmp.eq.s32.totalorder %s21, 0
      %p56 = por %p54, %p55
      %p57 = scmp.ne.s32.totalorder %s43, %s44
      %p58 = scmp.eq.s32.totalorder %s22, 3
      %p59 = por %p57, %p58
      %p61 = scmp.ne.s32.totalorder %s44, %s60
      %p62 = scmp.eq.s32.totalorder %s22, 0
      %p63 = por %p61, %p62
      %s65 = sadd.s32 %s64, 1
      %p68 = scmp.eq.s32.totalorder %s16, 3
      %p69 = scmp.ne.s32.totalorder %s64, %s66
      %p70 = scmp.eq.s32.totalorder %s16, 0
      %p71 = por %p69, %p70
      %p72 = scmp.ne.s32.totalorder %s64, %s66
      %p73 = scmp.eq.s32.totalorder %s21, 3
      %p74 = por %p72, %p73
      %p75 = scmp.ne.s32.totalorder %s66, %s67
      %p76 = scmp.eq.s32.totalorder %s21, 0
      %p77 = por %p75, %p76
      %p78 = scmp.ne.s32.totalorder %s66, %s67
      %p79 = scmp.eq.s32.totalorder %s22, 3
      %p80 = por %p78, %p79
      %p82 = scmp.ne.s32.totalorder %s67, %s81
      %p83 = scmp.eq.s32.totalorder %s22, 0
      %p84 = por %p82, %p83
      %s86 = sadd.s32 %s85, 1
      %p89 = scmp.eq.s32.totalorder %s16, 3
      %p90 = scmp.ne.s32.totalorder %s85, %s87
      %p91 = scmp.eq.s32.totalorder %s16, 0
      %p92 = por %p90, %p91
      %p93 = scmp.ne.s32.totalorder %s85, %s87
      %p94 = scmp.eq.s32.totalorder %s21, 3
      %p95 = por %p93, %p94
      %p96 = scmp.ne.s32.totalorder %s87, %s88
      %p97 = scmp.eq.s32.totalorder %s21, 0
      %p98 = por %p96, %p97
      %p99 = scmp.ne.s32.totalorder %s87, %s88
      %p100 = scmp.eq.s32.totalorder %s22, 3
      %p101 = por %p99, %p100
      %p103 = scmp.ne.s32.totalorder %s88, %s102
      %p104 = scmp.eq.s32.totalorder %s22, 0
      %p105 = por %p103, %p104
      %s106 = ssub.s32 %s23, %s35
      %s107 = ssub.s32 %s24, %s31
      %s108 = sor.u32 %s106, %s107
      %p109 = scmp.eq.s32.totalorder %s108, 0
      %s111 = sadd.s32 %s110, 1
      %s112 = scalar_select %p109, %s110, %s111
      %p115 = pneg %p109
      %p116 = scmp.eq.s32.totalorder %s16, 3
      %p117 = por %p115, %p116
      %p118 = scmp.ne.s32.totalorder %s110, %s113
      %p119 = scmp.eq.s32.totalorder %s16, 0
      %p120 = por %p118, %p119
      %p121 = scmp.ne.s32.totalorder %s110, %s113
      %p122 = scmp.eq.s32.totalorder %s21, 3
      %p123 = por %p121, %p122
      %p124 = scmp.ne.s32.totalorder %s113, %s114
      %p125 = scmp.eq.s32.totalorder %s21, 0
      %p126 = por %p124, %p125
      %p127 = scmp.ne.s32.totalorder %s113, %s114
      %p128 = scmp.eq.s32.totalorder %s22, 3
      %p129 = por %p127, %p128
      %p131 = scmp.ne.s32.totalorder %s114, %s130
      %p132 = scmp.eq.s32.totalorder %s22, 0
      %p133 = por %p131, %p132
      %p134 = scmp.le.s32.totalorder 1, %s16
      %p135 = scmp.lt.s32.totalorder %s16, 5
      %p136 = pnand %p134, %p135
      %p137 = pneg %p136
      // Predicated region
      $region9: #{upconv_forward.4} parent=5 // pred_check
        _
      $region10: #{upconv_forward.4} parent=5 // pred_check_branch
        %139 = sbr.rel (%p136) target = $region12
      $region11: #{upconv_forward.4} parent=5 // pred_region
        %s140 = ssub.s32 %s16, 1
        // Predicated region
        $region13: #{upconv_forward.4} parent=11 // pred_check
          %p141 = pneg %p77
        $region14: #{upconv_forward.4} parent=11 // pred_check_branch
          %143 = sbr.rel (%p141) target = $region16
        $region15: #{upconv_forward.4} parent=11 // pred_region
          %s145 = ssub.s32 64, 64
          %146 = vsyncadd [#allocation6], %s145
          %s148 = sshll.u32 [#allocation5], 4
          %s149 = int_to_ptr.vmem [resolvable:$true] %s148
          %151 = dma.hbm_to_vmem [thread:$0]  %s1, 64, %s149, [#allocation6]
        $region16: #{upconv_forward.4} parent=11 // pred_fallthru
          _
        // Predicated region
        $region17: #{upconv_forward.4} parent=11 // pred_check
          %p152 = pneg %p98
        $region18: #{upconv_forward.4} parent=11 // pred_check_branch
          %154 = sbr.rel (%p152) target = $region20
        $region19: #{upconv_forward.4} parent=11 // pred_region
          %s156 = ssub.s32 128, 128
          %157 = vsyncadd [#allocation6], %s156
          %s158 = sshll.u32 [#allocation7], 4
          %s159 = int_to_ptr.vmem [resolvable:$true] %s158
          %164 = dma.hbm_to_vmem [thread:$0]  %s2, 128, %s159, [#allocation6], 64, 64, 4
        $region20: #{upconv_forward.4} parent=11 // pred_fallthru
          _
      $region12: #{upconv_forward.4} parent=5 // pred_fallthru
        _
      %p165 = scmp.lt.s32.totalorder %s16, 4
      // Predicated region
      $region21: #{upconv_forward.4} parent=5 // pred_check
        %p166 = pneg %p165
      $region22: #{upconv_forward.4} parent=5 // pred_check_branch
        %168 = sbr.rel (%p166) target = $region24
      $region23: #{upconv_forward.4} parent=5 // pred_region
        // Predicated region
        $region25: #{upconv_forward.4} parent=23 // pred_check
          %p169 = pneg %p50
        $region26: #{upconv_forward.4} parent=23 // pred_check_branch
          %171 = sbr.rel (%p169) target = $region28
        $region27: #{upconv_forward.4} parent=23 // pred_region
          %s172 = sand.u32 %s40, 1
          %s173 = scalar_lea.sflag [#allocation3], %s172
          %s174 = sand.u32 %s40, 1
          %s175 = smul.addr %s174, 16
          %s176 = scalar_lea.vmem [#allocation2], %s175
          %s177 = smul.u32 4, %s24
          %s179 = ssub.s32 256, 256
          %180 = vsyncadd %s173, %s179
          %s181 = smul.addr %s23, 8
          %s182 = sadd.s32 %s177, %s181
          %s183 = smul.addr %s182, 64
          %s184 = scalar_lea.hbm %s0, %s183
          %s185 = sshll.u32 %s176, 4
          %s186 = int_to_ptr.vmem [resolvable:$true] %s185
          %191 = dma.hbm_to_vmem [thread:$0]  %s184, 256, %s186, %s173, 64, 64, 4
        $region28: #{upconv_forward.4} parent=23 // pred_fallthru
          _
      $region24: #{upconv_forward.4} parent=5 // pred_fallthru
        _
      %p192 = scmp.le.s32.totalorder 1, %s16
      %p193 = scmp.lt.s32.totalorder %s16, 5
      %p194 = pnand %p192, %p193
      %p195 = pneg %p194
      // Predicated region
      $region29: #{upconv_forward.4} parent=5 // pred_check
        _
      $region30: #{upconv_forward.4} parent=5 // pred_check_branch
        %197 = sbr.rel (%p194) target = $region32
      $region31: #{upconv_forward.4} parent=5 // pred_region
        %s198 = ssub.s32 %s16, 1
        %s199 = sand.u32 %s43, 1
        %s200 = scalar_lea.sflag [#allocation3], %s199
        %s201 = sand.u32 %s43, 1
        %s202 = smul.addr %s201, 16
        %s203 = scalar_lea.vmem [#allocation2], %s202
        // Predicated region
        $region33: #{upconv_forward.4} parent=31 // pred_check
          %p204 = pneg %p56
        $region34: #{upconv_forward.4} parent=31 // pred_check_branch
          %206 = sbr.rel (%p204) target = $region36
        $region35: #{upconv_forward.4} parent=31 // pred_region
          %207 = dma.done %s200, 256
        $region36: #{upconv_forward.4} parent=31 // pred_fallthru
          _
        // Predicated region
        $region37: #{upconv_forward.4} parent=31 // pred_check
          %p208 = pneg %p77
        $region38: #{upconv_forward.4} parent=31 // pred_check_branch
          %210 = sbr.rel (%p208) target = $region40
        $region39: #{upconv_forward.4} parent=31 // pred_region
          %211 = dma.done [#allocation6], 64
        $region40: #{upconv_forward.4} parent=31 // pred_fallthru
          _
        // Predicated region
        $region41: #{upconv_forward.4} parent=31 // pred_check
          %p212 = pneg %p98
        $region42: #{upconv_forward.4} parent=31 // pred_check_branch
          %214 = sbr.rel (%p212) target = $region44
        $region43: #{upconv_forward.4} parent=31 // pred_region
          %215 = dma.done [#allocation6], 128
        $region44: #{upconv_forward.4} parent=31 // pred_fallthru
          _
        %s216 = sand.u32 %s43, 1
        %s217 = scalar_lea.sflag [#allocation3], %s216
        %s218 = sand.u32 %s43, 1
        %s219 = smul.addr %s218, 16
        %s220 = scalar_lea.vmem [#allocation2], %s219
        %p221 = pneg %p56
        %p222 = pneg %p53
        %p223 = pneg %p77
        %p224 = pneg %p74
        %p225 = pneg %p98
        %p226 = pneg %p95
        %p227 = pneg %p126
        %p228 = pneg %p123
        %s229 = sand.u32 %s113, 1
        %s230 = scalar_lea.sflag [#allocation4], %s229
        %s231 = sand.u32 %s113, 1
        %s232 = smul.addr %s231, 32
        %s233 = scalar_lea.vmem [#allocation8], %s232
        %s234 = smul.u32 4, %s26
        %s235 = smul.u32 4, %s26
        %v237 = vld [vmem:[%s203] sm:$0xf]
        %v238 = vld [vmem:[%s203 + $0x4] sm:$0xf]
        %v239 = vld [vmem:[%s203 + $0x8] sm:$0xf]
        %v240 = vld [vmem:[%s203 + $0xc] sm:$0xf]
        %v241 = vld [vmem:[#allocation5] sm:$0xf]
        %v246 = vunpack.c.l.b16 %v237
        %v247 = vunpack.c.l.b16 %v238
        %v248 = vunpack.c.l.b16 %v239
        %v249 = vunpack.c.l.b16 %v240
        %v250 = vpack.c.b16 %v247, %v246
        %v251 = vpack.c.b16 %v249, %v248
        %vm252 = vcmask 64512
        %v254 = vsel %vm252, %v250, 0
        %v257 = vsel %vm252, %v251, 0
        %vm259 = vcmask 1043456
        %v261 = vsel %vm259, %v241, 0
        %263 = vmatprep.subr.bf16.mxu0 0
        %264 = vmatpush1.bf16.msra.mxu0 %v261
        %265 = vmatprep.subr.bf16.mxu0 0
        %266 = vmatpush1.bf16.msra.mxu0 0
        %267 = vmatprep.subr.bf16.mxu0 0
        %268 = vmatpush1.bf16.msra.mxu0 0
        %269 = vmatprep.subr.bf16.mxu0 0
        %270 = vmatpush1.bf16.msra.mxu0 0
        %271 = vmatprep.subr.bf16.mxu0 0
        %272 = vmatpush1.bf16.msra.mxu0 0
        %273 = vmatprep.subr.bf16.mxu0 0
        %274 = vmatpush1.bf16.msra.mxu0 0
        %275 = vmatprep.subr.bf16.mxu0 0
        %276 = vmatpush1.bf16.msra.mxu0 0
        %277 = vmatprep.subr.bf16.mxu0 0
        %278 = vmatpush1.bf16.msra.mxu0 0
        %279 = vmatprep.subr.bf16.mxu0 0
        %280 = vmatpush1.bf16.msra.mxu0 0
        %281 = vmatprep.subr.bf16.mxu0 0
        %282 = vmatpush1.bf16.msra.mxu0 0
        %283 = vmatprep.subr.bf16.mxu0 0
        %284 = vmatpush1.bf16.msra.mxu0 0
        %285 = vmatprep.subr.bf16.mxu0 0
        %286 = vmatpush1.bf16.msra.mxu0 0
        %287 = vmatprep.subr.bf16.mxu0 0
        %288 = vmatpush1.bf16.msra.mxu0 0
        %289 = vmatprep.subr.bf16.mxu0 0
        %290 = vmatpush1.bf16.msra.mxu0 0
        %291 = vmatprep.subr.bf16.mxu0 0
        %292 = vmatpush1.bf16.msra.mxu0 0
        %293 = vmatprep.subr.bf16.mxu0 0
        %294 = vmatpush1.bf16.msra.mxu0 0
        %295 = vmatprep.mubr.bf16.mxu0 0
        %296 = vmatmul.mubr.bf16.gmra.mrb[0].mxu0 %v254
        %v297 = vpop.f32.mrb[0].mxu0
        %v298 = vadd.f32 0.0, %v297
        %v299 = vpop.f32.mrb[0].mxu0
        %v300 = vpop.f32.mrb[0].mxu0
        %v301 = vadd.f32 0.0, %v300
        %v302 = vpop.f32.mrb[0].mxu0
        %303 = vmatprep.mubr.bf16.mxu0 0
        %304 = vmatmul.mubr.bf16.gmra.mrb[0].mxu0 %v257
        %v305 = vpop.f32.mrb[0].mxu0
        %v306 = vadd.f32 0.0, %v305
        %v307 = vpop.f32.mrb[0].mxu0
        %v308 = vpop.f32.mrb[0].mxu0
        %v309 = vadd.f32 0.0, %v308
        %v310 = vpop.f32.mrb[0].mxu0
        %311 = vdwg.mxu0
        %v312 = vpack.c.bf16 %v301, %v298
        %v313 = vpack.c.bf16 %v309, %v306
        %v314 = vld [vmem:[#allocation7] sm:$0xf]
        %v315 = vld [vmem:[#allocation7 + $0x4] sm:$0xf]
        %v318 = vunpack.c.l.b16 %v314
        %v319 = vunpack.c.l.b16 %v315
        %v320 = vpack.c.b16 %v319, %v318
        %v322 = vsel %vm252, %v320, 0
        %v325 = vsel %vm259, %v312, 0
        %327 = vmatprep.subr.bf16.mxu0 0
        %328 = vmatpush1.bf16.msra.mxu0 %v325
        %329 = vmatprep.subr.bf16.mxu0 0
        %330 = vmatpush1.bf16.msra.mxu0 0
        %331 = vmatprep.subr.bf16.mxu0 0
        %332 = vmatpush1.bf16.msra.mxu0 0
        %333 = vmatprep.subr.bf16.mxu0 0
        %334 = vmatpush1.bf16.msra.mxu0 0
        %335 = vmatprep.subr.bf16.mxu0 0
        %336 = vmatpush1.bf16.msra.mxu0 0
        %337 = vmatprep.subr.bf16.mxu0 0
        %338 = vmatpush1.bf16.msra.mxu0 0
        %339 = vmatprep.subr.bf16.mxu0 0
        %340 = vmatpush1.bf16.msra.mxu0 0
        %341 = vmatprep.subr.bf16.mxu0 0
        %342 = vmatpush1.bf16.msra.mxu0 0
        %343 = vmatprep.subr.bf16.mxu0 0
        %344 = vmatpush1.bf16.msra.mxu0 0
        %345 = vmatprep.subr.bf16.mxu0 0
        %346 = vmatpush1.bf16.msra.mxu0 0
        %347 = vmatprep.subr.bf16.mxu0 0
        %348 = vmatpush1.bf16.msra.mxu0 0
        %349 = vmatprep.subr.bf16.mxu0 0
        %350 = vmatpush1.bf16.msra.mxu0 0
        %351 = vmatprep.subr.bf16.mxu0 0
        %352 = vmatpush1.bf16.msra.mxu0 0
        %353 = vmatprep.subr.bf16.mxu0 0
        %354 = vmatpush1.bf16.msra.mxu0 0
        %355 = vmatprep.subr.bf16.mxu0 0
        %356 = vmatpush1.bf16.msra.mxu0 0
        %357 = vmatprep.subr.bf16.mxu0 0
        %358 = vmatpush1.bf16.msra.mxu0 0
        %359 = vmatprep.mubr.bf16.mxu0 0
        %360 = vmatmul.mubr.bf16.gmra.mrb[0].mxu0 %v322
        %v361 = vpop.f32.mrb[0].mxu0
        %v362 = vadd.f32 0.0, %v361
        %v363 = vpop.f32.mrb[0].mxu0
        %v364 = vpop.f32.mrb[0].mxu0
        %v365 = vadd.f32 0.0, %v364
        %v366 = vpop.f32.mrb[0].mxu0
        %367 = vdwg.mxu0
        %v368 = vpack.c.bf16 %v365, %v362
        %v370 = vunpack.c.l.b16 %v368
        %v371 = vunpack.c.h.b16 %v368
        %v372 = vpack.c.b16 %v370, %v370
        %v373 = vpack.c.b16 %v371, %v371
        %vm376 = vcmask 27648
        %377 = vst.msk [vmem:[%s233] sm:$0xf] %vm376, %v372
        %378 = vst.msk [vmem:[%s233 + $0x4] sm:$0xf] %vm376, %v373
        %v380 = vrot.slane %v312, 4
        %v382 = vsel %vm259, %v380, 0
        %384 = vmatprep.subr.bf16.mxu0 0
        %385 = vmatpush1.bf16.msra.mxu0 %v382
        %386 = vmatprep.subr.bf16.mxu0 0
        %387 = vmatpush1.bf16.msra.mxu0 0
        %388 = vmatprep.subr.bf16.mxu0 0
        %389 = vmatpush1.bf16.msra.mxu0 0
        %390 = vmatprep.subr.bf16.mxu0 0
        %391 = vmatpush1.bf16.msra.mxu0 0
        %392 = vmatprep.subr.bf16.mxu0 0
        %393 = vmatpush1.bf16.msra.mxu0 0
        %394 = vmatprep.subr.bf16.mxu0 0
        %395 = vmatpush1.bf16.msra.mxu0 0
        %396 = vmatprep.subr.bf16.mxu0 0
        %397 = vmatpush1.bf16.msra.mxu0 0
        %398 = vmatprep.subr.bf16.mxu0 0
        %399 = vmatpush1.bf16.msra.mxu0 0
        %400 = vmatprep.subr.bf16.mxu0 0
        %401 = vmatpush1.bf16.msra.mxu0 0
        %402 = vmatprep.subr.bf16.mxu0 0
        %403 = vmatpush1.bf16.msra.mxu0 0
        %404 = vmatprep.subr.bf16.mxu0 0
        %405 = vmatpush1.bf16.msra.mxu0 0
        %406 = vmatprep.subr.bf16.mxu0 0
        %407 = vmatpush1.bf16.msra.mxu0 0
        %408 = vmatprep.subr.bf16.mxu0 0
        %409 = vmatpush1.bf16.msra.mxu0 0
        %410 = vmatprep.subr.bf16.mxu0 0
        %411 = vmatpush1.bf16.msra.mxu0 0
        %412 = vmatprep.subr.bf16.mxu0 0
        %413 = vmatpush1.bf16.msra.mxu0 0
        %414 = vmatprep.subr.bf16.mxu0 0
        %415 = vmatpush1.bf16.msra.mxu0 0
        %416 = vmatprep.mubr.bf16.mxu0 0
        %417 = vmatmul.mubr.bf16.gmra.mrb[0].mxu0 %v322
        %v418 = vpop.f32.mrb[0].mxu0
        %v419 = vadd.f32 0.0, %v418
        %v420 = vpop.f32.mrb[0].mxu0
        %v421 = vpop.f32.mrb[0].mxu0
        %v422 = vadd.f32 0.0, %v421
        %v423 = vpop.f32.mrb[0].mxu0
        %424 = vdwg.mxu0
        %v425 = vpack.c.bf16 %v422, %v419
        %v427 = vunpack.c.l.b16 %v425
        %v428 = vunpack.c.h.b16 %v425
        %v429 = vpack.c.b16 %v427, %v427
        %v430 = vpack.c.b16 %v428, %v428
        %s433 = scalar_lea.vmem %s233, 8 [#allocation8]
        %434 = vst.msk [vmem:[%s433] sm:$0xf] %vm376, %v429
        %435 = vst.msk [vmem:[%s433 + $0x4] sm:$0xf] %vm376, %v430
        %v437 = vsel %vm259, %v313, 0
        %439 = vmatprep.subr.bf16.mxu0 0
        %440 = vmatpush1.bf16.msra.mxu0 %v437
        %441 = vmatprep.subr.bf16.mxu0 0
        %442 = vmatpush1.bf16.msra.mxu0 0
        %443 = vmatprep.subr.bf16.mxu0 0
        %444 = vmatpush1.bf16.msra.mxu0 0
        %445 = vmatprep.subr.bf16.mxu0 0
        %446 = vmatpush1.bf16.msra.mxu0 0
        %447 = vmatprep.subr.bf16.mxu0 0
        %448 = vmatpush1.bf16.msra.mxu0 0
        %449 = vmatprep.subr.bf16.mxu0 0
        %450 = vmatpush1.bf16.msra.mxu0 0
        %451 = vmatprep.subr.bf16.mxu0 0
        %452 = vmatpush1.bf16.msra.mxu0 0
        %453 = vmatprep.subr.bf16.mxu0 0
        %454 = vmatpush1.bf16.msra.mxu0 0
        %455 = vmatprep.subr.bf16.mxu0 0
        %456 = vmatpush1.bf16.msra.mxu0 0
        %457 = vmatprep.subr.bf16.mxu0 0
        %458 = vmatpush1.bf16.msra.mxu0 0
        %459 = vmatprep.subr.bf16.mxu0 0
        %460 = vmatpush1.bf16.msra.mxu0 0
        %461 = vmatprep.subr.bf16.mxu0 0
        %462 = vmatpush1.bf16.msra.mxu0 0
        %463 = vmatprep.subr.bf16.mxu0 0
        %464 = vmatpush1.bf16.msra.mxu0 0
        %465 = vmatprep.subr.bf16.mxu0 0
        %466 = vmatpush1.bf16.msra.mxu0 0
        %467 = vmatprep.subr.bf16.mxu0 0
        %468 = vmatpush1.bf16.msra.mxu0 0
        %469 = vmatprep.subr.bf16.mxu0 0
        %470 = vmatpush1.bf16.msra.mxu0 0
        %471 = vmatprep.mubr.bf16.mxu0 0
        %472 = vmatmul.mubr.bf16.gmra.mrb[0].mxu0 %v322
        %v473 = vpop.f32.mrb[0].mxu0
        %v474 = vadd.f32 0.0, %v473
        %v475 = vpop.f32.mrb[0].mxu0
        %v476 = vpop.f32.mrb[0].mxu0
        %v477 = vadd.f32 0.0, %v476
        %v478 = vpop.f32.mrb[0].mxu0
        %479 = vdwg.mxu0
        %v480 = vpack.c.bf16 %v477, %v474
        %v482 = vunpack.c.l.b16 %v480
        %v483 = vunpack.c.h.b16 %v480
        %v484 = vpack.c.b16 %v482, %v482
        %v485 = vpack.c.b16 %v483, %v483
        %s488 = scalar_lea.vmem %s233, 16 [#allocation8]
        %489 = vst.msk [vmem:[%s488] sm:$0xf] %vm376, %v484
        %490 = vst.msk [vmem:[%s488 + $0x4] sm:$0xf] %vm376, %v485
        %v492 = vrot.slane %v313, 4
        %v494 = vsel %vm259, %v492, 0
        %496 = vmatprep.subr.bf16.mxu0 0
        %497 = vmatpush1.bf16.msra.mxu0 %v494
        %498 = vmatprep.subr.bf16.mxu0 0
        %499 = vmatpush1.bf16.msra.mxu0 0
        %500 = vmatprep.subr.bf16.mxu0 0
        %501 = vmatpush1.bf16.msra.mxu0 0
        %502 = vmatprep.subr.bf16.mxu0 0
        %503 = vmatpush1.bf16.msra.mxu0 0
        %504 = vmatprep.subr.bf16.mxu0 0
        %505 = vmatpush1.bf16.msra.mxu0 0
        %506 = vmatprep.subr.bf16.mxu0 0
        %507 = vmatpush1.bf16.msra.mxu0 0
        %508 = vmatprep.subr.bf16.mxu0 0
        %509 = vmatpush1.bf16.msra.mxu0 0
        %510 = vmatprep.subr.bf16.mxu0 0
        %511 = vmatpush1.bf16.msra.mxu0 0
        %512 = vmatprep.subr.bf16.mxu0 0
        %513 = vmatpush1.bf16.msra.mxu0 0
        %514 = vmatprep.subr.bf16.mxu0 0
        %515 = vmatpush1.bf16.msra.mxu0 0
        %516 = vmatprep.subr.bf16.mxu0 0
        %517 = vmatpush1.bf16.msra.mxu0 0
        %518 = vmatprep.subr.bf16.mxu0 0
        %519 = vmatpush1.bf16.msra.mxu0 0
        %520 = vmatprep.subr.bf16.mxu0 0
        %521 = vmatpush1.bf16.msra.mxu0 0
        %522 = vmatprep.subr.bf16.mxu0 0
        %523 = vmatpush1.bf16.msra.mxu0 0
        %524 = vmatprep.subr.bf16.mxu0 0
        %525 = vmatpush1.bf16.msra.mxu0 0
        %526 = vmatprep.subr.bf16.mxu0 0
        %527 = vmatpush1.bf16.msra.mxu0 0
        %528 = vmatprep.mubr.bf16.mxu0 0
        %529 = vmatmul.mubr.bf16.gmra.mrb[0].mxu0 %v322
        %v530 = vpop.f32.mrb[0].mxu0
        %v531 = vadd.f32 0.0, %v530
        %v532 = vpop.f32.mrb[0].mxu0
        %v533 = vpop.f32.mrb[0].mxu0
        %v534 = vadd.f32 0.0, %v533
        %v535 = vpop.f32.mrb[0].mxu0
        %536 = vdwg.mxu0
        %v537 = vpack.c.bf16 %v534, %v531
        %v539 = vunpack.c.l.b16 %v537
        %v540 = vunpack.c.h.b16 %v537
        %v541 = vpack.c.b16 %v539, %v539
        %v542 = vpack.c.b16 %v540, %v540
        %s545 = scalar_lea.vmem %s233, 24 [#allocation8]
        %546 = vst.msk [vmem:[%s545] sm:$0xf] %vm376, %v541
        %547 = vst.msk [vmem:[%s545 + $0x4] sm:$0xf] %vm376, %v542
        %s548 = sand.u32 %s113, 1
        %s549 = scalar_lea.sflag [#allocation4], %s548
        %s550 = sand.u32 %s113, 1
        %s551 = smul.addr %s550, 32
        %s552 = scalar_lea.vmem [#allocation8], %s551
        // Predicated region
        $region45: #{upconv_forward.4} parent=31 // pred_check
          %p553 = pneg %p123
        $region46: #{upconv_forward.4} parent=31 // pred_check_branch
          %555 = sbr.rel (%p553) target = $region48
        $region47: #{upconv_forward.4} parent=31 // pred_region
          %s556 = smul.u32 4, %s26
          %s558 = ssub.s32 512, 512
          %559 = vsyncadd %s549, %s558
          %s560 = smul.addr %s556, 2
          %s561 = smul.addr %s25, 16
          %s562 = sadd.s32 %s560, %s561
          %s563 = smul.addr %s562, 64
          %s564 = scalar_lea.hbm %s3, %s563
          %s565 = sshll.u32 %s552, 4
          %s566 = int_to_ptr.vmem [resolvable:$true] %s565
          %571 = dma.vmem_to_hbm [thread:$0]  %s566, 512, %s564, %s549, 64, 64, 4
        $region48: #{upconv_forward.4} parent=31 // pred_fallthru
          _
      $region32: #{upconv_forward.4} parent=5 // pred_fallthru
        _
      %p572 = scmp.le.s32.totalorder 2, %s16
      // Predicated region
      $region49: #{upconv_forward.4} parent=5 // pred_check
        %p573 = pneg %p572
      $region50: #{upconv_forward.4} parent=5 // pred_check_branch
        %575 = sbr.rel (%p573) target = $region52
      $region51: #{upconv_forward.4} parent=5 // pred_region
        %s576 = ssub.s32 %s16, 2
        // Predicated region
        $region53: #{upconv_forward.4} parent=51 // pred_check
          %p577 = pneg %p129
        $region54: #{upconv_forward.4} parent=51 // pred_check_branch
          %579 = sbr.rel (%p577) target = $region56
        $region55: #{upconv_forward.4} parent=51 // pred_region
          %s580 = sand.u32 %s114, 1
          %s581 = scalar_lea.sflag [#allocation4], %s580
          %s582 = sand.u32 %s114, 1
          %s583 = smul.addr %s582, 32
          %s584 = scalar_lea.vmem [#allocation8], %s583
          %585 = dma.done %s581, 512
        $region56: #{upconv_forward.4} parent=51 // pred_fallthru
          _
      $region52: #{upconv_forward.4} parent=5 // pred_fallthru
        _
    $region6: #{upconv_forward.4} parent=1 // loop_footer
      %s20 = sadd.s32 1, %s16
    $region7: #{upconv_forward.4} parent=1 // loop_footer_branch
      %15 = sbr.rel target = $region3
    $region8: #{upconv_forward.4} parent=1 // loop_exit
      _
    %586 = vsyncpa [#allocation3], 1
    %s587 = scalar_lea.sflag [#allocation3], 1
    %588 = vsyncpa %s587, 1
    %589 = vsyncpa [#allocation6], 1
    %590 = vsyncpa [#allocation4], 1
    %s591 = scalar_lea.sflag [#allocation4], 1
    %592 = vsyncpa %s591, 1

// kernel: upconv_forward.7
$region0: #{upconv_forward.7}
  #allocation0 [shape = 'u32[]', space=smem, size = 0x4, offset = 0x4, fixed_abs, tag = 'smem constant byte address 0x4 - core index']
  #allocation1 [shape = 'u32[144,128]{1,0:T(1,128)}', space=vmem, size = 0x12000, scoped, tag = 'internal scratch']
  #allocation2 [shape = 'bf16[10,24,12]{2,1,0:T(8,128)(2,1)}', space=vmem, size = 0xf000, scoped, tag = 'scratch operand']
  %s0 = inlined_call_operand.hbm [shape: bf16[2,16,16,4], index: 0, kind: input, shape index: {}, may-alias: {0,1,2}]
  %s1 = inlined_call_operand.hbm [shape: bf16[2,16,16,4], index: 1, kind: input, shape index: {}, may-alias: {0,1,2}]
  %s2 = inlined_call_operand.hbm [shape: bf16[2,16,16,4], index: 2, kind: input, shape index: {}, may-alias: {0,1,2}]
  %s3 = inlined_call_operand.hbm [shape: bf16[3,12,4], index: 3, kind: input, shape index: {}]
  %s4 = inlined_call_operand.hbm [shape: f32[1,4], index: 4, kind: input, shape index: {}]
  %s5 = inlined_call_operand.hbm [shape: f32[1,4], index: 5, kind: input, shape index: {}]
  %s6 = inlined_call_operand.hbm [shape: f32[2,16,16,4], index: 6, kind: output, shape index: {}]
  %s7 = sld [smem:[#allocation0]]
  $region85: #{upconv_forward.7} parent=0
    _
  %s9 = ssub.s32 1, %s7
  %s10 = scalar_select 0, %s9, %s7
  $region1: #{upconv_forward.7} parent=0
    #allocation3 [shape = 'u8[65536]{0}', space=vmem, size = 0x10000, scoped, tag = 'input window, operand 0']
    #allocation4 [shape = 's32[2]{0}', space=sflag, size = 0x8, scoped, tag = 'scoped memory for upconv_forward.7']
    #allocation5 [shape = 's32[2]{0}', space=sflag, size = 0x8, scoped, tag = 'scoped memory for upconv_forward.7']
    #allocation6 [shape = 'u8[8192]{0}', space=vmem, size = 0x2000, scoped, tag = 'input window, operand 1']
    #allocation7 [shape = 's32[2]{0}', space=sflag, size = 0x8, scoped, tag = 'scoped memory for upconv_forward.7']
    #allocation8 [shape = 'u8[8192]{0}', space=vmem, size = 0x2000, scoped, tag = 'input window, operand 2']
    #allocation9 [shape = 'u8[12288]{0}', space=vmem, size = 0x3000, scoped, tag = 'input window, operand 3, single buffered']
    #allocation10 [shape = 's32[1]{0}', space=sflag, size = 0x4, scoped, tag = 'scoped memory for upconv_forward.7']
    #allocation11 [shape = 'u8[512]{0}', space=vmem, size = 0x400, scoped, tag = 'input window, operand 4, single buffered']
    #allocation12 [shape = 'u8[512]{0}', space=vmem, size = 0x400, scoped, tag = 'input window, operand 5, single buffered']
    #allocation13 [shape = 's32[1]{0}', space=sflag, size = 0x4, scoped, tag = 'scoped memory for upconv_forward.7']
    #allocation14 [shape = 'u8[131072]{0}', space=vmem, size = 0x20000, scoped, tag = 'output window, operand 0']
    %11 = vsyncpa [#allocation4], 0
    %s12 = scalar_lea.sflag [#allocation4], 1
    %13 = vsyncpa %s12, 0
    %14 = vsyncpa [#allocation7], 0
    %s15 = scalar_lea.sflag [#allocation7], 1
    %16 = vsyncpa %s15, 0
    %17 = vsyncpa [#allocation10], 0
    %18 = vsyncpa [#allocation13], 0
    %19 = vsyncpa [#allocation5], 0
    %s20 = scalar_lea.sflag [#allocation5], 1
    %21 = vsyncpa %s20, 0
    loop: start=0, step=1, limit=6
    $region2: #{upconv_forward.7} parent=1 // loop_pre_header
      _
    $region3: #{upconv_forward.7} parent=1 // loop_header
      %s23 = sphi 0, %s27
      %p24 = scmp.ge.s32.totalorder %s23, 6
      %s30 = sphi 0, %s49
      %s31 = sphi 0, %s45
      %s32 = sphi 0, %s41
      %s33 = sphi 0, %s30
      %s34 = sphi 0, %s31
      %s35 = sphi 0, %s32
      %s36 = sphi 0, %s33
      %s37 = sphi 0, %s34
      %s38 = sphi 0, %s35
      %s54 = sphi 0, %s56
      %s57 = sphi 0, %s54
      %s58 = sphi 0, %s57
      %s74 = sphi 0, %s58
      %s90 = sphi 0, %s92
      %s93 = sphi 0, %s90
      %s94 = sphi 0, %s93
      %s110 = sphi 0, %s94
      %s126 = sphi 0, %s128
      %s129 = sphi 0, %s126
      %s130 = sphi 0, %s129
      %s146 = sphi 0, %s130
      %s152 = sphi 0, %s154
      %s155 = sphi 0, %s152
      %s156 = sphi 0, %s155
      %s172 = sphi 0, %s156
      %s178 = sphi 0, %s180
      %s181 = sphi 0, %s178
      %s182 = sphi 0, %s181
      %s198 = sphi 0, %s182
      %s204 = sphi 0, %s206
      %s207 = sphi 0, %s204
      %s208 = sphi 0, %s207
      %s224 = sphi 0, %s208
      %s234 = sphi 0, %s236
      %s237 = sphi 0, %s234
      %s238 = sphi 0, %s237
      %s254 = sphi 0, %s238
    $region4: #{upconv_forward.7} parent=1 // loop_header_branch
      %26 = sbr.rel (%p24) target = $region8
    $region5: #{upconv_forward.7} parent=1 // loop_body
      %s28 = ssub.s32 %s23, 1
      %s29 = ssub.s32 %s23, 2
      %s39 = sadd.s32 1, %s32
      %p40 = scmp.ge.s32.totalorder %s39, 1
      %s41 = scalar_select %p40, 0, %s39
      %s42 = sadd.s32 1, %s31
      %s43 = scalar_select %p40, %s42, %s31
      %p44 = scmp.ge.s32.totalorder %s43, 2
      %s45 = scalar_select %p44, 0, %s43
      %s46 = sadd.s32 1, %s30
      %s47 = scalar_select %p44, %s46, %s30
      %p48 = scmp.ge.s32.totalorder %s47, 2
      %s49 = scalar_select %p48, 0, %s47
      %s50 = ssub.s32 %s30, %s49
      %s51 = ssub.s32 %s31, %s45
      %s52 = sor.u32 %s50, %s51
      %p53 = scmp.eq.s32.totalorder %s52, 0
      %s55 = sadd.s32 %s54, 1
      %s56 = scalar_select %p53, %s54, %s55
      %p59 = pneg %p53
      %p60 = scmp.eq.s32.totalorder %s23, 3
      %p61 = por %p59, %p60
      %p62 = scmp.ne.s32.totalorder %s54, %s57
      %p63 = scmp.eq.s32.totalorder %s23, 0
      %p64 = por %p62, %p63
      %p65 = scmp.ne.s32.totalorder %s54, %s57
      %p66 = scmp.eq.s32.totalorder %s28, 3
      %p67 = por %p65, %p66
      %p68 = scmp.ne.s32.totalorder %s57, %s58
      %p69 = scmp.eq.s32.totalorder %s28, 0
      %p70 = por %p68, %p69
      %p71 = scmp.ne.s32.totalorder %s57, %s58
      %p72 = scmp.eq.s32.totalorder %s29, 3
      %p73 = por %p71, %p72
      %p75 = scmp.ne.s32.totalorder %s58, %s74
      %p76 = scmp.eq.s32.totalorder %s29, 0
      %p77 = por %p75, %p76
      %s78 = smul.u32 %s31, 8
      %s79 = ssub.s32 %s78, 1
      %p80 = scmp.gt.s32.totalorder %s79, 0
      %s81 = scalar_select %p80, %s79, 0
      %s82 = smul.u32 %s45, 8
      %s83 = ssub.s32 %s82, 1
      %p84 = scmp.gt.s32.totalorder %s83, 0
      %s85 = scalar_select %p84, %s83, 0
      %s86 = ssub.s32 %s30, %s49
      %s87 = ssub.s32 %s81, %s85
      %s88 = sor.u32 %s86, %s87
      %p89 = scmp.eq.s32.totalorder %s88, 0
      %s91 = sadd.s32 %s90, 1
      %s92 = scalar_select %p89, %s90, %s91
      %p95 = pneg %p89
      %p96 = scmp.eq.s32.totalorder %s23, 3
      %p97 = por %p95, %p96
      %p98 = scmp.ne.s32.totalorder %s90, %s93
      %p99 = scmp.eq.s32.totalorder %s23, 0
      %p100 = por %p98, %p99
      %p101 = scmp.ne.s32.totalorder %s90, %s93
      %p102 = scmp.eq.s32.totalorder %s28, 3
      %p103 = por %p101, %p102
      %p104 = scmp.ne.s32.totalorder %s93, %s94
      %p105 = scmp.eq.s32.totalorder %s28, 0
      %p106 = por %p104, %p105
      %p107 = scmp.ne.s32.totalorder %s93, %s94
      %p108 = scmp.eq.s32.totalorder %s29, 3
      %p109 = por %p107, %p108
      %p111 = scmp.ne.s32.totalorder %s94, %s110
      %p112 = scmp.eq.s32.totalorder %s29, 0
      %p113 = por %p111, %p112
      %s114 = sadd.s32 %s31, 1
      %s115 = smul.u32 %s114, 8
      %p116 = scmp.lt.s32.totalorder %s115, 15
      %s117 = scalar_select %p116, %s115, 15
      %s118 = sadd.s32 %s45, 1
      %s119 = smul.u32 %s118, 8
      %p120 = scmp.lt.s32.totalorder %s119, 15
      %s121 = scalar_select %p120, %s119, 15
      %s122 = ssub.s32 %s30, %s49
      %s123 = ssub.s32 %s117, %s121
      %s124 = sor.u32 %s122, %s123
      %p125 = scmp.eq.s32.totalorder %s124, 0
      %s127 = sadd.s32 %s126, 1
      %s128 = scalar_select %p125, %s126, %s127
      %p131 = pneg %p125
      %p132 = scmp.eq.s32.totalorder %s23, 3
      %p133 = por %p131, %p132
      %p134 = scmp.ne.s32.totalorder %s126, %s129
      %p135 = scmp.eq.s32.totalorder %s23, 0
      %p136 = por %p134, %p135
      %p137 = scmp.ne.s32.totalorder %s126, %s129
      %p138 = scmp.eq.s32.totalorder %s28, 3
      %p139 = por %p137, %p138
      %p140 = scmp.ne.s32.totalorder %s129, %s130
      %p141 = scmp.eq.s32.totalorder %s28, 0
      %p142 = por %p140, %p141
      %p143 = scmp.ne.s32.totalorder %s129, %s130
      %p144 = scmp.eq.s32.totalorder %s29, 3
      %p145 = por %p143, %p144
      %p147 = scmp.ne.s32.totalorder %s130, %s146
      %p148 = scmp.eq.s32.totalorder %s29, 0
      %p149 = por %p147, %p148
      %s150 = ssub.s32 %s32, %s41
      %p151 = scmp.eq.s32.totalorder %s150, 0
      %s153 = sadd.s32 %s152, 1
      %s154 = scalar_select %p151, %s152, %s153
      %p157 = pneg %p151
      %p158 = scmp.eq.s32.totalorder %s23, 3
      %p159 = por %p157, %p158
      %p160 = scmp.ne.s32.totalorder %s152, %s155
      %p161 = scmp.eq.s32.totalorder %s23, 0
      %p162 = por %p160, %p161
      %p163 = scmp.ne.s32.totalorder %s152, %s155
      %p164 = scmp.eq.s32.totalorder %s28, 3
      %p165 = por %p163, %p164
      %p166 = scmp.ne.s32.totalorder %s155, %s156
      %p167 = scmp.eq.s32.totalorder %s28, 0
      %p168 = por %p166, %p167
      %p169 = scmp.ne.s32.totalorder %s155, %s156
      %p170 = scmp.eq.s32.totalorder %s29, 3
      %p171 = por %p169, %p170
      %p173 = scmp.ne.s32.totalorder %s156, %s172
      %p174 = scmp.eq.s32.totalorder %s29, 0
      %p175 = por %p173, %p174
      %s176 = ssub.s32 %s32, %s41
      %p177 = scmp.eq.s32.totalorder %s176, 0
      %s179 = sadd.s32 %s178, 1
      %s180 = scalar_select %p177, %s178, %s179
      %p183 = pneg %p177
      %p184 = scmp.eq.s32.totalorder %s23, 3
      %p185 = por %p183, %p184
      %p186 = scmp.ne.s32.totalorder %s178, %s181
      %p187 = scmp.eq.s32.totalorder %s23, 0
      %p188 = por %p186, %p187
      %p189 = scmp.ne.s32.totalorder %s178, %s181
      %p190 = scmp.eq.s32.totalorder %s28, 3
      %p191 = por %p189, %p190
      %p192 = scmp.ne.s32.totalorder %s181, %s182
      %p193 = scmp.eq.s32.totalorder %s28, 0
      %p194 = por %p192, %p193
      %p195 = scmp.ne.s32.totalorder %s181, %s182
      %p196 = scmp.eq.s32.totalorder %s29, 3
      %p197 = por %p195, %p196
      %p199 = scmp.ne.s32.totalorder %s182, %s198
      %p200 = scmp.eq.s32.totalorder %s29, 0
      %p201 = por %p199, %p200
      %s202 = ssub.s32 %s32, %s41
      %p203 = scmp.eq.s32.totalorder %s202, 0
      %s205 = sadd.s32 %s204, 1
      %s206 = scalar_select %p203, %s204, %s205
      %p209 = pneg %p203
      %p210 = scmp.eq.s32.totalorder %s23, 3
      %p211 = por %p209, %p210
      %p212 = scmp.ne.s32.totalorder %s204, %s207
      %p213 = scmp.eq.s32.totalorder %s23, 0
      %p214 = por %p212, %p213
      %p215 = scmp.ne.s32.totalorder %s204, %s207
      %p216 = scmp.eq.s32.totalorder %s28, 3
      %p217 = por %p215, %p216
      %p218 = scmp.ne.s32.totalorder %s207, %s208
      %p219 = scmp.eq.s32.totalorder %s28, 0
      %p220 = por %p218, %p219
      %p221 = scmp.ne.s32.totalorder %s207, %s208
      %p222 = scmp.eq.s32.totalorder %s29, 3
      %p223 = por %p221, %p222
      %p225 = scmp.ne.s32.totalorder %s208, %s224
      %p226 = scmp.eq.s32.totalorder %s29, 0
      %p227 = por %p225, %p226
      %s228 = ssub.s32 %s30, %s49
      %s229 = ssub.s32 %s31, %s45
      %s230 = sor.u32 %s228, %s229
      %s231 = ssub.s32 %s32, %s41
      %s232 = sor.u32 %s230, %s231
      %p233 = scmp.eq.s32.totalorder %s232, 0
      %s235 = sadd.s32 %s234, 1
      %s236 = scalar_select %p233, %s234, %s235
      %p239 = pneg %p233
      %p240 = scmp.eq.s32.totalorder %s23, 3
      %p241 = por %p239, %p240
      %p242 = scmp.ne.s32.totalorder %s234, %s237
      %p243 = scmp.eq.s32.totalorder %s23, 0
      %p244 = por %p242, %p243
      %p245 = scmp.ne.s32.totalorder %s234, %s237
      %p246 = scmp.eq.s32.totalorder %s28, 3
      %p247 = por %p245, %p246
      %p248 = scmp.ne.s32.totalorder %s237, %s238
      %p249 = scmp.eq.s32.totalorder %s28, 0
      %p250 = por %p248, %p249
      %p251 = scmp.ne.s32.totalorder %s237, %s238
      %p252 = scmp.eq.s32.totalorder %s29, 3
      %p253 = por %p251, %p252
      %p255 = scmp.ne.s32.totalorder %s238, %s254
      %p256 = scmp.eq.s32.totalorder %s29, 0
      %p257 = por %p255, %p256
      %p258 = scmp.le.s32.totalorder 1, %s23
      %p259 = scmp.lt.s32.totalorder %s23, 5
      %p260 = pnand %p258, %p259
      %p261 = pneg %p260
      // Predicated region
      $region9: #{upconv_forward.7} parent=5 // pred_check
        _
      $region10: #{upconv_forward.7} parent=5 // pred_check_branch
        %263 = sbr.rel (%p260) target = $region12
      $region11: #{upconv_forward.7} parent=5 // pred_region
        %s264 = ssub.s32 %s23, 1
        // Predicated region
        $region13: #{upconv_forward.7} parent=11 // pred_check
          %p265 = pneg %p168
        $region14: #{upconv_forward.7} parent=11 // pred_check_branch
          %267 = sbr.rel (%p265) target = $region16
        $region15: #{upconv_forward.7} parent=11 // pred_region
          %s269 = ssub.s32 384, 384
          %270 = vsyncadd [#allocation10], %s269
          %s271 = smul.addr %s35, 64
          %s272 = scalar_lea.hbm %s3, %s271
          %s273 = sshll.u32 [#allocation9], 4
          %s274 = int_to_ptr.vmem [resolvable:$true] %s273
          %279 = dma.hbm_to_vmem [thread:$0]  %s272, 384, %s274, [#allocation10], 64, 64, 4
        $region16: #{upconv_forward.7} parent=11 // pred_fallthru
          _
        // Predicated region
        $region17: #{upconv_forward.7} parent=11 // pred_check
          %p280 = pneg %p194
        $region18: #{upconv_forward.7} parent=11 // pred_check_branch
          %282 = sbr.rel (%p280) target = $region20
        $region19: #{upconv_forward.7} parent=11 // pred_region
          %s284 = ssub.s32 16, 16
          %285 = vsyncadd [#allocation10], %s284
          %s286 = smul.addr %s35, 16
          %s287 = scalar_lea.hbm %s4, %s286
          %s289 = sshll.u32 [#allocation11], 4
          %s290 = int_to_ptr.vmem [resolvable:$true] %s289
          %292 = dma.hbm_to_vmem [thread:$0]  %s287, 16, %s290, [#allocation10]
        $region20: #{upconv_forward.7} parent=11 // pred_fallthru
          _
        // Predicated region
        $region21: #{upconv_forward.7} parent=11 // pred_check
          %p293 = pneg %p220
        $region22: #{upconv_forward.7} parent=11 // pred_check_branch
          %295 = sbr.rel (%p293) target = $region24
        $region23: #{upconv_forward.7} parent=11 // pred_region
          %s297 = ssub.s32 16, 16
          %298 = vsyncadd [#allocation13], %s297
          %s299 = smul.addr %s35, 16
          %s300 = scalar_lea.hbm %s5, %s299
          %s302 = sshll.u32 [#allocation12], 4
          %s303 = int_to_ptr.vmem [resolvable:$true] %s302
          %305 = dma.hbm_to_vmem [thread:$0]  %s300, 16, %s303, [#allocation13]
        $region24: #{upconv_forward.7} parent=11 // pred_fallthru
          _
      $region12: #{upconv_forward.7} parent=5 // pred_fallthru
        _
      %p306 = scmp.lt.s32.totalorder %s23, 4
      // Predicated region
      $region25: #{upconv_forward.7} parent=5 // pred_check
        %p307 = pneg %p306
      $region26: #{upconv_forward.7} parent=5 // pred_check_branch
        %309 = sbr.rel (%p307) target = $region28
      $region27: #{upconv_forward.7} parent=5 // pred_region
        // Predicated region
        $region29: #{upconv_forward.7} parent=27 // pred_check
          %p310 = pneg %p64
        $region30: #{upconv_forward.7} parent=27 // pred_check_branch
          %312 = sbr.rel (%p310) target = $region32
        $region31: #{upconv_forward.7} parent=27 // pred_region
          %s313 = sand.u32 %s54, 1
          %s314 = scalar_lea.sflag [#allocation4], %s313
          %s315 = sand.u32 %s54, 1
          %s316 = smul.addr %s315, 64
          %s317 = scalar_lea.vmem [#allocation3], %s316
          %s318 = smul.u32 8, %s31
          %s320 = ssub.s32 1024, 1024
          %321 = vsyncadd %s314, %s320
          %s322 = smul.addr %s318, 2
          %s323 = smul.addr %s30, 32
          %s324 = sadd.s32 %s322, %s323
          %s325 = smul.addr %s324, 64
          %s326 = scalar_lea.hbm %s0, %s325
          %s327 = sshll.u32 %s317, 4
          %s328 = int_to_ptr.vmem [resolvable:$true] %s327
          %333 = dma.hbm_to_vmem [thread:$0]  %s326, 1024, %s328, %s314, 64, 64, 4
        $region32: #{upconv_forward.7} parent=27 // pred_fallthru
          _
        // Predicated region
        $region33: #{upconv_forward.7} parent=27 // pred_check
          %p334 = pneg %p100
        $region34: #{upconv_forward.7} parent=27 // pred_check_branch
          %336 = sbr.rel (%p334) target = $region36
        $region35: #{upconv_forward.7} parent=27 // pred_region
          %s337 = sand.u32 %s23, 1
          %s338 = scalar_lea.sflag [#allocation7], %s337
          %s339 = sand.u32 %s90, 1
          %s340 = smul.addr %s339, 8
          %s341 = scalar_lea.vmem [#allocation6], %s340
          %s342 = smul.u32 %s31, 8
          %s343 = ssub.s32 %s342, 1
          %p344 = scmp.gt.s32.totalorder %s343, 0
          %s345 = scalar_select %p344, %s343, 0
          %s347 = ssub.s32 128, 128
          %348 = vsyncadd %s338, %s347
          %s349 = smul.addr %s345, 2
          %s350 = smul.addr %s30, 32
          %s351 = sadd.s32 %s349, %s350
          %s352 = smul.addr %s351, 64
          %s353 = scalar_lea.hbm %s1, %s352
          %s354 = sshll.u32 %s341, 4
          %s355 = int_to_ptr.vmem [resolvable:$true] %s354
          %360 = dma.hbm_to_vmem [thread:$0]  %s353, 128, %s355, %s338, 64, 64, 4
        $region36: #{upconv_forward.7} parent=27 // pred_fallthru
          _
        // Predicated region
        $region37: #{upconv_forward.7} parent=27 // pred_check
          %p361 = pneg %p136
        $region38: #{upconv_forward.7} parent=27 // pred_check_branch
          %363 = sbr.rel (%p361) target = $region40
        $region39: #{upconv_forward.7} parent=27 // pred_region
          %s364 = sand.u32 %s23, 1
          %s365 = scalar_lea.sflag [#allocation7], %s364
          %s366 = sand.u32 %s126, 1
          %s367 = smul.addr %s366, 8
          %s368 = scalar_lea.vmem [#allocation8], %s367
          %s369 = sadd.s32 %s31, 1
          %s370 = smul.u32 %s369, 8
          %p371 = scmp.lt.s32.totalorder %s370, 15
          %s372 = scalar_select %p371, %s370, 15
          %s374 = ssub.s32 128, 128
          %375 = vsyncadd %s365, %s374
          %s376 = smul.addr %s372, 2
          %s377 = smul.addr %s30, 32
          %s378 = sadd.s32 %s376, %s377
          %s379 = smul.addr %s378, 64
          %s380 = scalar_lea.hbm %s2, %s379
          %s381 = sshll.u32 %s368, 4
          %s382 = int_to_ptr.vmem [resolvable:$true] %s381
          %387 = dma.hbm_to_vmem [thread:$0]  %s380, 128, %s382, %s365, 64, 64, 4
        $region40: #{upconv_forward.7} parent=27 // pred_fallthru
          _
      $region28: #{upconv_forward.7} parent=5 // pred_fallthru
        _
      %p388 = scmp.le.s32.totalorder 1, %s23
      %p389 = scmp.lt.s32.totalorder %s23, 5
      %p390 = pnand %p388, %p389
      %p391 = pneg %p390
      // Predicated region
      $region41: #{upconv_forward.7} parent=5 // pred_check
        _
      $region42: #{upconv_forward.7} parent=5 // pred_check_branch
        %393 = sbr.rel (%p390) target = $region44
      $region43: #{upconv_forward.7} parent=5 // pred_region
        %s394 = ssub.s32 %s23, 1
        %s395 = sand.u32 %s57, 1
        %s396 = scalar_lea.sflag [#allocation4], %s395
        %s397 = sand.u32 %s57, 1
        %s398 = smul.addr %s397, 64
        %s399 = scalar_lea.vmem [#allocation3], %s398
        // Predicated region
        $region45: #{upconv_forward.7} parent=43 // pred_check
          %p400 = pneg %p70
        $region46: #{upconv_forward.7} parent=43 // pred_check_branch
          %402 = sbr.rel (%p400) target = $region48
        $region47: #{upconv_forward.7} parent=43 // pred_region
          %403 = dma.done %s396, 1024
        $region48: #{upconv_forward.7} parent=43 // pred_fallthru
          _
        %s404 = sand.u32 %s28, 1
        %s405 = scalar_lea.sflag [#allocation7], %s404
        %s406 = sand.u32 %s93, 1
        %s407 = smul.addr %s406, 8
        %s408 = scalar_lea.vmem [#allocation6], %s407
        // Predicated region
        $region49: #{upconv_forward.7} parent=43 // pred_check
          %p409 = pneg %p106
        $region50: #{upconv_forward.7} parent=43 // pred_check_branch
          %411 = sbr.rel (%p409) target = $region52
        $region51: #{upconv_forward.7} parent=43 // pred_region
          %412 = dma.done %s405, 128
        $region52: #{upconv_forward.7} parent=43 // pred_fallthru
          _
        %s413 = sand.u32 %s28, 1
        %s414 = scalar_lea.sflag [#allocation7], %s413
        %s415 = sand.u32 %s129, 1
        %s416 = smul.addr %s415, 8
        %s417 = scalar_lea.vmem [#allocation8], %s416
        // Predicated region
        $region53: #{upconv_forward.7} parent=43 // pred_check
          %p418 = pneg %p142
        $region54: #{upconv_forward.7} parent=43 // pred_check_branch
          %420 = sbr.rel (%p418) target = $region56
        $region55: #{upconv_forward.7} parent=43 // pred_region
          %421 = dma.done %s414, 128
        $region56: #{upconv_forward.7} parent=43 // pred_fallthru
          _
        // Predicated region
        $region57: #{upconv_forward.7} parent=43 // pred_check
          %p422 = pneg %p168
        $region58: #{upconv_forward.7} parent=43 // pred_check_branch
          %424 = sbr.rel (%p422) target = $region60
        $region59: #{upconv_forward.7} parent=43 // pred_region
          %425 = dma.done [#allocation10], 384
        $region60: #{upconv_forward.7} parent=43 // pred_fallthru
          _
        // Predicated region
        $region61: #{upconv_forward.7} parent=43 // pred_check
          %p426 = pneg %p194
        $region62: #{upconv_forward.7} parent=43 // pred_check_branch
          %428 = sbr.rel (%p426) target = $region64
        $region63: #{upconv_forward.7} parent=43 // pred_region
          %429 = dma.done [#allocation10], 16
        $region64: #{upconv_forward.7} parent=43 // pred_fallthru
          _
        // Predicated region
        $region65: #{upconv_forward.7} parent=43 // pred_check
          %p430 = pneg %p220
        $region66: #{upconv_forward.7} parent=43 // pred_check_branch
          %432 = sbr.rel (%p430) target = $region68
        $region67: #{upconv_forward.7} parent=43 // pred_region
          %433 = dma.done [#allocation13], 16
        $region68: #{upconv_forward.7} parent=43 // pred_fallthru
          _
        %s434 = sand.u32 %s57, 1
        %s435 = scalar_lea.sflag [#allocation4], %s434
        %s436 = sand.u32 %s57, 1
        %s437 = smul.addr %s436, 64
        %s438 = scalar_lea.vmem [#allocation3], %s437
        %p439 = pneg %p70
        %p440 = pneg %p67
        %s441 = sand.u32 %s28, 1
        %s442 = scalar_lea.sflag [#allocation7], %s441
        %s443 = sand.u32 %s93, 1
        %s444 = smul.addr %s443, 8
        %s445 = scalar_lea.vmem [#allocation6], %s444
        %p446 = pneg %p106
        %p447 = pneg %p103
        %s448 = sand.u32 %s28, 1
        %s449 = scalar_lea.sflag [#allocation7], %s448
        %s450 = sand.u32 %s129, 1
        %s451 = smul.addr %s450, 8
        %s452 = scalar_lea.vmem [#allocation8], %s451
        %p453 = pneg %p142
        %p454 = pneg %p139
        %p455 = pneg %p168
        %p456 = pneg %p165
        %p457 = pneg %p194
        %p458 = pneg %p191
        %p459 = pneg %p220
        %p460 = pneg %p217
        %p461 = pneg %p250
        %p462 = pneg %p247
        %s463 = sand.u32 %s237, 1
        %s464 = scalar_lea.sflag [#allocation5], %s463
        %s465 = sand.u32 %s237, 1
        %s466 = smul.addr %s465, 128
        %s467 = scalar_lea.vmem [#allocation14], %s466
        %s468 = smul.u32 8, %s34
        %s469 = smul.u32 %s34, 8
        %s470 = ssub.s32 %s469, 1
        %p471 = scmp.gt.s32.totalorder %s470, 0
        %s472 = scalar_select %p471, %s470, 0
        %s473 = sadd.s32 %s34, 1
        %s474 = smul.u32 %s473, 8
        %p475 = scmp.lt.s32.totalorder %s474, 15
        %s476 = scalar_select %p475, %s474, 15
        %s477 = smul.u32 8, %s34
        %p479 = scmp.eq.s32.totalorder %s35, 0
        // Predicated region
        $region69: #{upconv_forward.7} parent=43 // pred_check
          %p480 = pneg %p479
        $region70: #{upconv_forward.7} parent=43 // pred_check_branch
          %482 = sbr.rel (%p480) target = $region72
        $region71: #{upconv_forward.7} parent=43 // pred_region
          %v483 = vld [vmem:[%s399] sm:$0xf]
          %v484 = vld [vmem:[%s399 + $0x4] sm:$0xf]
          %v485 = vld [vmem:[%s399 + $0x8] sm:$0xf]
          %v486 = vld [vmem:[%s399 + $0xc] sm:$0xf]
          %v487 = vld [vmem:[%s399 + $0x10] sm:$0xf]
          %v488 = vld [vmem:[%s399 + $0x14] sm:$0xf]
          %v489 = vld [vmem:[%s399 + $0x18] sm:$0xf]
          %v490 = vld [vmem:[%s399 + $0x1c] sm:$0xf]
          %v491 = vld [vmem:[%s399 + $0x20] sm:$0xf]
          %v492 = vld [vmem:[%s399 + $0x24] sm:$0xf]
          %v493 = vld [vmem:[%s399 + $0x28] sm:$0xf]
          %v494 = vld [vmem:[%s399 + $0x2c] sm:$0xf]
          %v495 = vld [vmem:[%s399 + $0x30] sm:$0xf]
          %v496 = vld [vmem:[%s399 + $0x34] sm:$0xf]
          %v497 = vld [vmem:[%s399 + $0x38] sm:$0xf]
          %v498 = vld [vmem:[%s399 + $0x3c] sm:$0xf]
          %p499 = scmp.gt.s32.totalorder %s34, 0
          %v500 = vld [vmem:[%s408] sm:$0xf]
          %v501 = vld [vmem:[%s408 + $0x4] sm:$0xf]
          %s502 = scalar_select %p499, 1, 0
          %v503 = vstv %s502
          %vm504 = vcmp.eq.s32.totalorder %v503, 1
          %v505 = vsel %vm504, %v500, 0
          %v506 = vsel %vm504, %v501, 0
          %p507 = scmp.lt.s32.totalorder %s34, 1
          %v508 = vld [vmem:[%s417] sm:$0xf]
          %v509 = vld [vmem:[%s417 + $0x4] sm:$0xf]
          %s510 = scalar_select %p507, 1, 0
          %v511 = vstv %s510
          %vm512 = vcmp.eq.s32.totalorder %v511, 1
          %v513 = vsel %vm512, %v508, 0
          %v514 = vsel %vm512, %v509, 0
          %vm515 = vsmask.f32 256
          %vm516 = vsmask.f32 4368
          %vm517 = vmor %vm515, %vm516
          %v519 = vshrl.u32 %v505, 16
          %v521 = vrot.slane %v519, 7
          %v522 = vshll.u32 %v505, 16
          %v524 = vor.u32 %v521, %v522
          %v525 = vrot.slane %v521, 4
          %v527 = vshrl.u32 %v506, 16
          %v529 = vrot.slane %v527, 7
          %v530 = vshll.u32 %v506, 16
          %v532 = vor.u32 %v529, %v530
          %v533 = vsel %vm517, %v525, %v532
          %v534 = vrot.slane %v529, 4
          %vm538 = vcmask 27648
          %vm539 = vsmask.f32 7938
          %vm540 = vmand %vm538, %vm539
          %v541 = vld [vmem:[#allocation2] sm:$0xf]
          %v542 = vsel %vm540, %v524, %v541
          %543 = vst [vmem:[#allocation2] sm:$0xf] %v542
          %vm544 = vcmask 27648
          %545 = vst.msk [vmem:[#allocation2 + $0x4] sm:$0xf] %vm544, %v533
          %vm546 = vcmask 24576
          %vm547 = vmand %vm546, %vm515
          %v548 = vld [vmem:[#allocation2 + $0x8] sm:$0x1]
          %v549 = vsel %vm547, %v534, %v548
          %550 = vst [vmem:[#allocation2 + $0x8] sm:$0x1] %v549
          %v552 = vshrl.u32 %v483, 16
          %v554 = vrot.slane %v552, 7
          %v555 = vshll.u32 %v483, 16
          %v557 = vor.u32 %v554, %v555
          %v558 = vrot.slane %v554, 4
          %v560 = vshrl.u32 %v484, 16
          %v562 = vrot.slane %v560, 7
          %v563 = vshll.u32 %v484, 16
          %v565 = vor.u32 %v562, %v563
          %v566 = vsel %vm517, %v558, %v565
          %v567 = vrot.slane %v562, 4
          %v569 = vshrl.u32 %v485, 16
          %v571 = vrot.slane %v569, 7
          %v572 = vshll.u32 %v485, 16
          %v574 = vor.u32 %v571, %v572
          %v575 = vrot.slane %v571, 4
          %v577 = vshrl.u32 %v486, 16
          %v579 = vrot.slane %v577, 7
          %v580 = vshll.u32 %v486, 16
          %v582 = vor.u32 %v579, %v580
          %v583 = vsel %vm517, %v575, %v582
          %v584 = vrot.slane %v579, 4
          %v586 = vshrl.u32 %v487, 16
          %v588 = vrot.slane %v586, 7
          %v589 = vshll.u32 %v487, 16
          %v591 = vor.u32 %v588, %v589
          %v592 = vrot.slane %v588, 4
          %v594 = vshrl.u32 %v488, 16
          %v596 = vrot.slane %v594, 7
          %v597 = vshll.u32 %v488, 16
          %v599 = vor.u32 %v596, %v597
          %v600 = vsel %vm517, %v592, %v599
          %v601 = vrot.slane %v596, 4
          %v603 = vshrl.u32 %v489, 16
          %v605 = vrot.slane %v603, 7
          %v606 = vshll.u32 %v489, 16
          %v608 = vor.u32 %v605, %v606
          %v609 = vrot.slane %v605, 4
          %v611 = vshrl.u32 %v490, 16
          %v613 = vrot.slane %v611, 7
          %v614 = vshll.u32 %v490, 16
          %v616 = vor.u32 %v613, %v614
          %v617 = vsel %vm517, %v609, %v616
          %v618 = vrot.slane %v613, 4
          %v620 = vshrl.u32 %v491, 16
          %v622 = vrot.slane %v620, 7
          %v623 = vshll.u32 %v491, 16
          %v625 = vor.u32 %v622, %v623
          %v626 = vrot.slane %v622, 4
          %v628 = vshrl.u32 %v492, 16
          %v630 = vrot.slane %v628, 7
          %v631 = vshll.u32 %v492, 16
          %v633 = vor.u32 %v630, %v631
          %v634 = vsel %vm517, %v626, %v633
          %v635 = vrot.slane %v630, 4
          %v637 = vshrl.u32 %v493, 16
          %v639 = vrot.slane %v637, 7
          %v640 = vshll.u32 %v493, 16
          %v642 = vor.u32 %v639, %v640
          %v643 = vrot.slane %v639, 4
          %v645 = vshrl.u32 %v494, 16
          %v647 = vrot.slane %v645, 7
          %v648 = vshll.u32 %v494, 16
          %v650 = vor.u32 %v647, %v648
          %v651 = vsel %vm517, %v643, %v650
          %v652 = vrot.slane %v647, 4
          %v654 = vshrl.u32 %v495, 16
          %v656 = vrot.slane %v654, 7
          %v657 = vshll.u32 %v495, 16
          %v659 = vor.u32 %v656, %v657
          %v660 = vrot.slane %v656, 4
          %v662 = vshrl.u32 %v496, 16
          %v664 = vrot.slane %v662, 7
          %v665 = vshll.u32 %v496, 16
          %v667 = vor.u32 %v664, %v665
          %v668 = vsel %vm517, %v660, %v667
          %v669 = vrot.slane %v664, 4
          %v671 = vshrl.u32 %v497, 16
          %v673 = vrot.slane %v671, 7
          %v674 = vshll.u32 %v497, 16
          %v676 = vor.u32 %v673, %v674
          %v677 = vrot.slane %v673, 4
          %v679 = vshrl.u32 %v498, 16
          %v681 = vrot.slane %v679, 7
          %v682 = vshll.u32 %v498, 16
          %v684 = vor.u32 %v681, %v682
          %v685 = vsel %vm517, %v677, %v684
          %v686 = vrot.slane %v681, 4
          %s711 = scalar_lea.vmem [#allocation2], 12
          %v712 = vld [vmem:[%s711] sm:$0xf]
          %v713 = vsel %vm540, %v557, %v712
          %714 = vst [vmem:[%s711] sm:$0xf] %v713
          %715 = vst.msk [vmem:[%s711 + $0x4] sm:$0xf] %vm544, %v566
          %v716 = vld [vmem:[%s711 + $0x8] sm:$0x1]
          %v717 = vsel %vm547, %v567, %v716
          %718 = vst [vmem:[%s711 + $0x8] sm:$0x1] %v717
          %v719 = vld [vmem:[%s711 + $0xc] sm:$0xf]
          %v720 = vsel %vm540, %v574, %v719
          %721 = vst [vmem:[%s711 + $0xc] sm:$0xf] %v720
          %722 = vst.msk [vmem:[%s711 + $0x10] sm:$0xf] %vm544, %v583
          %v723 = vld [vmem:[%s711 + $0x14] sm:$0x1]
          %v724 = vsel %vm547, %v584, %v723
          %725 = vst [vmem:[%s711 + $0x14] sm:$0x1] %v724
          %v726 = vld [vmem:[%s711 + $0x18] sm:$0xf]
          %v727 = vsel %vm540, %v591, %v726
          %728 = vst [vmem:[%s711 + $0x18] sm:$0xf] %v727
          %729 = vst.msk [vmem:[%s711 + $0x1c] sm:$0xf] %vm544, %v600
          %v730 = vld [vmem:[%s711 + $0x20] sm:$0x1]
          %v731 = vsel %vm547, %v601, %v730
          %732 = vst [vmem:[%s711 + $0x20] sm:$0x1] %v731
          %v733 = vld [vmem:[%s711 + $0x24] sm:$0xf]
          %v734 = vsel %vm540, %v608, %v733
          %735 = vst [vmem:[%s711 + $0x24] sm:$0xf] %v734
          %736 = vst.msk [vmem:[%s711 + $0x28] sm:$0xf] %vm544, %v617
          %v737 = vld [vmem:[%s711 + $0x2c] sm:$0x1]
          %v738 = vsel %vm547, %v618, %v737
          %739 = vst [vmem:[%s711 + $0x2c] sm:$0x1] %v738
          %v740 = vld [vmem:[%s711 + $0x30] sm:$0xf]
          %v741 = vsel %vm540, %v625, %v740
          %742 = vst [vmem:[%s711 + $0x30] sm:$0xf] %v741
          %743 = vst.msk [vmem:[%s711 + $0x34] sm:$0xf] %vm544, %v634
          %v744 = vld [vmem:[%s711 + $0x38] sm:$0x1]
          %v745 = vsel %vm547, %v635, %v744
          %746 = vst [vmem:[%s711 + $0x38] sm:$0x1] %v745
          %v747 = vld [vmem:[%s711 + $0x3c] sm:$0xf]
          %v748 = vsel %vm540, %v642, %v747
          %749 = vst [vmem:[%s711 + $0x3c] sm:$0xf] %v748
          %750 = vst.msk [vmem:[%s711 + $0x40] sm:$0xf] %vm544, %v651
          %v751 = vld [vmem:[%s711 + $0x44] sm:$0x1]
          %v752 = vsel %vm547, %v652, %v751
          %753 = vst [vmem:[%s711 + $0x44] sm:$0x1] %v752
          %v754 = vld [vmem:[%s711 + $0x48] sm:$0xf]
          %v755 = vsel %vm540, %v659, %v754
          %756 = vst [vmem:[%s711 + $0x48] sm:$0xf] %v755
          %757 = vst.msk [vmem:[%s711 + $0x4c] sm:$0xf] %vm544, %v668
          %v758 = vld [vmem:[%s711 + $0x50] sm:$0x1]
          %v759 = vsel %vm547, %v669, %v758
          %760 = vst [vmem:[%s711 + $0x50] sm:$0x1] %v759
          %v761 = vld [vmem:[%s711 + $0x54] sm:$0xf]
          %v762 = vsel %vm540, %v676, %v761
          %763 = vst [vmem:[%s711 + $0x54] sm:$0xf] %v762
          %764 = vst.msk [vmem:[%s711 + $0x58] sm:$0xf] %vm544, %v685
          %v765 = vld [vmem:[%s711 + $0x5c] sm:$0x1]
          %v766 = vsel %vm547, %v686, %v765
          %767 = vst [vmem:[%s711 + $0x5c] sm:$0x1] %v766
          %v769 = vshrl.u32 %v513, 16
          %v771 = vrot.slane %v769, 7
          %v772 = vshll.u32 %v513, 16
          %v774 = vor.u32 %v771, %v772
          %v775 = vrot.slane %v771, 4
          %v777 = vshrl.u32 %v514, 16
          %v779 = vrot.slane %v777, 7
          %v780 = vshll.u32 %v514, 16
          %v782 = vor.u32 %v779, %v780
          %v783 = vsel %vm517, %v775, %v782
          %v784 = vrot.slane %v779, 4
          %s788 = scalar_lea.vmem [#allocation2], 108
          %v789 = vld [vmem:[%s788] sm:$0xf]
          %v790 = vsel %vm540, %v774, %v789
          %791 = vst [vmem:[%s788] sm:$0xf] %v790
          %792 = vst.msk [vmem:[%s788 + $0x4] sm:$0xf] %vm544, %v783
          %v793 = vld [vmem:[%s788 + $0x8] sm:$0x1]
          %v794 = vsel %vm547, %v784, %v793
          %795 = vst [vmem:[%s788 + $0x8] sm:$0x1] %v794
          %v796 = vld [vmem:[#allocation2] sm:$0x1]
          %v797 = vsel %vm547, 0, %v796
          %798 = vst [vmem:[#allocation2] sm:$0x1] %v797
          %v799 = vld [vmem:[#allocation2 + $0xc] sm:$0x1]
          %v800 = vsel %vm547, 0, %v799
          %801 = vst [vmem:[#allocation2 + $0xc] sm:$0x1] %v800
          %v802 = vld [vmem:[#allocation2 + $0x18] sm:$0x1]
          %v803 = vsel %vm547, 0, %v802
          %804 = vst [vmem:[#allocation2 + $0x18] sm:$0x1] %v803
          %v805 = vld [vmem:[#allocation2 + $0x24] sm:$0x1]
          %v806 = vsel %vm547, 0, %v805
          %807 = vst [vmem:[#allocation2 + $0x24] sm:$0x1] %v806
          %v808 = vld [vmem:[#allocation2 + $0x30] sm:$0x1]
          %v809 = vsel %vm547, 0, %v808
          %810 = vst [vmem:[#allocation2 + $0x30] sm:$0x1] %v809
          %v811 = vld [vmem:[#allocation2 + $0x3c] sm:$0x1]
          %v812 = vsel %vm547, 0, %v811
          %813 = vst [vmem:[#allocation2 + $0x3c] sm:$0x1] %v812
          %v814 = vld [vmem:[#allocation2 + $0x48] sm:$0x1]
          %v815 = vsel %vm547, 0, %v814
          %816 = vst [vmem:[#allocation2 + $0x48] sm:$0x1] %v815
          %v817 = vld [vmem:[#allocation2 + $0x54] sm:$0x1]
          %v818 = vsel %vm547, 0, %v817
          %819 = vst [vmem:[#allocation2 + $0x54] sm:$0x1] %v818
          %v820 = vld [vmem:[#allocation2 + $0x60] sm:$0x1]
          %v821 = vsel %vm547, 0, %v820
          %822 = vst [vmem:[#allocation2 + $0x60] sm:$0x1] %v821
          %v823 = vld [vmem:[#allocation2 + $0x6c] sm:$0x1]
          %v824 = vsel %vm547, 0, %v823
          %825 = vst [vmem:[#allocation2 + $0x6c] sm:$0x1] %v824
          %828 = vrot.lane.b32.xlu0 %v505, 4
          %v829 = vpop.permute.xlu0 %828
          %830 = vrot.lane.b32.xlu0 %v506, 4
          %v831 = vpop.permute.xlu0 %830
          %vm834 = vcmask 60448
          %835 = vst.msk [vmem:[#allocation2] sm:$0xf] %vm834, %v829
          %836 = vst.msk [vmem:[#allocation2 + $0x4] sm:$0xf] %vm834, %v831
          %853 = vrot.lane.b32.xlu0 %v483, 4
          %v854 = vpop.permute.xlu0 %853
          %855 = vrot.lane.b32.xlu0 %v484, 4
          %v856 = vpop.permute.xlu0 %855
          %857 = vrot.lane.b32.xlu0 %v485, 4
          %v858 = vpop.permute.xlu0 %857
          %859 = vrot.lane.b32.xlu0 %v486, 4
          %v860 = vpop.permute.xlu0 %859
          %861 = vrot.lane.b32.xlu0 %v487, 4
          %v862 = vpop.permute.xlu0 %861
          %863 = vrot.lane.b32.xlu0 %v488, 4
          %v864 = vpop.permute.xlu0 %863
          %865 = vrot.lane.b32.xlu0 %v489, 4
          %v866 = vpop.permute.xlu0 %865
          %867 = vrot.lane.b32.xlu0 %v490, 4
          %v868 = vpop.permute.xlu0 %867
          %869 = vrot.lane.b32.xlu0 %v491, 4
          %v870 = vpop.permute.xlu0 %869
          %871 = vrot.lane.b32.xlu0 %v492, 4
          %v872 = vpop.permute.xlu0 %871
          %873 = vrot.lane.b32.xlu0 %v493, 4
          %v874 = vpop.permute.xlu0 %873
          %875 = vrot.lane.b32.xlu0 %v494, 4
          %v876 = vpop.permute.xlu0 %875
          %877 = vrot.lane.b32.xlu0 %v495, 4
          %v878 = vpop.permute.xlu0 %877
          %879 = vrot.lane.b32.xlu0 %v496, 4
          %v880 = vpop.permute.xlu0 %879
          %881 = vrot.lane.b32.xlu0 %v497, 4
          %v882 = vpop.permute.xlu0 %881
          %883 = vrot.lane.b32.xlu0 %v498, 4
          %v884 = vpop.permute.xlu0 %883
          %901 = vst.msk [vmem:[%s711] sm:$0xf] %vm834, %v854
          %902 = vst.msk [vmem:[%s711 + $0x4] sm:$0xf] %vm834, %v856
          %903 = vst.msk [vmem:[%s711 + $0xc] sm:$0xf] %vm834, %v858
          %904 = vst.msk [vmem:[%s711 + $0x10] sm:$0xf] %vm834, %v860
          %905 = vst.msk [vmem:[%s711 + $0x18] sm:$0xf] %vm834, %v862
          %906 = vst.msk [vmem:[%s711 + $0x1c] sm:$0xf] %vm834, %v864
          %907 = vst.msk [vmem:[%s711 + $0x24] sm:$0xf] %vm834, %v866
          %908 = vst.msk [vmem:[%s711 + $0x28] sm:$0xf] %vm834, %v868
          %909 = vst.msk [vmem:[%s711 + $0x30] sm:$0xf] %vm834, %v870
          %910 = vst.msk [vmem:[%s711 + $0x34] sm:$0xf] %vm834, %v872
          %911 = vst.msk [vmem:[%s711 + $0x3c] sm:$0xf] %vm834, %v874
          %912 = vst.msk [vmem:[%s711 + $0x40] sm:$0xf] %vm834, %v876
          %913 = vst.msk [vmem:[%s711 + $0x48] sm:$0xf] %vm834, %v878
          %914 = vst.msk [vmem:[%s711 + $0x4c] sm:$0xf] %vm834, %v880
          %915 = vst.msk [vmem:[%s711 + $0x54] sm:$0xf] %vm834, %v882
          %916 = vst.msk [vmem:[%s711 + $0x58] sm:$0xf] %vm834, %v884
          %919 = vrot.lane.b32.xlu0 %v513, 4
          %v920 = vpop.permute.xlu0 %919
          %921 = vrot.lane.b32.xlu0 %v514, 4
          %v922 = vpop.permute.xlu0 %921
          %925 = vst.msk [vmem:[%s788] sm:$0xf] %vm834, %v920
          %926 = vst.msk [vmem:[%s788 + $0x4] sm:$0xf] %vm834, %v922
          %vm927 = vsmask.f32 3328
          %vm928 = vsmask.f32 7440
          %vm929 = vmor %vm927, %vm928
          %v930 = vrot.slane %v519, 4
          %v931 = vrot.slane %v522, 5
          %v932 = vor.u32 %v930, %v931
          %v933 = vrot.slane %v932, 4
          %v934 = vrot.slane %v530, 5
          %v935 = vsel %vm929, %v933, %v934
          %v936 = vrot.slane %v527, 4
          %v937 = vor.u32 %v936, %v934
          %v938 = vrot.slane %v937, 4
          %939 = vrot.lane.b32.xlu0 %v935, 8
          %v940 = vpop.permute.xlu0 %939
          %941 = vrot.lane.b32.xlu0 %v938, 8
          %v942 = vpop.permute.xlu0 %941
          %vm945 = vcmask 93248
          %946 = vst.msk [vmem:[#allocation2] sm:$0xf] %vm945, %v940
          %vm947 = vcmask 93248
          %vm948 = vmand %vm947, %vm927
          %v949 = vld [vmem:[#allocation2 + $0x4] sm:$0xf]
          %v950 = vsel %vm948, %v942, %v949
          %951 = vst [vmem:[#allocation2 + $0x4] sm:$0xf] %v950
          %v952 = vrot.slane %v552, 4
          %v953 = vrot.slane %v555, 5
          %v954 = vor.u32 %v952, %v953
          %v955 = vrot.slane %v954, 4
          %v956 = vrot.slane %v563, 5
          %v957 = vsel %vm929, %v955, %v956
          %v958 = vrot.slane %v560, 4
          %v959 = vor.u32 %v958, %v956
          %v960 = vrot.slane %v959, 4
          %v961 = vrot.slane %v569, 4
          %v962 = vrot.slane %v572, 5
          %v963 = vor.u32 %v961, %v962
          %v964 = vrot.slane %v963, 4
          %v965 = vrot.slane %v580, 5
          %v966 = vsel %vm929, %v964, %v965
          %v967 = vrot.slane %v577, 4
          %v968 = vor.u32 %v967, %v965
          %v969 = vrot.slane %v968, 4
          %v970 = vrot.slane %v586, 4
          %v971 = vrot.slane %v589, 5
          %v972 = vor.u32 %v970, %v971
          %v973 = vrot.slane %v972, 4
          %v974 = vrot.slane %v597, 5
          %v975 = vsel %vm929, %v973, %v974
          %v976 = vrot.slane %v594, 4
          %v977 = vor.u32 %v976, %v974
          %v978 = vrot.slane %v977, 4
          %v979 = vrot.slane %v603, 4
          %v980 = vrot.slane %v606, 5
          %v981 = vor.u32 %v979, %v980
          %v982 = vrot.slane %v981, 4
          %v983 = vrot.slane %v614, 5
          %v984 = vsel %vm929, %v982, %v983
          %v985 = vrot.slane %v611, 4
          %v986 = vor.u32 %v985, %v983
          %v987 = vrot.slane %v986, 4
          %v988 = vrot.slane %v620, 4
          %v989 = vrot.slane %v623, 5
          %v990 = vor.u32 %v988, %v989
          %v991 = vrot.slane %v990, 4
          %v992 = vrot.slane %v631, 5
          %v993 = vsel %vm929, %v991, %v992
          %v994 = vrot.slane %v628, 4
          %v995 = vor.u32 %v994, %v992
          %v996 = vrot.slane %v995, 4
          %v997 = vrot.slane %v637, 4
          %v998 = vrot.slane %v640, 5
          %v999 = vor.u32 %v997, %v998
          %v1000 = vrot.slane %v999, 4
          %v1001 = vrot.slane %v648, 5
          %v1002 = vsel %vm929, %v1000, %v1001
          %v1003 = vrot.slane %v645, 4
          %v1004 = vor.u32 %v1003, %v1001
          %v1005 = vrot.slane %v1004, 4
          %v1006 = vrot.slane %v654, 4
          %v1007 = vrot.slane %v657, 5
          %v1008 = vor.u32 %v1006, %v1007
          %v1009 = vrot.slane %v1008, 4
          %v1010 = vrot.slane %v665, 5
          %v1011 = vsel %vm929, %v1009, %v1010
          %v1012 = vrot.slane %v662, 4
          %v1013 = vor.u32 %v1012, %v1010
          %v1014 = vrot.slane %v1013, 4
          %v1015 = vrot.slane %v671, 4
          %v1016 = vrot.slane %v674, 5
          %v1017 = vor.u32 %v1015, %v1016
          %v1018 = vrot.slane %v1017, 4
          %v1019 = vrot.slane %v682, 5
          %v1020 = vsel %vm929, %v1018, %v1019
          %v1021 = vrot.slane %v679, 4
          %v1022 = vor.u32 %v1021, %v1019
          %v1023 = vrot.slane %v1022, 4
          %1024 = vrot.lane.b32.xlu0 %v957, 8
          %v1025 = vpop.permute.xlu0 %1024
          %1026 = vrot.lane.b32.xlu0 %v960, 8
          %v1027 = vpop.permute.xlu0 %1026
          %1028 = vrot.lane.b32.xlu0 %v966, 8
          %v1029 = vpop.permute.xlu0 %1028
          %1030 = vrot.lane.b32.xlu0 %v969, 8
          %v1031 = vpop.permute.xlu0 %1030
          %1032 = vrot.lane.b32.xlu0 %v975, 8
          %v1033 = vpop.permute.xlu0 %1032
          %1034 = vrot.lane.b32.xlu0 %v978, 8
          %v1035 = vpop.permute.xlu0 %1034
          %1036 = vrot.lane.b32.xlu0 %v984, 8
          %v1037 = vpop.permute.xlu0 %1036
          %1038 = vrot.lane.b32.xlu0 %v987, 8
          %v1039 = vpop.permute.xlu0 %1038
          %1040 = vrot.lane.b32.xlu0 %v993, 8
          %v1041 = vpop.permute.xlu0 %1040
          %1042 = vrot.lane.b32.xlu0 %v996, 8
          %v1043 = vpop.permute.xlu0 %1042
          %1044 = vrot.lane.b32.xlu0 %v1002, 8
          %v1045 = vpop.permute.xlu0 %1044
          %1046 = vrot.lane.b32.xlu0 %v1005, 8
          %v1047 = vpop.permute.xlu0 %1046
          %1048 = vrot.lane.b32.xlu0 %v1011, 8
          %v1049 = vpop.permute.xlu0 %1048
          %1050 = vrot.lane.b32.xlu0 %v1014, 8
          %v1051 = vpop.permute.xlu0 %1050
          %1052 = vrot.lane.b32.xlu0 %v1020, 8
          %v1053 = vpop.permute.xlu0 %1052
          %1054 = vrot.lane.b32.xlu0 %v1023, 8
          %v1055 = vpop.permute.xlu0 %1054
          %1072 = vst.msk [vmem:[%s711] sm:$0xf] %vm945, %v1025
          %v1073 = vld [vmem:[%s711 + $0x4] sm:$0xf]
          %v1074 = vsel %vm948, %v1027, %v1073
          %1075 = vst [vmem:[%s711 + $0x4] sm:$0xf] %v1074
          %1076 = vst.msk [vmem:[%s711 + $0xc] sm:$0xf] %vm945, %v1029
          %v1077 = vld [vmem:[%s711 + $0x10] sm:$0xf]
          %v1078 = vsel %vm948, %v1031, %v1077
          %1079 = vst [vmem:[%s711 + $0x10] sm:$0xf] %v1078
          %1080 = vst.msk [vmem:[%s711 + $0x18] sm:$0xf] %vm945, %v1033
          %v1081 = vld [vmem:[%s711 + $0x1c] sm:$0xf]
          %v1082 = vsel %vm948, %v1035, %v1081
          %1083 = vst [vmem:[%s711 + $0x1c] sm:$0xf] %v1082
          %1084 = vst.msk [vmem:[%s711 + $0x24] sm:$0xf] %vm945, %v1037
          %v1085 = vld [vmem:[%s711 + $0x28] sm:$0xf]
          %v1086 = vsel %vm948, %v1039, %v1085
          %1087 = vst [vmem:[%s711 + $0x28] sm:$0xf] %v1086
          %1088 = vst.msk [vmem:[%s711 + $0x30] sm:$0xf] %vm945, %v1041
          %v1089 = vld [vmem:[%s711 + $0x34] sm:$0xf]
          %v1090 = vsel %vm948, %v1043, %v1089
          %1091 = vst [vmem:[%s711 + $0x34] sm:$0xf] %v1090
          %1092 = vst.msk [vmem:[%s711 + $0x3c] sm:$0xf] %vm945, %v1045
          %v1093 = vld [vmem:[%s711 + $0x40] sm:$0xf]
          %v1094 = vsel %vm948, %v1047, %v1093
          %1095 = vst [vmem:[%s711 + $0x40] sm:$0xf] %v1094
          %1096 = vst.msk [vmem:[%s711 + $0x48] sm:$0xf] %vm945, %v1049
          %v1097 = vld [vmem:[%s711 + $0x4c] sm:$0xf]
          %v1098 = vsel %vm948, %v1051, %v1097
          %1099 = vst [vmem:[%s711 + $0x4c] sm:$0xf] %v1098
          %1100 = vst.msk [vmem:[%s711 + $0x54] sm:$0xf] %vm945, %v1053
          %v1101 = vld [vmem:[%s711 + $0x58] sm:$0xf]
          %v1102 = vsel %vm948, %v1055, %v1101
          %1103 = vst [vmem:[%s711 + $0x58] sm:$0xf] %v1102
          %v1104 = vrot.slane %v769, 4
          %v1105 = vrot.slane %v772, 5
          %v1106 = vor.u32 %v1104, %v1105
          %v1107 = vrot.slane %v1106, 4
          %v1108 = vrot.slane %v780, 5
          %v1109 = vsel %vm929, %v1107, %v1108
          %v1110 = vrot.slane %v777, 4
          %v1111 = vor.u32 %v1110, %v1108
          %v1112 = vrot.slane %v1111, 4
          %1113 = vrot.lane.b32.xlu0 %v1109, 8
          %v1114 = vpop.permute.xlu0 %1113
          %1115 = vrot.lane.b32.xlu0 %v1112, 8
          %v1116 = vpop.permute.xlu0 %1115
          %1119 = vst.msk [vmem:[%s788] sm:$0xf] %vm945, %v1114
          %v1120 = vld [vmem:[%s788 + $0x4] sm:$0xf]
          %v1121 = vsel %vm948, %v1116, %v1120
          %1122 = vst [vmem:[%s788 + $0x4] sm:$0xf] %v1121
          %vm1123 = vcmask 93251
          %vm1124 = vsmask.f32 7950
          %vm1125 = vmand %vm1123, %vm1124
          %v1126 = vld [vmem:[#allocation2 + $0x4] sm:$0x8]
          %v1127 = vsel %vm1125, 0, %v1126
          %1128 = vst [vmem:[#allocation2 + $0x4] sm:$0x8] %v1127
          %v1129 = vld [vmem:[#allocation2 + $0x10] sm:$0x8]
          %v1130 = vsel %vm1125, 0, %v1129
          %1131 = vst [vmem:[#allocation2 + $0x10] sm:$0x8] %v1130
          %v1132 = vld [vmem:[#allocation2 + $0x1c] sm:$0x8]
          %v1133 = vsel %vm1125, 0, %v1132
          %1134 = vst [vmem:[#allocation2 + $0x1c] sm:$0x8] %v1133
          %v1135 = vld [vmem:[#allocation2 + $0x28] sm:$0x8]
          %v1136 = vsel %vm1125, 0, %v1135
          %1137 = vst [vmem:[#allocation2 + $0x28] sm:$0x8] %v1136
          %v1138 = vld [vmem:[#allocation2 + $0x34] sm:$0x8]
          %v1139 = vsel %vm1125, 0, %v1138
          %1140 = vst [vmem:[#allocation2 + $0x34] sm:$0x8] %v1139
          %v1141 = vld [vmem:[#allocation2 + $0x40] sm:$0x8]
          %v1142 = vsel %vm1125, 0, %v1141
          %1143 = vst [vmem:[#allocation2 + $0x40] sm:$0x8] %v1142
          %v1144 = vld [vmem:[#allocation2 + $0x4c] sm:$0x8]
          %v1145 = vsel %vm1125, 0, %v1144
          %1146 = vst [vmem:[#allocation2 + $0x4c] sm:$0x8] %v1145
          %v1147 = vld [vmem:[#allocation2 + $0x58] sm:$0x8]
          %v1148 = vsel %vm1125, 0, %v1147
          %1149 = vst [vmem:[#allocation2 + $0x58] sm:$0x8] %v1148
          %v1150 = vld [vmem:[#allocation2 + $0x64] sm:$0x8]
          %v1151 = vsel %vm1125, 0, %v1150
          %1152 = vst [vmem:[#allocation2 + $0x64] sm:$0x8] %v1151
          %v1153 = vld [vmem:[#allocation2 + $0x70] sm:$0x8]
          %v1154 = vsel %vm1125, 0, %v1153
          %1155 = vst [vmem:[#allocation2 + $0x70] sm:$0x8] %v1154
        $region72: #{upconv_forward.7} parent=43 // pred_fallthru
          _
        %v1156 = vld [vmem:[#allocation2] sm:$0xf]
        %v1157 = vld [vmem:[#allocation2 + $0x4] sm:$0xf]
        %v1158 = vld [vmem:[#allocation2 + $0x8] sm:$0xf]
        %v1159 = vld [vmem:[#allocation2 + $0xc] sm:$0xf]
        %v1160 = vld [vmem:[#allocation2 + $0x10] sm:$0xf]
        %v1161 = vld [vmem:[#allocation2 + $0x14] sm:$0xf]
        %v1162 = vld [vmem:[#allocation2 + $0x18] sm:$0xf]
        %v1163 = vld [vmem:[#allocation2 + $0x1c] sm:$0xf]
        %v1164 = vld [vmem:[#allocation2 + $0x20] sm:$0xf]
        %v1165 = vld [vmem:[#allocation2 + $0x24] sm:$0xf]
        %v1166 = vld [vmem:[#allocation2 + $0x28] sm:$0xf]
        %v1167 = vld [vmem:[#allocation2 + $0x2c] sm:$0xf]
        %v1168 = vld [vmem:[#allocation2 + $0x30] sm:$0xf]
        %v1169 = vld [vmem:[#allocation2 + $0x34] sm:$0xf]
        %v1170 = vld [vmem:[#allocation2 + $0x38] sm:$0xf]
        %v1171 = vld [vmem:[#allocation2 + $0x3c] sm:$0xf]
        %v1172 = vld [vmem:[#allocation2 + $0x40] sm:$0xf]
        %v1173 = vld [vmem:[#allocation2 + $0x44] sm:$0xf]
        %v1174 = vld [vmem:[#allocation2 + $0x48] sm:$0xf]
        %v1175 = vld [vmem:[#allocation2 + $0x4c] sm:$0xf]
        %v1176 = vld [vmem:[#allocation2 + $0x50] sm:$0xf]
        %v1177 = vld [vmem:[#allocation2 + $0x54] sm:$0xf]
        %v1178 = vld [vmem:[#allocation2 + $0x58] sm:$0xf]
        %v1179 = vld [vmem:[#allocation2 + $0x5c] sm:$0xf]
        %v1180 = vld [vmem:[#allocation9] sm:$0xf]
        %v1181 = vld [vmem:[#allocation9 + $0x4] sm:$0x3]
        %s1182 = scalar_lea.vmem [#allocation2], 12
        %v1183 = vld [vmem:[%s1182] sm:$0xf]
        %v1184 = vld [vmem:[%s1182 + $0x4] sm:$0xf]
        %v1185 = vld [vmem:[%s1182 + $0x8] sm:$0xf]
        %v1186 = vld [vmem:[%s1182 + $0xc] sm:$0xf]
        %v1187 = vld [vmem:[%s1182 + $0x10] sm:$0xf]
        %v1188 = vld [vmem:[%s1182 + $0x14] sm:$0xf]
        %v1189 = vld [vmem:[%s1182 + $0x18] sm:$0xf]
        %v1190 = vld [vmem:[%s1182 + $0x1c] sm:$0xf]
        %v1191 = vld [vmem:[%s1182 + $0x20] sm:$0xf]
        %v1192 = vld [vmem:[%s1182 + $0x24] sm:$0xf]
        %v1193 = vld [vmem:[%s1182 + $0x28] sm:$0xf]
        %v1194 = vld [vmem:[%s1182 + $0x2c] sm:$0xf]
        %v1195 = vld [vmem:[%s1182 + $0x30] sm:$0xf]
        %v1196 = vld [vmem:[%s1182 + $0x34] sm:$0xf]
        %v1197 = vld [vmem:[%s1182 + $0x38] sm:$0xf]
        %v1198 = vld [vmem:[%s1182 + $0x3c] sm:$0xf]
        %v1199 = vld [vmem:[%s1182 + $0x40] sm:$0xf]
        %v1200 = vld [vmem:[%s1182 + $0x44] sm:$0xf]
        %v1201 = vld [vmem:[%s1182 + $0x48] sm:$0xf]
        %v1202 = vld [vmem:[%s1182 + $0x4c] sm:$0xf]
        %v1203 = vld [vmem:[%s1182 + $0x50] sm:$0xf]
        %v1204 = vld [vmem:[%s1182 + $0x54] sm:$0xf]
        %v1205 = vld [vmem:[%s1182 + $0x58] sm:$0xf]
        %v1206 = vld [vmem:[%s1182 + $0x5c] sm:$0xf]
        %s1207 = scalar_lea.vmem [#allocation9], 8
        %v1208 = vld [vmem:[%s1207] sm:$0xf]
        %v1209 = vld [vmem:[%s1207 + $0x4] sm:$0x3]
        %v1234 = vunpack.c.l.b16 %v1183
        %v1235 = vunpack.c.l.b16 %v1184
        %v1236 = vunpack.c.l.b16 %v1185
        %v1237 = vunpack.c.l.b16 %v1186
        %v1238 = vunpack.c.l.b16 %v1187
        %v1239 = vunpack.c.l.b16 %v1188
        %v1240 = vunpack.c.l.b16 %v1189
        %v1241 = vunpack.c.l.b16 %v1190
        %v1242 = vunpack.c.l.b16 %v1191
        %v1243 = vunpack.c.l.b16 %v1192
        %v1244 = vunpack.c.l.b16 %v1193
        %v1245 = vunpack.c.l.b16 %v1194
        %v1246 = vunpack.c.l.b16 %v1195
        %v1247 = vunpack.c.l.b16 %v1196
        %v1248 = vunpack.c.l.b16 %v1197
        %v1249 = vunpack.c.l.b16 %v1198
        %v1250 = vunpack.c.l.b16 %v1199
        %v1251 = vunpack.c.l.b16 %v1200
        %v1252 = vunpack.c.l.b16 %v1201
        %v1253 = vunpack.c.l.b16 %v1202
        %v1254 = vunpack.c.l.b16 %v1203
        %v1255 = vunpack.c.l.b16 %v1204
        %v1256 = vunpack.c.l.b16 %v1205
        %v1257 = vunpack.c.l.b16 %v1206
        %v1258 = vpack.c.b16 %v1235, %v1234
        %v1259 = vpack.c.b16 %v1237, %v1236
        %v1260 = vpack.c.b16 %v1239, %v1238
        %v1261 = vpack.c.b16 %v1241, %v1240
        %v1262 = vpack.c.b16 %v1243, %v1242
        %v1263 = vpack.c.b16 %v1245, %v1244
        %v1264 = vpack.c.b16 %v1247, %v1246
        %v1265 = vpack.c.b16 %v1249, %v1248
        %v1266 = vpack.c.b16 %v1251, %v1250
        %v1267 = vpack.c.b16 %v1253, %v1252
        %v1268 = vpack.c.b16 %v1255, %v1254
        %v1269 = vpack.c.b16 %v1257, %v1256
        %v1272 = vunpack.c.l.b16 %v1208
        %v1273 = vunpack.c.l.b16 %v1209
        %v1274 = vpack.c.b16 %v1273, %v1272
        %vm1275 = vcmask 97280
        %v1277 = vsel %vm1275, %v1258, 0
        %v1280 = vsel %vm1275, %v1259, 0
        %v1283 = vsel %vm1275, %v1260, 0
        %v1286 = vsel %vm1275, %v1261, 0
        %v1289 = vsel %vm1275, %v1262, 0
        %v1292 = vsel %vm1275, %v1263, 0
        %v1295 = vsel %vm1275, %v1264, 0
        %v1298 = vsel %vm1275, %v1265, 0
        %v1301 = vsel %vm1275, %v1266, 0
        %v1304 = vsel %vm1275, %v1267, 0
        %v1307 = vsel %vm1275, %v1268, 0
        %v1310 = vsel %vm1275, %v1269, 0
        %vm1312 = vcmask 1045504
        %v1314 = vsel %vm1312, %v1274, 0
        %1316 = vmatprep.subr.bf16.mxu0 0
        %1317 = vmatpush1.bf16.msra.mxu0 %v1314
        %1318 = vmatprep.subr.bf16.mxu0 0
        %1319 = vmatpush1.bf16.msra.mxu0 0
        %1320 = vmatprep.subr.bf16.mxu0 0
        %1321 = vmatpush1.bf16.msra.mxu0 0
        %1322 = vmatprep.subr.bf16.mxu0 0
        %1323 = vmatpush1.bf16.msra.mxu0 0
        %1324 = vmatprep.subr.bf16.mxu0 0
        %1325 = vmatpush1.bf16.msra.mxu0 0
        %1326 = vmatprep.subr.bf16.mxu0 0
        %1327 = vmatpush1.bf16.msra.mxu0 0
        %1328 = vmatprep.subr.bf16.mxu0 0
        %1329 = vmatpush1.bf16.msra.mxu0 0
        %1330 = vmatprep.subr.bf16.mxu0 0
        %1331 = vmatpush1.bf16.msra.mxu0 0
        %1332 = vmatprep.subr.bf16.mxu0 0
        %1333 = vmatpush1.bf16.msra.mxu0 0
        %1334 = vmatprep.subr.bf16.mxu0 0
        %1335 = vmatpush1.bf16.msra.mxu0 0
        %1336 = vmatprep.subr.bf16.mxu0 0
        %1337 = vmatpush1.bf16.msra.mxu0 0
        %1338 = vmatprep.subr.bf16.mxu0 0
        %1339 = vmatpush1.bf16.msra.mxu0 0
        %1340 = vmatprep.subr.bf16.mxu0 0
        %1341 = vmatpush1.bf16.msra.mxu0 0
        %1342 = vmatprep.subr.bf16.mxu0 0
        %1343 = vmatpush1.bf16.msra.mxu0 0
        %1344 = vmatprep.subr.bf16.mxu0 0
        %1345 = vmatpush1.bf16.msra.mxu0 0
        %1346 = vmatprep.subr.bf16.mxu0 0
        %1347 = vmatpush1.bf16.msra.mxu0 0
        %1348 = vmatprep.mubr.bf16.mxu0 0
        %1349 = vmatmul.mubr.bf16.gmra.mrb[0].mxu0 %v1277
        %v1350 = vpop.f32.mrb[0].mxu0
        %v1351 = vadd.f32 0.0, %v1350
        %v1352 = vpop.f32.mrb[0].mxu0
        %v1353 = vpop.f32.mrb[0].mxu0
        %v1354 = vadd.f32 0.0, %v1353
        %v1355 = vpop.f32.mrb[0].mxu0
        %1356 = vmatprep.mubr.bf16.mxu0 0
        %1357 = vmatmul.mubr.bf16.gmra.mrb[0].mxu0 %v1280
        %v1358 = vpop.f32.mrb[0].mxu0
        %v1359 = vpop.f32.mrb[0].mxu0
        %v1360 = vpop.f32.mrb[0].mxu0
        %v1361 = vadd.f32 0.0, %v1360
        %v1362 = vpop.f32.mrb[0].mxu0
        %1363 = vmatprep.mubr.bf16.mxu0 0
        %1364 = vmatmul.mubr.bf16.gmra.mrb[0].mxu0 %v1283
        %v1365 = vpop.f32.mrb[0].mxu0
        %v1366 = vadd.f32 0.0, %v1365
        %v1367 = vpop.f32.mrb[0].mxu0
        %v1368 = vpop.f32.mrb[0].mxu0
        %v1369 = vpop.f32.mrb[0].mxu0
        %1370 = vmatprep.mubr.bf16.mxu0 0
        %1371 = vmatmul.mubr.bf16.gmra.mrb[0].mxu0 %v1286
        %v1372 = vpop.f32.mrb[0].mxu0
        %v1373 = vadd.f32 0.0, %v1372
        %v1374 = vpop.f32.mrb[0].mxu0
        %v1375 = vpop.f32.mrb[0].mxu0
        %v1376 = vadd.f32 0.0, %v1375
        %v1377 = vpop.f32.mrb[0].mxu0
        %1378 = vmatprep.mubr.bf16.mxu0 0
        %1379 = vmatmul.mubr.bf16.gmra.mrb[0].mxu0 %v1289
        %v1380 = vpop.f32.mrb[0].mxu0
        %v1381 = vpop.f32.mrb[0].mxu0
        %v1382 = vpop.f32.mrb[0].mxu0
        %v1383 = vadd.f32 0.0, %v1382
        %v1384 = vpop.f32.mrb[0].mxu0
        %1385 = vmatprep.mubr.bf16.mxu0 0
        %1386 = vmatmul.mubr.bf16.gmra.mrb[0].mxu0 %v1292
        %v1387 = vpop.f32.mrb[0].mxu0
        %v1388 = vadd.f32 0.0, %v1387
        %v1389 = vpop.f32.mrb[0].mxu0
        %v1390 = vpop.f32.mrb[0].mxu0
        %v1391 = vpop.f32.mrb[0].mxu0
        %1392 = vmatprep.mubr.bf16.mxu0 0
        %1393 = vmatmul.mubr.bf16.gmra.mrb[0].mxu0 %v1295
        %v1394 = vpop.f32.mrb[0].mxu0
        %v1395 = vadd.f32 0.0, %v1394
        %v1396 = vpop.f32.mrb[0].mxu0
        %v1397 = vpop.f32.mrb[0].mxu0
        %v1398 = vadd.f32 0.0, %v1397
        %v1399 = vpop.f32.mrb[0].mxu0
        %1400 = vmatprep.mubr.bf16.mxu0 0
        %1401 = vmatmul.mubr.bf16.gmra.mrb[0].mxu0 %v1298
        %v1402 = vpop.f32.mrb[0].mxu0
        %v1403 = vpop.f32.mrb[0].mxu0
        %v1404 = vpop.f32.mrb[0].mxu0
        %v1405 = vadd.f32 0.0, %v1404
        %v1406 = vpop.f32.mrb[0].mxu0
        %1407 = vmatprep.mubr.bf16.mxu0 0
        %1408 = vmatmul.mubr.bf16.gmra.mrb[0].mxu0 %v1301
        %v1409 = vpop.f32.mrb[0].mxu0
        %v1410 = vadd.f32 0.0, %v1409
        %v1411 = vpop.f32.mrb[0].mxu0
        %v1412 = vpop.f32.mrb[0].mxu0
        %v1413 = vpop.f32.mrb[0].mxu0
        %1414 = vmatprep.mubr.bf16.mxu0 0
        %1415 = vmatmul.mubr.bf16.gmra.mrb[0].mxu0 %v1304
        %v1416 = vpop.f32.mrb[0].mxu0
        %v1417 = vadd.f32 0.0, %v1416
        %v1418 = vpop.f32.mrb[0].mxu0
        %v1419 = vpop.f32.mrb[0].mxu0
        %v1420 = vadd.f32 0.0, %v1419
        %v1421 = vpop.f32.mrb[0].mxu0
        %1422 = vmatprep.mubr.bf16.mxu0 0
        %1423 = vmatmul.mubr.bf16.gmra.mrb[0].mxu0 %v1307
        %v1424 = vpop.f32.mrb[0].mxu0
        %v1425 = vpop.f32.mrb[0].mxu0
        %v1426 = vpop.f32.mrb[0].mxu0
        %v1427 = vadd.f32 0.0, %v1426
        %v1428 = vpop.f32.mrb[0].mxu0
        %1429 = vmatprep.mubr.bf16.mxu0 0
        %1430 = vmatmul.mubr.bf16.gmra.mrb[0].mxu0 %v1310
        %v1431 = vpop.f32.mrb[0].mxu0
        %v1432 = vadd.f32 0.0, %v1431
        %v1433 = vpop.f32.mrb[0].mxu0
        %v1434 = vpop.f32.mrb[0].mxu0
        %v1435 = vpop.f32.mrb[0].mxu0
        %1436 = vdwg.mxu0
        %v1461 = vunpack.c.l.b16 %v1156
        %v1462 = vunpack.c.l.b16 %v1157
        %v1463 = vunpack.c.l.b16 %v1158
        %v1464 = vunpack.c.l.b16 %v1159
        %v1465 = vunpack.c.l.b16 %v1160
        %v1466 = vunpack.c.l.b16 %v1161
        %v1467 = vunpack.c.l.b16 %v1162
        %v1468 = vunpack.c.l.b16 %v1163
        %v1469 = vunpack.c.l.b16 %v1164
        %v1470 = vunpack.c.l.b16 %v1165
        %v1471 = vunpack.c.l.b16 %v1166
        %v1472 = vunpack.c.l.b16 %v1167
        %v1473 = vunpack.c.l.b16 %v1168
        %v1474 = vunpack.c.l.b16 %v1169
        %v1475 = vunpack.c.l.b16 %v1170
        %v1476 = vunpack.c.l.b16 %v1171
        %v1477 = vunpack.c.l.b16 %v1172
        %v1478 = vunpack.c.l.b16 %v1173
        %v1479 = vunpack.c.l.b16 %v1174
        %v1480 = vunpack.c.l.b16 %v1175
        %v1481 = vunpack.c.l.b16 %v1176
        %v1482 = vunpack.c.l.b16 %v1177
        %v1483 = vunpack.c.l.b16 %v1178
        %v1484 = vunpack.c.l.b16 %v1179
        %v1485 = vpack.c.b16 %v1462, %v1461
        %v1486 = vpack.c.b16 %v1464, %v1463
        %v1487 = vpack.c.b16 %v1466, %v1465
        %v1488 = vpack.c.b16 %v1468, %v1467
        %v1489 = vpack.c.b16 %v1470, %v1469
        %v1490 = vpack.c.b16 %v1472, %v1471
        %v1491 = vpack.c.b16 %v1474, %v1473
        %v1492 = vpack.c.b16 %v1476, %v1475
        %v1493 = vpack.c.b16 %v1478, %v1477
        %v1494 = vpack.c.b16 %v1480, %v1479
        %v1495 = vpack.c.b16 %v1482, %v1481
        %v1496 = vpack.c.b16 %v1484, %v1483
        %v1499 = vunpack.c.l.b16 %v1180
        %v1500 = vunpack.c.l.b16 %v1181
        %v1501 = vpack.c.b16 %v1500, %v1499
        %v1503 = vsel %vm1275, %v1485, 0
        %v1506 = vsel %vm1275, %v1486, 0
        %v1509 = vsel %vm1275, %v1487, 0
        %v1512 = vsel %vm1275, %v1488, 0
        %v1515 = vsel %vm1275, %v1489, 0
        %v1518 = vsel %vm1275, %v1490, 0
        %v1521 = vsel %vm1275, %v1491, 0
        %v1524 = vsel %vm1275, %v1492, 0
        %v1527 = vsel %vm1275, %v1493, 0
        %v1530 = vsel %vm1275, %v1494, 0
        %v1533 = vsel %vm1275, %v1495, 0
        %v1536 = vsel %vm1275, %v1496, 0
        %v1539 = vsel %vm1312, %v1501, 0
        %1541 = vmatprep.subr.bf16.mxu0 0
        %1542 = vmatpush1.bf16.msra.mxu0 %v1539
        %1543 = vmatprep.subr.bf16.mxu0 0
        %1544 = vmatpush1.bf16.msra.mxu0 0
        %1545 = vmatprep.subr.bf16.mxu0 0
        %1546 = vmatpush1.bf16.msra.mxu0 0
        %1547 = vmatprep.subr.bf16.mxu0 0
        %1548 = vmatpush1.bf16.msra.mxu0 0
        %1549 = vmatprep.subr.bf16.mxu0 0
        %1550 = vmatpush1.bf16.msra.mxu0 0
        %1551 = vmatprep.subr.bf16.mxu0 0
        %1552 = vmatpush1.bf16.msra.mxu0 0
        %1553 = vmatprep.subr.bf16.mxu0 0
        %1554 = vmatpush1.bf16.msra.mxu0 0
        %1555 = vmatprep.subr.bf16.mxu0 0
        %1556 = vmatpush1.bf16.msra.mxu0 0
        %1557 = vmatprep.subr.bf16.mxu0 0
        %1558 = vmatpush1.bf16.msra.mxu0 0
        %1559 = vmatprep.subr.bf16.mxu0 0
        %1560 = vmatpush1.bf16.msra.mxu0 0
        %1561 = vmatprep.subr.bf16.mxu0 0
        %1562 = vmatpush1.bf16.msra.mxu0 0
        %1563 = vmatprep.subr.bf16.mxu0 0
        %1564 = vmatpush1.bf16.msra.mxu0 0
        %1565 = vmatprep.subr.bf16.mxu0 0
        %1566 = vmatpush1.bf16.msra.mxu0 0
        %1567 = vmatprep.subr.bf16.mxu0 0
        %1568 = vmatpush1.bf16.msra.mxu0 0
        %1569 = vmatprep.subr.bf16.mxu0 0
        %1570 = vmatpush1.bf16.msra.mxu0 0
        %1571 = vmatprep.subr.bf16.mxu0 0
        %1572 = vmatpush1.bf16.msra.mxu0 0
        %1573 = vmatprep.mubr.bf16.mxu0 0
        %1574 = vmatmul.mubr.bf16.gmra.mrb[0].mxu0 %v1503
        %v1575 = vpop.f32.mrb[0].mxu0
        %v1576 = vadd.f32 %v1351, %v1575
        %v1577 = vpop.f32.mrb[0].mxu0
        %v1578 = vpop.f32.mrb[0].mxu0
        %v1579 = vadd.f32 %v1354, %v1578
        %v1580 = vpop.f32.mrb[0].mxu0
        %1581 = vmatprep.mubr.bf16.mxu0 0
        %1582 = vmatmul.mubr.bf16.gmra.mrb[0].mxu0 %v1506
        %v1583 = vpop.f32.mrb[0].mxu0
        %v1584 = vpop.f32.mrb[0].mxu0
        %v1585 = vpop.f32.mrb[0].mxu0
        %v1586 = vadd.f32 %v1361, %v1585
        %v1587 = vpop.f32.mrb[0].mxu0
        %1588 = vmatprep.mubr.bf16.mxu0 0
        %1589 = vmatmul.mubr.bf16.gmra.mrb[0].mxu0 %v1509
        %v1590 = vpop.f32.mrb[0].mxu0
        %v1591 = vadd.f32 %v1366, %v1590
        %v1592 = vpop.f32.mrb[0].mxu0
        %v1593 = vpop.f32.mrb[0].mxu0
        %v1594 = vpop.f32.mrb[0].mxu0
        %1595 = vmatprep.mubr.bf16.mxu0 0
        %1596 = vmatmul.mubr.bf16.gmra.mrb[0].mxu0 %v1512
        %v1597 = vpop.f32.mrb[0].mxu0
        %v1598 = vadd.f32 %v1373, %v1597
        %v1599 = vpop.f32.mrb[0].mxu0
        %v1600 = vpop.f32.mrb[0].mxu0
        %v1601 = vadd.f32 %v1376, %v1600
        %v1602 = vpop.f32.mrb[0].mxu0
        %1603 = vmatprep.mubr.bf16.mxu0 0
        %1604 = vmatmul.mubr.bf16.gmra.mrb[0].mxu0 %v1515
        %v1605 = vpop.f32.mrb[0].mxu0
        %v1606 = vpop.f32.mrb[0].mxu0
        %v1607 = vpop.f32.mrb[0].mxu0
        %v1608 = vadd.f32 %v1383, %v1607
        %v1609 = vpop.f32.mrb[0].mxu0
        %1610 = vmatprep.mubr.bf16.mxu0 0
        %1611 = vmatmul.mubr.bf16.gmra.mrb[0].mxu0 %v1518
        %v1612 = vpop.f32.mrb[0].mxu0
        %v1613 = vadd.f32 %v1388, %v1612
        %v1614 = vpop.f32.mrb[0].mxu0
        %v1615 = vpop.f32.mrb[0].mxu0
        %v1616 = vpop.f32.mrb[0].mxu0
        %1617 = vmatprep.mubr.bf16.mxu0 0
        %1618 = vmatmul.mubr.bf16.gmra.mrb[0].mxu0 %v1521
        %v1619 = vpop.f32.mrb[0].mxu0
        %v1620 = vadd.f32 %v1395, %v1619
        %v1621 = vpop.f32.mrb[0].mxu0
        %v1622 = vpop.f32.mrb[0].mxu0
        %v1623 = vadd.f32 %v1398, %v1622
        %v1624 = vpop.f32.mrb[0].mxu0
        %1625 = vmatprep.mubr.bf16.mxu0 0
        %1626 = vmatmul.mubr.bf16.gmra.mrb[0].mxu0 %v1524
        %v1627 = vpop.f32.mrb[0].mxu0
        %v1628 = vpop.f32.mrb[0].mxu0
        %v1629 = vpop.f32.mrb[0].mxu0
        %v1630 = vadd.f32 %v1405, %v1629
        %v1631 = vpop.f32.mrb[0].mxu0
        %1632 = vmatprep.mubr.bf16.mxu0 0
        %1633 = vmatmul.mubr.bf16.gmra.mrb[0].mxu0 %v1527
        %v1634 = vpop.f32.mrb[0].mxu0
        %v1635 = vadd.f32 %v1410, %v1634
        %v1636 = vpop.f32.mrb[0].mxu0
        %v1637 = vpop.f32.mrb[0].mxu0
        %v1638 = vpop.f32.mrb[0].mxu0
        %1639 = vmatprep.mubr.bf16.mxu0 0
        %1640 = vmatmul.mubr.bf16.gmra.mrb[0].mxu0 %v1530
        %v1641 = vpop.f32.mrb[0].mxu0
        %v1642 = vadd.f32 %v1417, %v1641
        %v1643 = vpop.f32.mrb[0].mxu0
        %v1644 = vpop.f32.mrb[0].mxu0
        %v1645 = vadd.f32 %v1420, %v1644
        %v1646 = vpop.f32.mrb[0].mxu0
        %1647 = vmatprep.mubr.bf16.mxu0 0
        %1648 = vmatmul.mubr.bf16.gmra.mrb[0].mxu0 %v1533
        %v1649 = vpop.f32.mrb[0].mxu0
        %v1650 = vpop.f32.mrb[0].mxu0
        %v1651 = vpop.f32.mrb[0].mxu0
        %v1652 = vadd.f32 %v1427, %v1651
        %v1653 = vpop.f32.mrb[0].mxu0
        %1654 = vmatprep.mubr.bf16.mxu0 0
        %1655 = vmatmul.mubr.bf16.gmra.mrb[0].mxu0 %v1536
        %v1656 = vpop.f32.mrb[0].mxu0
        %v1657 = vadd.f32 %v1432, %v1656
        %v1658 = vpop.f32.mrb[0].mxu0
        %v1659 = vpop.f32.mrb[0].mxu0
        %v1660 = vpop.f32.mrb[0].mxu0
        %1661 = vdwg.mxu0
        %s1662 = scalar_lea.vmem [#allocation2], 24
        %v1663 = vld [vmem:[%s1662] sm:$0xf]
        %v1664 = vld [vmem:[%s1662 + $0x4] sm:$0xf]
        %v1665 = vld [vmem:[%s1662 + $0x8] sm:$0xf]
        %v1666 = vld [vmem:[%s1662 + $0xc] sm:$0xf]
        %v1667 = vld [vmem:[%s1662 + $0x10] sm:$0xf]
        %v1668 = vld [vmem:[%s1662 + $0x14] sm:$0xf]
        %v1669 = vld [vmem:[%s1662 + $0x18] sm:$0xf]
        %v1670 = vld [vmem:[%s1662 + $0x1c] sm:$0xf]
        %v1671 = vld [vmem:[%s1662 + $0x20] sm:$0xf]
        %v1672 = vld [vmem:[%s1662 + $0x24] sm:$0xf]
        %v1673 = vld [vmem:[%s1662 + $0x28] sm:$0xf]
        %v1674 = vld [vmem:[%s1662 + $0x2c] sm:$0xf]
        %v1675 = vld [vmem:[%s1662 + $0x30] sm:$0xf]
        %v1676 = vld [vmem:[%s1662 + $0x34] sm:$0xf]
        %v1677 = vld [vmem:[%s1662 + $0x38] sm:$0xf]
        %v1678 = vld [vmem:[%s1662 + $0x3c] sm:$0xf]
        %v1679 = vld [vmem:[%s1662 + $0x40] sm:$0xf]
        %v1680 = vld [vmem:[%s1662 + $0x44] sm:$0xf]
        %v1681 = vld [vmem:[%s1662 + $0x48] sm:$0xf]
        %v1682 = vld [vmem:[%s1662 + $0x4c] sm:$0xf]
        %v1683 = vld [vmem:[%s1662 + $0x50] sm:$0xf]
        %v1684 = vld [vmem:[%s1662 + $0x54] sm:$0xf]
        %v1685 = vld [vmem:[%s1662 + $0x58] sm:$0xf]
        %v1686 = vld [vmem:[%s1662 + $0x5c] sm:$0xf]
        %s1687 = scalar_lea.vmem [#allocation9], 16
        %v1688 = vld [vmem:[%s1687] sm:$0xf]
        %v1689 = vld [vmem:[%s1687 + $0x4] sm:$0x3]
        %v1714 = vunpack.c.l.b16 %v1663
        %v1715 = vunpack.c.l.b16 %v1664
        %v1716 = vunpack.c.l.b16 %v1665
        %v1717 = vunpack.c.l.b16 %v1666
        %v1718 = vunpack.c.l.b16 %v1667
        %v1719 = vunpack.c.l.b16 %v1668
        %v1720 = vunpack.c.l.b16 %v1669
        %v1721 = vunpack.c.l.b16 %v1670
        %v1722 = vunpack.c.l.b16 %v1671
        %v1723 = vunpack.c.l.b16 %v1672
        %v1724 = vunpack.c.l.b16 %v1673
        %v1725 = vunpack.c.l.b16 %v1674
        %v1726 = vunpack.c.l.b16 %v1675
        %v1727 = vunpack.c.l.b16 %v1676
        %v1728 = vunpack.c.l.b16 %v1677
        %v1729 = vunpack.c.l.b16 %v1678
        %v1730 = vunpack.c.l.b16 %v1679
        %v1731 = vunpack.c.l.b16 %v1680
        %v1732 = vunpack.c.l.b16 %v1681
        %v1733 = vunpack.c.l.b16 %v1682
        %v1734 = vunpack.c.l.b16 %v1683
        %v1735 = vunpack.c.l.b16 %v1684
        %v1736 = vunpack.c.l.b16 %v1685
        %v1737 = vunpack.c.l.b16 %v1686
        %v1738 = vpack.c.b16 %v1715, %v1714
        %v1739 = vpack.c.b16 %v1717, %v1716
        %v1740 = vpack.c.b16 %v1719, %v1718
        %v1741 = vpack.c.b16 %v1721, %v1720
        %v1742 = vpack.c.b16 %v1723, %v1722
        %v1743 = vpack.c.b16 %v1725, %v1724
        %v1744 = vpack.c.b16 %v1727, %v1726
        %v1745 = vpack.c.b16 %v1729, %v1728
        %v1746 = vpack.c.b16 %v1731, %v1730
        %v1747 = vpack.c.b16 %v1733, %v1732
        %v1748 = vpack.c.b16 %v1735, %v1734
        %v1749 = vpack.c.b16 %v1737, %v1736
        %v1752 = vunpack.c.l.b16 %v1688
        %v1753 = vunpack.c.l.b16 %v1689
        %v1754 = vpack.c.b16 %v1753, %v1752
        %v1756 = vsel %vm1275, %v1738, 0
        %v1759 = vsel %vm1275, %v1739, 0
        %v1762 = vsel %vm1275, %v1740, 0
        %v1765 = vsel %vm1275, %v1741, 0
        %v1768 = vsel %vm1275, %v1742, 0
        %v1771 = vsel %vm1275, %v1743, 0
        %v1774 = vsel %vm1275, %v1744, 0
        %v1777 = vsel %vm1275, %v1745, 0
        %v1780 = vsel %vm1275, %v1746, 0
        %v1783 = vsel %vm1275, %v1747, 0
        %v1786 = vsel %vm1275, %v1748, 0
        %v1789 = vsel %vm1275, %v1749, 0
        %v1792 = vsel %vm1312, %v1754, 0
        %1794 = vmatprep.subr.bf16.mxu0 0
        %1795 = vmatpush1.bf16.msra.mxu0 %v1792
        %1796 = vmatprep.subr.bf16.mxu0 0
        %1797 = vmatpush1.bf16.msra.mxu0 0
        %1798 = vmatprep.subr.bf16.mxu0 0
        %1799 = vmatpush1.bf16.msra.mxu0 0
        %1800 = vmatprep.subr.bf16.mxu0 0
        %1801 = vmatpush1.bf16.msra.mxu0 0
        %1802 = vmatprep.subr.bf16.mxu0 0
        %1803 = vmatpush1.bf16.msra.mxu0 0
        %1804 = vmatprep.subr.bf16.mxu0 0
        %1805 = vmatpush1.bf16.msra.mxu0 0
        %1806 = vmatprep.subr.bf16.mxu0 0
        %1807 = vmatpush1.bf16.msra.mxu0 0
        %1808 = vmatprep.subr.bf16.mxu0 0
        %1809 = vmatpush1.bf16.msra.mxu0 0
        %1810 = vmatprep.subr.bf16.mxu0 0
        %1811 = vmatpush1.bf16.msra.mxu0 0
        %1812 = vmatprep.subr.bf16.mxu0 0
        %1813 = vmatpush1.bf16.msra.mxu0 0
        %1814 = vmatprep.subr.bf16.mxu0 0
        %1815 = vmatpush1.bf16.msra.mxu0 0
        %1816 = vmatprep.subr.bf16.mxu0 0
        %1817 = vmatpush1.bf16.msra.mxu0 0
        %1818 = vmatprep.subr.bf16.mxu0 0
        %1819 = vmatpush1.bf16.msra.mxu0 0
        %1820 = vmatprep.subr.bf16.mxu0 0
        %1821 = vmatpush1.bf16.msra.mxu0 0
        %1822 = vmatprep.subr.bf16.mxu0 0
        %1823 = vmatpush1.bf16.msra.mxu0 0
        %1824 = vmatprep.subr.bf16.mxu0 0
        %1825 = vmatpush1.bf16.msra.mxu0 0
        %1826 = vmatprep.mubr.bf16.mxu0 0
        %1827 = vmatmul.mubr.bf16.gmra.mrb[0].mxu0 %v1756
        %v1828 = vpop.f32.mrb[0].mxu0
        %v1829 = vadd.f32 0.0, %v1828
        %v1830 = vpop.f32.mrb[0].mxu0
        %v1831 = vpop.f32.mrb[0].mxu0
        %v1832 = vadd.f32 0.0, %v1831
        %v1833 = vpop.f32.mrb[0].mxu0
        %1834 = vmatprep.mubr.bf16.mxu0 0
        %1835 = vmatmul.mubr.bf16.gmra.mrb[0].mxu0 %v1759
        %v1836 = vpop.f32.mrb[0].mxu0
        %v1837 = vpop.f32.mrb[0].mxu0
        %v1838 = vpop.f32.mrb[0].mxu0
        %v1839 = vadd.f32 0.0, %v1838
        %v1840 = vpop.f32.mrb[0].mxu0
        %1841 = vmatprep.mubr.bf16.mxu0 0
        %1842 = vmatmul.mubr.bf16.gmra.mrb[0].mxu0 %v1762
        %v1843 = vpop.f32.mrb[0].mxu0
        %v1844 = vadd.f32 0.0, %v1843
        %v1845 = vpop.f32.mrb[0].mxu0
        %v1846 = vpop.f32.mrb[0].mxu0
        %v1847 = vpop.f32.mrb[0].mxu0
        %1848 = vmatprep.mubr.bf16.mxu0 0
        %1849 = vmatmul.mubr.bf16.gmra.mrb[0].mxu0 %v1765
        %v1850 = vpop.f32.mrb[0].mxu0
        %v1851 = vadd.f32 0.0, %v1850
        %v1852 = vpop.f32.mrb[0].mxu0
        %v1853 = vpop.f32.mrb[0].mxu0
        %v1854 = vadd.f32 0.0, %v1853
        %v1855 = vpop.f32.mrb[0].mxu0
        %1856 = vmatprep.mubr.bf16.mxu0 0
        %1857 = vmatmul.mubr.bf16.gmra.mrb[0].mxu0 %v1768
        %v1858 = vpop.f32.mrb[0].mxu0
        %v1859 = vpop.f32.mrb[0].mxu0
        %v1860 = vpop.f32.mrb[0].mxu0
        %v1861 = vadd.f32 0.0, %v1860
        %v1862 = vpop.f32.mrb[0].mxu0
        %1863 = vmatprep.mubr.bf16.mxu0 0
        %1864 = vmatmul.mubr.bf16.gmra.mrb[0].mxu0 %v1771
        %v1865 = vpop.f32.mrb[0].mxu0
        %v1866 = vadd.f32 0.0, %v1865
        %v1867 = vpop.f32.mrb[0].mxu0
        %v1868 = vpop.f32.mrb[0].mxu0
        %v1869 = vpop.f32.mrb[0].mxu0
        %1870 = vmatprep.mubr.bf16.mxu0 0
        %1871 = vmatmul.mubr.bf16.gmra.mrb[0].mxu0 %v1774
        %v1872 = vpop.f32.mrb[0].mxu0
        %v1873 = vadd.f32 0.0, %v1872
        %v1874 = vpop.f32.mrb[0].mxu0
        %v1875 = vpop.f32.mrb[0].mxu0
        %v1876 = vadd.f32 0.0, %v1875
        %v1877 = vpop.f32.mrb[0].mxu0
        %1878 = vmatprep.mubr.bf16.mxu0 0
        %1879 = vmatmul.mubr.bf16.gmra.mrb[0].mxu0 %v1777
        %v1880 = vpop.f32.mrb[0].mxu0
        %v1881 = vpop.f32.mrb[0].mxu0
        %v1882 = vpop.f32.mrb[0].mxu0
        %v1883 = vadd.f32 0.0, %v1882
        %v1884 = vpop.f32.mrb[0].mxu0
        %1885 = vmatprep.mubr.bf16.mxu0 0
        %1886 = vmatmul.mubr.bf16.gmra.mrb[0].mxu0 %v1780
        %v1887 = vpop.f32.mrb[0].mxu0
        %v1888 = vadd.f32 0.0, %v1887
        %v1889 = vpop.f32.mrb[0].mxu0
        %v1890 = vpop.f32.mrb[0].mxu0
        %v1891 = vpop.f32.mrb[0].mxu0
        %1892 = vmatprep.mubr.bf16.mxu0 0
        %1893 = vmatmul.mubr.bf16.gmra.mrb[0].mxu0 %v1783
        %v1894 = vpop.f32.mrb[0].mxu0
        %v1895 = vadd.f32 0.0, %v1894
        %v1896 = vpop.f32.mrb[0].mxu0
        %v1897 = vpop.f32.mrb[0].mxu0
        %v1898 = vadd.f32 0.0, %v1897
        %v1899 = vpop.f32.mrb[0].mxu0
        %1900 = vmatprep.mubr.bf16.mxu0 0
        %1901 = vmatmul.mubr.bf16.gmra.mrb[0].mxu0 %v1786
        %v1902 = vpop.f32.mrb[0].mxu0
        %v1903 = vpop.f32.mrb[0].mxu0
        %v1904 = vpop.f32.mrb[0].mxu0
        %v1905 = vadd.f32 0.0, %v1904
        %v1906 = vpop.f32.mrb[0].mxu0
        %1907 = vmatprep.mubr.bf16.mxu0 0
        %1908 = vmatmul.mubr.bf16.gmra.mrb[0].mxu0 %v1789
        %v1909 = vpop.f32.mrb[0].mxu0
        %v1910 = vadd.f32 0.0, %v1909
        %v1911 = vpop.f32.mrb[0].mxu0
        %v1912 = vpop.f32.mrb[0].mxu0
        %v1913 = vpop.f32.mrb[0].mxu0
        %1914 = vdwg.mxu0
        %v1915 = vadd.f32 %v1576, %v1829
        %v1916 = vadd.f32 %v1579, %v1832
        %v1917 = vadd.f32 %v1586, %v1839
        %v1918 = vadd.f32 %v1591, %v1844
        %v1919 = vadd.f32 %v1598, %v1851
        %v1920 = vadd.f32 %v1601, %v1854
        %v1921 = vadd.f32 %v1608, %v1861
        %v1922 = vadd.f32 %v1613, %v1866
        %v1923 = vadd.f32 %v1620, %v1873
        %v1924 = vadd.f32 %v1623, %v1876
        %v1925 = vadd.f32 %v1630, %v1883
        %v1926 = vadd.f32 %v1635, %v1888
        %v1927 = vadd.f32 %v1642, %v1895
        %v1928 = vadd.f32 %v1645, %v1898
        %v1929 = vadd.f32 %v1652, %v1905
        %v1930 = vadd.f32 %v1657, %v1910
        %v1931 = vld [vmem:[#allocation11] sm:$0x1]
        %v1933 = vlaneseq
        %v1934 = vshrl.u32 %v1933, 7
        %v1935 = vsub.s32 0, %v1934
        %v1936 = vrot.slane %v1931, %v1935
        %v1938 = vmul.f32 %v1915, %v1936
        %v1939 = vmul.f32 %v1916, %v1936
        %v1940 = vmul.f32 %v1917, %v1936
        %v1941 = vmul.f32 %v1918, %v1936
        %v1942 = vmul.f32 %v1919, %v1936
        %v1943 = vmul.f32 %v1920, %v1936
        %v1944 = vmul.f32 %v1921, %v1936
        %v1945 = vmul.f32 %v1922, %v1936
        %v1946 = vmul.f32 %v1923, %v1936
        %v1947 = vmul.f32 %v1924, %v1936
        %v1948 = vmul.f32 %v1925, %v1936
        %v1949 = vmul.f32 %v1926, %v1936
        %v1950 = vmul.f32 %v1927, %v1936
        %v1951 = vmul.f32 %v1928, %v1936
        %v1952 = vmul.f32 %v1929, %v1936
        %v1953 = vmul.f32 %v1930, %v1936
        %v1954 = vld [vmem:[#allocation12] sm:$0x1]
        %v1956 = vlaneseq
        %v1957 = vshrl.u32 %v1956, 7
        %v1958 = vsub.s32 0, %v1957
        %v1959 = vrot.slane %v1954, %v1958
        %v1961 = vadd.f32 %v1938, %v1959
        %v1962 = vadd.f32 %v1939, %v1959
        %v1963 = vadd.f32 %v1940, %v1959
        %v1964 = vadd.f32 %v1941, %v1959
        %v1965 = vadd.f32 %v1942, %v1959
        %v1966 = vadd.f32 %v1943, %v1959
        %v1967 = vadd.f32 %v1944, %v1959
        %v1968 = vadd.f32 %v1945, %v1959
        %v1969 = vadd.f32 %v1946, %v1959
        %v1970 = vadd.f32 %v1947, %v1959
        %v1971 = vadd.f32 %v1948, %v1959
        %v1972 = vadd.f32 %v1949, %v1959
        %v1973 = vadd.f32 %v1950, %v1959
        %v1974 = vadd.f32 %v1951, %v1959
        %v1975 = vadd.f32 %v1952, %v1959
        %v1976 = vadd.f32 %v1953, %v1959
        %v1977 = vmax.f32 %v1961, 0.0
        %v1978 = vmax.f32 %v1962, 0.0
        %v1979 = vmax.f32 %v1963, 0.0
        %v1980 = vmax.f32 %v1964, 0.0
        %v1981 = vmax.f32 %v1965, 0.0
        %v1982 = vmax.f32 %v1966, 0.0
        %v1983 = vmax.f32 %v1967, 0.0
        %v1984 = vmax.f32 %v1968, 0.0
        %v1985 = vmax.f32 %v1969, 0.0
        %v1986 = vmax.f32 %v1970, 0.0
        %v1987 = vmax.f32 %v1971, 0.0
        %v1988 = vmax.f32 %v1972, 0.0
        %v1989 = vmax.f32 %v1973, 0.0
        %v1990 = vmax.f32 %v1974, 0.0
        %v1991 = vmax.f32 %v1975, 0.0
        %v1992 = vmax.f32 %v1976, 0.0
        %vm1993 = vcmask 31744
        %1994 = vst.msk [vmem:[%s467] sm:$0xff] %vm1993, %v1977
        %1995 = vst.msk [vmem:[%s467 + $0x8] sm:$0xff] %vm1993, %v1978
        %1996 = vst.msk [vmem:[%s467 + $0x10] sm:$0xff] %vm1993, %v1979
        %1997 = vst.msk [vmem:[%s467 + $0x18] sm:$0xff] %vm1993, %v1980
        %1998 = vst.msk [vmem:[%s467 + $0x20] sm:$0xff] %vm1993, %v1981
        %1999 = vst.msk [vmem:[%s467 + $0x28] sm:$0xff] %vm1993, %v1982
        %2000 = vst.msk [vmem:[%s467 + $0x30] sm:$0xff] %vm1993, %v1983
        %2001 = vst.msk [vmem:[%s467 + $0x38] sm:$0xff] %vm1993, %v1984
        %2002 = vst.msk [vmem:[%s467 + $0x40] sm:$0xff] %vm1993, %v1985
        %2003 = vst.msk [vmem:[%s467 + $0x48] sm:$0xff] %vm1993, %v1986
        %2004 = vst.msk [vmem:[%s467 + $0x50] sm:$0xff] %vm1993, %v1987
        %2005 = vst.msk [vmem:[%s467 + $0x58] sm:$0xff] %vm1993, %v1988
        %2006 = vst.msk [vmem:[%s467 + $0x60] sm:$0xff] %vm1993, %v1989
        %2007 = vst.msk [vmem:[%s467 + $0x68] sm:$0xff] %vm1993, %v1990
        %2008 = vst.msk [vmem:[%s467 + $0x70] sm:$0xff] %vm1993, %v1991
        %2009 = vst.msk [vmem:[%s467 + $0x78] sm:$0xff] %vm1993, %v1992
        %s2010 = sand.u32 %s237, 1
        %s2011 = scalar_lea.sflag [#allocation5], %s2010
        %s2012 = sand.u32 %s237, 1
        %s2013 = smul.addr %s2012, 128
        %s2014 = scalar_lea.vmem [#allocation14], %s2013
        // Predicated region
        $region73: #{upconv_forward.7} parent=43 // pred_check
          %p2015 = pneg %p247
        $region74: #{upconv_forward.7} parent=43 // pred_check_branch
          %2017 = sbr.rel (%p2015) target = $region76
        $region75: #{upconv_forward.7} parent=43 // pred_region
          %s2018 = smul.u32 8, %s34
          %s2020 = ssub.s32 2048, 2048
          %2021 = vsyncadd %s2011, %s2020
          %s2022 = smul.addr %s2018, 2
          %s2023 = sadd.s32 %s35, %s2022
          %s2024 = smul.addr %s33, 32
          %s2025 = sadd.s32 %s2023, %s2024
          %s2026 = smul.addr %s2025, 128
          %s2027 = scalar_lea.hbm %s6, %s2026
          %s2028 = sshll.u32 %s2014, 4
          %s2029 = int_to_ptr.vmem [resolvable:$true] %s2028
          %2034 = dma.vmem_to_hbm [thread:$0]  %s2029, 2048, %s2027, %s2011, 128, 128, 8
        $region76: #{upconv_forward.7} parent=43 // pred_fallthru
          _
      $region44: #{upconv_forward.7} parent=5 // pred_fallthru
        _
      %p2035 = scmp.le.s32.totalorder 2, %s23
      // Predicated region
      $region77: #{upconv_forward.7} parent=5 // pred_check
        %p2036 = pneg %p2035
      $region78: #{upconv_forward.7} parent=5 // pred_check_branch
        %2038 = sbr.rel (%p2036) target = $region80
      $region79: #{upconv_forward.7} parent=5 // pred_region
        %s2039 = ssub.s32 %s23, 2
        // Predicated region
        $region81: #{upconv_forward.7} parent=79 // pred_check
          %p2040 = pneg %p253
        $region82: #{upconv_forward.7} parent=79 // pred_check_branch
          %2042 = sbr.rel (%p2040) target = $region84
        $region83: #{upconv_forward.7} parent=79 // pred_region
          %s2043 = sand.u32 %s238, 1
          %s2044 = scalar_lea.sflag [#allocation5], %s2043
          %s2045 = sand.u32 %s238, 1
          %s2046 = smul.addr %s2045, 128
          %s2047 = scalar_lea.vmem [#allocation14], %s2046
          %2048 = dma.done %s2044, 2048
        $region84: #{upconv_forward.7} parent=79 // pred_fallthru
          _
      $region80: #{upconv_forward.7} parent=5 // pred_fallthru
        _
    $region6: #{upconv_forward.7} parent=1 // loop_footer
      %s27 = sadd.s32 1, %s23
    $region7: #{upconv_forward.7} parent=1 // loop_footer_branch
      %22 = sbr.rel target = $region3
    $region8: #{upconv_forward.7} parent=1 // loop_exit
      _
    %2049 = vsyncpa [#allocation4], 1
    %s2050 = scalar_lea.sflag [#allocation4], 1
    %2051 = vsyncpa %s2050, 1
    %2052 = vsyncpa [#allocation7], 1
    %s2053 = scalar_lea.sflag [#allocation7], 1
    %2054 = vsyncpa %s2053, 1
    %2055 = vsyncpa [#allocation10], 1
    %2056 = vsyncpa [#allocation13], 1
    %2057 = vsyncpa [#allocation5], 1
    %s2058 = scalar_lea.sflag [#allocation5], 1
    %2059 = vsyncpa %s2058, 1

// kernel: upconv_forward.6
$region0: #{upconv_forward.6}
  #allocation0 [shape = 'u32[]', space=smem, size = 0x4, offset = 0x4, fixed_abs, tag = 'smem constant byte address 0x4 - core index']
  #allocation1 [shape = 'u32[144,128]{1,0:T(1,128)}', space=vmem, size = 0x12000, scoped, tag = 'internal scratch']
  #allocation2 [shape = 'bf16[10,24,12]{2,1,0:T(8,128)(2,1)}', space=vmem, size = 0xf000, scoped, tag = 'scratch operand']
  #allocation3 [shape = 'bf16[10,24,12]{2,1,0:T(8,128)(2,1)}', space=vmem, size = 0xf000, scoped, tag = 'scratch operand']
  %s0 = inlined_call_operand.hbm [shape: bf16[2,16,16,4], index: 0, kind: input, shape index: {}, may-alias: {0,1,2}]
  %s1 = inlined_call_operand.hbm [shape: bf16[2,16,16,4], index: 1, kind: input, shape index: {}, may-alias: {0,1,2}]
  %s2 = inlined_call_operand.hbm [shape: bf16[2,16,16,4], index: 2, kind: input, shape index: {}, may-alias: {0,1,2}]
  %s3 = inlined_call_operand.hbm [shape: bf16[2,16,16,4], index: 3, kind: input, shape index: {}, may-alias: {3,4,5}]
  %s4 = inlined_call_operand.hbm [shape: bf16[2,16,16,4], index: 4, kind: input, shape index: {}, may-alias: {3,4,5}]
  %s5 = inlined_call_operand.hbm [shape: bf16[2,16,16,4], index: 5, kind: input, shape index: {}, may-alias: {3,4,5}]
  %s6 = inlined_call_operand.hbm [shape: bf16[3,12,4], index: 6, kind: input, shape index: {}]
  %s7 = inlined_call_operand.hbm [shape: bf16[3,12,4], index: 7, kind: input, shape index: {}]
  %s8 = inlined_call_operand.hbm [shape: f32[1,4], index: 8, kind: input, shape index: {}]
  %s9 = inlined_call_operand.hbm [shape: f32[1,4], index: 9, kind: input, shape index: {}]
  %s10 = inlined_call_operand.hbm [shape: bf16[2,16,16,4], index: 10, kind: output, shape index: {}]
  %s11 = sld [smem:[#allocation0]]
  $region117: #{upconv_forward.6} parent=0
    _
  %s13 = ssub.s32 1, %s11
  %s14 = scalar_select 0, %s13, %s11
  $region1: #{upconv_forward.6} parent=0
    #allocation4 [shape = 'u8[65536]{0}', space=vmem, size = 0x10000, scoped, tag = 'input window, operand 0']
    #allocation5 [shape = 's32[2]{0}', space=sflag, size = 0x8, scoped, tag = 'scoped memory for upconv_forward.6']
    #allocation6 [shape = 's32[2]{0}', space=sflag, size = 0x8, scoped, tag = 'scoped memory for upconv_forward.6']
    #allocation7 [shape = 'u8[8192]{0}', space=vmem, size = 0x2000, scoped, tag = 'input window, operand 1']
    #allocation8 [shape = 's32[2]{0}', space=sflag, size = 0x8, scoped, tag = 'scoped memory for upconv_forward.6']
    #allocation9 [shape = 'u8[8192]{0}', space=vmem, size = 0x2000, scoped, tag = 'input window, operand 2']
    #allocation10 [shape = 'u8[65536]{0}', space=vmem, size = 0x10000, scoped, tag = 'input window, operand 3']
    #allocation11 [shape = 's32[2]{0}', space=sflag, size = 0x8, scoped, tag = 'scoped memory for upconv_forward.6']
    #allocation12 [shape = 'u8[8192]{0}', space=vmem, size = 0x2000, scoped, tag = 'input window, operand 4']
    #allocation13 [shape = 'u8[8192]{0}', space=vmem, size = 0x2000, scoped, tag = 'input window, operand 5']
    #allocation14 [shape = 's32[2]{0}', space=sflag, size = 0x8, scoped, tag = 'scoped memory for upconv_forward.6']
    #allocation15 [shape = 'u8[12288]{0}', space=vmem, size = 0x3000, scoped, tag = 'input window, operand 6, single buffered']
    #allocation16 [shape = 'u8[12288]{0}', space=vmem, size = 0x3000, scoped, tag = 'input window, operand 7, single buffered']
    #allocation17 [shape = 's32[1]{0}', space=sflag, size = 0x4, scoped, tag = 'scoped memory for upconv_forward.6']
    #allocation18 [shape = 'u8[512]{0}', space=vmem, size = 0x400, scoped, tag = 'input window, operand 8, single buffered']
    #allocation19 [shape = 'u8[512]{0}', space=vmem, size = 0x400, scoped, tag = 'input window, operand 9, single buffered']
    #allocation20 [shape = 's32[1]{0}', space=sflag, size = 0x4, scoped, tag = 'scoped memory for upconv_forward.6']
    #allocation21 [shape = 'u8[65536]{0}', space=vmem, size = 0x10000, scoped, tag = 'output window, operand 0']
    %15 = vsyncpa [#allocation5], 0
    %s16 = scalar_lea.sflag [#allocation5], 1
    %17 = vsyncpa %s16, 0
    %18 = vsyncpa [#allocation8], 0
    %s19 = scalar_lea.sflag [#allocation8], 1
    %20 = vsyncpa %s19, 0
    %21 = vsyncpa [#allocation11], 0
    %s22 = scalar_lea.sflag [#allocation11], 1
    %23 = vsyncpa %s22, 0
    %24 = vsyncpa [#allocation14], 0
    %s25 = scalar_lea.sflag [#allocation14], 1
    %26 = vsyncpa %s25, 0
    %27 = vsyncpa [#allocation17], 0
    %28 = vsyncpa [#allocation20], 0
    %29 = vsyncpa [#allocation6], 0
    %s30 = scalar_lea.sflag [#allocation6], 1
    %31 = vsyncpa %s30, 0
    loop: start=0, step=1, limit=6
    $region2: #{upconv_forward.6} parent=1 // loop_pre_header
      _
    $region3: #{upconv_forward.6} parent=1 // loop_header
      %s33 = sphi 0, %s37
      %p34 = scmp.ge.s32.totalorder %s33, 6
      %s40 = sphi 0, %s59
      %s41 = sphi 0, %s55
      %s42 = sphi 0, %s51
      %s43 = sphi 0, %s40
      %s44 = sphi 0, %s41
      %s45 = sphi 0, %s42
      %s46 = sphi 0, %s43
      %s47 = sphi 0, %s44
      %s48 = sphi 0, %s45
      %s64 = sphi 0, %s66
      %s67 = sphi 0, %s64
      %s68 = sphi 0, %s67
      %s84 = sphi 0, %s68
      %s100 = sphi 0, %s102
      %s103 = sphi 0, %s100
      %s104 = sphi 0, %s103
      %s120 = sphi 0, %s104
      %s136 = sphi 0, %s138
      %s139 = sphi 0, %s136
      %s140 = sphi 0, %s139
      %s156 = sphi 0, %s140
      %s164 = sphi 0, %s166
      %s167 = sphi 0, %s164
      %s168 = sphi 0, %s167
      %s184 = sphi 0, %s168
      %s200 = sphi 0, %s202
      %s203 = sphi 0, %s200
      %s204 = sphi 0, %s203
      %s220 = sphi 0, %s204
      %s236 = sphi 0, %s238
      %s239 = sphi 0, %s236
      %s240 = sphi 0, %s239
      %s256 = sphi 0, %s240
      %s262 = sphi 0, %s264
      %s265 = sphi 0, %s262
      %s266 = sphi 0, %s265
      %s282 = sphi 0, %s266
      %s288 = sphi 0, %s290
      %s291 = sphi 0, %s288
      %s292 = sphi 0, %s291
      %s308 = sphi 0, %s292
      %s314 = sphi 0, %s316
      %s317 = sphi 0, %s314
      %s318 = sphi 0, %s317
      %s334 = sphi 0, %s318
      %s340 = sphi 0, %s342
      %s343 = sphi 0, %s340
      %s344 = sphi 0, %s343
      %s360 = sphi 0, %s344
      %s370 = sphi 0, %s372
      %s373 = sphi 0, %s370
      %s374 = sphi 0, %s373
      %s390 = sphi 0, %s374
    $region4: #{upconv_forward.6} parent=1 // loop_header_branch
      %36 = sbr.rel (%p34) target = $region8
    $region5: #{upconv_forward.6} parent=1 // loop_body
      %s38 = ssub.s32 %s33, 1
      %s39 = ssub.s32 %s33, 2
      %s49 = sadd.s32 1, %s42
      %p50 = scmp.ge.s32.totalorder %s49, 1
      %s51 = scalar_select %p50, 0, %s49
      %s52 = sadd.s32 1, %s41
      %s53 = scalar_select %p50, %s52, %s41
      %p54 = scmp.ge.s32.totalorder %s53, 2
      %s55 = scalar_select %p54, 0, %s53
      %s56 = sadd.s32 1, %s40
      %s57 = scalar_select %p54, %s56, %s40
      %p58 = scmp.ge.s32.totalorder %s57, 2
      %s59 = scalar_select %p58, 0, %s57
      %s60 = ssub.s32 %s40, %s59
      %s61 = ssub.s32 %s41, %s55
      %s62 = sor.u32 %s60, %s61
      %p63 = scmp.eq.s32.totalorder %s62, 0
      %s65 = sadd.s32 %s64, 1
      %s66 = scalar_select %p63, %s64, %s65
      %p69 = pneg %p63
      %p70 = scmp.eq.s32.totalorder %s33, 3
      %p71 = por %p69, %p70
      %p72 = scmp.ne.s32.totalorder %s64, %s67
      %p73 = scmp.eq.s32.totalorder %s33, 0
      %p74 = por %p72, %p73
      %p75 = scmp.ne.s32.totalorder %s64, %s67
      %p76 = scmp.eq.s32.totalorder %s38, 3
      %p77 = por %p75, %p76
      %p78 = scmp.ne.s32.totalorder %s67, %s68
      %p79 = scmp.eq.s32.totalorder %s38, 0
      %p80 = por %p78, %p79
      %p81 = scmp.ne.s32.totalorder %s67, %s68
      %p82 = scmp.eq.s32.totalorder %s39, 3
      %p83 = por %p81, %p82
      %p85 = scmp.ne.s32.totalorder %s68, %s84
      %p86 = scmp.eq.s32.totalorder %s39, 0
      %p87 = por %p85, %p86
      %s88 = smul.u32 %s41, 8
      %s89 = ssub.s32 %s88, 1
      %p90 = scmp.gt.s32.totalorder %s89, 0
      %s91 = scalar_select %p90, %s89, 0
      %s92 = smul.u32 %s55, 8
      %s93 = ssub.s32 %s92, 1
      %p94 = scmp.gt.s32.totalorder %s93, 0
      %s95 = scalar_select %p94, %s93, 0
      %s96 = ssub.s32 %s40, %s59
      %s97 = ssub.s32 %s91, %s95
      %s98 = sor.u32 %s96, %s97
      %p99 = scmp.eq.s32.totalorder %s98, 0
      %s101 = sadd.s32 %s100, 1
      %s102 = scalar_select %p99, %s100, %s101
      %p105 = pneg %p99
      %p106 = scmp.eq.s32.totalorder %s33, 3
      %p107 = por %p105, %p106
      %p108 = scmp.ne.s32.totalorder %s100, %s103
      %p109 = scmp.eq.s32.totalorder %s33, 0
      %p110 = por %p108, %p109
      %p111 = scmp.ne.s32.totalorder %s100, %s103
      %p112 = scmp.eq.s32.totalorder %s38, 3
      %p113 = por %p111, %p112
      %p114 = scmp.ne.s32.totalorder %s103, %s104
      %p115 = scmp.eq.s32.totalorder %s38, 0
      %p116 = por %p114, %p115
      %p117 = scmp.ne.s32.totalorder %s103, %s104
      %p118 = scmp.eq.s32.totalorder %s39, 3
      %p119 = por %p117, %p118
      %p121 = scmp.ne.s32.totalorder %s104, %s120
      %p122 = scmp.eq.s32.totalorder %s39, 0
      %p123 = por %p121, %p122
      %s124 = sadd.s32 %s41, 1
      %s125 = smul.u32 %s124, 8
      %p126 = scmp.lt.s32.totalorder %s125, 15
      %s127 = scalar_select %p126, %s125, 15
      %s128 = sadd.s32 %s55, 1
      %s129 = smul.u32 %s128, 8
      %p130 = scmp.lt.s32.totalorder %s129, 15
      %s131 = scalar_select %p130, %s129, 15
      %s132 = ssub.s32 %s40, %s59
      %s133 = ssub.s32 %s127, %s131
      %s134 = sor.u32 %s132, %s133
      %p135 = scmp.eq.s32.totalorder %s134, 0
      %s137 = sadd.s32 %s136, 1
      %s138 = scalar_select %p135, %s136, %s137
      %p141 = pneg %p135
      %p142 = scmp.eq.s32.totalorder %s33, 3
      %p143 = por %p141, %p142
      %p144 = scmp.ne.s32.totalorder %s136, %s139
      %p145 = scmp.eq.s32.totalorder %s33, 0
      %p146 = por %p144, %p145
      %p147 = scmp.ne.s32.totalorder %s136, %s139
      %p148 = scmp.eq.s32.totalorder %s38, 3
      %p149 = por %p147, %p148
      %p150 = scmp.ne.s32.totalorder %s139, %s140
      %p151 = scmp.eq.s32.totalorder %s38, 0
      %p152 = por %p150, %p151
      %p153 = scmp.ne.s32.totalorder %s139, %s140
      %p154 = scmp.eq.s32.totalorder %s39, 3
      %p155 = por %p153, %p154
      %p157 = scmp.ne.s32.totalorder %s140, %s156
      %p158 = scmp.eq.s32.totalorder %s39, 0
      %p159 = por %p157, %p158
      %s160 = ssub.s32 %s40, %s59
      %s161 = ssub.s32 %s41, %s55
      %s162 = sor.u32 %s160, %s161
      %p163 = scmp.eq.s32.totalorder %s162, 0
      %s165 = sadd.s32 %s164, 1
      %s166 = scalar_select %p163, %s164, %s165
      %p169 = pneg %p163
      %p170 = scmp.eq.s32.totalorder %s33, 3
      %p171 = por %p169, %p170
      %p172 = scmp.ne.s32.totalorder %s164, %s167
      %p173 = scmp.eq.s32.totalorder %s33, 0
      %p174 = por %p172, %p173
      %p175 = scmp.ne.s32.totalorder %s164, %s167
      %p176 = scmp.eq.s32.totalorder %s38, 3
      %p177 = por %p175, %p176
      %p178 = scmp.ne.s32.totalorder %s167, %s168
      %p179 = scmp.eq.s32.totalorder %s38, 0
      %p180 = por %p178, %p179
      %p181 = scmp.ne.s32.totalorder %s167, %s168
      %p182 = scmp.eq.s32.totalorder %s39, 3
      %p183 = por %p181, %p182
      %p185 = scmp.ne.s32.totalorder %s168, %s184
      %p186 = scmp.eq.s32.totalorder %s39, 0
      %p187 = por %p185, %p186
      %s188 = smul.u32 %s41, 8
      %s189 = ssub.s32 %s188, 1
      %p190 = scmp.gt.s32.totalorder %s189, 0
      %s191 = scalar_select %p190, %s189, 0
      %s192 = smul.u32 %s55, 8
      %s193 = ssub.s32 %s192, 1
      %p194 = scmp.gt.s32.totalorder %s193, 0
      %s195 = scalar_select %p194, %s193, 0
      %s196 = ssub.s32 %s40, %s59
      %s197 = ssub.s32 %s191, %s195
      %s198 = sor.u32 %s196, %s197
      %p199 = scmp.eq.s32.totalorder %s198, 0
      %s201 = sadd.s32 %s200, 1
      %s202 = scalar_select %p199, %s200, %s201
      %p205 = pneg %p199
      %p206 = scmp.eq.s32.totalorder %s33, 3
      %p207 = por %p205, %p206
      %p208 = scmp.ne.s32.totalorder %s200, %s203
      %p209 = scmp.eq.s32.totalorder %s33, 0
      %p210 = por %p208, %p209
      %p211 = scmp.ne.s32.totalorder %s200, %s203
      %p212 = scmp.eq.s32.totalorder %s38, 3
      %p213 = por %p211, %p212
      %p214 = scmp.ne.s32.totalorder %s203, %s204
      %p215 = scmp.eq.s32.totalorder %s38, 0
      %p216 = por %p214, %p215
      %p217 = scmp.ne.s32.totalorder %s203, %s204
      %p218 = scmp.eq.s32.totalorder %s39, 3
      %p219 = por %p217, %p218
      %p221 = scmp.ne.s32.totalorder %s204, %s220
      %p222 = scmp.eq.s32.totalorder %s39, 0
      %p223 = por %p221, %p222
      %s224 = sadd.s32 %s41, 1
      %s225 = smul.u32 %s224, 8
      %p226 = scmp.lt.s32.totalorder %s225, 15
      %s227 = scalar_select %p226, %s225, 15
      %s228 = sadd.s32 %s55, 1
      %s229 = smul.u32 %s228, 8
      %p230 = scmp.lt.s32.totalorder %s229, 15
      %s231 = scalar_select %p230, %s229, 15
      %s232 = ssub.s32 %s40, %s59
      %s233 = ssub.s32 %s227, %s231
      %s234 = sor.u32 %s232, %s233
      %p235 = scmp.eq.s32.totalorder %s234, 0
      %s237 = sadd.s32 %s236, 1
      %s238 = scalar_select %p235, %s236, %s237
      %p241 = pneg %p235
      %p242 = scmp.eq.s32.totalorder %s33, 3
      %p243 = por %p241, %p242
      %p244 = scmp.ne.s32.totalorder %s236, %s239
      %p245 = scmp.eq.s32.totalorder %s33, 0
      %p246 = por %p244, %p245
      %p247 = scmp.ne.s32.totalorder %s236, %s239
      %p248 = scmp.eq.s32.totalorder %s38, 3
      %p249 = por %p247, %p248
      %p250 = scmp.ne.s32.totalorder %s239, %s240
      %p251 = scmp.eq.s32.totalorder %s38, 0
      %p252 = por %p250, %p251
      %p253 = scmp.ne.s32.totalorder %s239, %s240
      %p254 = scmp.eq.s32.totalorder %s39, 3
      %p255 = por %p253, %p254
      %p257 = scmp.ne.s32.totalorder %s240, %s256
      %p258 = scmp.eq.s32.totalorder %s39, 0
      %p259 = por %p257, %p258
      %s260 = ssub.s32 %s42, %s51
      %p261 = scmp.eq.s32.totalorder %s260, 0
      %s263 = sadd.s32 %s262, 1
      %s264 = scalar_select %p261, %s262, %s263
      %p267 = pneg %p261
      %p268 = scmp.eq.s32.totalorder %s33, 3
      %p269 = por %p267, %p268
      %p270 = scmp.ne.s32.totalorder %s262, %s265
      %p271 = scmp.eq.s32.totalorder %s33, 0
      %p272 = por %p270, %p271
      %p273 = scmp.ne.s32.totalorder %s262, %s265
      %p274 = scmp.eq.s32.totalorder %s38, 3
      %p275 = por %p273, %p274
      %p276 = scmp.ne.s32.totalorder %s265, %s266
      %p277 = scmp.eq.s32.totalorder %s38, 0
      %p278 = por %p276, %p277
      %p279 = scmp.ne.s32.totalorder %s265, %s266
      %p280 = scmp.eq.s32.totalorder %s39, 3
      %p281 = por %p279, %p280
      %p283 = scmp.ne.s32.totalorder %s266, %s282
      %p284 = scmp.eq.s32.totalorder %s39, 0
      %p285 = por %p283, %p284
      %s286 = ssub.s32 %s42, %s51
      %p287 = scmp.eq.s32.totalorder %s286, 0
      %s289 = sadd.s32 %s288, 1
      %s290 = scalar_select %p287, %s288, %s289
      %p293 = pneg %p287
      %p294 = scmp.eq.s32.totalorder %s33, 3
      %p295 = por %p293, %p294
      %p296 = scmp.ne.s32.totalorder %s288, %s291
      %p297 = scmp.eq.s32.totalorder %s33, 0
      %p298 = por %p296, %p297
      %p299 = scmp.ne.s32.totalorder %s288, %s291
      %p300 = scmp.eq.s32.totalorder %s38, 3
      %p301 = por %p299, %p300
      %p302 = scmp.ne.s32.totalorder %s291, %s292
      %p303 = scmp.eq.s32.totalorder %s38, 0
      %p304 = por %p302, %p303
      %p305 = scmp.ne.s32.totalorder %s291, %s292
      %p306 = scmp.eq.s32.totalorder %s39, 3
      %p307 = por %p305, %p306
      %p309 = scmp.ne.s32.totalorder %s292, %s308
      %p310 = scmp.eq.s32.totalorder %s39, 0
      %p311 = por %p309, %p310
      %s312 = ssub.s32 %s42, %s51
      %p313 = scmp.eq.s32.totalorder %s312, 0
      %s315 = sadd.s32 %s314, 1
      %s316 = scalar_select %p313, %s314, %s315
      %p319 = pneg %p313
      %p320 = scmp.eq.s32.totalorder %s33, 3
      %p321 = por %p319, %p320
      %p322 = scmp.ne.s32.totalorder %s314, %s317
      %p323 = scmp.eq.s32.totalorder %s33, 0
      %p324 = por %p322, %p323
      %p325 = scmp.ne.s32.totalorder %s314, %s317
      %p326 = scmp.eq.s32.totalorder %s38, 3
      %p327 = por %p325, %p326
      %p328 = scmp.ne.s32.totalorder %s317, %s318
      %p329 = scmp.eq.s32.totalorder %s38, 0
      %p330 = por %p328, %p329
      %p331 = scmp.ne.s32.totalorder %s317, %s318
      %p332 = scmp.eq.s32.totalorder %s39, 3
      %p333 = por %p331, %p332
      %p335 = scmp.ne.s32.totalorder %s318, %s334
      %p336 = scmp.eq.s32.totalorder %s39, 0
      %p337 = por %p335, %p336
      %s338 = ssub.s32 %s42, %s51
      %p339 = scmp.eq.s32.totalorder %s338, 0
      %s341 = sadd.s32 %s340, 1
      %s342 = scalar_select %p339, %s340, %s341
      %p345 = pneg %p339
      %p346 = scmp.eq.s32.totalorder %s33, 3
      %p347 = por %p345, %p346
      %p348 = scmp.ne.s32.totalorder %s340, %s343
      %p349 = scmp.eq.s32.totalorder %s33, 0
      %p350 = por %p348, %p349
      %p351 = scmp.ne.s32.totalorder %s340, %s343
      %p352 = scmp.eq.s32.totalorder %s38, 3
      %p353 = por %p351, %p352
      %p354 = scmp.ne.s32.totalorder %s343, %s344
      %p355 = scmp.eq.s32.totalorder %s38, 0
      %p356 = por %p354, %p355
      %p357 = scmp.ne.s32.totalorder %s343, %s344
      %p358 = scmp.eq.s32.totalorder %s39, 3
      %p359 = por %p357, %p358
      %p361 = scmp.ne.s32.totalorder %s344, %s360
      %p362 = scmp.eq.s32.totalorder %s39, 0
      %p363 = por %p361, %p362
      %s364 = ssub.s32 %s40, %s59
      %s365 = ssub.s32 %s41, %s55
      %s366 = sor.u32 %s364, %s365
      %s367 = ssub.s32 %s42, %s51
      %s368 = sor.u32 %s366, %s367
      %p369 = scmp.eq.s32.totalorder %s368, 0
      %s371 = sadd.s32 %s370, 1
      %s372 = scalar_select %p369, %s370, %s371
      %p375 = pneg %p369
      %p376 = scmp.eq.s32.totalorder %s33, 3
      %p377 = por %p375, %p376
      %p378 = scmp.ne.s32.totalorder %s370, %s373
      %p379 = scmp.eq.s32.totalorder %s33, 0
      %p380 = por %p378, %p379
      %p381 = scmp.ne.s32.totalorder %s370, %s373
      %p382 = scmp.eq.s32.totalorder %s38, 3
      %p383 = por %p381, %p382
      %p384 = scmp.ne.s32.totalorder %s373, %s374
      %p385 = scmp.eq.s32.totalorder %s38, 0
      %p386 = por %p384, %p385
      %p387 = scmp.ne.s32.totalorder %s373, %s374
      %p388 = scmp.eq.s32.totalorder %s39, 3
      %p389 = por %p387, %p388
      %p391 = scmp.ne.s32.totalorder %s374, %s390
      %p392 = scmp.eq.s32.totalorder %s39, 0
      %p393 = por %p391, %p392
      %p394 = scmp.le.s32.totalorder 1, %s33
      %p395 = scmp.lt.s32.totalorder %s33, 5
      %p396 = pnand %p394, %p395
      %p397 = pneg %p396
      // Predicated region
      $region9: #{upconv_forward.6} parent=5 // pred_check
        _
      $region10: #{upconv_forward.6} parent=5 // pred_check_branch
        %399 = sbr.rel (%p396) target = $region12
      $region11: #{upconv_forward.6} parent=5 // pred_region
        %s400 = ssub.s32 %s33, 1
        // Predicated region
        $region13: #{upconv_forward.6} parent=11 // pred_check
          %p401 = pneg %p278
        $region14: #{upconv_forward.6} parent=11 // pred_check_branch
          %403 = sbr.rel (%p401) target = $region16
        $region15: #{upconv_forward.6} parent=11 // pred_region
          %s405 = ssub.s32 384, 384
          %406 = vsyncadd [#allocation14], %s405
          %s407 = smul.addr %s45, 64
          %s408 = scalar_lea.hbm %s6, %s407
          %s409 = sshll.u32 [#allocation15], 4
          %s410 = int_to_ptr.vmem [resolvable:$true] %s409
          %415 = dma.hbm_to_vmem [thread:$0]  %s408, 384, %s410, [#allocation14], 64, 64, 4
        $region16: #{upconv_forward.6} parent=11 // pred_fallthru
          _
        // Predicated region
        $region17: #{upconv_forward.6} parent=11 // pred_check
          %p416 = pneg %p304
        $region18: #{upconv_forward.6} parent=11 // pred_check_branch
          %418 = sbr.rel (%p416) target = $region20
        $region19: #{upconv_forward.6} parent=11 // pred_region
          %s420 = ssub.s32 384, 384
          %421 = vsyncadd [#allocation17], %s420
          %s422 = smul.addr %s45, 64
          %s423 = scalar_lea.hbm %s7, %s422
          %s424 = sshll.u32 [#allocation16], 4
          %s425 = int_to_ptr.vmem [resolvable:$true] %s424
          %430 = dma.hbm_to_vmem [thread:$0]  %s423, 384, %s425, [#allocation17], 64, 64, 4
        $region20: #{upconv_forward.6} parent=11 // pred_fallthru
          _
        // Predicated region
        $region21: #{upconv_forward.6} parent=11 // pred_check
          %p431 = pneg %p330
        $region22: #{upconv_forward.6} parent=11 // pred_check_branch
          %433 = sbr.rel (%p431) target = $region24
        $region23: #{upconv_forward.6} parent=11 // pred_region
          %s435 = ssub.s32 16, 16
          %436 = vsyncadd [#allocation17], %s435
          %s437 = smul.addr %s45, 16
          %s438 = scalar_lea.hbm %s8, %s437
          %s440 = sshll.u32 [#allocation18], 4
          %s441 = int_to_ptr.vmem [resolvable:$true] %s440
          %443 = dma.hbm_to_vmem [thread:$0]  %s438, 16, %s441, [#allocation17]
        $region24: #{upconv_forward.6} parent=11 // pred_fallthru
          _
        // Predicated region
        $region25: #{upconv_forward.6} parent=11 // pred_check
          %p444 = pneg %p356
        $region26: #{upconv_forward.6} parent=11 // pred_check_branch
          %446 = sbr.rel (%p444) target = $region28
        $region27: #{upconv_forward.6} parent=11 // pred_region
          %s448 = ssub.s32 16, 16
          %449 = vsyncadd [#allocation20], %s448
          %s450 = smul.addr %s45, 16
          %s451 = scalar_lea.hbm %s9, %s450
          %s453 = sshll.u32 [#allocation19], 4
          %s454 = int_to_ptr.vmem [resolvable:$true] %s453
          %456 = dma.hbm_to_vmem [thread:$0]  %s451, 16, %s454, [#allocation20]
        $region28: #{upconv_forward.6} parent=11 // pred_fallthru
          _
      $region12: #{upconv_forward.6} parent=5 // pred_fallthru
        _
      %p457 = scmp.lt.s32.totalorder %s33, 4
      // Predicated region
      $region29: #{upconv_forward.6} parent=5 // pred_check
        %p458 = pneg %p457
      $region30: #{upconv_forward.6} parent=5 // pred_check_branch
        %460 = sbr.rel (%p458) target = $region32
      $region31: #{upconv_forward.6} parent=5 // pred_region
        // Predicated region
        $region33: #{upconv_forward.6} parent=31 // pred_check
          %p461 = pneg %p74
        $region34: #{upconv_forward.6} parent=31 // pred_check_branch
          %463 = sbr.rel (%p461) target = $region36
        $region35: #{upconv_forward.6} parent=31 // pred_region
          %s464 = sand.u32 %s64, 1
          %s465 = scalar_lea.sflag [#allocation5], %s464
          %s466 = sand.u32 %s64, 1
          %s467 = smul.addr %s466, 64
          %s468 = scalar_lea.vmem [#allocation4], %s467
          %s469 = smul.u32 8, %s41
          %s471 = ssub.s32 1024, 1024
          %472 = vsyncadd %s465, %s471
          %s473 = smul.addr %s469, 2
          %s474 = smul.addr %s40, 32
          %s475 = sadd.s32 %s473, %s474
          %s476 = smul.addr %s475, 64
          %s477 = scalar_lea.hbm %s0, %s476
          %s478 = sshll.u32 %s468, 4
          %s479 = int_to_ptr.vmem [resolvable:$true] %s478
          %484 = dma.hbm_to_vmem [thread:$0]  %s477, 1024, %s479, %s465, 64, 64, 4
        $region36: #{upconv_forward.6} parent=31 // pred_fallthru
          _
        // Predicated region
        $region37: #{upconv_forward.6} parent=31 // pred_check
          %p485 = pneg %p110
        $region38: #{upconv_forward.6} parent=31 // pred_check_branch
          %487 = sbr.rel (%p485) target = $region40
        $region39: #{upconv_forward.6} parent=31 // pred_region
          %s488 = sand.u32 %s33, 1
          %s489 = scalar_lea.sflag [#allocation8], %s488
          %s490 = sand.u32 %s100, 1
          %s491 = smul.addr %s490, 8
          %s492 = scalar_lea.vmem [#allocation7], %s491
          %s493 = smul.u32 %s41, 8
          %s494 = ssub.s32 %s493, 1
          %p495 = scmp.gt.s32.totalorder %s494, 0
          %s496 = scalar_select %p495, %s494, 0
          %s498 = ssub.s32 128, 128
          %499 = vsyncadd %s489, %s498
          %s500 = smul.addr %s496, 2
          %s501 = smul.addr %s40, 32
          %s502 = sadd.s32 %s500, %s501
          %s503 = smul.addr %s502, 64
          %s504 = scalar_lea.hbm %s1, %s503
          %s505 = sshll.u32 %s492, 4
          %s506 = int_to_ptr.vmem [resolvable:$true] %s505
          %511 = dma.hbm_to_vmem [thread:$0]  %s504, 128, %s506, %s489, 64, 64, 4
        $region40: #{upconv_forward.6} parent=31 // pred_fallthru
          _
        // Predicated region
        $region41: #{upconv_forward.6} parent=31 // pred_check
          %p512 = pneg %p146
        $region42: #{upconv_forward.6} parent=31 // pred_check_branch
          %514 = sbr.rel (%p512) target = $region44
        $region43: #{upconv_forward.6} parent=31 // pred_region
          %s515 = sand.u32 %s33, 1
          %s516 = scalar_lea.sflag [#allocation8], %s515
          %s517 = sand.u32 %s136, 1
          %s518 = smul.addr %s517, 8
          %s519 = scalar_lea.vmem [#allocation9], %s518
          %s520 = sadd.s32 %s41, 1
          %s521 = smul.u32 %s520, 8
          %p522 = scmp.lt.s32.totalorder %s521, 15
          %s523 = scalar_select %p522, %s521, 15
          %s525 = ssub.s32 128, 128
          %526 = vsyncadd %s516, %s525
          %s527 = smul.addr %s523, 2
          %s528 = smul.addr %s40, 32
          %s529 = sadd.s32 %s527, %s528
          %s530 = smul.addr %s529, 64
          %s531 = scalar_lea.hbm %s2, %s530
          %s532 = sshll.u32 %s519, 4
          %s533 = int_to_ptr.vmem [resolvable:$true] %s532
          %538 = dma.hbm_to_vmem [thread:$0]  %s531, 128, %s533, %s516, 64, 64, 4
        $region44: #{upconv_forward.6} parent=31 // pred_fallthru
          _
        // Predicated region
        $region45: #{upconv_forward.6} parent=31 // pred_check
          %p539 = pneg %p174
        $region46: #{upconv_forward.6} parent=31 // pred_check_branch
          %541 = sbr.rel (%p539) target = $region48
        $region47: #{upconv_forward.6} parent=31 // pred_region
          %s542 = sand.u32 %s33, 1
          %s543 = scalar_lea.sflag [#allocation11], %s542
          %s544 = sand.u32 %s164, 1
          %s545 = smul.addr %s544, 64
          %s546 = scalar_lea.vmem [#allocation10], %s545
          %s547 = smul.u32 8, %s41
          %s549 = ssub.s32 1024, 1024
          %550 = vsyncadd %s543, %s549
          %s551 = smul.addr %s547, 2
          %s552 = smul.addr %s40, 32
          %s553 = sadd.s32 %s551, %s552
          %s554 = smul.addr %s553, 64
          %s555 = scalar_lea.hbm %s3, %s554
          %s556 = sshll.u32 %s546, 4
          %s557 = int_to_ptr.vmem [resolvable:$true] %s556
          %562 = dma.hbm_to_vmem [thread:$0]  %s555, 1024, %s557, %s543, 64, 64, 4
        $region48: #{upconv_forward.6} parent=31 // pred_fallthru
          _
        // Predicated region
        $region49: #{upconv_forward.6} parent=31 // pred_check
          %p563 = pneg %p210
        $region50: #{upconv_forward.6} parent=31 // pred_check_branch
          %565 = sbr.rel (%p563) target = $region52
        $region51: #{upconv_forward.6} parent=31 // pred_region
          %s566 = sand.u32 %s33, 1
          %s567 = scalar_lea.sflag [#allocation11], %s566
          %s568 = sand.u32 %s200, 1
          %s569 = smul.addr %s568, 8
          %s570 = scalar_lea.vmem [#allocation12], %s569
          %s571 = smul.u32 %s41, 8
          %s572 = ssub.s32 %s571, 1
          %p573 = scmp.gt.s32.totalorder %s572, 0
          %s574 = scalar_select %p573, %s572, 0
          %s576 = ssub.s32 128, 128
          %577 = vsyncadd %s567, %s576
          %s578 = smul.addr %s574, 2
          %s579 = smul.addr %s40, 32
          %s580 = sadd.s32 %s578, %s579
          %s581 = smul.addr %s580, 64
          %s582 = scalar_lea.hbm %s4, %s581
          %s583 = sshll.u32 %s570, 4
          %s584 = int_to_ptr.vmem [resolvable:$true] %s583
          %589 = dma.hbm_to_vmem [thread:$0]  %s582, 128, %s584, %s567, 64, 64, 4
        $region52: #{upconv_forward.6} parent=31 // pred_fallthru
          _
        // Predicated region
        $region53: #{upconv_forward.6} parent=31 // pred_check
          %p590 = pneg %p246
        $region54: #{upconv_forward.6} parent=31 // pred_check_branch
          %592 = sbr.rel (%p590) target = $region56
        $region55: #{upconv_forward.6} parent=31 // pred_region
          %s593 = sand.u32 %s33, 1
          %s594 = scalar_lea.sflag [#allocation14], %s593
          %s595 = sand.u32 %s236, 1
          %s596 = smul.addr %s595, 8
          %s597 = scalar_lea.vmem [#allocation13], %s596
          %s598 = sadd.s32 %s41, 1
          %s599 = smul.u32 %s598, 8
          %p600 = scmp.lt.s32.totalorder %s599, 15
          %s601 = scalar_select %p600, %s599, 15
          %s603 = ssub.s32 128, 128
          %604 = vsyncadd %s594, %s603
          %s605 = smul.addr %s601, 2
          %s606 = smul.addr %s40, 32
          %s607 = sadd.s32 %s605, %s606
          %s608 = smul.addr %s607, 64
          %s609 = scalar_lea.hbm %s5, %s608
          %s610 = sshll.u32 %s597, 4
          %s611 = int_to_ptr.vmem [resolvable:$true] %s610
          %616 = dma.hbm_to_vmem [thread:$0]  %s609, 128, %s611, %s594, 64, 64, 4
        $region56: #{upconv_forward.6} parent=31 // pred_fallthru
          _
      $region32: #{upconv_forward.6} parent=5 // pred_fallthru
        _
      %p617 = scmp.le.s32.totalorder 1, %s33
      %p618 = scmp.lt.s32.totalorder %s33, 5
      %p619 = pnand %p617, %p618
      %p620 = pneg %p619
      // Predicated region
      $region57: #{upconv_forward.6} parent=5 // pred_check
        _
      $region58: #{upconv_forward.6} parent=5 // pred_check_branch
        %622 = sbr.rel (%p619) target = $region60
      $region59: #{upconv_forward.6} parent=5 // pred_region
        %s623 = ssub.s32 %s33, 1
        %s624 = sand.u32 %s67, 1
        %s625 = scalar_lea.sflag [#allocation5], %s624
        %s626 = sand.u32 %s67, 1
        %s627 = smul.addr %s626, 64
        %s628 = scalar_lea.vmem [#allocation4], %s627
        // Predicated region
        $region61: #{upconv_forward.6} parent=59 // pred_check
          %p629 = pneg %p80
        $region62: #{upconv_forward.6} parent=59 // pred_check_branch
          %631 = sbr.rel (%p629) target = $region64
        $region63: #{upconv_forward.6} parent=59 // pred_region
          %632 = dma.done %s625, 1024
        $region64: #{upconv_forward.6} parent=59 // pred_fallthru
          _
        %s633 = sand.u32 %s38, 1
        %s634 = scalar_lea.sflag [#allocation8], %s633
        %s635 = sand.u32 %s103, 1
        %s636 = smul.addr %s635, 8
        %s637 = scalar_lea.vmem [#allocation7], %s636
        // Predicated region
        $region65: #{upconv_forward.6} parent=59 // pred_check
          %p638 = pneg %p116
        $region66: #{upconv_forward.6} parent=59 // pred_check_branch
          %640 = sbr.rel (%p638) target = $region68
        $region67: #{upconv_forward.6} parent=59 // pred_region
          %641 = dma.done %s634, 128
        $region68: #{upconv_forward.6} parent=59 // pred_fallthru
          _
        %s642 = sand.u32 %s38, 1
        %s643 = scalar_lea.sflag [#allocation8], %s642
        %s644 = sand.u32 %s139, 1
        %s645 = smul.addr %s644, 8
        %s646 = scalar_lea.vmem [#allocation9], %s645
        // Predicated region
        $region69: #{upconv_forward.6} parent=59 // pred_check
          %p647 = pneg %p152
        $region70: #{upconv_forward.6} parent=59 // pred_check_branch
          %649 = sbr.rel (%p647) target = $region72
        $region71: #{upconv_forward.6} parent=59 // pred_region
          %650 = dma.done %s643, 128
        $region72: #{upconv_forward.6} parent=59 // pred_fallthru
          _
        %s651 = sand.u32 %s38, 1
        %s652 = scalar_lea.sflag [#allocation11], %s651
        %s653 = sand.u32 %s167, 1
        %s654 = smul.addr %s653, 64
        %s655 = scalar_lea.vmem [#allocation10], %s654
        // Predicated region
        $region73: #{upconv_forward.6} parent=59 // pred_check
          %p656 = pneg %p180
        $region74: #{upconv_forward.6} parent=59 // pred_check_branch
          %658 = sbr.rel (%p656) target = $region76
        $region75: #{upconv_forward.6} parent=59 // pred_region
          %659 = dma.done %s652, 1024
        $region76: #{upconv_forward.6} parent=59 // pred_fallthru
          _
        %s660 = sand.u32 %s38, 1
        %s661 = scalar_lea.sflag [#allocation11], %s660
        %s662 = sand.u32 %s203, 1
        %s663 = smul.addr %s662, 8
        %s664 = scalar_lea.vmem [#allocation12], %s663
        // Predicated region
        $region77: #{upconv_forward.6} parent=59 // pred_check
          %p665 = pneg %p216
        $region78: #{upconv_forward.6} parent=59 // pred_check_branch
          %667 = sbr.rel (%p665) target = $region80
        $region79: #{upconv_forward.6} parent=59 // pred_region
          %668 = dma.done %s661, 128
        $region80: #{upconv_forward.6} parent=59 // pred_fallthru
          _
        %s669 = sand.u32 %s38, 1
        %s670 = scalar_lea.sflag [#allocation14], %s669
        %s671 = sand.u32 %s239, 1
        %s672 = smul.addr %s671, 8
        %s673 = scalar_lea.vmem [#allocation13], %s672
        // Predicated region
        $region81: #{upconv_forward.6} parent=59 // pred_check
          %p674 = pneg %p252
        $region82: #{upconv_forward.6} parent=59 // pred_check_branch
          %676 = sbr.rel (%p674) target = $region84
        $region83: #{upconv_forward.6} parent=59 // pred_region
          %677 = dma.done %s670, 128
        $region84: #{upconv_forward.6} parent=59 // pred_fallthru
          _
        // Predicated region
        $region85: #{upconv_forward.6} parent=59 // pred_check
          %p678 = pneg %p278
        $region86: #{upconv_forward.6} parent=59 // pred_check_branch
          %680 = sbr.rel (%p678) target = $region88
        $region87: #{upconv_forward.6} parent=59 // pred_region
          %681 = dma.done [#allocation14], 384
        $region88: #{upconv_forward.6} parent=59 // pred_fallthru
          _
        // Predicated region
        $region89: #{upconv_forward.6} parent=59 // pred_check
          %p682 = pneg %p304
        $region90: #{upconv_forward.6} parent=59 // pred_check_branch
          %684 = sbr.rel (%p682) target = $region92
        $region91: #{upconv_forward.6} parent=59 // pred_region
          %685 = dma.done [#allocation17], 384
        $region92: #{upconv_forward.6} parent=59 // pred_fallthru
          _
        // Predicated region
        $region93: #{upconv_forward.6} parent=59 // pred_check
          %p686 = pneg %p330
        $region94: #{upconv_forward.6} parent=59 // pred_check_branch
          %688 = sbr.rel (%p686) target = $region96
        $region95: #{upconv_forward.6} parent=59 // pred_region
          %689 = dma.done [#allocation17], 16
        $region96: #{upconv_forward.6} parent=59 // pred_fallthru
          _
        // Predicated region
        $region97: #{upconv_forward.6} parent=59 // pred_check
          %p690 = pneg %p356
        $region98: #{upconv_forward.6} parent=59 // pred_check_branch
          %692 = sbr.rel (%p690) target = $region100
        $region99: #{upconv_forward.6} parent=59 // pred_region
          %693 = dma.done [#allocation20], 16
        $region100: #{upconv_forward.6} parent=59 // pred_fallthru
          _
        %s694 = sand.u32 %s67, 1
        %s695 = scalar_lea.sflag [#allocation5], %s694
        %s696 = sand.u32 %s67, 1
        %s697 = smul.addr %s696, 64
        %s698 = scalar_lea.vmem [#allocation4], %s697
        %p699 = pneg %p80
        %p700 = pneg %p77
        %s701 = sand.u32 %s38, 1
        %s702 = scalar_lea.sflag [#allocation8], %s701
        %s703 = sand.u32 %s103, 1
        %s704 = smul.addr %s703, 8
        %s705 = scalar_lea.vmem [#allocation7], %s704
        %p706 = pneg %p116
        %p707 = pneg %p113
        %s708 = sand.u32 %s38, 1
        %s709 = scalar_lea.sflag [#allocation8], %s708
        %s710 = sand.u32 %s139, 1
        %s711 = smul.addr %s710, 8
        %s712 = scalar_lea.vmem [#allocation9], %s711
        %p713 = pneg %p152
        %p714 = pneg %p149
        %s715 = sand.u32 %s38, 1
        %s716 = scalar_lea.sflag [#allocation11], %s715
        %s717 = sand.u32 %s167, 1
        %s718 = smul.addr %s717, 64
        %s719 = scalar_lea.vmem [#allocation10], %s718
        %p720 = pneg %p180
        %p721 = pneg %p177
        %s722 = sand.u32 %s38, 1
        %s723 = scalar_lea.sflag [#allocation11], %s722
        %s724 = sand.u32 %s203, 1
        %s725 = smul.addr %s724, 8
        %s726 = scalar_lea.vmem [#allocation12], %s725
        %p727 = pneg %p216
        %p728 = pneg %p213
        %s729 = sand.u32 %s38, 1
        %s730 = scalar_lea.sflag [#allocation14], %s729
        %s731 = sand.u32 %s239, 1
        %s732 = smul.addr %s731, 8
        %s733 = scalar_lea.vmem [#allocation13], %s732
        %p734 = pneg %p252
        %p735 = pneg %p249
        %p736 = pneg %p278
        %p737 = pneg %p275
        %p738 = pneg %p304
        %p739 = pneg %p301
        %p740 = pneg %p330
        %p741 = pneg %p327
        %p742 = pneg %p356
        %p743 = pneg %p353
        %p744 = pneg %p386
        %p745 = pneg %p383
        %s746 = sand.u32 %s373, 1
        %s747 = scalar_lea.sflag [#allocation6], %s746
        %s748 = sand.u32 %s373, 1
        %s749 = smul.addr %s748, 64
        %s750 = scalar_lea.vmem [#allocation21], %s749
        %s751 = smul.u32 8, %s44
        %s752 = smul.u32 %s44, 8
        %s753 = ssub.s32 %s752, 1
        %p754 = scmp.gt.s32.totalorder %s753, 0
        %s755 = scalar_select %p754, %s753, 0
        %s756 = sadd.s32 %s44, 1
        %s757 = smul.u32 %s756, 8
        %p758 = scmp.lt.s32.totalorder %s757, 15
        %s759 = scalar_select %p758, %s757, 15
        %s760 = smul.u32 8, %s44
        %s761 = smul.u32 %s44, 8
        %s762 = ssub.s32 %s761, 1
        %p763 = scmp.gt.s32.totalorder %s762, 0
        %s764 = scalar_select %p763, %s762, 0
        %s765 = sadd.s32 %s44, 1
        %s766 = smul.u32 %s765, 8
        %p767 = scmp.lt.s32.totalorder %s766, 15
        %s768 = scalar_select %p767, %s766, 15
        %s769 = smul.u32 8, %s44
        %p771 = scmp.eq.s32.totalorder %s45, 0
        // Predicated region
        $region101: #{upconv_forward.6} parent=59 // pred_check
          %p772 = pneg %p771
        $region102: #{upconv_forward.6} parent=59 // pred_check_branch
          %774 = sbr.rel (%p772) target = $region104
        $region103: #{upconv_forward.6} parent=59 // pred_region
          %v775 = vld [vmem:[%s628] sm:$0xf]
          %v776 = vld [vmem:[%s628 + $0x4] sm:$0xf]
          %v777 = vld [vmem:[%s628 + $0x8] sm:$0xf]
          %v778 = vld [vmem:[%s628 + $0xc] sm:$0xf]
          %v779 = vld [vmem:[%s628 + $0x10] sm:$0xf]
          %v780 = vld [vmem:[%s628 + $0x14] sm:$0xf]
          %v781 = vld [vmem:[%s628 + $0x18] sm:$0xf]
          %v782 = vld [vmem:[%s628 + $0x1c] sm:$0xf]
          %v783 = vld [vmem:[%s628 + $0x20] sm:$0xf]
          %v784 = vld [vmem:[%s628 + $0x24] sm:$0xf]
          %v785 = vld [vmem:[%s628 + $0x28] sm:$0xf]
          %v786 = vld [vmem:[%s628 + $0x2c] sm:$0xf]
          %v787 = vld [vmem:[%s628 + $0x30] sm:$0xf]
          %v788 = vld [vmem:[%s628 + $0x34] sm:$0xf]
          %v789 = vld [vmem:[%s628 + $0x38] sm:$0xf]
          %v790 = vld [vmem:[%s628 + $0x3c] sm:$0xf]
          %p791 = scmp.gt.s32.totalorder %s44, 0
          %v792 = vld [vmem:[%s637] sm:$0xf]
          %v793 = vld [vmem:[%s637 + $0x4] sm:$0xf]
          %s794 = scalar_select %p791, 1, 0
          %v795 = vstv %s794
          %vm796 = vcmp.eq.s32.totalorder %v795, 1
          %v797 = vsel %vm796, %v792, 0
          %v798 = vsel %vm796, %v793, 0
          %p799 = scmp.lt.s32.totalorder %s44, 1
          %v800 = vld [vmem:[%s646] sm:$0xf]
          %v801 = vld [vmem:[%s646 + $0x4] sm:$0xf]
          %s802 = scalar_select %p799, 1, 0
          %v803 = vstv %s802
          %vm804 = vcmp.eq.s32.totalorder %v803, 1
          %v805 = vsel %vm804, %v800, 0
          %v806 = vsel %vm804, %v801, 0
          %vm807 = vsmask.f32 256
          %vm808 = vsmask.f32 4368
          %vm809 = vmor %vm807, %vm808
          %v811 = vshrl.u32 %v797, 16
          %v813 = vrot.slane %v811, 7
          %v814 = vshll.u32 %v797, 16
          %v816 = vor.u32 %v813, %v814
          %v817 = vrot.slane %v813, 4
          %v819 = vshrl.u32 %v798, 16
          %v821 = vrot.slane %v819, 7
          %v822 = vshll.u32 %v798, 16
          %v824 = vor.u32 %v821, %v822
          %v825 = vsel %vm809, %v817, %v824
          %v826 = vrot.slane %v821, 4
          %vm830 = vcmask 27648
          %vm831 = vsmask.f32 7938
          %vm832 = vmand %vm830, %vm831
          %v833 = vld [vmem:[#allocation2] sm:$0xf]
          %v834 = vsel %vm832, %v816, %v833
          %835 = vst [vmem:[#allocation2] sm:$0xf] %v834
          %vm836 = vcmask 27648
          %837 = vst.msk [vmem:[#allocation2 + $0x4] sm:$0xf] %vm836, %v825
          %vm838 = vcmask 24576
          %vm839 = vmand %vm838, %vm807
          %v840 = vld [vmem:[#allocation2 + $0x8] sm:$0x1]
          %v841 = vsel %vm839, %v826, %v840
          %842 = vst [vmem:[#allocation2 + $0x8] sm:$0x1] %v841
          %v844 = vshrl.u32 %v775, 16
          %v846 = vrot.slane %v844, 7
          %v847 = vshll.u32 %v775, 16
          %v849 = vor.u32 %v846, %v847
          %v850 = vrot.slane %v846, 4
          %v852 = vshrl.u32 %v776, 16
          %v854 = vrot.slane %v852, 7
          %v855 = vshll.u32 %v776, 16
          %v857 = vor.u32 %v854, %v855
          %v858 = vsel %vm809, %v850, %v857
          %v859 = vrot.slane %v854, 4
          %v861 = vshrl.u32 %v777, 16
          %v863 = vrot.slane %v861, 7
          %v864 = vshll.u32 %v777, 16
          %v866 = vor.u32 %v863, %v864
          %v867 = vrot.slane %v863, 4
          %v869 = vshrl.u32 %v778, 16
          %v871 = vrot.slane %v869, 7
          %v872 = vshll.u32 %v778, 16
          %v874 = vor.u32 %v871, %v872
          %v875 = vsel %vm809, %v867, %v874
          %v876 = vrot.slane %v871, 4
          %v878 = vshrl.u32 %v779, 16
          %v880 = vrot.slane %v878, 7
          %v881 = vshll.u32 %v779, 16
          %v883 = vor.u32 %v880, %v881
          %v884 = vrot.slane %v880, 4
          %v886 = vshrl.u32 %v780, 16
          %v888 = vrot.slane %v886, 7
          %v889 = vshll.u32 %v780, 16
          %v891 = vor.u32 %v888, %v889
          %v892 = vsel %vm809, %v884, %v891
          %v893 = vrot.slane %v888, 4
          %v895 = vshrl.u32 %v781, 16
          %v897 = vrot.slane %v895, 7
          %v898 = vshll.u32 %v781, 16
          %v900 = vor.u32 %v897, %v898
          %v901 = vrot.slane %v897, 4
          %v903 = vshrl.u32 %v782, 16
          %v905 = vrot.slane %v903, 7
          %v906 = vshll.u32 %v782, 16
          %v908 = vor.u32 %v905, %v906
          %v909 = vsel %vm809, %v901, %v908
          %v910 = vrot.slane %v905, 4
          %v912 = vshrl.u32 %v783, 16
          %v914 = vrot.slane %v912, 7
          %v915 = vshll.u32 %v783, 16
          %v917 = vor.u32 %v914, %v915
          %v918 = vrot.slane %v914, 4
          %v920 = vshrl.u32 %v784, 16
          %v922 = vrot.slane %v920, 7
          %v923 = vshll.u32 %v784, 16
          %v925 = vor.u32 %v922, %v923
          %v926 = vsel %vm809, %v918, %v925
          %v927 = vrot.slane %v922, 4
          %v929 = vshrl.u32 %v785, 16
          %v931 = vrot.slane %v929, 7
          %v932 = vshll.u32 %v785, 16
          %v934 = vor.u32 %v931, %v932
          %v935 = vrot.slane %v931, 4
          %v937 = vshrl.u32 %v786, 16
          %v939 = vrot.slane %v937, 7
          %v940 = vshll.u32 %v786, 16
          %v942 = vor.u32 %v939, %v940
          %v943 = vsel %vm809, %v935, %v942
          %v944 = vrot.slane %v939, 4
          %v946 = vshrl.u32 %v787, 16
          %v948 = vrot.slane %v946, 7
          %v949 = vshll.u32 %v787, 16
          %v951 = vor.u32 %v948, %v949
          %v952 = vrot.slane %v948, 4
          %v954 = vshrl.u32 %v788, 16
          %v956 = vrot.slane %v954, 7
          %v957 = vshll.u32 %v788, 16
          %v959 = vor.u32 %v956, %v957
          %v960 = vsel %vm809, %v952, %v959
          %v961 = vrot.slane %v956, 4
          %v963 = vshrl.u32 %v789, 16
          %v965 = vrot.slane %v963, 7
          %v966 = vshll.u32 %v789, 16
          %v968 = vor.u32 %v965, %v966
          %v969 = vrot.slane %v965, 4
          %v971 = vshrl.u32 %v790, 16
          %v973 = vrot.slane %v971, 7
          %v974 = vshll.u32 %v790, 16
          %v976 = vor.u32 %v973, %v974
          %v977 = vsel %vm809, %v969, %v976
          %v978 = vrot.slane %v973, 4
          %s1003 = scalar_lea.vmem [#allocation2], 12
          %v1004 = vld [vmem:[%s1003] sm:$0xf]
          %v1005 = vsel %vm832, %v849, %v1004
          %1006 = vst [vmem:[%s1003] sm:$0xf] %v1005
          %1007 = vst.msk [vmem:[%s1003 + $0x4] sm:$0xf] %vm836, %v858
          %v1008 = vld [vmem:[%s1003 + $0x8] sm:$0x1]
          %v1009 = vsel %vm839, %v859, %v1008
          %1010 = vst [vmem:[%s1003 + $0x8] sm:$0x1] %v1009
          %v1011 = vld [vmem:[%s1003 + $0xc] sm:$0xf]
          %v1012 = vsel %vm832, %v866, %v1011
          %1013 = vst [vmem:[%s1003 + $0xc] sm:$0xf] %v1012
          %1014 = vst.msk [vmem:[%s1003 + $0x10] sm:$0xf] %vm836, %v875
          %v1015 = vld [vmem:[%s1003 + $0x14] sm:$0x1]
          %v1016 = vsel %vm839, %v876, %v1015
          %1017 = vst [vmem:[%s1003 + $0x14] sm:$0x1] %v1016
          %v1018 = vld [vmem:[%s1003 + $0x18] sm:$0xf]
          %v1019 = vsel %vm832, %v883, %v1018
          %1020 = vst [vmem:[%s1003 + $0x18] sm:$0xf] %v1019
          %1021 = vst.msk [vmem:[%s1003 + $0x1c] sm:$0xf] %vm836, %v892
          %v1022 = vld [vmem:[%s1003 + $0x20] sm:$0x1]
          %v1023 = vsel %vm839, %v893, %v1022
          %1024 = vst [vmem:[%s1003 + $0x20] sm:$0x1] %v1023
          %v1025 = vld [vmem:[%s1003 + $0x24] sm:$0xf]
          %v1026 = vsel %vm832, %v900, %v1025
          %1027 = vst [vmem:[%s1003 + $0x24] sm:$0xf] %v1026
          %1028 = vst.msk [vmem:[%s1003 + $0x28] sm:$0xf] %vm836, %v909
          %v1029 = vld [vmem:[%s1003 + $0x2c] sm:$0x1]
          %v1030 = vsel %vm839, %v910, %v1029
          %1031 = vst [vmem:[%s1003 + $0x2c] sm:$0x1] %v1030
          %v1032 = vld [vmem:[%s1003 + $0x30] sm:$0xf]
          %v1033 = vsel %vm832, %v917, %v1032
          %1034 = vst [vmem:[%s1003 + $0x30] sm:$0xf] %v1033
          %1035 = vst.msk [vmem:[%s1003 + $0x34] sm:$0xf] %vm836, %v926
          %v1036 = vld [vmem:[%s1003 + $0x38] sm:$0x1]
          %v1037 = vsel %vm839, %v927, %v1036
          %1038 = vst [vmem:[%s1003 + $0x38] sm:$0x1] %v1037
          %v1039 = vld [vmem:[%s1003 + $0x3c] sm:$0xf]
          %v1040 = vsel %vm832, %v934, %v1039
          %1041 = vst [vmem:[%s1003 + $0x3c] sm:$0xf] %v1040
          %1042 = vst.msk [vmem:[%s1003 + $0x40] sm:$0xf] %vm836, %v943
          %v1043 = vld [vmem:[%s1003 + $0x44] sm:$0x1]
          %v1044 = vsel %vm839, %v944, %v1043
          %1045 = vst [vmem:[%s1003 + $0x44] sm:$0x1] %v1044
          %v1046 = vld [vmem:[%s1003 + $0x48] sm:$0xf]
          %v1047 = vsel %vm832, %v951, %v1046
          %1048 = vst [vmem:[%s1003 + $0x48] sm:$0xf] %v1047
          %1049 = vst.msk [vmem:[%s1003 + $0x4c] sm:$0xf] %vm836, %v960
          %v1050 = vld [vmem:[%s1003 + $0x50] sm:$0x1]
          %v1051 = vsel %vm839, %v961, %v1050
          %1052 = vst [vmem:[%s1003 + $0x50] sm:$0x1] %v1051
          %v1053 = vld [vmem:[%s1003 + $0x54] sm:$0xf]
          %v1054 = vsel %vm832, %v968, %v1053
          %1055 = vst [vmem:[%s1003 + $0x54] sm:$0xf] %v1054
          %1056 = vst.msk [vmem:[%s1003 + $0x58] sm:$0xf] %vm836, %v977
          %v1057 = vld [vmem:[%s1003 + $0x5c] sm:$0x1]
          %v1058 = vsel %vm839, %v978, %v1057
          %1059 = vst [vmem:[%s1003 + $0x5c] sm:$0x1] %v1058
          %v1061 = vshrl.u32 %v805, 16
          %v1063 = vrot.slane %v1061, 7
          %v1064 = vshll.u32 %v805, 16
          %v1066 = vor.u32 %v1063, %v1064
          %v1067 = vrot.slane %v1063, 4
          %v1069 = vshrl.u32 %v806, 16
          %v1071 = vrot.slane %v1069, 7
          %v1072 = vshll.u32 %v806, 16
          %v1074 = vor.u32 %v1071, %v1072
          %v1075 = vsel %vm809, %v1067, %v1074
          %v1076 = vrot.slane %v1071, 4
          %s1080 = scalar_lea.vmem [#allocation2], 108
          %v1081 = vld [vmem:[%s1080] sm:$0xf]
          %v1082 = vsel %vm832, %v1066, %v1081
          %1083 = vst [vmem:[%s1080] sm:$0xf] %v1082
          %1084 = vst.msk [vmem:[%s1080 + $0x4] sm:$0xf] %vm836, %v1075
          %v1085 = vld [vmem:[%s1080 + $0x8] sm:$0x1]
          %v1086 = vsel %vm839, %v1076, %v1085
          %1087 = vst [vmem:[%s1080 + $0x8] sm:$0x1] %v1086
          %v1088 = vld [vmem:[#allocation2] sm:$0x1]
          %v1089 = vsel %vm839, 0, %v1088
          %1090 = vst [vmem:[#allocation2] sm:$0x1] %v1089
          %v1091 = vld [vmem:[#allocation2 + $0xc] sm:$0x1]
          %v1092 = vsel %vm839, 0, %v1091
          %1093 = vst [vmem:[#allocation2 + $0xc] sm:$0x1] %v1092
          %v1094 = vld [vmem:[#allocation2 + $0x18] sm:$0x1]
          %v1095 = vsel %vm839, 0, %v1094
          %1096 = vst [vmem:[#allocation2 + $0x18] sm:$0x1] %v1095
          %v1097 = vld [vmem:[#allocation2 + $0x24] sm:$0x1]
          %v1098 = vsel %vm839, 0, %v1097
          %1099 = vst [vmem:[#allocation2 + $0x24] sm:$0x1] %v1098
          %v1100 = vld [vmem:[#allocation2 + $0x30] sm:$0x1]
          %v1101 = vsel %vm839, 0, %v1100
          %1102 = vst [vmem:[#allocation2 + $0x30] sm:$0x1] %v1101
          %v1103 = vld [vmem:[#allocation2 + $0x3c] sm:$0x1]
          %v1104 = vsel %vm839, 0, %v1103
          %1105 = vst [vmem:[#allocation2 + $0x3c] sm:$0x1] %v1104
          %v1106 = vld [vmem:[#allocation2 + $0x48] sm:$0x1]
          %v1107 = vsel %vm839, 0, %v1106
          %1108 = vst [vmem:[#allocation2 + $0x48] sm:$0x1] %v1107
          %v1109 = vld [vmem:[#allocation2 + $0x54] sm:$0x1]
          %v1110 = vsel %vm839, 0, %v1109
          %1111 = vst [vmem:[#allocation2 + $0x54] sm:$0x1] %v1110
          %v1112 = vld [vmem:[#allocation2 + $0x60] sm:$0x1]
          %v1113 = vsel %vm839, 0, %v1112
          %1114 = vst [vmem:[#allocation2 + $0x60] sm:$0x1] %v1113
          %v1115 = vld [vmem:[#allocation2 + $0x6c] sm:$0x1]
          %v1116 = vsel %vm839, 0, %v1115
          %1117 = vst [vmem:[#allocation2 + $0x6c] sm:$0x1] %v1116
          %1120 = vrot.lane.b32.xlu0 %v797, 4
          %v1121 = vpop.permute.xlu0 %1120
          %1122 = vrot.lane.b32.xlu0 %v798, 4
          %v1123 = vpop.permute.xlu0 %1122
          %vm1126 = vcmask 60448
          %1127 = vst.msk [vmem:[#allocation2] sm:$0xf] %vm1126, %v1121
          %1128 = vst.msk [vmem:[#allocation2 + $0x4] sm:$0xf] %vm1126, %v1123
          %1145 = vrot.lane.b32.xlu0 %v775, 4
          %v1146 = vpop.permute.xlu0 %1145
          %1147 = vrot.lane.b32.xlu0 %v776, 4
          %v1148 = vpop.permute.xlu0 %1147
          %1149 = vrot.lane.b32.xlu0 %v777, 4
          %v1150 = vpop.permute.xlu0 %1149
          %1151 = vrot.lane.b32.xlu0 %v778, 4
          %v1152 = vpop.permute.xlu0 %1151
          %1153 = vrot.lane.b32.xlu0 %v779, 4
          %v1154 = vpop.permute.xlu0 %1153
          %1155 = vrot.lane.b32.xlu0 %v780, 4
          %v1156 = vpop.permute.xlu0 %1155
          %1157 = vrot.lane.b32.xlu0 %v781, 4
          %v1158 = vpop.permute.xlu0 %1157
          %1159 = vrot.lane.b32.xlu0 %v782, 4
          %v1160 = vpop.permute.xlu0 %1159
          %1161 = vrot.lane.b32.xlu0 %v783, 4
          %v1162 = vpop.permute.xlu0 %1161
          %1163 = vrot.lane.b32.xlu0 %v784, 4
          %v1164 = vpop.permute.xlu0 %1163
          %1165 = vrot.lane.b32.xlu0 %v785, 4
          %v1166 = vpop.permute.xlu0 %1165
          %1167 = vrot.lane.b32.xlu0 %v786, 4
          %v1168 = vpop.permute.xlu0 %1167
          %1169 = vrot.lane.b32.xlu0 %v787, 4
          %v1170 = vpop.permute.xlu0 %1169
          %1171 = vrot.lane.b32.xlu0 %v788, 4
          %v1172 = vpop.permute.xlu0 %1171
          %1173 = vrot.lane.b32.xlu0 %v789, 4
          %v1174 = vpop.permute.xlu0 %1173
          %1175 = vrot.lane.b32.xlu0 %v790, 4
          %v1176 = vpop.permute.xlu0 %1175
          %1193 = vst.msk [vmem:[%s1003] sm:$0xf] %vm1126, %v1146
          %1194 = vst.msk [vmem:[%s1003 + $0x4] sm:$0xf] %vm1126, %v1148
          %1195 = vst.msk [vmem:[%s1003 + $0xc] sm:$0xf] %vm1126, %v1150
          %1196 = vst.msk [vmem:[%s1003 + $0x10] sm:$0xf] %vm1126, %v1152
          %1197 = vst.msk [vmem:[%s1003 + $0x18] sm:$0xf] %vm1126, %v1154
          %1198 = vst.msk [vmem:[%s1003 + $0x1c] sm:$0xf] %vm1126, %v1156
          %1199 = vst.msk [vmem:[%s1003 + $0x24] sm:$0xf] %vm1126, %v1158
          %1200 = vst.msk [vmem:[%s1003 + $0x28] sm:$0xf] %vm1126, %v1160
          %1201 = vst.msk [vmem:[%s1003 + $0x30] sm:$0xf] %vm1126, %v1162
          %1202 = vst.msk [vmem:[%s1003 + $0x34] sm:$0xf] %vm1126, %v1164
          %1203 = vst.msk [vmem:[%s1003 + $0x3c] sm:$0xf] %vm1126, %v1166
          %1204 = vst.msk [vmem:[%s1003 + $0x40] sm:$0xf] %vm1126, %v1168
          %1205 = vst.msk [vmem:[%s1003 + $0x48] sm:$0xf] %vm1126, %v1170
          %1206 = vst.msk [vmem:[%s1003 + $0x4c] sm:$0xf] %vm1126, %v1172
          %1207 = vst.msk [vmem:[%s1003 + $0x54] sm:$0xf] %vm1126, %v1174
          %1208 = vst.msk [vmem:[%s1003 + $0x58] sm:$0xf] %vm1126, %v1176
          %1211 = vrot.lane.b32.xlu0 %v805, 4
          %v1212 = vpop.permute.xlu0 %1211
          %1213 = vrot.lane.b32.xlu0 %v806, 4
          %v1214 = vpop.permute.xlu0 %1213
          %1217 = vst.msk [vmem:[%s1080] sm:$0xf] %vm1126, %v1212
          %1218 = vst.msk [vmem:[%s1080 + $0x4] sm:$0xf] %vm1126, %v1214
          %vm1219 = vsmask.f32 3328
          %vm1220 = vsmask.f32 7440
          %vm1221 = vmor %vm1219, %vm1220
          %v1222 = vrot.slane %v811, 4
          %v1223 = vrot.slane %v814, 5
          %v1224 = vor.u32 %v1222, %v1223
          %v1225 = vrot.slane %v1224, 4
          %v1226 = vrot.slane %v822, 5
          %v1227 = vsel %vm1221, %v1225, %v1226
          %v1228 = vrot.slane %v819, 4
          %v1229 = vor.u32 %v1228, %v1226
          %v1230 = vrot.slane %v1229, 4
          %1231 = vrot.lane.b32.xlu0 %v1227, 8
          %v1232 = vpop.permute.xlu0 %1231
          %1233 = vrot.lane.b32.xlu0 %v1230, 8
          %v1234 = vpop.permute.xlu0 %1233
          %vm1237 = vcmask 93248
          %1238 = vst.msk [vmem:[#allocation2] sm:$0xf] %vm1237, %v1232
          %vm1239 = vcmask 93248
          %vm1240 = vmand %vm1239, %vm1219
          %v1241 = vld [vmem:[#allocation2 + $0x4] sm:$0xf]
          %v1242 = vsel %vm1240, %v1234, %v1241
          %1243 = vst [vmem:[#allocation2 + $0x4] sm:$0xf] %v1242
          %v1244 = vrot.slane %v844, 4
          %v1245 = vrot.slane %v847, 5
          %v1246 = vor.u32 %v1244, %v1245
          %v1247 = vrot.slane %v1246, 4
          %v1248 = vrot.slane %v855, 5
          %v1249 = vsel %vm1221, %v1247, %v1248
          %v1250 = vrot.slane %v852, 4
          %v1251 = vor.u32 %v1250, %v1248
          %v1252 = vrot.slane %v1251, 4
          %v1253 = vrot.slane %v861, 4
          %v1254 = vrot.slane %v864, 5
          %v1255 = vor.u32 %v1253, %v1254
          %v1256 = vrot.slane %v1255, 4
          %v1257 = vrot.slane %v872, 5
          %v1258 = vsel %vm1221, %v1256, %v1257
          %v1259 = vrot.slane %v869, 4
          %v1260 = vor.u32 %v1259, %v1257
          %v1261 = vrot.slane %v1260, 4
          %v1262 = vrot.slane %v878, 4
          %v1263 = vrot.slane %v881, 5
          %v1264 = vor.u32 %v1262, %v1263
          %v1265 = vrot.slane %v1264, 4
          %v1266 = vrot.slane %v889, 5
          %v1267 = vsel %vm1221, %v1265, %v1266
          %v1268 = vrot.slane %v886, 4
          %v1269 = vor.u32 %v1268, %v1266
          %v1270 = vrot.slane %v1269, 4
          %v1271 = vrot.slane %v895, 4
          %v1272 = vrot.slane %v898, 5
          %v1273 = vor.u32 %v1271, %v1272
          %v1274 = vrot.slane %v1273, 4
          %v1275 = vrot.slane %v906, 5
          %v1276 = vsel %vm1221, %v1274, %v1275
          %v1277 = vrot.slane %v903, 4
          %v1278 = vor.u32 %v1277, %v1275
          %v1279 = vrot.slane %v1278, 4
          %v1280 = vrot.slane %v912, 4
          %v1281 = vrot.slane %v915, 5
          %v1282 = vor.u32 %v1280, %v1281
          %v1283 = vrot.slane %v1282, 4
          %v1284 = vrot.slane %v923, 5
          %v1285 = vsel %vm1221, %v1283, %v1284
          %v1286 = vrot.slane %v920, 4
          %v1287 = vor.u32 %v1286, %v1284
          %v1288 = vrot.slane %v1287, 4
          %v1289 = vrot.slane %v929, 4
          %v1290 = vrot.slane %v932, 5
          %v1291 = vor.u32 %v1289, %v1290
          %v1292 = vrot.slane %v1291, 4
          %v1293 = vrot.slane %v940, 5
          %v1294 = vsel %vm1221, %v1292, %v1293
          %v1295 = vrot.slane %v937, 4
          %v1296 = vor.u32 %v1295, %v1293
          %v1297 = vrot.slane %v1296, 4
          %v1298 = vrot.slane %v946, 4
          %v1299 = vrot.slane %v949, 5
          %v1300 = vor.u32 %v1298, %v1299
          %v1301 = vrot.slane %v1300, 4
          %v1302 = vrot.slane %v957, 5
          %v1303 = vsel %vm1221, %v1301, %v1302
          %v1304 = vrot.slane %v954, 4
          %v1305 = vor.u32 %v1304, %v1302
          %v1306 = vrot.slane %v1305, 4
          %v1307 = vrot.slane %v963, 4
          %v1308 = vrot.slane %v966, 5
          %v1309 = vor.u32 %v1307, %v1308
          %v1310 = vrot.slane %v1309, 4
          %v1311 = vrot.slane %v974, 5
          %v1312 = vsel %vm1221, %v1310, %v1311
          %v1313 = vrot.slane %v971, 4
          %v1314 = vor.u32 %v1313, %v1311
          %v1315 = vrot.slane %v1314, 4
          %1316 = vrot.lane.b32.xlu0 %v1249, 8
          %v1317 = vpop.permute.xlu0 %1316
          %1318 = vrot.lane.b32.xlu0 %v1252, 8
          %v1319 = vpop.permute.xlu0 %1318
          %1320 = vrot.lane.b32.xlu0 %v1258, 8
          %v1321 = vpop.permute.xlu0 %1320
          %1322 = vrot.lane.b32.xlu0 %v1261, 8
          %v1323 = vpop.permute.xlu0 %1322
          %1324 = vrot.lane.b32.xlu0 %v1267, 8
          %v1325 = vpop.permute.xlu0 %1324
          %1326 = vrot.lane.b32.xlu0 %v1270, 8
          %v1327 = vpop.permute.xlu0 %1326
          %1328 = vrot.lane.b32.xlu0 %v1276, 8
          %v1329 = vpop.permute.xlu0 %1328
          %1330 = vrot.lane.b32.xlu0 %v1279, 8
          %v1331 = vpop.permute.xlu0 %1330
          %1332 = vrot.lane.b32.xlu0 %v1285, 8
          %v1333 = vpop.permute.xlu0 %1332
          %1334 = vrot.lane.b32.xlu0 %v1288, 8
          %v1335 = vpop.permute.xlu0 %1334
          %1336 = vrot.lane.b32.xlu0 %v1294, 8
          %v1337 = vpop.permute.xlu0 %1336
          %1338 = vrot.lane.b32.xlu0 %v1297, 8
          %v1339 = vpop.permute.xlu0 %1338
          %1340 = vrot.lane.b32.xlu0 %v1303, 8
          %v1341 = vpop.permute.xlu0 %1340
          %1342 = vrot.lane.b32.xlu0 %v1306, 8
          %v1343 = vpop.permute.xlu0 %1342
          %1344 = vrot.lane.b32.xlu0 %v1312, 8
          %v1345 = vpop.permute.xlu0 %1344
          %1346 = vrot.lane.b32.xlu0 %v1315, 8
          %v1347 = vpop.permute.xlu0 %1346
          %1364 = vst.msk [vmem:[%s1003] sm:$0xf] %vm1237, %v1317
          %v1365 = vld [vmem:[%s1003 + $0x4] sm:$0xf]
          %v1366 = vsel %vm1240, %v1319, %v1365
          %1367 = vst [vmem:[%s1003 + $0x4] sm:$0xf] %v1366
          %1368 = vst.msk [vmem:[%s1003 + $0xc] sm:$0xf] %vm1237, %v1321
          %v1369 = vld [vmem:[%s1003 + $0x10] sm:$0xf]
          %v1370 = vsel %vm1240, %v1323, %v1369
          %1371 = vst [vmem:[%s1003 + $0x10] sm:$0xf] %v1370
          %1372 = vst.msk [vmem:[%s1003 + $0x18] sm:$0xf] %vm1237, %v1325
          %v1373 = vld [vmem:[%s1003 + $0x1c] sm:$0xf]
          %v1374 = vsel %vm1240, %v1327, %v1373
          %1375 = vst [vmem:[%s1003 + $0x1c] sm:$0xf] %v1374
          %1376 = vst.msk [vmem:[%s1003 + $0x24] sm:$0xf] %vm1237, %v1329
          %v1377 = vld [vmem:[%s1003 + $0x28] sm:$0xf]
          %v1378 = vsel %vm1240, %v1331, %v1377
          %1379 = vst [vmem:[%s1003 + $0x28] sm:$0xf] %v1378
          %1380 = vst.msk [vmem:[%s1003 + $0x30] sm:$0xf] %vm1237, %v1333
          %v1381 = vld [vmem:[%s1003 + $0x34] sm:$0xf]
          %v1382 = vsel %vm1240, %v1335, %v1381
          %1383 = vst [vmem:[%s1003 + $0x34] sm:$0xf] %v1382
          %1384 = vst.msk [vmem:[%s1003 + $0x3c] sm:$0xf] %vm1237, %v1337
          %v1385 = vld [vmem:[%s1003 + $0x40] sm:$0xf]
          %v1386 = vsel %vm1240, %v1339, %v1385
          %1387 = vst [vmem:[%s1003 + $0x40] sm:$0xf] %v1386
          %1388 = vst.msk [vmem:[%s1003 + $0x48] sm:$0xf] %vm1237, %v1341
          %v1389 = vld [vmem:[%s1003 + $0x4c] sm:$0xf]
          %v1390 = vsel %vm1240, %v1343, %v1389
          %1391 = vst [vmem:[%s1003 + $0x4c] sm:$0xf] %v1390
          %1392 = vst.msk [vmem:[%s1003 + $0x54] sm:$0xf] %vm1237, %v1345
          %v1393 = vld [vmem:[%s1003 + $0x58] sm:$0xf]
          %v1394 = vsel %vm1240, %v1347, %v1393
          %1395 = vst [vmem:[%s1003 + $0x58] sm:$0xf] %v1394
          %v1396 = vrot.slane %v1061, 4
          %v1397 = vrot.slane %v1064, 5
          %v1398 = vor.u32 %v1396, %v1397
          %v1399 = vrot.slane %v1398, 4
          %v1400 = vrot.slane %v1072, 5
          %v1401 = vsel %vm1221, %v1399, %v1400
          %v1402 = vrot.slane %v1069, 4
          %v1403 = vor.u32 %v1402, %v1400
          %v1404 = vrot.slane %v1403, 4
          %1405 = vrot.lane.b32.xlu0 %v1401, 8
          %v1406 = vpop.permute.xlu0 %1405
          %1407 = vrot.lane.b32.xlu0 %v1404, 8
          %v1408 = vpop.permute.xlu0 %1407
          %1411 = vst.msk [vmem:[%s1080] sm:$0xf] %vm1237, %v1406
          %v1412 = vld [vmem:[%s1080 + $0x4] sm:$0xf]
          %v1413 = vsel %vm1240, %v1408, %v1412
          %1414 = vst [vmem:[%s1080 + $0x4] sm:$0xf] %v1413
          %vm1415 = vcmask 93251
          %vm1416 = vsmask.f32 7950
          %vm1417 = vmand %vm1415, %vm1416
          %v1418 = vld [vmem:[#allocation2 + $0x4] sm:$0x8]
          %v1419 = vsel %vm1417, 0, %v1418
          %1420 = vst [vmem:[#allocation2 + $0x4] sm:$0x8] %v1419
          %v1421 = vld [vmem:[#allocation2 + $0x10] sm:$0x8]
          %v1422 = vsel %vm1417, 0, %v1421
          %1423 = vst [vmem:[#allocation2 + $0x10] sm:$0x8] %v1422
          %v1424 = vld [vmem:[#allocation2 + $0x1c] sm:$0x8]
          %v1425 = vsel %vm1417, 0, %v1424
          %1426 = vst [vmem:[#allocation2 + $0x1c] sm:$0x8] %v1425
          %v1427 = vld [vmem:[#allocation2 + $0x28] sm:$0x8]
          %v1428 = vsel %vm1417, 0, %v1427
          %1429 = vst [vmem:[#allocation2 + $0x28] sm:$0x8] %v1428
          %v1430 = vld [vmem:[#allocation2 + $0x34] sm:$0x8]
          %v1431 = vsel %vm1417, 0, %v1430
          %1432 = vst [vmem:[#allocation2 + $0x34] sm:$0x8] %v1431
          %v1433 = vld [vmem:[#allocation2 + $0x40] sm:$0x8]
          %v1434 = vsel %vm1417, 0, %v1433
          %1435 = vst [vmem:[#allocation2 + $0x40] sm:$0x8] %v1434
          %v1436 = vld [vmem:[#allocation2 + $0x4c] sm:$0x8]
          %v1437 = vsel %vm1417, 0, %v1436
          %1438 = vst [vmem:[#allocation2 + $0x4c] sm:$0x8] %v1437
          %v1439 = vld [vmem:[#allocation2 + $0x58] sm:$0x8]
          %v1440 = vsel %vm1417, 0, %v1439
          %1441 = vst [vmem:[#allocation2 + $0x58] sm:$0x8] %v1440
          %v1442 = vld [vmem:[#allocation2 + $0x64] sm:$0x8]
          %v1443 = vsel %vm1417, 0, %v1442
          %1444 = vst [vmem:[#allocation2 + $0x64] sm:$0x8] %v1443
          %v1445 = vld [vmem:[#allocation2 + $0x70] sm:$0x8]
          %v1446 = vsel %vm1417, 0, %v1445
          %1447 = vst [vmem:[#allocation2 + $0x70] sm:$0x8] %v1446
          %v1448 = vld [vmem:[%s655] sm:$0xf]
          %v1449 = vld [vmem:[%s655 + $0x4] sm:$0xf]
          %v1450 = vld [vmem:[%s655 + $0x8] sm:$0xf]
          %v1451 = vld [vmem:[%s655 + $0xc] sm:$0xf]
          %v1452 = vld [vmem:[%s655 + $0x10] sm:$0xf]
          %v1453 = vld [vmem:[%s655 + $0x14] sm:$0xf]
          %v1454 = vld [vmem:[%s655 + $0x18] sm:$0xf]
          %v1455 = vld [vmem:[%s655 + $0x1c] sm:$0xf]
          %v1456 = vld [vmem:[%s655 + $0x20] sm:$0xf]
          %v1457 = vld [vmem:[%s655 + $0x24] sm:$0xf]
          %v1458 = vld [vmem:[%s655 + $0x28] sm:$0xf]
          %v1459 = vld [vmem:[%s655 + $0x2c] sm:$0xf]
          %v1460 = vld [vmem:[%s655 + $0x30] sm:$0xf]
          %v1461 = vld [vmem:[%s655 + $0x34] sm:$0xf]
          %v1462 = vld [vmem:[%s655 + $0x38] sm:$0xf]
          %v1463 = vld [vmem:[%s655 + $0x3c] sm:$0xf]
          %v1464 = vld [vmem:[%s664] sm:$0xf]
          %v1465 = vld [vmem:[%s664 + $0x4] sm:$0xf]
          %v1466 = vsel %vm796, %v1464, 0
          %v1467 = vsel %vm796, %v1465, 0
          %v1468 = vld [vmem:[%s673] sm:$0xf]
          %v1469 = vld [vmem:[%s673 + $0x4] sm:$0xf]
          %v1470 = vsel %vm804, %v1468, 0
          %v1471 = vsel %vm804, %v1469, 0
          %v1473 = vshrl.u32 %v1466, 16
          %v1475 = vrot.slane %v1473, 7
          %v1476 = vshll.u32 %v1466, 16
          %v1478 = vor.u32 %v1475, %v1476
          %v1479 = vrot.slane %v1475, 4
          %v1481 = vshrl.u32 %v1467, 16
          %v1483 = vrot.slane %v1481, 7
          %v1484 = vshll.u32 %v1467, 16
          %v1486 = vor.u32 %v1483, %v1484
          %v1487 = vsel %vm809, %v1479, %v1486
          %v1488 = vrot.slane %v1483, 4
          %v1492 = vld [vmem:[#allocation3] sm:$0xf]
          %v1493 = vsel %vm832, %v1478, %v1492
          %1494 = vst [vmem:[#allocation3] sm:$0xf] %v1493
          %1495 = vst.msk [vmem:[#allocation3 + $0x4] sm:$0xf] %vm836, %v1487
          %v1496 = vld [vmem:[#allocation3 + $0x8] sm:$0x1]
          %v1497 = vsel %vm839, %v1488, %v1496
          %1498 = vst [vmem:[#allocation3 + $0x8] sm:$0x1] %v1497
          %v1500 = vshrl.u32 %v1448, 16
          %v1502 = vrot.slane %v1500, 7
          %v1503 = vshll.u32 %v1448, 16
          %v1505 = vor.u32 %v1502, %v1503
          %v1506 = vrot.slane %v1502, 4
          %v1508 = vshrl.u32 %v1449, 16
          %v1510 = vrot.slane %v1508, 7
          %v1511 = vshll.u32 %v1449, 16
          %v1513 = vor.u32 %v1510, %v1511
          %v1514 = vsel %vm809, %v1506, %v1513
          %v1515 = vrot.slane %v1510, 4
          %v1517 = vshrl.u32 %v1450, 16
          %v1519 = vrot.slane %v1517, 7
          %v1520 = vshll.u32 %v1450, 16
          %v1522 = vor.u32 %v1519, %v1520
          %v1523 = vrot.slane %v1519, 4
          %v1525 = vshrl.u32 %v1451, 16
          %v1527 = vrot.slane %v1525, 7
          %v1528 = vshll.u32 %v1451, 16
          %v1530 = vor.u32 %v1527, %v1528
          %v1531 = vsel %vm809, %v1523, %v1530
          %v1532 = vrot.slane %v1527, 4
          %v1534 = vshrl.u32 %v1452, 16
          %v1536 = vrot.slane %v1534, 7
          %v1537 = vshll.u32 %v1452, 16
          %v1539 = vor.u32 %v1536, %v1537
          %v1540 = vrot.slane %v1536, 4
          %v1542 = vshrl.u32 %v1453, 16
          %v1544 = vrot.slane %v1542, 7
          %v1545 = vshll.u32 %v1453, 16
          %v1547 = vor.u32 %v1544, %v1545
          %v1548 = vsel %vm809, %v1540, %v1547
          %v1549 = vrot.slane %v1544, 4
          %v1551 = vshrl.u32 %v1454, 16
          %v1553 = vrot.slane %v1551, 7
          %v1554 = vshll.u32 %v1454, 16
          %v1556 = vor.u32 %v1553, %v1554
          %v1557 = vrot.slane %v1553, 4
          %v1559 = vshrl.u32 %v1455, 16
          %v1561 = vrot.slane %v1559, 7
          %v1562 = vshll.u32 %v1455, 16
          %v1564 = vor.u32 %v1561, %v1562
          %v1565 = vsel %vm809, %v1557, %v1564
          %v1566 = vrot.slane %v1561, 4
          %v1568 = vshrl.u32 %v1456, 16
          %v1570 = vrot.slane %v1568, 7
          %v1571 = vshll.u32 %v1456, 16
          %v1573 = vor.u32 %v1570, %v1571
          %v1574 = vrot.slane %v1570, 4
          %v1576 = vshrl.u32 %v1457, 16
          %v1578 = vrot.slane %v1576, 7
          %v1579 = vshll.u32 %v1457, 16
          %v1581 = vor.u32 %v1578, %v1579
          %v1582 = vsel %vm809, %v1574, %v1581
          %v1583 = vrot.slane %v1578, 4
          %v1585 = vshrl.u32 %v1458, 16
          %v1587 = vrot.slane %v1585, 7
          %v1588 = vshll.u32 %v1458, 16
          %v1590 = vor.u32 %v1587, %v1588
          %v1591 = vrot.slane %v1587, 4
          %v1593 = vshrl.u32 %v1459, 16
          %v1595 = vrot.slane %v1593, 7
          %v1596 = vshll.u32 %v1459, 16
          %v1598 = vor.u32 %v1595, %v1596
          %v1599 = vsel %vm809, %v1591, %v1598
          %v1600 = vrot.slane %v1595, 4
          %v1602 = vshrl.u32 %v1460, 16
          %v1604 = vrot.slane %v1602, 7
          %v1605 = vshll.u32 %v1460, 16
          %v1607 = vor.u32 %v1604, %v1605
          %v1608 = vrot.slane %v1604, 4
          %v1610 = vshrl.u32 %v1461, 16
          %v1612 = vrot.slane %v1610, 7
          %v1613 = vshll.u32 %v1461, 16
          %v1615 = vor.u32 %v1612, %v1613
          %v1616 = vsel %vm809, %v1608, %v1615
          %v1617 = vrot.slane %v1612, 4
          %v1619 = vshrl.u32 %v1462, 16
          %v1621 = vrot.slane %v1619, 7
          %v1622 = vshll.u32 %v1462, 16
          %v1624 = vor.u32 %v1621, %v1622
          %v1625 = vrot.slane %v1621, 4
          %v1627 = vshrl.u32 %v1463, 16
          %v1629 = vrot.slane %v1627, 7
          %v1630 = vshll.u32 %v1463, 16
          %v1632 = vor.u32 %v1629, %v1630
          %v1633 = vsel %vm809, %v1625, %v1632
          %v1634 = vrot.slane %v1629, 4
          %s1659 = scalar_lea.vmem [#allocation3], 12
          %v1660 = vld [vmem:[%s1659] sm:$0xf]
          %v1661 = vsel %vm832, %v1505, %v1660
          %1662 = vst [vmem:[%s1659] sm:$0xf] %v1661
          %1663 = vst.msk [vmem:[%s1659 + $0x4] sm:$0xf] %vm836, %v1514
          %v1664 = vld [vmem:[%s1659 + $0x8] sm:$0x1]
          %v1665 = vsel %vm839, %v1515, %v1664
          %1666 = vst [vmem:[%s1659 + $0x8] sm:$0x1] %v1665
          %v1667 = vld [vmem:[%s1659 + $0xc] sm:$0xf]
          %v1668 = vsel %vm832, %v1522, %v1667
          %1669 = vst [vmem:[%s1659 + $0xc] sm:$0xf] %v1668
          %1670 = vst.msk [vmem:[%s1659 + $0x10] sm:$0xf] %vm836, %v1531
          %v1671 = vld [vmem:[%s1659 + $0x14] sm:$0x1]
          %v1672 = vsel %vm839, %v1532, %v1671
          %1673 = vst [vmem:[%s1659 + $0x14] sm:$0x1] %v1672
          %v1674 = vld [vmem:[%s1659 + $0x18] sm:$0xf]
          %v1675 = vsel %vm832, %v1539, %v1674
          %1676 = vst [vmem:[%s1659 + $0x18] sm:$0xf] %v1675
          %1677 = vst.msk [vmem:[%s1659 + $0x1c] sm:$0xf] %vm836, %v1548
          %v1678 = vld [vmem:[%s1659 + $0x20] sm:$0x1]
          %v1679 = vsel %vm839, %v1549, %v1678
          %1680 = vst [vmem:[%s1659 + $0x20] sm:$0x1] %v1679
          %v1681 = vld [vmem:[%s1659 + $0x24] sm:$0xf]
          %v1682 = vsel %vm832, %v1556, %v1681
          %1683 = vst [vmem:[%s1659 + $0x24] sm:$0xf] %v1682
          %1684 = vst.msk [vmem:[%s1659 + $0x28] sm:$0xf] %vm836, %v1565
          %v1685 = vld [vmem:[%s1659 + $0x2c] sm:$0x1]
          %v1686 = vsel %vm839, %v1566, %v1685
          %1687 = vst [vmem:[%s1659 + $0x2c] sm:$0x1] %v1686
          %v1688 = vld [vmem:[%s1659 + $0x30] sm:$0xf]
          %v1689 = vsel %vm832, %v1573, %v1688
          %1690 = vst [vmem:[%s1659 + $0x30] sm:$0xf] %v1689
          %1691 = vst.msk [vmem:[%s1659 + $0x34] sm:$0xf] %vm836, %v1582
          %v1692 = vld [vmem:[%s1659 + $0x38] sm:$0x1]
          %v1693 = vsel %vm839, %v1583, %v1692
          %1694 = vst [vmem:[%s1659 + $0x38] sm:$0x1] %v1693
          %v1695 = vld [vmem:[%s1659 + $0x3c] sm:$0xf]
          %v1696 = vsel %vm832, %v1590, %v1695
          %1697 = vst [vmem:[%s1659 + $0x3c] sm:$0xf] %v1696
          %1698 = vst.msk [vmem:[%s1659 + $0x40] sm:$0xf] %vm836, %v1599
          %v1699 = vld [vmem:[%s1659 + $0x44] sm:$0x1]
          %v1700 = vsel %vm839, %v1600, %v1699
          %1701 = vst [vmem:[%s1659 + $0x44] sm:$0x1] %v1700
          %v1702 = vld [vmem:[%s1659 + $0x48] sm:$0xf]
          %v1703 = vsel %vm832, %v1607, %v1702
          %1704 = vst [vmem:[%s1659 + $0x48] sm:$0xf] %v1703
          %1705 = vst.msk [vmem:[%s1659 + $0x4c] sm:$0xf] %vm836, %v1616
          %v1706 = vld [vmem:[%s1659 + $0x50] sm:$0x1]
          %v1707 = vsel %vm839, %v1617, %v1706
          %1708 = vst [vmem:[%s1659 + $0x50] sm:$0x1] %v1707
          %v1709 = vld [vmem:[%s1659 + $0x54] sm:$0xf]
          %v1710 = vsel %vm832, %v1624, %v1709
          %1711 = vst [vmem:[%s1659 + $0x54] sm:$0xf] %v1710
          %1712 = vst.msk [vmem:[%s1659 + $0x58] sm:$0xf] %vm836, %v1633
          %v1713 = vld [vmem:[%s1659 + $0x5c] sm:$0x1]
          %v1714 = vsel %vm839, %v1634, %v1713
          %1715 = vst [vmem:[%s1659 + $0x5c] sm:$0x1] %v1714
          %v1717 = vshrl.u32 %v1470, 16
          %v1719 = vrot.slane %v1717, 7
          %v1720 = vshll.u32 %v1470, 16
          %v1722 = vor.u32 %v1719, %v1720
          %v1723 = vrot.slane %v1719, 4
          %v1725 = vshrl.u32 %v1471, 16
          %v1727 = vrot.slane %v1725, 7
          %v1728 = vshll.u32 %v1471, 16
          %v1730 = vor.u32 %v1727, %v1728
          %v1731 = vsel %vm809, %v1723, %v1730
          %v1732 = vrot.slane %v1727, 4
          %s1736 = scalar_lea.vmem [#allocation3], 108
          %v1737 = vld [vmem:[%s1736] sm:$0xf]
          %v1738 = vsel %vm832, %v1722, %v1737
          %1739 = vst [vmem:[%s1736] sm:$0xf] %v1738
          %1740 = vst.msk [vmem:[%s1736 + $0x4] sm:$0xf] %vm836, %v1731
          %v1741 = vld [vmem:[%s1736 + $0x8] sm:$0x1]
          %v1742 = vsel %vm839, %v1732, %v1741
          %1743 = vst [vmem:[%s1736 + $0x8] sm:$0x1] %v1742
          %v1744 = vld [vmem:[#allocation3] sm:$0x1]
          %v1745 = vsel %vm839, 0, %v1744
          %1746 = vst [vmem:[#allocation3] sm:$0x1] %v1745
          %v1747 = vld [vmem:[#allocation3 + $0xc] sm:$0x1]
          %v1748 = vsel %vm839, 0, %v1747
          %1749 = vst [vmem:[#allocation3 + $0xc] sm:$0x1] %v1748
          %v1750 = vld [vmem:[#allocation3 + $0x18] sm:$0x1]
          %v1751 = vsel %vm839, 0, %v1750
          %1752 = vst [vmem:[#allocation3 + $0x18] sm:$0x1] %v1751
          %v1753 = vld [vmem:[#allocation3 + $0x24] sm:$0x1]
          %v1754 = vsel %vm839, 0, %v1753
          %1755 = vst [vmem:[#allocation3 + $0x24] sm:$0x1] %v1754
          %v1756 = vld [vmem:[#allocation3 + $0x30] sm:$0x1]
          %v1757 = vsel %vm839, 0, %v1756
          %1758 = vst [vmem:[#allocation3 + $0x30] sm:$0x1] %v1757
          %v1759 = vld [vmem:[#allocation3 + $0x3c] sm:$0x1]
          %v1760 = vsel %vm839, 0, %v1759
          %1761 = vst [vmem:[#allocation3 + $0x3c] sm:$0x1] %v1760
          %v1762 = vld [vmem:[#allocation3 + $0x48] sm:$0x1]
          %v1763 = vsel %vm839, 0, %v1762
          %1764 = vst [vmem:[#allocation3 + $0x48] sm:$0x1] %v1763
          %v1765 = vld [vmem:[#allocation3 + $0x54] sm:$0x1]
          %v1766 = vsel %vm839, 0, %v1765
          %1767 = vst [vmem:[#allocation3 + $0x54] sm:$0x1] %v1766
          %v1768 = vld [vmem:[#allocation3 + $0x60] sm:$0x1]
          %v1769 = vsel %vm839, 0, %v1768
          %1770 = vst [vmem:[#allocation3 + $0x60] sm:$0x1] %v1769
          %v1771 = vld [vmem:[#allocation3 + $0x6c] sm:$0x1]
          %v1772 = vsel %vm839, 0, %v1771
          %1773 = vst [vmem:[#allocation3 + $0x6c] sm:$0x1] %v1772
          %1776 = vrot.lane.b32.xlu0 %v1466, 4
          %v1777 = vpop.permute.xlu0 %1776
          %1778 = vrot.lane.b32.xlu0 %v1467, 4
          %v1779 = vpop.permute.xlu0 %1778
          %1782 = vst.msk [vmem:[#allocation3] sm:$0xf] %vm1126, %v1777
          %1783 = vst.msk [vmem:[#allocation3 + $0x4] sm:$0xf] %vm1126, %v1779
          %1800 = vrot.lane.b32.xlu0 %v1448, 4
          %v1801 = vpop.permute.xlu0 %1800
          %1802 = vrot.lane.b32.xlu0 %v1449, 4
          %v1803 = vpop.permute.xlu0 %1802
          %1804 = vrot.lane.b32.xlu0 %v1450, 4
          %v1805 = vpop.permute.xlu0 %1804
          %1806 = vrot.lane.b32.xlu0 %v1451, 4
          %v1807 = vpop.permute.xlu0 %1806
          %1808 = vrot.lane.b32.xlu0 %v1452, 4
          %v1809 = vpop.permute.xlu0 %1808
          %1810 = vrot.lane.b32.xlu0 %v1453, 4
          %v1811 = vpop.permute.xlu0 %1810
          %1812 = vrot.lane.b32.xlu0 %v1454, 4
          %v1813 = vpop.permute.xlu0 %1812
          %1814 = vrot.lane.b32.xlu0 %v1455, 4
          %v1815 = vpop.permute.xlu0 %1814
          %1816 = vrot.lane.b32.xlu0 %v1456, 4
          %v1817 = vpop.permute.xlu0 %1816
          %1818 = vrot.lane.b32.xlu0 %v1457, 4
          %v1819 = vpop.permute.xlu0 %1818
          %1820 = vrot.lane.b32.xlu0 %v1458, 4
          %v1821 = vpop.permute.xlu0 %1820
          %1822 = vrot.lane.b32.xlu0 %v1459, 4
          %v1823 = vpop.permute.xlu0 %1822
          %1824 = vrot.lane.b32.xlu0 %v1460, 4
          %v1825 = vpop.permute.xlu0 %1824
          %1826 = vrot.lane.b32.xlu0 %v1461, 4
          %v1827 = vpop.permute.xlu0 %1826
          %1828 = vrot.lane.b32.xlu0 %v1462, 4
          %v1829 = vpop.permute.xlu0 %1828
          %1830 = vrot.lane.b32.xlu0 %v1463, 4
          %v1831 = vpop.permute.xlu0 %1830
          %1848 = vst.msk [vmem:[%s1659] sm:$0xf] %vm1126, %v1801
          %1849 = vst.msk [vmem:[%s1659 + $0x4] sm:$0xf] %vm1126, %v1803
          %1850 = vst.msk [vmem:[%s1659 + $0xc] sm:$0xf] %vm1126, %v1805
          %1851 = vst.msk [vmem:[%s1659 + $0x10] sm:$0xf] %vm1126, %v1807
          %1852 = vst.msk [vmem:[%s1659 + $0x18] sm:$0xf] %vm1126, %v1809
          %1853 = vst.msk [vmem:[%s1659 + $0x1c] sm:$0xf] %vm1126, %v1811
          %1854 = vst.msk [vmem:[%s1659 + $0x24] sm:$0xf] %vm1126, %v1813
          %1855 = vst.msk [vmem:[%s1659 + $0x28] sm:$0xf] %vm1126, %v1815
          %1856 = vst.msk [vmem:[%s1659 + $0x30] sm:$0xf] %vm1126, %v1817
          %1857 = vst.msk [vmem:[%s1659 + $0x34] sm:$0xf] %vm1126, %v1819
          %1858 = vst.msk [vmem:[%s1659 + $0x3c] sm:$0xf] %vm1126, %v1821
          %1859 = vst.msk [vmem:[%s1659 + $0x40] sm:$0xf] %vm1126, %v1823
          %1860 = vst.msk [vmem:[%s1659 + $0x48] sm:$0xf] %vm1126, %v1825
          %1861 = vst.msk [vmem:[%s1659 + $0x4c] sm:$0xf] %vm1126, %v1827
          %1862 = vst.msk [vmem:[%s1659 + $0x54] sm:$0xf] %vm1126, %v1829
          %1863 = vst.msk [vmem:[%s1659 + $0x58] sm:$0xf] %vm1126, %v1831
          %1866 = vrot.lane.b32.xlu0 %v1470, 4
          %v1867 = vpop.permute.xlu0 %1866
          %1868 = vrot.lane.b32.xlu0 %v1471, 4
          %v1869 = vpop.permute.xlu0 %1868
          %1872 = vst.msk [vmem:[%s1736] sm:$0xf] %vm1126, %v1867
          %1873 = vst.msk [vmem:[%s1736 + $0x4] sm:$0xf] %vm1126, %v1869
          %v1874 = vrot.slane %v1473, 4
          %v1875 = vrot.slane %v1476, 5
          %v1876 = vor.u32 %v1874, %v1875
          %v1877 = vrot.slane %v1876, 4
          %v1878 = vrot.slane %v1484, 5
          %v1879 = vsel %vm1221, %v1877, %v1878
          %v1880 = vrot.slane %v1481, 4
          %v1881 = vor.u32 %v1880, %v1878
          %v1882 = vrot.slane %v1881, 4
          %1883 = vrot.lane.b32.xlu0 %v1879, 8
          %v1884 = vpop.permute.xlu0 %1883
          %1885 = vrot.lane.b32.xlu0 %v1882, 8
          %v1886 = vpop.permute.xlu0 %1885
          %1889 = vst.msk [vmem:[#allocation3] sm:$0xf] %vm1237, %v1884
          %v1890 = vld [vmem:[#allocation3 + $0x4] sm:$0xf]
          %v1891 = vsel %vm1240, %v1886, %v1890
          %1892 = vst [vmem:[#allocation3 + $0x4] sm:$0xf] %v1891
          %v1893 = vrot.slane %v1500, 4
          %v1894 = vrot.slane %v1503, 5
          %v1895 = vor.u32 %v1893, %v1894
          %v1896 = vrot.slane %v1895, 4
          %v1897 = vrot.slane %v1511, 5
          %v1898 = vsel %vm1221, %v1896, %v1897
          %v1899 = vrot.slane %v1508, 4
          %v1900 = vor.u32 %v1899, %v1897
          %v1901 = vrot.slane %v1900, 4
          %v1902 = vrot.slane %v1517, 4
          %v1903 = vrot.slane %v1520, 5
          %v1904 = vor.u32 %v1902, %v1903
          %v1905 = vrot.slane %v1904, 4
          %v1906 = vrot.slane %v1528, 5
          %v1907 = vsel %vm1221, %v1905, %v1906
          %v1908 = vrot.slane %v1525, 4
          %v1909 = vor.u32 %v1908, %v1906
          %v1910 = vrot.slane %v1909, 4
          %v1911 = vrot.slane %v1534, 4
          %v1912 = vrot.slane %v1537, 5
          %v1913 = vor.u32 %v1911, %v1912
          %v1914 = vrot.slane %v1913, 4
          %v1915 = vrot.slane %v1545, 5
          %v1916 = vsel %vm1221, %v1914, %v1915
          %v1917 = vrot.slane %v1542, 4
          %v1918 = vor.u32 %v1917, %v1915
          %v1919 = vrot.slane %v1918, 4
          %v1920 = vrot.slane %v1551, 4
          %v1921 = vrot.slane %v1554, 5
          %v1922 = vor.u32 %v1920, %v1921
          %v1923 = vrot.slane %v1922, 4
          %v1924 = vrot.slane %v1562, 5
          %v1925 = vsel %vm1221, %v1923, %v1924
          %v1926 = vrot.slane %v1559, 4
          %v1927 = vor.u32 %v1926, %v1924
          %v1928 = vrot.slane %v1927, 4
          %v1929 = vrot.slane %v1568, 4
          %v1930 = vrot.slane %v1571, 5
          %v1931 = vor.u32 %v1929, %v1930
          %v1932 = vrot.slane %v1931, 4
          %v1933 = vrot.slane %v1579, 5
          %v1934 = vsel %vm1221, %v1932, %v1933
          %v1935 = vrot.slane %v1576, 4
          %v1936 = vor.u32 %v1935, %v1933
          %v1937 = vrot.slane %v1936, 4
          %v1938 = vrot.slane %v1585, 4
          %v1939 = vrot.slane %v1588, 5
          %v1940 = vor.u32 %v1938, %v1939
          %v1941 = vrot.slane %v1940, 4
          %v1942 = vrot.slane %v1596, 5
          %v1943 = vsel %vm1221, %v1941, %v1942
          %v1944 = vrot.slane %v1593, 4
          %v1945 = vor.u32 %v1944, %v1942
          %v1946 = vrot.slane %v1945, 4
          %v1947 = vrot.slane %v1602, 4
          %v1948 = vrot.slane %v1605, 5
          %v1949 = vor.u32 %v1947, %v1948
          %v1950 = vrot.slane %v1949, 4
          %v1951 = vrot.slane %v1613, 5
          %v1952 = vsel %vm1221, %v1950, %v1951
          %v1953 = vrot.slane %v1610, 4
          %v1954 = vor.u32 %v1953, %v1951
          %v1955 = vrot.slane %v1954, 4
          %v1956 = vrot.slane %v1619, 4
          %v1957 = vrot.slane %v1622, 5
          %v1958 = vor.u32 %v1956, %v1957
          %v1959 = vrot.slane %v1958, 4
          %v1960 = vrot.slane %v1630, 5
          %v1961 = vsel %vm1221, %v1959, %v1960
          %v1962 = vrot.slane %v1627, 4
          %v1963 = vor.u32 %v1962, %v1960
          %v1964 = vrot.slane %v1963, 4
          %1965 = vrot.lane.b32.xlu0 %v1898, 8
          %v1966 = vpop.permute.xlu0 %1965
          %1967 = vrot.lane.b32.xlu0 %v1901, 8
          %v1968 = vpop.permute.xlu0 %1967
          %1969 = vrot.lane.b32.xlu0 %v1907, 8
          %v1970 = vpop.permute.xlu0 %1969
          %1971 = vrot.lane.b32.xlu0 %v1910, 8
          %v1972 = vpop.permute.xlu0 %1971
          %1973 = vrot.lane.b32.xlu0 %v1916, 8
          %v1974 = vpop.permute.xlu0 %1973
          %1975 = vrot.lane.b32.xlu0 %v1919, 8
          %v1976 = vpop.permute.xlu0 %1975
          %1977 = vrot.lane.b32.xlu0 %v1925, 8
          %v1978 = vpop.permute.xlu0 %1977
          %1979 = vrot.lane.b32.xlu0 %v1928, 8
          %v1980 = vpop.permute.xlu0 %1979
          %1981 = vrot.lane.b32.xlu0 %v1934, 8
          %v1982 = vpop.permute.xlu0 %1981
          %1983 = vrot.lane.b32.xlu0 %v1937, 8
          %v1984 = vpop.permute.xlu0 %1983
          %1985 = vrot.lane.b32.xlu0 %v1943, 8
          %v1986 = vpop.permute.xlu0 %1985
          %1987 = vrot.lane.b32.xlu0 %v1946, 8
          %v1988 = vpop.permute.xlu0 %1987
          %1989 = vrot.lane.b32.xlu0 %v1952, 8
          %v1990 = vpop.permute.xlu0 %1989
          %1991 = vrot.lane.b32.xlu0 %v1955, 8
          %v1992 = vpop.permute.xlu0 %1991
          %1993 = vrot.lane.b32.xlu0 %v1961, 8
          %v1994 = vpop.permute.xlu0 %1993
          %1995 = vrot.lane.b32.xlu0 %v1964, 8
          %v1996 = vpop.permute.xlu0 %1995
          %2013 = vst.msk [vmem:[%s1659] sm:$0xf] %vm1237, %v1966
          %v2014 = vld [vmem:[%s1659 + $0x4] sm:$0xf]
          %v2015 = vsel %vm1240, %v1968, %v2014
          %2016 = vst [vmem:[%s1659 + $0x4] sm:$0xf] %v2015
          %2017 = vst.msk [vmem:[%s1659 + $0xc] sm:$0xf] %vm1237, %v1970
          %v2018 = vld [vmem:[%s1659 + $0x10] sm:$0xf]
          %v2019 = vsel %vm1240, %v1972, %v2018
          %2020 = vst [vmem:[%s1659 + $0x10] sm:$0xf] %v2019
          %2021 = vst.msk [vmem:[%s1659 + $0x18] sm:$0xf] %vm1237, %v1974
          %v2022 = vld [vmem:[%s1659 + $0x1c] sm:$0xf]
          %v2023 = vsel %vm1240, %v1976, %v2022
          %2024 = vst [vmem:[%s1659 + $0x1c] sm:$0xf] %v2023
          %2025 = vst.msk [vmem:[%s1659 + $0x24] sm:$0xf] %vm1237, %v1978
          %v2026 = vld [vmem:[%s1659 + $0x28] sm:$0xf]
          %v2027 = vsel %vm1240, %v1980, %v2026
          %2028 = vst [vmem:[%s1659 + $0x28] sm:$0xf] %v2027
          %2029 = vst.msk [vmem:[%s1659 + $0x30] sm:$0xf] %vm1237, %v1982
          %v2030 = vld [vmem:[%s1659 + $0x34] sm:$0xf]
          %v2031 = vsel %vm1240, %v1984, %v2030
          %2032 = vst [vmem:[%s1659 + $0x34] sm:$0xf] %v2031
          %2033 = vst.msk [vmem:[%s1659 + $0x3c] sm:$0xf] %vm1237, %v1986
          %v2034 = vld [vmem:[%s1659 + $0x40] sm:$0xf]
          %v2035 = vsel %vm1240, %v1988, %v2034
          %2036 = vst [vmem:[%s1659 + $0x40] sm:$0xf] %v2035
          %2037 = vst.msk [vmem:[%s1659 + $0x48] sm:$0xf] %vm1237, %v1990
          %v2038 = vld [vmem:[%s1659 + $0x4c] sm:$0xf]
          %v2039 = vsel %vm1240, %v1992, %v2038
          %2040 = vst [vmem:[%s1659 + $0x4c] sm:$0xf] %v2039
          %2041 = vst.msk [vmem:[%s1659 + $0x54] sm:$0xf] %vm1237, %v1994
          %v2042 = vld [vmem:[%s1659 + $0x58] sm:$0xf]
          %v2043 = vsel %vm1240, %v1996, %v2042
          %2044 = vst [vmem:[%s1659 + $0x58] sm:$0xf] %v2043
          %v2045 = vrot.slane %v1717, 4
          %v2046 = vrot.slane %v1720, 5
          %v2047 = vor.u32 %v2045, %v2046
          %v2048 = vrot.slane %v2047, 4
          %v2049 = vrot.slane %v1728, 5
          %v2050 = vsel %vm1221, %v2048, %v2049
          %v2051 = vrot.slane %v1725, 4
          %v2052 = vor.u32 %v2051, %v2049
          %v2053 = vrot.slane %v2052, 4
          %2054 = vrot.lane.b32.xlu0 %v2050, 8
          %v2055 = vpop.permute.xlu0 %2054
          %2056 = vrot.lane.b32.xlu0 %v2053, 8
          %v2057 = vpop.permute.xlu0 %2056
          %2060 = vst.msk [vmem:[%s1736] sm:$0xf] %vm1237, %v2055
          %v2061 = vld [vmem:[%s1736 + $0x4] sm:$0xf]
          %v2062 = vsel %vm1240, %v2057, %v2061
          %2063 = vst [vmem:[%s1736 + $0x4] sm:$0xf] %v2062
          %v2064 = vld [vmem:[#allocation3 + $0x4] sm:$0x8]
          %v2065 = vsel %vm1417, 0, %v2064
          %2066 = vst [vmem:[#allocation3 + $0x4] sm:$0x8] %v2065
          %v2067 = vld [vmem:[#allocation3 + $0x10] sm:$0x8]
          %v2068 = vsel %vm1417, 0, %v2067
          %2069 = vst [vmem:[#allocation3 + $0x10] sm:$0x8] %v2068
          %v2070 = vld [vmem:[#allocation3 + $0x1c] sm:$0x8]
          %v2071 = vsel %vm1417, 0, %v2070
          %2072 = vst [vmem:[#allocation3 + $0x1c] sm:$0x8] %v2071
          %v2073 = vld [vmem:[#allocation3 + $0x28] sm:$0x8]
          %v2074 = vsel %vm1417, 0, %v2073
          %2075 = vst [vmem:[#allocation3 + $0x28] sm:$0x8] %v2074
          %v2076 = vld [vmem:[#allocation3 + $0x34] sm:$0x8]
          %v2077 = vsel %vm1417, 0, %v2076
          %2078 = vst [vmem:[#allocation3 + $0x34] sm:$0x8] %v2077
          %v2079 = vld [vmem:[#allocation3 + $0x40] sm:$0x8]
          %v2080 = vsel %vm1417, 0, %v2079
          %2081 = vst [vmem:[#allocation3 + $0x40] sm:$0x8] %v2080
          %v2082 = vld [vmem:[#allocation3 + $0x4c] sm:$0x8]
          %v2083 = vsel %vm1417, 0, %v2082
          %2084 = vst [vmem:[#allocation3 + $0x4c] sm:$0x8] %v2083
          %v2085 = vld [vmem:[#allocation3 + $0x58] sm:$0x8]
          %v2086 = vsel %vm1417, 0, %v2085
          %2087 = vst [vmem:[#allocation3 + $0x58] sm:$0x8] %v2086
          %v2088 = vld [vmem:[#allocation3 + $0x64] sm:$0x8]
          %v2089 = vsel %vm1417, 0, %v2088
          %2090 = vst [vmem:[#allocation3 + $0x64] sm:$0x8] %v2089
          %v2091 = vld [vmem:[#allocation3 + $0x70] sm:$0x8]
          %v2092 = vsel %vm1417, 0, %v2091
          %2093 = vst [vmem:[#allocation3 + $0x70] sm:$0x8] %v2092
        $region104: #{upconv_forward.6} parent=59 // pred_fallthru
          _
        %v2094 = vld [vmem:[#allocation2] sm:$0xf]
        %v2095 = vld [vmem:[#allocation2 + $0x4] sm:$0xf]
        %v2096 = vld [vmem:[#allocation2 + $0x8] sm:$0xf]
        %v2097 = vld [vmem:[#allocation2 + $0xc] sm:$0xf]
        %v2098 = vld [vmem:[#allocation2 + $0x10] sm:$0xf]
        %v2099 = vld [vmem:[#allocation2 + $0x14] sm:$0xf]
        %v2100 = vld [vmem:[#allocation2 + $0x18] sm:$0xf]
        %v2101 = vld [vmem:[#allocation2 + $0x1c] sm:$0xf]
        %v2102 = vld [vmem:[#allocation2 + $0x20] sm:$0xf]
        %v2103 = vld [vmem:[#allocation2 + $0x24] sm:$0xf]
        %v2104 = vld [vmem:[#allocation2 + $0x28] sm:$0xf]
        %v2105 = vld [vmem:[#allocation2 + $0x2c] sm:$0xf]
        %v2106 = vld [vmem:[#allocation2 + $0x30] sm:$0xf]
        %v2107 = vld [vmem:[#allocation2 + $0x34] sm:$0xf]
        %v2108 = vld [vmem:[#allocation2 + $0x38] sm:$0xf]
        %v2109 = vld [vmem:[#allocation2 + $0x3c] sm:$0xf]
        %v2110 = vld [vmem:[#allocation2 + $0x40] sm:$0xf]
        %v2111 = vld [vmem:[#allocation2 + $0x44] sm:$0xf]
        %v2112 = vld [vmem:[#allocation2 + $0x48] sm:$0xf]
        %v2113 = vld [vmem:[#allocation2 + $0x4c] sm:$0xf]
        %v2114 = vld [vmem:[#allocation2 + $0x50] sm:$0xf]
        %v2115 = vld [vmem:[#allocation2 + $0x54] sm:$0xf]
        %v2116 = vld [vmem:[#allocation2 + $0x58] sm:$0xf]
        %v2117 = vld [vmem:[#allocation2 + $0x5c] sm:$0xf]
        %v2118 = vld [vmem:[#allocation15] sm:$0xf]
        %v2119 = vld [vmem:[#allocation15 + $0x4] sm:$0x3]
        %s2120 = scalar_lea.vmem [#allocation2], 12
        %v2121 = vld [vmem:[%s2120] sm:$0xf]
        %v2122 = vld [vmem:[%s2120 + $0x4] sm:$0xf]
        %v2123 = vld [vmem:[%s2120 + $0x8] sm:$0xf]
        %v2124 = vld [vmem:[%s2120 + $0xc] sm:$0xf]
        %v2125 = vld [vmem:[%s2120 + $0x10] sm:$0xf]
        %v2126 = vld [vmem:[%s2120 + $0x14] sm:$0xf]
        %v2127 = vld [vmem:[%s2120 + $0x18] sm:$0xf]
        %v2128 = vld [vmem:[%s2120 + $0x1c] sm:$0xf]
        %v2129 = vld [vmem:[%s2120 + $0x20] sm:$0xf]
        %v2130 = vld [vmem:[%s2120 + $0x24] sm:$0xf]
        %v2131 = vld [vmem:[%s2120 + $0x28] sm:$0xf]
        %v2132 = vld [vmem:[%s2120 + $0x2c] sm:$0xf]
        %v2133 = vld [vmem:[%s2120 + $0x30] sm:$0xf]
        %v2134 = vld [vmem:[%s2120 + $0x34] sm:$0xf]
        %v2135 = vld [vmem:[%s2120 + $0x38] sm:$0xf]
        %v2136 = vld [vmem:[%s2120 + $0x3c] sm:$0xf]
        %v2137 = vld [vmem:[%s2120 + $0x40] sm:$0xf]
        %v2138 = vld [vmem:[%s2120 + $0x44] sm:$0xf]
        %v2139 = vld [vmem:[%s2120 + $0x48] sm:$0xf]
        %v2140 = vld [vmem:[%s2120 + $0x4c] sm:$0xf]
        %v2141 = vld [vmem:[%s2120 + $0x50] sm:$0xf]
        %v2142 = vld [vmem:[%s2120 + $0x54] sm:$0xf]
        %v2143 = vld [vmem:[%s2120 + $0x58] sm:$0xf]
        %v2144 = vld [vmem:[%s2120 + $0x5c] sm:$0xf]
        %s2145 = scalar_lea.vmem [#allocation15], 8
        %v2146 = vld [vmem:[%s2145] sm:$0xf]
        %v2147 = vld [vmem:[%s2145 + $0x4] sm:$0x3]
        %v2172 = vunpack.c.l.b16 %v2121
        %v2173 = vunpack.c.l.b16 %v2122
        %v2174 = vunpack.c.l.b16 %v2123
        %v2175 = vunpack.c.l.b16 %v2124
        %v2176 = vunpack.c.l.b16 %v2125
        %v2177 = vunpack.c.l.b16 %v2126
        %v2178 = vunpack.c.l.b16 %v2127
        %v2179 = vunpack.c.l.b16 %v2128
        %v2180 = vunpack.c.l.b16 %v2129
        %v2181 = vunpack.c.l.b16 %v2130
        %v2182 = vunpack.c.l.b16 %v2131
        %v2183 = vunpack.c.l.b16 %v2132
        %v2184 = vunpack.c.l.b16 %v2133
        %v2185 = vunpack.c.l.b16 %v2134
        %v2186 = vunpack.c.l.b16 %v2135
        %v2187 = vunpack.c.l.b16 %v2136
        %v2188 = vunpack.c.l.b16 %v2137
        %v2189 = vunpack.c.l.b16 %v2138
        %v2190 = vunpack.c.l.b16 %v2139
        %v2191 = vunpack.c.l.b16 %v2140
        %v2192 = vunpack.c.l.b16 %v2141
        %v2193 = vunpack.c.l.b16 %v2142
        %v2194 = vunpack.c.l.b16 %v2143
        %v2195 = vunpack.c.l.b16 %v2144
        %v2196 = vpack.c.b16 %v2173, %v2172
        %v2197 = vpack.c.b16 %v2175, %v2174
        %v2198 = vpack.c.b16 %v2177, %v2176
        %v2199 = vpack.c.b16 %v2179, %v2178
        %v2200 = vpack.c.b16 %v2181, %v2180
        %v2201 = vpack.c.b16 %v2183, %v2182
        %v2202 = vpack.c.b16 %v2185, %v2184
        %v2203 = vpack.c.b16 %v2187, %v2186
        %v2204 = vpack.c.b16 %v2189, %v2188
        %v2205 = vpack.c.b16 %v2191, %v2190
        %v2206 = vpack.c.b16 %v2193, %v2192
        %v2207 = vpack.c.b16 %v2195, %v2194
        %v2210 = vunpack.c.l.b16 %v2146
        %v2211 = vunpack.c.l.b16 %v2147
        %v2212 = vpack.c.b16 %v2211, %v2210
        %vm2213 = vcmask 97280
        %v2215 = vsel %vm2213, %v2196, 0
        %v2218 = vsel %vm2213, %v2197, 0
        %v2221 = vsel %vm2213, %v2198, 0
        %v2224 = vsel %vm2213, %v2199, 0
        %v2227 = vsel %vm2213, %v2200, 0
        %v2230 = vsel %vm2213, %v2201, 0
        %v2233 = vsel %vm2213, %v2202, 0
        %v2236 = vsel %vm2213, %v2203, 0
        %v2239 = vsel %vm2213, %v2204, 0
        %v2242 = vsel %vm2213, %v2205, 0
        %v2245 = vsel %vm2213, %v2206, 0
        %v2248 = vsel %vm2213, %v2207, 0
        %vm2250 = vcmask 1045504
        %v2252 = vsel %vm2250, %v2212, 0
        %2254 = vmatprep.subr.bf16.mxu0 0
        %2255 = vmatpush1.bf16.msra.mxu0 %v2252
        %2256 = vmatprep.subr.bf16.mxu0 0
        %2257 = vmatpush1.bf16.msra.mxu0 0
        %2258 = vmatprep.subr.bf16.mxu0 0
        %2259 = vmatpush1.bf16.msra.mxu0 0
        %2260 = vmatprep.subr.bf16.mxu0 0
        %2261 = vmatpush1.bf16.msra.mxu0 0
        %2262 = vmatprep.subr.bf16.mxu0 0
        %2263 = vmatpush1.bf16.msra.mxu0 0
        %2264 = vmatprep.subr.bf16.mxu0 0
        %2265 = vmatpush1.bf16.msra.mxu0 0
        %2266 = vmatprep.subr.bf16.mxu0 0
        %2267 = vmatpush1.bf16.msra.mxu0 0
        %2268 = vmatprep.subr.bf16.mxu0 0
        %2269 = vmatpush1.bf16.msra.mxu0 0
        %2270 = vmatprep.subr.bf16.mxu0 0
        %2271 = vmatpush1.bf16.msra.mxu0 0
        %2272 = vmatprep.subr.bf16.mxu0 0
        %2273 = vmatpush1.bf16.msra.mxu0 0
        %2274 = vmatprep.subr.bf16.mxu0 0
        %2275 = vmatpush1.bf16.msra.mxu0 0
        %2276 = vmatprep.subr.bf16.mxu0 0
        %2277 = vmatpush1.bf16.msra.mxu0 0
        %2278 = vmatprep.subr.bf16.mxu0 0
        %2279 = vmatpush1.bf16.msra.mxu0 0
        %2280 = vmatprep.subr.bf16.mxu0 0
        %2281 = vmatpush1.bf16.msra.mxu0 0
        %2282 = vmatprep.subr.bf16.mxu0 0
        %2283 = vmatpush1.bf16.msra.mxu0 0
        %2284 = vmatprep.subr.bf16.mxu0 0
        %2285 = vmatpush1.bf16.msra.mxu0 0
        %2286 = vmatprep.mubr.bf16.mxu0 0
        %2287 = vmatmul.mubr.bf16.gmra.mrb[0].mxu0 %v2215
        %v2288 = vpop.f32.mrb[0].mxu0
        %v2289 = vadd.f32 0.0, %v2288
        %v2290 = vpop.f32.mrb[0].mxu0
        %v2291 = vpop.f32.mrb[0].mxu0
        %v2292 = vadd.f32 0.0, %v2291
        %v2293 = vpop.f32.mrb[0].mxu0
        %2294 = vmatprep.mubr.bf16.mxu0 0
        %2295 = vmatmul.mubr.bf16.gmra.mrb[0].mxu0 %v2218
        %v2296 = vpop.f32.mrb[0].mxu0
        %v2297 = vpop.f32.mrb[0].mxu0
        %v2298 = vpop.f32.mrb[0].mxu0
        %v2299 = vadd.f32 0.0, %v2298
        %v2300 = vpop.f32.mrb[0].mxu0
        %2301 = vmatprep.mubr.bf16.mxu0 0
        %2302 = vmatmul.mubr.bf16.gmra.mrb[0].mxu0 %v2221
        %v2303 = vpop.f32.mrb[0].mxu0
        %v2304 = vadd.f32 0.0, %v2303
        %v2305 = vpop.f32.mrb[0].mxu0
        %v2306 = vpop.f32.mrb[0].mxu0
        %v2307 = vpop.f32.mrb[0].mxu0
        %2308 = vmatprep.mubr.bf16.mxu0 0
        %2309 = vmatmul.mubr.bf16.gmra.mrb[0].mxu0 %v2224
        %v2310 = vpop.f32.mrb[0].mxu0
        %v2311 = vadd.f32 0.0, %v2310
        %v2312 = vpop.f32.mrb[0].mxu0
        %v2313 = vpop.f32.mrb[0].mxu0
        %v2314 = vadd.f32 0.0, %v2313
        %v2315 = vpop.f32.mrb[0].mxu0
        %2316 = vmatprep.mubr.bf16.mxu0 0
        %2317 = vmatmul.mubr.bf16.gmra.mrb[0].mxu0 %v2227
        %v2318 = vpop.f32.mrb[0].mxu0
        %v2319 = vpop.f32.mrb[0].mxu0
        %v2320 = vpop.f32.mrb[0].mxu0
        %v2321 = vadd.f32 0.0, %v2320
        %v2322 = vpop.f32.mrb[0].mxu0
        %2323 = vmatprep.mubr.bf16.mxu0 0
        %2324 = vmatmul.mubr.bf16.gmra.mrb[0].mxu0 %v2230
        %v2325 = vpop.f32.mrb[0].mxu0
        %v2326 = vadd.f32 0.0, %v2325
        %v2327 = vpop.f32.mrb[0].mxu0
        %v2328 = vpop.f32.mrb[0].mxu0
        %v2329 = vpop.f32.mrb[0].mxu0
        %2330 = vmatprep.mubr.bf16.mxu0 0
        %2331 = vmatmul.mubr.bf16.gmra.mrb[0].mxu0 %v2233
        %v2332 = vpop.f32.mrb[0].mxu0
        %v2333 = vadd.f32 0.0, %v2332
        %v2334 = vpop.f32.mrb[0].mxu0
        %v2335 = vpop.f32.mrb[0].mxu0
        %v2336 = vadd.f32 0.0, %v2335
        %v2337 = vpop.f32.mrb[0].mxu0
        %2338 = vmatprep.mubr.bf16.mxu0 0
        %2339 = vmatmul.mubr.bf16.gmra.mrb[0].mxu0 %v2236
        %v2340 = vpop.f32.mrb[0].mxu0
        %v2341 = vpop.f32.mrb[0].mxu0
        %v2342 = vpop.f32.mrb[0].mxu0
        %v2343 = vadd.f32 0.0, %v2342
        %v2344 = vpop.f32.mrb[0].mxu0
        %2345 = vmatprep.mubr.bf16.mxu0 0
        %2346 = vmatmul.mubr.bf16.gmra.mrb[0].mxu0 %v2239
        %v2347 = vpop.f32.mrb[0].mxu0
        %v2348 = vadd.f32 0.0, %v2347
        %v2349 = vpop.f32.mrb[0].mxu0
        %v2350 = vpop.f32.mrb[0].mxu0
        %v2351 = vpop.f32.mrb[0].mxu0
        %2352 = vmatprep.mubr.bf16.mxu0 0
        %2353 = vmatmul.mubr.bf16.gmra.mrb[0].mxu0 %v2242
        %v2354 = vpop.f32.mrb[0].mxu0
        %v2355 = vadd.f32 0.0, %v2354
        %v2356 = vpop.f32.mrb[0].mxu0
        %v2357 = vpop.f32.mrb[0].mxu0
        %v2358 = vadd.f32 0.0, %v2357
        %v2359 = vpop.f32.mrb[0].mxu0
        %2360 = vmatprep.mubr.bf16.mxu0 0
        %2361 = vmatmul.mubr.bf16.gmra.mrb[0].mxu0 %v2245
        %v2362 = vpop.f32.mrb[0].mxu0
        %v2363 = vpop.f32.mrb[0].mxu0
        %v2364 = vpop.f32.mrb[0].mxu0
        %v2365 = vadd.f32 0.0, %v2364
        %v2366 = vpop.f32.mrb[0].mxu0
        %2367 = vmatprep.mubr.bf16.mxu0 0
        %2368 = vmatmul.mubr.bf16.gmra.mrb[0].mxu0 %v2248
        %v2369 = vpop.f32.mrb[0].mxu0
        %v2370 = vadd.f32 0.0, %v2369
        %v2371 = vpop.f32.mrb[0].mxu0
        %v2372 = vpop.f32.mrb[0].mxu0
        %v2373 = vpop.f32.mrb[0].mxu0
        %2374 = vdwg.mxu0
        %v2399 = vunpack.c.l.b16 %v2094
        %v2400 = vunpack.c.l.b16 %v2095
        %v2401 = vunpack.c.l.b16 %v2096
        %v2402 = vunpack.c.l.b16 %v2097
        %v2403 = vunpack.c.l.b16 %v2098
        %v2404 = vunpack.c.l.b16 %v2099
        %v2405 = vunpack.c.l.b16 %v2100
        %v2406 = vunpack.c.l.b16 %v2101
        %v2407 = vunpack.c.l.b16 %v2102
        %v2408 = vunpack.c.l.b16 %v2103
        %v2409 = vunpack.c.l.b16 %v2104
        %v2410 = vunpack.c.l.b16 %v2105
        %v2411 = vunpack.c.l.b16 %v2106
        %v2412 = vunpack.c.l.b16 %v2107
        %v2413 = vunpack.c.l.b16 %v2108
        %v2414 = vunpack.c.l.b16 %v2109
        %v2415 = vunpack.c.l.b16 %v2110
        %v2416 = vunpack.c.l.b16 %v2111
        %v2417 = vunpack.c.l.b16 %v2112
        %v2418 = vunpack.c.l.b16 %v2113
        %v2419 = vunpack.c.l.b16 %v2114
        %v2420 = vunpack.c.l.b16 %v2115
        %v2421 = vunpack.c.l.b16 %v2116
        %v2422 = vunpack.c.l.b16 %v2117
        %v2423 = vpack.c.b16 %v2400, %v2399
        %v2424 = vpack.c.b16 %v2402, %v2401
        %v2425 = vpack.c.b16 %v2404, %v2403
        %v2426 = vpack.c.b16 %v2406, %v2405
        %v2427 = vpack.c.b16 %v2408, %v2407
        %v2428 = vpack.c.b16 %v2410, %v2409
        %v2429 = vpack.c.b16 %v2412, %v2411
        %v2430 = vpack.c.b16 %v2414, %v2413
        %v2431 = vpack.c.b16 %v2416, %v2415
        %v2432 = vpack.c.b16 %v2418, %v2417
        %v2433 = vpack.c.b16 %v2420, %v2419
        %v2434 = vpack.c.b16 %v2422, %v2421
        %v2437 = vunpack.c.l.b16 %v2118
        %v2438 = vunpack.c.l.b16 %v2119
        %v2439 = vpack.c.b16 %v2438, %v2437
        %v2441 = vsel %vm2213, %v2423, 0
        %v2444 = vsel %vm2213, %v2424, 0
        %v2447 = vsel %vm2213, %v2425, 0
        %v2450 = vsel %vm2213, %v2426, 0
        %v2453 = vsel %vm2213, %v2427, 0
        %v2456 = vsel %vm2213, %v2428, 0
        %v2459 = vsel %vm2213, %v2429, 0
        %v2462 = vsel %vm2213, %v2430, 0
        %v2465 = vsel %vm2213, %v2431, 0
        %v2468 = vsel %vm2213, %v2432, 0
        %v2471 = vsel %vm2213, %v2433, 0
        %v2474 = vsel %vm2213, %v2434, 0
        %v2477 = vsel %vm2250, %v2439, 0
        %2479 = vmatprep.subr.bf16.mxu0 0
        %2480 = vmatpush1.bf16.msra.mxu0 %v2477
        %2481 = vmatprep.subr.bf16.mxu0 0
        %2482 = vmatpush1.bf16.msra.mxu0 0
        %2483 = vmatprep.subr.bf16.mxu0 0
        %2484 = vmatpush1.bf16.msra.mxu0 0
        %2485 = vmatprep.subr.bf16.mxu0 0
        %2486 = vmatpush1.bf16.msra.mxu0 0
        %2487 = vmatprep.subr.bf16.mxu0 0
        %2488 = vmatpush1.bf16.msra.mxu0 0
        %2489 = vmatprep.subr.bf16.mxu0 0
        %2490 = vmatpush1.bf16.msra.mxu0 0
        %2491 = vmatprep.subr.bf16.mxu0 0
        %2492 = vmatpush1.bf16.msra.mxu0 0
        %2493 = vmatprep.subr.bf16.mxu0 0
        %2494 = vmatpush1.bf16.msra.mxu0 0
        %2495 = vmatprep.subr.bf16.mxu0 0
        %2496 = vmatpush1.bf16.msra.mxu0 0
        %2497 = vmatprep.subr.bf16.mxu0 0
        %2498 = vmatpush1.bf16.msra.mxu0 0
        %2499 = vmatprep.subr.bf16.mxu0 0
        %2500 = vmatpush1.bf16.msra.mxu0 0
        %2501 = vmatprep.subr.bf16.mxu0 0
        %2502 = vmatpush1.bf16.msra.mxu0 0
        %2503 = vmatprep.subr.bf16.mxu0 0
        %2504 = vmatpush1.bf16.msra.mxu0 0
        %2505 = vmatprep.subr.bf16.mxu0 0
        %2506 = vmatpush1.bf16.msra.mxu0 0
        %2507 = vmatprep.subr.bf16.mxu0 0
        %2508 = vmatpush1.bf16.msra.mxu0 0
        %2509 = vmatprep.subr.bf16.mxu0 0
        %2510 = vmatpush1.bf16.msra.mxu0 0
        %2511 = vmatprep.mubr.bf16.mxu0 0
        %2512 = vmatmul.mubr.bf16.gmra.mrb[0].mxu0 %v2441
        %v2513 = vpop.f32.mrb[0].mxu0
        %v2514 = vadd.f32 %v2289, %v2513
        %v2515 = vpop.f32.mrb[0].mxu0
        %v2516 = vpop.f32.mrb[0].mxu0
        %v2517 = vadd.f32 %v2292, %v2516
        %v2518 = vpop.f32.mrb[0].mxu0
        %2519 = vmatprep.mubr.bf16.mxu0 0
        %2520 = vmatmul.mubr.bf16.gmra.mrb[0].mxu0 %v2444
        %v2521 = vpop.f32.mrb[0].mxu0
        %v2522 = vpop.f32.mrb[0].mxu0
        %v2523 = vpop.f32.mrb[0].mxu0
        %v2524 = vadd.f32 %v2299, %v2523
        %v2525 = vpop.f32.mrb[0].mxu0
        %2526 = vmatprep.mubr.bf16.mxu0 0
        %2527 = vmatmul.mubr.bf16.gmra.mrb[0].mxu0 %v2447
        %v2528 = vpop.f32.mrb[0].mxu0
        %v2529 = vadd.f32 %v2304, %v2528
        %v2530 = vpop.f32.mrb[0].mxu0
        %v2531 = vpop.f32.mrb[0].mxu0
        %v2532 = vpop.f32.mrb[0].mxu0
        %2533 = vmatprep.mubr.bf16.mxu0 0
        %2534 = vmatmul.mubr.bf16.gmra.mrb[0].mxu0 %v2450
        %v2535 = vpop.f32.mrb[0].mxu0
        %v2536 = vadd.f32 %v2311, %v2535
        %v2537 = vpop.f32.mrb[0].mxu0
        %v2538 = vpop.f32.mrb[0].mxu0
        %v2539 = vadd.f32 %v2314, %v2538
        %v2540 = vpop.f32.mrb[0].mxu0
        %2541 = vmatprep.mubr.bf16.mxu0 0
        %2542 = vmatmul.mubr.bf16.gmra.mrb[0].mxu0 %v2453
        %v2543 = vpop.f32.mrb[0].mxu0
        %v2544 = vpop.f32.mrb[0].mxu0
        %v2545 = vpop.f32.mrb[0].mxu0
        %v2546 = vadd.f32 %v2321, %v2545
        %v2547 = vpop.f32.mrb[0].mxu0
        %2548 = vmatprep.mubr.bf16.mxu0 0
        %2549 = vmatmul.mubr.bf16.gmra.mrb[0].mxu0 %v2456
        %v2550 = vpop.f32.mrb[0].mxu0
        %v2551 = vadd.f32 %v2326, %v2550
        %v2552 = vpop.f32.mrb[0].mxu0
        %v2553 = vpop.f32.mrb[0].mxu0
        %v2554 = vpop.f32.mrb[0].mxu0
        %2555 = vmatprep.mubr.bf16.mxu0 0
        %2556 = vmatmul.mubr.bf16.gmra.mrb[0].mxu0 %v2459
        %v2557 = vpop.f32.mrb[0].mxu0
        %v2558 = vadd.f32 %v2333, %v2557
        %v2559 = vpop.f32.mrb[0].mxu0
        %v2560 = vpop.f32.mrb[0].mxu0
        %v2561 = vadd.f32 %v2336, %v2560
        %v2562 = vpop.f32.mrb[0].mxu0
        %2563 = vmatprep.mubr.bf16.mxu0 0
        %2564 = vmatmul.mubr.bf16.gmra.mrb[0].mxu0 %v2462
        %v2565 = vpop.f32.mrb[0].mxu0
        %v2566 = vpop.f32.mrb[0].mxu0
        %v2567 = vpop.f32.mrb[0].mxu0
        %v2568 = vadd.f32 %v2343, %v2567
        %v2569 = vpop.f32.mrb[0].mxu0
        %2570 = vmatprep.mubr.bf16.mxu0 0
        %2571 = vmatmul.mubr.bf16.gmra.mrb[0].mxu0 %v2465
        %v2572 = vpop.f32.mrb[0].mxu0
        %v2573 = vadd.f32 %v2348, %v2572
        %v2574 = vpop.f32.mrb[0].mxu0
        %v2575 = vpop.f32.mrb[0].mxu0
        %v2576 = vpop.f32.mrb[0].mxu0
        %2577 = vmatprep.mubr.bf16.mxu0 0
        %2578 = vmatmul.mubr.bf16.gmra.mrb[0].mxu0 %v2468
        %v2579 = vpop.f32.mrb[0].mxu0
        %v2580 = vadd.f32 %v2355, %v2579
        %v2581 = vpop.f32.mrb[0].mxu0
        %v2582 = vpop.f32.mrb[0].mxu0
        %v2583 = vadd.f32 %v2358, %v2582
        %v2584 = vpop.f32.mrb[0].mxu0
        %2585 = vmatprep.mubr.bf16.mxu0 0
        %2586 = vmatmul.mubr.bf16.gmra.mrb[0].mxu0 %v2471
        %v2587 = vpop.f32.mrb[0].mxu0
        %v2588 = vpop.f32.mrb[0].mxu0
        %v2589 = vpop.f32.mrb[0].mxu0
        %v2590 = vadd.f32 %v2365, %v2589
        %v2591 = vpop.f32.mrb[0].mxu0
        %2592 = vmatprep.mubr.bf16.mxu0 0
        %2593 = vmatmul.mubr.bf16.gmra.mrb[0].mxu0 %v2474
        %v2594 = vpop.f32.mrb[0].mxu0
        %v2595 = vadd.f32 %v2370, %v2594
        %v2596 = vpop.f32.mrb[0].mxu0
        %v2597 = vpop.f32.mrb[0].mxu0
        %v2598 = vpop.f32.mrb[0].mxu0
        %2599 = vdwg.mxu0
        %s2600 = scalar_lea.vmem [#allocation2], 24
        %v2601 = vld [vmem:[%s2600] sm:$0xf]
        %v2602 = vld [vmem:[%s2600 + $0x4] sm:$0xf]
        %v2603 = vld [vmem:[%s2600 + $0x8] sm:$0xf]
        %v2604 = vld [vmem:[%s2600 + $0xc] sm:$0xf]
        %v2605 = vld [vmem:[%s2600 + $0x10] sm:$0xf]
        %v2606 = vld [vmem:[%s2600 + $0x14] sm:$0xf]
        %v2607 = vld [vmem:[%s2600 + $0x18] sm:$0xf]
        %v2608 = vld [vmem:[%s2600 + $0x1c] sm:$0xf]
        %v2609 = vld [vmem:[%s2600 + $0x20] sm:$0xf]
        %v2610 = vld [vmem:[%s2600 + $0x24] sm:$0xf]
        %v2611 = vld [vmem:[%s2600 + $0x28] sm:$0xf]
        %v2612 = vld [vmem:[%s2600 + $0x2c] sm:$0xf]
        %v2613 = vld [vmem:[%s2600 + $0x30] sm:$0xf]
        %v2614 = vld [vmem:[%s2600 + $0x34] sm:$0xf]
        %v2615 = vld [vmem:[%s2600 + $0x38] sm:$0xf]
        %v2616 = vld [vmem:[%s2600 + $0x3c] sm:$0xf]
        %v2617 = vld [vmem:[%s2600 + $0x40] sm:$0xf]
        %v2618 = vld [vmem:[%s2600 + $0x44] sm:$0xf]
        %v2619 = vld [vmem:[%s2600 + $0x48] sm:$0xf]
        %v2620 = vld [vmem:[%s2600 + $0x4c] sm:$0xf]
        %v2621 = vld [vmem:[%s2600 + $0x50] sm:$0xf]
        %v2622 = vld [vmem:[%s2600 + $0x54] sm:$0xf]
        %v2623 = vld [vmem:[%s2600 + $0x58] sm:$0xf]
        %v2624 = vld [vmem:[%s2600 + $0x5c] sm:$0xf]
        %s2625 = scalar_lea.vmem [#allocation15], 16
        %v2626 = vld [vmem:[%s2625] sm:$0xf]
        %v2627 = vld [vmem:[%s2625 + $0x4] sm:$0x3]
        %v2652 = vunpack.c.l.b16 %v2601
        %v2653 = vunpack.c.l.b16 %v2602
        %v2654 = vunpack.c.l.b16 %v2603
        %v2655 = vunpack.c.l.b16 %v2604
        %v2656 = vunpack.c.l.b16 %v2605
        %v2657 = vunpack.c.l.b16 %v2606
        %v2658 = vunpack.c.l.b16 %v2607
        %v2659 = vunpack.c.l.b16 %v2608
        %v2660 = vunpack.c.l.b16 %v2609
        %v2661 = vunpack.c.l.b16 %v2610
        %v2662 = vunpack.c.l.b16 %v2611
        %v2663 = vunpack.c.l.b16 %v2612
        %v2664 = vunpack.c.l.b16 %v2613
        %v2665 = vunpack.c.l.b16 %v2614
        %v2666 = vunpack.c.l.b16 %v2615
        %v2667 = vunpack.c.l.b16 %v2616
        %v2668 = vunpack.c.l.b16 %v2617
        %v2669 = vunpack.c.l.b16 %v2618
        %v2670 = vunpack.c.l.b16 %v2619
        %v2671 = vunpack.c.l.b16 %v2620
        %v2672 = vunpack.c.l.b16 %v2621
        %v2673 = vunpack.c.l.b16 %v2622
        %v2674 = vunpack.c.l.b16 %v2623
        %v2675 = vunpack.c.l.b16 %v2624
        %v2676 = vpack.c.b16 %v2653, %v2652
        %v2677 = vpack.c.b16 %v2655, %v2654
        %v2678 = vpack.c.b16 %v2657, %v2656
        %v2679 = vpack.c.b16 %v2659, %v2658
        %v2680 = vpack.c.b16 %v2661, %v2660
        %v2681 = vpack.c.b16 %v2663, %v2662
        %v2682 = vpack.c.b16 %v2665, %v2664
        %v2683 = vpack.c.b16 %v2667, %v2666
        %v2684 = vpack.c.b16 %v2669, %v2668
        %v2685 = vpack.c.b16 %v2671, %v2670
        %v2686 = vpack.c.b16 %v2673, %v2672
        %v2687 = vpack.c.b16 %v2675, %v2674
        %v2690 = vunpack.c.l.b16 %v2626
        %v2691 = vunpack.c.l.b16 %v2627
        %v2692 = vpack.c.b16 %v2691, %v2690
        %v2694 = vsel %vm2213, %v2676, 0
        %v2697 = vsel %vm2213, %v2677, 0
        %v2700 = vsel %vm2213, %v2678, 0
        %v2703 = vsel %vm2213, %v2679, 0
        %v2706 = vsel %vm2213, %v2680, 0
        %v2709 = vsel %vm2213, %v2681, 0
        %v2712 = vsel %vm2213, %v2682, 0
        %v2715 = vsel %vm2213, %v2683, 0
        %v2718 = vsel %vm2213, %v2684, 0
        %v2721 = vsel %vm2213, %v2685, 0
        %v2724 = vsel %vm2213, %v2686, 0
        %v2727 = vsel %vm2213, %v2687, 0
        %v2730 = vsel %vm2250, %v2692, 0
        %2732 = vmatprep.subr.bf16.mxu0 0
        %2733 = vmatpush1.bf16.msra.mxu0 %v2730
        %2734 = vmatprep.subr.bf16.mxu0 0
        %2735 = vmatpush1.bf16.msra.mxu0 0
        %2736 = vmatprep.subr.bf16.mxu0 0
        %2737 = vmatpush1.bf16.msra.mxu0 0
        %2738 = vmatprep.subr.bf16.mxu0 0
        %2739 = vmatpush1.bf16.msra.mxu0 0
        %2740 = vmatprep.subr.bf16.mxu0 0
        %2741 = vmatpush1.bf16.msra.mxu0 0
        %2742 = vmatprep.subr.bf16.mxu0 0
        %2743 = vmatpush1.bf16.msra.mxu0 0
        %2744 = vmatprep.subr.bf16.mxu0 0
        %2745 = vmatpush1.bf16.msra.mxu0 0
        %2746 = vmatprep.subr.bf16.mxu0 0
        %2747 = vmatpush1.bf16.msra.mxu0 0
        %2748 = vmatprep.subr.bf16.mxu0 0
        %2749 = vmatpush1.bf16.msra.mxu0 0
        %2750 = vmatprep.subr.bf16.mxu0 0
        %2751 = vmatpush1.bf16.msra.mxu0 0
        %2752 = vmatprep.subr.bf16.mxu0 0
        %2753 = vmatpush1.bf16.msra.mxu0 0
        %2754 = vmatprep.subr.bf16.mxu0 0
        %2755 = vmatpush1.bf16.msra.mxu0 0
        %2756 = vmatprep.subr.bf16.mxu0 0
        %2757 = vmatpush1.bf16.msra.mxu0 0
        %2758 = vmatprep.subr.bf16.mxu0 0
        %2759 = vmatpush1.bf16.msra.mxu0 0
        %2760 = vmatprep.subr.bf16.mxu0 0
        %2761 = vmatpush1.bf16.msra.mxu0 0
        %2762 = vmatprep.subr.bf16.mxu0 0
        %2763 = vmatpush1.bf16.msra.mxu0 0
        %2764 = vmatprep.mubr.bf16.mxu0 0
        %2765 = vmatmul.mubr.bf16.gmra.mrb[0].mxu0 %v2694
        %v2766 = vpop.f32.mrb[0].mxu0
        %v2767 = vadd.f32 0.0, %v2766
        %v2768 = vpop.f32.mrb[0].mxu0
        %v2769 = vpop.f32.mrb[0].mxu0
        %v2770 = vadd.f32 0.0, %v2769
        %v2771 = vpop.f32.mrb[0].mxu0
        %2772 = vmatprep.mubr.bf16.mxu0 0
        %2773 = vmatmul.mubr.bf16.gmra.mrb[0].mxu0 %v2697
        %v2774 = vpop.f32.mrb[0].mxu0
        %v2775 = vpop.f32.mrb[0].mxu0
        %v2776 = vpop.f32.mrb[0].mxu0
        %v2777 = vadd.f32 0.0, %v2776
        %v2778 = vpop.f32.mrb[0].mxu0
        %2779 = vmatprep.mubr.bf16.mxu0 0
        %2780 = vmatmul.mubr.bf16.gmra.mrb[0].mxu0 %v2700
        %v2781 = vpop.f32.mrb[0].mxu0
        %v2782 = vadd.f32 0.0, %v2781
        %v2783 = vpop.f32.mrb[0].mxu0
        %v2784 = vpop.f32.mrb[0].mxu0
        %v2785 = vpop.f32.mrb[0].mxu0
        %2786 = vmatprep.mubr.bf16.mxu0 0
        %2787 = vmatmul.mubr.bf16.gmra.mrb[0].mxu0 %v2703
        %v2788 = vpop.f32.mrb[0].mxu0
        %v2789 = vadd.f32 0.0, %v2788
        %v2790 = vpop.f32.mrb[0].mxu0
        %v2791 = vpop.f32.mrb[0].mxu0
        %v2792 = vadd.f32 0.0, %v2791
        %v2793 = vpop.f32.mrb[0].mxu0
        %2794 = vmatprep.mubr.bf16.mxu0 0
        %2795 = vmatmul.mubr.bf16.gmra.mrb[0].mxu0 %v2706
        %v2796 = vpop.f32.mrb[0].mxu0
        %v2797 = vpop.f32.mrb[0].mxu0
        %v2798 = vpop.f32.mrb[0].mxu0
        %v2799 = vadd.f32 0.0, %v2798
        %v2800 = vpop.f32.mrb[0].mxu0
        %2801 = vmatprep.mubr.bf16.mxu0 0
        %2802 = vmatmul.mubr.bf16.gmra.mrb[0].mxu0 %v2709
        %v2803 = vpop.f32.mrb[0].mxu0
        %v2804 = vadd.f32 0.0, %v2803
        %v2805 = vpop.f32.mrb[0].mxu0
        %v2806 = vpop.f32.mrb[0].mxu0
        %v2807 = vpop.f32.mrb[0].mxu0
        %2808 = vmatprep.mubr.bf16.mxu0 0
        %2809 = vmatmul.mubr.bf16.gmra.mrb[0].mxu0 %v2712
        %v2810 = vpop.f32.mrb[0].mxu0
        %v2811 = vadd.f32 0.0, %v2810
        %v2812 = vpop.f32.mrb[0].mxu0
        %v2813 = vpop.f32.mrb[0].mxu0
        %v2814 = vadd.f32 0.0, %v2813
        %v2815 = vpop.f32.mrb[0].mxu0
        %2816 = vmatprep.mubr.bf16.mxu0 0
        %2817 = vmatmul.mubr.bf16.gmra.mrb[0].mxu0 %v2715
        %v2818 = vpop.f32.mrb[0].mxu0
        %v2819 = vpop.f32.mrb[0].mxu0
        %v2820 = vpop.f32.mrb[0].mxu0
        %v2821 = vadd.f32 0.0, %v2820
        %v2822 = vpop.f32.mrb[0].mxu0
        %2823 = vmatprep.mubr.bf16.mxu0 0
        %2824 = vmatmul.mubr.bf16.gmra.mrb[0].mxu0 %v2718
        %v2825 = vpop.f32.mrb[0].mxu0
        %v2826 = vadd.f32 0.0, %v2825
        %v2827 = vpop.f32.mrb[0].mxu0
        %v2828 = vpop.f32.mrb[0].mxu0
        %v2829 = vpop.f32.mrb[0].mxu0
        %2830 = vmatprep.mubr.bf16.mxu0 0
        %2831 = vmatmul.mubr.bf16.gmra.mrb[0].mxu0 %v2721
        %v2832 = vpop.f32.mrb[0].mxu0
        %v2833 = vadd.f32 0.0, %v2832
        %v2834 = vpop.f32.mrb[0].mxu0
        %v2835 = vpop.f32.mrb[0].mxu0
        %v2836 = vadd.f32 0.0, %v2835
        %v2837 = vpop.f32.mrb[0].mxu0
        %2838 = vmatprep.mubr.bf16.mxu0 0
        %2839 = vmatmul.mubr.bf16.gmra.mrb[0].mxu0 %v2724
        %v2840 = vpop.f32.mrb[0].mxu0
        %v2841 = vpop.f32.mrb[0].mxu0
        %v2842 = vpop.f32.mrb[0].mxu0
        %v2843 = vadd.f32 0.0, %v2842
        %v2844 = vpop.f32.mrb[0].mxu0
        %2845 = vmatprep.mubr.bf16.mxu0 0
        %2846 = vmatmul.mubr.bf16.gmra.mrb[0].mxu0 %v2727
        %v2847 = vpop.f32.mrb[0].mxu0
        %v2848 = vadd.f32 0.0, %v2847
        %v2849 = vpop.f32.mrb[0].mxu0
        %v2850 = vpop.f32.mrb[0].mxu0
        %v2851 = vpop.f32.mrb[0].mxu0
        %2852 = vdwg.mxu0
        %v2853 = vadd.f32 %v2514, %v2767
        %v2854 = vadd.f32 %v2517, %v2770
        %v2855 = vadd.f32 %v2524, %v2777
        %v2856 = vadd.f32 %v2529, %v2782
        %v2857 = vadd.f32 %v2536, %v2789
        %v2858 = vadd.f32 %v2539, %v2792
        %v2859 = vadd.f32 %v2546, %v2799
        %v2860 = vadd.f32 %v2551, %v2804
        %v2861 = vadd.f32 %v2558, %v2811
        %v2862 = vadd.f32 %v2561, %v2814
        %v2863 = vadd.f32 %v2568, %v2821
        %v2864 = vadd.f32 %v2573, %v2826
        %v2865 = vadd.f32 %v2580, %v2833
        %v2866 = vadd.f32 %v2583, %v2836
        %v2867 = vadd.f32 %v2590, %v2843
        %v2868 = vadd.f32 %v2595, %v2848
        %v2869 = vld [vmem:[#allocation3] sm:$0xf]
        %v2870 = vld [vmem:[#allocation3 + $0x4] sm:$0xf]
        %v2871 = vld [vmem:[#allocation3 + $0x8] sm:$0xf]
        %v2872 = vld [vmem:[#allocation3 + $0xc] sm:$0xf]
        %v2873 = vld [vmem:[#allocation3 + $0x10] sm:$0xf]
        %v2874 = vld [vmem:[#allocation3 + $0x14] sm:$0xf]
        %v2875 = vld [vmem:[#allocation3 + $0x18] sm:$0xf]
        %v2876 = vld [vmem:[#allocation3 + $0x1c] sm:$0xf]
        %v2877 = vld [vmem:[#allocation3 + $0x20] sm:$0xf]
        %v2878 = vld [vmem:[#allocation3 + $0x24] sm:$0xf]
        %v2879 = vld [vmem:[#allocation3 + $0x28] sm:$0xf]
        %v2880 = vld [vmem:[#allocation3 + $0x2c] sm:$0xf]
        %v2881 = vld [vmem:[#allocation3 + $0x30] sm:$0xf]
        %v2882 = vld [vmem:[#allocation3 + $0x34] sm:$0xf]
        %v2883 = vld [vmem:[#allocation3 + $0x38] sm:$0xf]
        %v2884 = vld [vmem:[#allocation3 + $0x3c] sm:$0xf]
        %v2885 = vld [vmem:[#allocation3 + $0x40] sm:$0xf]
        %v2886 = vld [vmem:[#allocation3 + $0x44] sm:$0xf]
        %v2887 = vld [vmem:[#allocation3 + $0x48] sm:$0xf]
        %v2888 = vld [vmem:[#allocation3 + $0x4c] sm:$0xf]
        %v2889 = vld [vmem:[#allocation3 + $0x50] sm:$0xf]
        %v2890 = vld [vmem:[#allocation3 + $0x54] sm:$0xf]
        %v2891 = vld [vmem:[#allocation3 + $0x58] sm:$0xf]
        %v2892 = vld [vmem:[#allocation3 + $0x5c] sm:$0xf]
        %v2893 = vld [vmem:[#allocation16] sm:$0xf]
        %v2894 = vld [vmem:[#allocation16 + $0x4] sm:$0x3]
        %v2919 = vunpack.c.l.b16 %v2869
        %v2920 = vunpack.c.l.b16 %v2870
        %v2921 = vunpack.c.l.b16 %v2871
        %v2922 = vunpack.c.l.b16 %v2872
        %v2923 = vunpack.c.l.b16 %v2873
        %v2924 = vunpack.c.l.b16 %v2874
        %v2925 = vunpack.c.l.b16 %v2875
        %v2926 = vunpack.c.l.b16 %v2876
        %v2927 = vunpack.c.l.b16 %v2877
        %v2928 = vunpack.c.l.b16 %v2878
        %v2929 = vunpack.c.l.b16 %v2879
        %v2930 = vunpack.c.l.b16 %v2880
        %v2931 = vunpack.c.l.b16 %v2881
        %v2932 = vunpack.c.l.b16 %v2882
        %v2933 = vunpack.c.l.b16 %v2883
        %v2934 = vunpack.c.l.b16 %v2884
        %v2935 = vunpack.c.l.b16 %v2885
        %v2936 = vunpack.c.l.b16 %v2886
        %v2937 = vunpack.c.l.b16 %v2887
        %v2938 = vunpack.c.l.b16 %v2888
        %v2939 = vunpack.c.l.b16 %v2889
        %v2940 = vunpack.c.l.b16 %v2890
        %v2941 = vunpack.c.l.b16 %v2891
        %v2942 = vunpack.c.l.b16 %v2892
        %v2943 = vpack.c.b16 %v2920, %v2919
        %v2944 = vpack.c.b16 %v2922, %v2921
        %v2945 = vpack.c.b16 %v2924, %v2923
        %v2946 = vpack.c.b16 %v2926, %v2925
        %v2947 = vpack.c.b16 %v2928, %v2927
        %v2948 = vpack.c.b16 %v2930, %v2929
        %v2949 = vpack.c.b16 %v2932, %v2931
        %v2950 = vpack.c.b16 %v2934, %v2933
        %v2951 = vpack.c.b16 %v2936, %v2935
        %v2952 = vpack.c.b16 %v2938, %v2937
        %v2953 = vpack.c.b16 %v2940, %v2939
        %v2954 = vpack.c.b16 %v2942, %v2941
        %v2957 = vunpack.c.l.b16 %v2893
        %v2958 = vunpack.c.l.b16 %v2894
        %v2959 = vpack.c.b16 %v2958, %v2957
        %v2961 = vsel %vm2213, %v2943, 0
        %v2964 = vsel %vm2213, %v2944, 0
        %v2967 = vsel %vm2213, %v2945, 0
        %v2970 = vsel %vm2213, %v2946, 0
        %v2973 = vsel %vm2213, %v2947, 0
        %v2976 = vsel %vm2213, %v2948, 0
        %v2979 = vsel %vm2213, %v2949, 0
        %v2982 = vsel %vm2213, %v2950, 0
        %v2985 = vsel %vm2213, %v2951, 0
        %v2988 = vsel %vm2213, %v2952, 0
        %v2991 = vsel %vm2213, %v2953, 0
        %v2994 = vsel %vm2213, %v2954, 0
        %v2997 = vsel %vm2250, %v2959, 0
        %2999 = vmatprep.subr.bf16.mxu0 0
        %3000 = vmatpush1.bf16.msra.mxu0 %v2997
        %3001 = vmatprep.subr.bf16.mxu0 0
        %3002 = vmatpush1.bf16.msra.mxu0 0
        %3003 = vmatprep.subr.bf16.mxu0 0
        %3004 = vmatpush1.bf16.msra.mxu0 0
        %3005 = vmatprep.subr.bf16.mxu0 0
        %3006 = vmatpush1.bf16.msra.mxu0 0
        %3007 = vmatprep.subr.bf16.mxu0 0
        %3008 = vmatpush1.bf16.msra.mxu0 0
        %3009 = vmatprep.subr.bf16.mxu0 0
        %3010 = vmatpush1.bf16.msra.mxu0 0
        %3011 = vmatprep.subr.bf16.mxu0 0
        %3012 = vmatpush1.bf16.msra.mxu0 0
        %3013 = vmatprep.subr.bf16.mxu0 0
        %3014 = vmatpush1.bf16.msra.mxu0 0
        %3015 = vmatprep.subr.bf16.mxu0 0
        %3016 = vmatpush1.bf16.msra.mxu0 0
        %3017 = vmatprep.subr.bf16.mxu0 0
        %3018 = vmatpush1.bf16.msra.mxu0 0
        %3019 = vmatprep.subr.bf16.mxu0 0
        %3020 = vmatpush1.bf16.msra.mxu0 0
        %3021 = vmatprep.subr.bf16.mxu0 0
        %3022 = vmatpush1.bf16.msra.mxu0 0
        %3023 = vmatprep.subr.bf16.mxu0 0
        %3024 = vmatpush1.bf16.msra.mxu0 0
        %3025 = vmatprep.subr.bf16.mxu0 0
        %3026 = vmatpush1.bf16.msra.mxu0 0
        %3027 = vmatprep.subr.bf16.mxu0 0
        %3028 = vmatpush1.bf16.msra.mxu0 0
        %3029 = vmatprep.subr.bf16.mxu0 0
        %3030 = vmatpush1.bf16.msra.mxu0 0
        %3031 = vmatprep.mubr.bf16.mxu0 0
        %3032 = vmatmul.mubr.bf16.gmra.mrb[0].mxu0 %v2961
        %v3033 = vpop.f32.mrb[0].mxu0
        %v3034 = vadd.f32 0.0, %v3033
        %v3035 = vpop.f32.mrb[0].mxu0
        %v3036 = vpop.f32.mrb[0].mxu0
        %v3037 = vadd.f32 0.0, %v3036
        %v3038 = vpop.f32.mrb[0].mxu0
        %3039 = vmatprep.mubr.bf16.mxu0 0
        %3040 = vmatmul.mubr.bf16.gmra.mrb[0].mxu0 %v2964
        %v3041 = vpop.f32.mrb[0].mxu0
        %v3042 = vpop.f32.mrb[0].mxu0
        %v3043 = vpop.f32.mrb[0].mxu0
        %v3044 = vadd.f32 0.0, %v3043
        %v3045 = vpop.f32.mrb[0].mxu0
        %3046 = vmatprep.mubr.bf16.mxu0 0
        %3047 = vmatmul.mubr.bf16.gmra.mrb[0].mxu0 %v2967
        %v3048 = vpop.f32.mrb[0].mxu0
        %v3049 = vadd.f32 0.0, %v3048
        %v3050 = vpop.f32.mrb[0].mxu0
        %v3051 = vpop.f32.mrb[0].mxu0
        %v3052 = vpop.f32.mrb[0].mxu0
        %3053 = vmatprep.mubr.bf16.mxu0 0
        %3054 = vmatmul.mubr.bf16.gmra.mrb[0].mxu0 %v2970
        %v3055 = vpop.f32.mrb[0].mxu0
        %v3056 = vadd.f32 0.0, %v3055
        %v3057 = vpop.f32.mrb[0].mxu0
        %v3058 = vpop.f32.mrb[0].mxu0
        %v3059 = vadd.f32 0.0, %v3058
        %v3060 = vpop.f32.mrb[0].mxu0
        %3061 = vmatprep.mubr.bf16.mxu0 0
        %3062 = vmatmul.mubr.bf16.gmra.mrb[0].mxu0 %v2973
        %v3063 = vpop.f32.mrb[0].mxu0
        %v3064 = vpop.f32.mrb[0].mxu0
        %v3065 = vpop.f32.mrb[0].mxu0
        %v3066 = vadd.f32 0.0, %v3065
        %v3067 = vpop.f32.mrb[0].mxu0
        %3068 = vmatprep.mubr.bf16.mxu0 0
        %3069 = vmatmul.mubr.bf16.gmra.mrb[0].mxu0 %v2976
        %v3070 = vpop.f32.mrb[0].mxu0
        %v3071 = vadd.f32 0.0, %v3070
        %v3072 = vpop.f32.mrb[0].mxu0
        %v3073 = vpop.f32.mrb[0].mxu0
        %v3074 = vpop.f32.mrb[0].mxu0
        %3075 = vmatprep.mubr.bf16.mxu0 0
        %3076 = vmatmul.mubr.bf16.gmra.mrb[0].mxu0 %v2979
        %v3077 = vpop.f32.mrb[0].mxu0
        %v3078 = vadd.f32 0.0, %v3077
        %v3079 = vpop.f32.mrb[0].mxu0
        %v3080 = vpop.f32.mrb[0].mxu0
        %v3081 = vadd.f32 0.0, %v3080
        %v3082 = vpop.f32.mrb[0].mxu0
        %3083 = vmatprep.mubr.bf16.mxu0 0
        %3084 = vmatmul.mubr.bf16.gmra.mrb[0].mxu0 %v2982
        %v3085 = vpop.f32.mrb[0].mxu0
        %v3086 = vpop.f32.mrb[0].mxu0
        %v3087 = vpop.f32.mrb[0].mxu0
        %v3088 = vadd.f32 0.0, %v3087
        %v3089 = vpop.f32.mrb[0].mxu0
        %3090 = vmatprep.mubr.bf16.mxu0 0
        %3091 = vmatmul.mubr.bf16.gmra.mrb[0].mxu0 %v2985
        %v3092 = vpop.f32.mrb[0].mxu0
        %v3093 = vadd.f32 0.0, %v3092
        %v3094 = vpop.f32.mrb[0].mxu0
        %v3095 = vpop.f32.mrb[0].mxu0
        %v3096 = vpop.f32.mrb[0].mxu0
        %3097 = vmatprep.mubr.bf16.mxu0 0
        %3098 = vmatmul.mubr.bf16.gmra.mrb[0].mxu0 %v2988
        %v3099 = vpop.f32.mrb[0].mxu0
        %v3100 = vadd.f32 0.0, %v3099
        %v3101 = vpop.f32.mrb[0].mxu0
        %v3102 = vpop.f32.mrb[0].mxu0
        %v3103 = vadd.f32 0.0, %v3102
        %v3104 = vpop.f32.mrb[0].mxu0
        %3105 = vmatprep.mubr.bf16.mxu0 0
        %3106 = vmatmul.mubr.bf16.gmra.mrb[0].mxu0 %v2991
        %v3107 = vpop.f32.mrb[0].mxu0
        %v3108 = vpop.f32.mrb[0].mxu0
        %v3109 = vpop.f32.mrb[0].mxu0
        %v3110 = vadd.f32 0.0, %v3109
        %v3111 = vpop.f32.mrb[0].mxu0
        %3112 = vmatprep.mubr.bf16.mxu0 0
        %3113 = vmatmul.mubr.bf16.gmra.mrb[0].mxu0 %v2994
        %v3114 = vpop.f32.mrb[0].mxu0
        %v3115 = vadd.f32 0.0, %v3114
        %v3116 = vpop.f32.mrb[0].mxu0
        %v3117 = vpop.f32.mrb[0].mxu0
        %v3118 = vpop.f32.mrb[0].mxu0
        %3119 = vdwg.mxu0
        %v3120 = vadd.f32 %v2853, %v3034
        %v3121 = vadd.f32 %v2854, %v3037
        %v3122 = vadd.f32 %v2855, %v3044
        %v3123 = vadd.f32 %v2856, %v3049
        %v3124 = vadd.f32 %v2857, %v3056
        %v3125 = vadd.f32 %v2858, %v3059
        %v3126 = vadd.f32 %v2859, %v3066
        %v3127 = vadd.f32 %v2860, %v3071
        %v3128 = vadd.f32 %v2861, %v3078
        %v3129 = vadd.f32 %v2862, %v3081
        %v3130 = vadd.f32 %v2863, %v3088
        %v3131 = vadd.f32 %v2864, %v3093
        %v3132 = vadd.f32 %v2865, %v3100
        %v3133 = vadd.f32 %v2866, %v3103
        %v3134 = vadd.f32 %v2867, %v3110
        %v3135 = vadd.f32 %v2868, %v3115
        %s3136 = scalar_lea.vmem [#allocation3], 12
        %v3137 = vld [vmem:[%s3136] sm:$0xf]
        %v3138 = vld [vmem:[%s3136 + $0x4] sm:$0xf]
        %v3139 = vld [vmem:[%s3136 + $0x8] sm:$0xf]
        %v3140 = vld [vmem:[%s3136 + $0xc] sm:$0xf]
        %v3141 = vld [vmem:[%s3136 + $0x10] sm:$0xf]
        %v3142 = vld [vmem:[%s3136 + $0x14] sm:$0xf]
        %v3143 = vld [vmem:[%s3136 + $0x18] sm:$0xf]
        %v3144 = vld [vmem:[%s3136 + $0x1c] sm:$0xf]
        %v3145 = vld [vmem:[%s3136 + $0x20] sm:$0xf]
        %v3146 = vld [vmem:[%s3136 + $0x24] sm:$0xf]
        %v3147 = vld [vmem:[%s3136 + $0x28] sm:$0xf]
        %v3148 = vld [vmem:[%s3136 + $0x2c] sm:$0xf]
        %v3149 = vld [vmem:[%s3136 + $0x30] sm:$0xf]
        %v3150 = vld [vmem:[%s3136 + $0x34] sm:$0xf]
        %v3151 = vld [vmem:[%s3136 + $0x38] sm:$0xf]
        %v3152 = vld [vmem:[%s3136 + $0x3c] sm:$0xf]
        %v3153 = vld [vmem:[%s3136 + $0x40] sm:$0xf]
        %v3154 = vld [vmem:[%s3136 + $0x44] sm:$0xf]
        %v3155 = vld [vmem:[%s3136 + $0x48] sm:$0xf]
        %v3156 = vld [vmem:[%s3136 + $0x4c] sm:$0xf]
        %v3157 = vld [vmem:[%s3136 + $0x50] sm:$0xf]
        %v3158 = vld [vmem:[%s3136 + $0x54] sm:$0xf]
        %v3159 = vld [vmem:[%s3136 + $0x58] sm:$0xf]
        %v3160 = vld [vmem:[%s3136 + $0x5c] sm:$0xf]
        %s3161 = scalar_lea.vmem [#allocation16], 8
        %v3162 = vld [vmem:[%s3161] sm:$0xf]
        %v3163 = vld [vmem:[%s3161 + $0x4] sm:$0x3]
        %v3188 = vunpack.c.l.b16 %v3137
        %v3189 = vunpack.c.l.b16 %v3138
        %v3190 = vunpack.c.l.b16 %v3139
        %v3191 = vunpack.c.l.b16 %v3140
        %v3192 = vunpack.c.l.b16 %v3141
        %v3193 = vunpack.c.l.b16 %v3142
        %v3194 = vunpack.c.l.b16 %v3143
        %v3195 = vunpack.c.l.b16 %v3144
        %v3196 = vunpack.c.l.b16 %v3145
        %v3197 = vunpack.c.l.b16 %v3146
        %v3198 = vunpack.c.l.b16 %v3147
        %v3199 = vunpack.c.l.b16 %v3148
        %v3200 = vunpack.c.l.b16 %v3149
        %v3201 = vunpack.c.l.b16 %v3150
        %v3202 = vunpack.c.l.b16 %v3151
        %v3203 = vunpack.c.l.b16 %v3152
        %v3204 = vunpack.c.l.b16 %v3153
        %v3205 = vunpack.c.l.b16 %v3154
        %v3206 = vunpack.c.l.b16 %v3155
        %v3207 = vunpack.c.l.b16 %v3156
        %v3208 = vunpack.c.l.b16 %v3157
        %v3209 = vunpack.c.l.b16 %v3158
        %v3210 = vunpack.c.l.b16 %v3159
        %v3211 = vunpack.c.l.b16 %v3160
        %v3212 = vpack.c.b16 %v3189, %v3188
        %v3213 = vpack.c.b16 %v3191, %v3190
        %v3214 = vpack.c.b16 %v3193, %v3192
        %v3215 = vpack.c.b16 %v3195, %v3194
        %v3216 = vpack.c.b16 %v3197, %v3196
        %v3217 = vpack.c.b16 %v3199, %v3198
        %v3218 = vpack.c.b16 %v3201, %v3200
        %v3219 = vpack.c.b16 %v3203, %v3202
        %v3220 = vpack.c.b16 %v3205, %v3204
        %v3221 = vpack.c.b16 %v3207, %v3206
        %v3222 = vpack.c.b16 %v3209, %v3208
        %v3223 = vpack.c.b16 %v3211, %v3210
        %v3226 = vunpack.c.l.b16 %v3162
        %v3227 = vunpack.c.l.b16 %v3163
        %v3228 = vpack.c.b16 %v3227, %v3226
        %v3230 = vsel %vm2213, %v3212, 0
        %v3233 = vsel %vm2213, %v3213, 0
        %v3236 = vsel %vm2213, %v3214, 0
        %v3239 = vsel %vm2213, %v3215, 0
        %v3242 = vsel %vm2213, %v3216, 0
        %v3245 = vsel %vm2213, %v3217, 0
        %v3248 = vsel %vm2213, %v3218, 0
        %v3251 = vsel %vm2213, %v3219, 0
        %v3254 = vsel %vm2213, %v3220, 0
        %v3257 = vsel %vm2213, %v3221, 0
        %v3260 = vsel %vm2213, %v3222, 0
        %v3263 = vsel %vm2213, %v3223, 0
        %v3266 = vsel %vm2250, %v3228, 0
        %3268 = vmatprep.subr.bf16.mxu0 0
        %3269 = vmatpush1.bf16.msra.mxu0 %v3266
        %3270 = vmatprep.subr.bf16.mxu0 0
        %3271 = vmatpush1.bf16.msra.mxu0 0
        %3272 = vmatprep.subr.bf16.mxu0 0
        %3273 = vmatpush1.bf16.msra.mxu0 0
        %3274 = vmatprep.subr.bf16.mxu0 0
        %3275 = vmatpush1.bf16.msra.mxu0 0
        %3276 = vmatprep.subr.bf16.mxu0 0
        %3277 = vmatpush1.bf16.msra.mxu0 0
        %3278 = vmatprep.subr.bf16.mxu0 0
        %3279 = vmatpush1.bf16.msra.mxu0 0
        %3280 = vmatprep.subr.bf16.mxu0 0
        %3281 = vmatpush1.bf16.msra.mxu0 0
        %3282 = vmatprep.subr.bf16.mxu0 0
        %3283 = vmatpush1.bf16.msra.mxu0 0
        %3284 = vmatprep.subr.bf16.mxu0 0
        %3285 = vmatpush1.bf16.msra.mxu0 0
        %3286 = vmatprep.subr.bf16.mxu0 0
        %3287 = vmatpush1.bf16.msra.mxu0 0
        %3288 = vmatprep.subr.bf16.mxu0 0
        %3289 = vmatpush1.bf16.msra.mxu0 0
        %3290 = vmatprep.subr.bf16.mxu0 0
        %3291 = vmatpush1.bf16.msra.mxu0 0
        %3292 = vmatprep.subr.bf16.mxu0 0
        %3293 = vmatpush1.bf16.msra.mxu0 0
        %3294 = vmatprep.subr.bf16.mxu0 0
        %3295 = vmatpush1.bf16.msra.mxu0 0
        %3296 = vmatprep.subr.bf16.mxu0 0
        %3297 = vmatpush1.bf16.msra.mxu0 0
        %3298 = vmatprep.subr.bf16.mxu0 0
        %3299 = vmatpush1.bf16.msra.mxu0 0
        %3300 = vmatprep.mubr.bf16.mxu0 0
        %3301 = vmatmul.mubr.bf16.gmra.mrb[0].mxu0 %v3230
        %v3302 = vpop.f32.mrb[0].mxu0
        %v3303 = vadd.f32 0.0, %v3302
        %v3304 = vpop.f32.mrb[0].mxu0
        %v3305 = vpop.f32.mrb[0].mxu0
        %v3306 = vadd.f32 0.0, %v3305
        %v3307 = vpop.f32.mrb[0].mxu0
        %3308 = vmatprep.mubr.bf16.mxu0 0
        %3309 = vmatmul.mubr.bf16.gmra.mrb[0].mxu0 %v3233
        %v3310 = vpop.f32.mrb[0].mxu0
        %v3311 = vpop.f32.mrb[0].mxu0
        %v3312 = vpop.f32.mrb[0].mxu0
        %v3313 = vadd.f32 0.0, %v3312
        %v3314 = vpop.f32.mrb[0].mxu0
        %3315 = vmatprep.mubr.bf16.mxu0 0
        %3316 = vmatmul.mubr.bf16.gmra.mrb[0].mxu0 %v3236
        %v3317 = vpop.f32.mrb[0].mxu0
        %v3318 = vadd.f32 0.0, %v3317
        %v3319 = vpop.f32.mrb[0].mxu0
        %v3320 = vpop.f32.mrb[0].mxu0
        %v3321 = vpop.f32.mrb[0].mxu0
        %3322 = vmatprep.mubr.bf16.mxu0 0
        %3323 = vmatmul.mubr.bf16.gmra.mrb[0].mxu0 %v3239
        %v3324 = vpop.f32.mrb[0].mxu0
        %v3325 = vadd.f32 0.0, %v3324
        %v3326 = vpop.f32.mrb[0].mxu0
        %v3327 = vpop.f32.mrb[0].mxu0
        %v3328 = vadd.f32 0.0, %v3327
        %v3329 = vpop.f32.mrb[0].mxu0
        %3330 = vmatprep.mubr.bf16.mxu0 0
        %3331 = vmatmul.mubr.bf16.gmra.mrb[0].mxu0 %v3242
        %v3332 = vpop.f32.mrb[0].mxu0
        %v3333 = vpop.f32.mrb[0].mxu0
        %v3334 = vpop.f32.mrb[0].mxu0
        %v3335 = vadd.f32 0.0, %v3334
        %v3336 = vpop.f32.mrb[0].mxu0
        %3337 = vmatprep.mubr.bf16.mxu0 0
        %3338 = vmatmul.mubr.bf16.gmra.mrb[0].mxu0 %v3245
        %v3339 = vpop.f32.mrb[0].mxu0
        %v3340 = vadd.f32 0.0, %v3339
        %v3341 = vpop.f32.mrb[0].mxu0
        %v3342 = vpop.f32.mrb[0].mxu0
        %v3343 = vpop.f32.mrb[0].mxu0
        %3344 = vmatprep.mubr.bf16.mxu0 0
        %3345 = vmatmul.mubr.bf16.gmra.mrb[0].mxu0 %v3248
        %v3346 = vpop.f32.mrb[0].mxu0
        %v3347 = vadd.f32 0.0, %v3346
        %v3348 = vpop.f32.mrb[0].mxu0
        %v3349 = vpop.f32.mrb[0].mxu0
        %v3350 = vadd.f32 0.0, %v3349
        %v3351 = vpop.f32.mrb[0].mxu0
        %3352 = vmatprep.mubr.bf16.mxu0 0
        %3353 = vmatmul.mubr.bf16.gmra.mrb[0].mxu0 %v3251
        %v3354 = vpop.f32.mrb[0].mxu0
        %v3355 = vpop.f32.mrb[0].mxu0
        %v3356 = vpop.f32.mrb[0].mxu0
        %v3357 = vadd.f32 0.0, %v3356
        %v3358 = vpop.f32.mrb[0].mxu0
        %3359 = vmatprep.mubr.bf16.mxu0 0
        %3360 = vmatmul.mubr.bf16.gmra.mrb[0].mxu0 %v3254
        %v3361 = vpop.f32.mrb[0].mxu0
        %v3362 = vadd.f32 0.0, %v3361
        %v3363 = vpop.f32.mrb[0].mxu0
        %v3364 = vpop.f32.mrb[0].mxu0
        %v3365 = vpop.f32.mrb[0].mxu0
        %3366 = vmatprep.mubr.bf16.mxu0 0
        %3367 = vmatmul.mubr.bf16.gmra.mrb[0].mxu0 %v3257
        %v3368 = vpop.f32.mrb[0].mxu0
        %v3369 = vadd.f32 0.0, %v3368
        %v3370 = vpop.f32.mrb[0].mxu0
        %v3371 = vpop.f32.mrb[0].mxu0
        %v3372 = vadd.f32 0.0, %v3371
        %v3373 = vpop.f32.mrb[0].mxu0
        %3374 = vmatprep.mubr.bf16.mxu0 0
        %3375 = vmatmul.mubr.bf16.gmra.mrb[0].mxu0 %v3260
        %v3376 = vpop.f32.mrb[0].mxu0
        %v3377 = vpop.f32.mrb[0].mxu0
        %v3378 = vpop.f32.mrb[0].mxu0
        %v3379 = vadd.f32 0.0, %v3378
        %v3380 = vpop.f32.mrb[0].mxu0
        %3381 = vmatprep.mubr.bf16.mxu0 0
        %3382 = vmatmul.mubr.bf16.gmra.mrb[0].mxu0 %v3263
        %v3383 = vpop.f32.mrb[0].mxu0
        %v3384 = vadd.f32 0.0, %v3383
        %v3385 = vpop.f32.mrb[0].mxu0
        %v3386 = vpop.f32.mrb[0].mxu0
        %v3387 = vpop.f32.mrb[0].mxu0
        %3388 = vdwg.mxu0
        %v3389 = vadd.f32 %v3120, %v3303
        %v3390 = vadd.f32 %v3121, %v3306
        %v3391 = vadd.f32 %v3122, %v3313
        %v3392 = vadd.f32 %v3123, %v3318
        %v3393 = vadd.f32 %v3124, %v3325
        %v3394 = vadd.f32 %v3125, %v3328
        %v3395 = vadd.f32 %v3126, %v3335
        %v3396 = vadd.f32 %v3127, %v3340
        %v3397 = vadd.f32 %v3128, %v3347
        %v3398 = vadd.f32 %v3129, %v3350
        %v3399 = vadd.f32 %v3130, %v3357
        %v3400 = vadd.f32 %v3131, %v3362
        %v3401 = vadd.f32 %v3132, %v3369
        %v3402 = vadd.f32 %v3133, %v3372
        %v3403 = vadd.f32 %v3134, %v3379
        %v3404 = vadd.f32 %v3135, %v3384
        %s3405 = scalar_lea.vmem [#allocation3], 24
        %v3406 = vld [vmem:[%s3405] sm:$0xf]
        %v3407 = vld [vmem:[%s3405 + $0x4] sm:$0xf]
        %v3408 = vld [vmem:[%s3405 + $0x8] sm:$0xf]
        %v3409 = vld [vmem:[%s3405 + $0xc] sm:$0xf]
        %v3410 = vld [vmem:[%s3405 + $0x10] sm:$0xf]
        %v3411 = vld [vmem:[%s3405 + $0x14] sm:$0xf]
        %v3412 = vld [vmem:[%s3405 + $0x18] sm:$0xf]
        %v3413 = vld [vmem:[%s3405 + $0x1c] sm:$0xf]
        %v3414 = vld [vmem:[%s3405 + $0x20] sm:$0xf]
        %v3415 = vld [vmem:[%s3405 + $0x24] sm:$0xf]
        %v3416 = vld [vmem:[%s3405 + $0x28] sm:$0xf]
        %v3417 = vld [vmem:[%s3405 + $0x2c] sm:$0xf]
        %v3418 = vld [vmem:[%s3405 + $0x30] sm:$0xf]
        %v3419 = vld [vmem:[%s3405 + $0x34] sm:$0xf]
        %v3420 = vld [vmem:[%s3405 + $0x38] sm:$0xf]
        %v3421 = vld [vmem:[%s3405 + $0x3c] sm:$0xf]
        %v3422 = vld [vmem:[%s3405 + $0x40] sm:$0xf]
        %v3423 = vld [vmem:[%s3405 + $0x44] sm:$0xf]
        %v3424 = vld [vmem:[%s3405 + $0x48] sm:$0xf]
        %v3425 = vld [vmem:[%s3405 + $0x4c] sm:$0xf]
        %v3426 = vld [vmem:[%s3405 + $0x50] sm:$0xf]
        %v3427 = vld [vmem:[%s3405 + $0x54] sm:$0xf]
        %v3428 = vld [vmem:[%s3405 + $0x58] sm:$0xf]
        %v3429 = vld [vmem:[%s3405 + $0x5c] sm:$0xf]
        %s3430 = scalar_lea.vmem [#allocation16], 16
        %v3431 = vld [vmem:[%s3430] sm:$0xf]
        %v3432 = vld [vmem:[%s3430 + $0x4] sm:$0x3]
        %v3457 = vunpack.c.l.b16 %v3406
        %v3458 = vunpack.c.l.b16 %v3407
        %v3459 = vunpack.c.l.b16 %v3408
        %v3460 = vunpack.c.l.b16 %v3409
        %v3461 = vunpack.c.l.b16 %v3410
        %v3462 = vunpack.c.l.b16 %v3411
        %v3463 = vunpack.c.l.b16 %v3412
        %v3464 = vunpack.c.l.b16 %v3413
        %v3465 = vunpack.c.l.b16 %v3414
        %v3466 = vunpack.c.l.b16 %v3415
        %v3467 = vunpack.c.l.b16 %v3416
        %v3468 = vunpack.c.l.b16 %v3417
        %v3469 = vunpack.c.l.b16 %v3418
        %v3470 = vunpack.c.l.b16 %v3419
        %v3471 = vunpack.c.l.b16 %v3420
        %v3472 = vunpack.c.l.b16 %v3421
        %v3473 = vunpack.c.l.b16 %v3422
        %v3474 = vunpack.c.l.b16 %v3423
        %v3475 = vunpack.c.l.b16 %v3424
        %v3476 = vunpack.c.l.b16 %v3425
        %v3477 = vunpack.c.l.b16 %v3426
        %v3478 = vunpack.c.l.b16 %v3427
        %v3479 = vunpack.c.l.b16 %v3428
        %v3480 = vunpack.c.l.b16 %v3429
        %v3481 = vpack.c.b16 %v3458, %v3457
        %v3482 = vpack.c.b16 %v3460, %v3459
        %v3483 = vpack.c.b16 %v3462, %v3461
        %v3484 = vpack.c.b16 %v3464, %v3463
        %v3485 = vpack.c.b16 %v3466, %v3465
        %v3486 = vpack.c.b16 %v3468, %v3467
        %v3487 = vpack.c.b16 %v3470, %v3469
        %v3488 = vpack.c.b16 %v3472, %v3471
        %v3489 = vpack.c.b16 %v3474, %v3473
        %v3490 = vpack.c.b16 %v3476, %v3475
        %v3491 = vpack.c.b16 %v3478, %v3477
        %v3492 = vpack.c.b16 %v3480, %v3479
        %v3495 = vunpack.c.l.b16 %v3431
        %v3496 = vunpack.c.l.b16 %v3432
        %v3497 = vpack.c.b16 %v3496, %v3495
        %v3499 = vsel %vm2213, %v3481, 0
        %v3502 = vsel %vm2213, %v3482, 0
        %v3505 = vsel %vm2213, %v3483, 0
        %v3508 = vsel %vm2213, %v3484, 0
        %v3511 = vsel %vm2213, %v3485, 0
        %v3514 = vsel %vm2213, %v3486, 0
        %v3517 = vsel %vm2213, %v3487, 0
        %v3520 = vsel %vm2213, %v3488, 0
        %v3523 = vsel %vm2213, %v3489, 0
        %v3526 = vsel %vm2213, %v3490, 0
        %v3529 = vsel %vm2213, %v3491, 0
        %v3532 = vsel %vm2213, %v3492, 0
        %v3535 = vsel %vm2250, %v3497, 0
        %3537 = vmatprep.subr.bf16.mxu0 0
        %3538 = vmatpush1.bf16.msra.mxu0 %v3535
        %3539 = vmatprep.subr.bf16.mxu0 0
        %3540 = vmatpush1.bf16.msra.mxu0 0
        %3541 = vmatprep.subr.bf16.mxu0 0
        %3542 = vmatpush1.bf16.msra.mxu0 0
        %3543 = vmatprep.subr.bf16.mxu0 0
        %3544 = vmatpush1.bf16.msra.mxu0 0
        %3545 = vmatprep.subr.bf16.mxu0 0
        %3546 = vmatpush1.bf16.msra.mxu0 0
        %3547 = vmatprep.subr.bf16.mxu0 0
        %3548 = vmatpush1.bf16.msra.mxu0 0
        %3549 = vmatprep.subr.bf16.mxu0 0
        %3550 = vmatpush1.bf16.msra.mxu0 0
        %3551 = vmatprep.subr.bf16.mxu0 0
        %3552 = vmatpush1.bf16.msra.mxu0 0
        %3553 = vmatprep.subr.bf16.mxu0 0
        %3554 = vmatpush1.bf16.msra.mxu0 0
        %3555 = vmatprep.subr.bf16.mxu0 0
        %3556 = vmatpush1.bf16.msra.mxu0 0
        %3557 = vmatprep.subr.bf16.mxu0 0
        %3558 = vmatpush1.bf16.msra.mxu0 0
        %3559 = vmatprep.subr.bf16.mxu0 0
        %3560 = vmatpush1.bf16.msra.mxu0 0
        %3561 = vmatprep.subr.bf16.mxu0 0
        %3562 = vmatpush1.bf16.msra.mxu0 0
        %3563 = vmatprep.subr.bf16.mxu0 0
        %3564 = vmatpush1.bf16.msra.mxu0 0
        %3565 = vmatprep.subr.bf16.mxu0 0
        %3566 = vmatpush1.bf16.msra.mxu0 0
        %3567 = vmatprep.subr.bf16.mxu0 0
        %3568 = vmatpush1.bf16.msra.mxu0 0
        %3569 = vmatprep.mubr.bf16.mxu0 0
        %3570 = vmatmul.mubr.bf16.gmra.mrb[0].mxu0 %v3499
        %v3571 = vpop.f32.mrb[0].mxu0
        %v3572 = vadd.f32 0.0, %v3571
        %v3573 = vpop.f32.mrb[0].mxu0
        %v3574 = vpop.f32.mrb[0].mxu0
        %v3575 = vadd.f32 0.0, %v3574
        %v3576 = vpop.f32.mrb[0].mxu0
        %3577 = vmatprep.mubr.bf16.mxu0 0
        %3578 = vmatmul.mubr.bf16.gmra.mrb[0].mxu0 %v3502
        %v3579 = vpop.f32.mrb[0].mxu0
        %v3580 = vpop.f32.mrb[0].mxu0
        %v3581 = vpop.f32.mrb[0].mxu0
        %v3582 = vadd.f32 0.0, %v3581
        %v3583 = vpop.f32.mrb[0].mxu0
        %3584 = vmatprep.mubr.bf16.mxu0 0
        %3585 = vmatmul.mubr.bf16.gmra.mrb[0].mxu0 %v3505
        %v3586 = vpop.f32.mrb[0].mxu0
        %v3587 = vadd.f32 0.0, %v3586
        %v3588 = vpop.f32.mrb[0].mxu0
        %v3589 = vpop.f32.mrb[0].mxu0
        %v3590 = vpop.f32.mrb[0].mxu0
        %3591 = vmatprep.mubr.bf16.mxu0 0
        %3592 = vmatmul.mubr.bf16.gmra.mrb[0].mxu0 %v3508
        %v3593 = vpop.f32.mrb[0].mxu0
        %v3594 = vadd.f32 0.0, %v3593
        %v3595 = vpop.f32.mrb[0].mxu0
        %v3596 = vpop.f32.mrb[0].mxu0
        %v3597 = vadd.f32 0.0, %v3596
        %v3598 = vpop.f32.mrb[0].mxu0
        %3599 = vmatprep.mubr.bf16.mxu0 0
        %3600 = vmatmul.mubr.bf16.gmra.mrb[0].mxu0 %v3511
        %v3601 = vpop.f32.mrb[0].mxu0
        %v3602 = vpop.f32.mrb[0].mxu0
        %v3603 = vpop.f32.mrb[0].mxu0
        %v3604 = vadd.f32 0.0, %v3603
        %v3605 = vpop.f32.mrb[0].mxu0
        %3606 = vmatprep.mubr.bf16.mxu0 0
        %3607 = vmatmul.mubr.bf16.gmra.mrb[0].mxu0 %v3514
        %v3608 = vpop.f32.mrb[0].mxu0
        %v3609 = vadd.f32 0.0, %v3608
        %v3610 = vpop.f32.mrb[0].mxu0
        %v3611 = vpop.f32.mrb[0].mxu0
        %v3612 = vpop.f32.mrb[0].mxu0
        %3613 = vmatprep.mubr.bf16.mxu0 0
        %3614 = vmatmul.mubr.bf16.gmra.mrb[0].mxu0 %v3517
        %v3615 = vpop.f32.mrb[0].mxu0
        %v3616 = vadd.f32 0.0, %v3615
        %v3617 = vpop.f32.mrb[0].mxu0
        %v3618 = vpop.f32.mrb[0].mxu0
        %v3619 = vadd.f32 0.0, %v3618
        %v3620 = vpop.f32.mrb[0].mxu0
        %3621 = vmatprep.mubr.bf16.mxu0 0
        %3622 = vmatmul.mubr.bf16.gmra.mrb[0].mxu0 %v3520
        %v3623 = vpop.f32.mrb[0].mxu0
        %v3624 = vpop.f32.mrb[0].mxu0
        %v3625 = vpop.f32.mrb[0].mxu0
        %v3626 = vadd.f32 0.0, %v3625
        %v3627 = vpop.f32.mrb[0].mxu0
        %3628 = vmatprep.mubr.bf16.mxu0 0
        %3629 = vmatmul.mubr.bf16.gmra.mrb[0].mxu0 %v3523
        %v3630 = vpop.f32.mrb[0].mxu0
        %v3631 = vadd.f32 0.0, %v3630
        %v3632 = vpop.f32.mrb[0].mxu0
        %v3633 = vpop.f32.mrb[0].mxu0
        %v3634 = vpop.f32.mrb[0].mxu0
        %3635 = vmatprep.mubr.bf16.mxu0 0
        %3636 = vmatmul.mubr.bf16.gmra.mrb[0].mxu0 %v3526
        %v3637 = vpop.f32.mrb[0].mxu0
        %v3638 = vadd.f32 0.0, %v3637
        %v3639 = vpop.f32.mrb[0].mxu0
        %v3640 = vpop.f32.mrb[0].mxu0
        %v3641 = vadd.f32 0.0, %v3640
        %v3642 = vpop.f32.mrb[0].mxu0
        %3643 = vmatprep.mubr.bf16.mxu0 0
        %3644 = vmatmul.mubr.bf16.gmra.mrb[0].mxu0 %v3529
        %v3645 = vpop.f32.mrb[0].mxu0
        %v3646 = vpop.f32.mrb[0].mxu0
        %v3647 = vpop.f32.mrb[0].mxu0
        %v3648 = vadd.f32 0.0, %v3647
        %v3649 = vpop.f32.mrb[0].mxu0
        %3650 = vmatprep.mubr.bf16.mxu0 0
        %3651 = vmatmul.mubr.bf16.gmra.mrb[0].mxu0 %v3532
        %v3652 = vpop.f32.mrb[0].mxu0
        %v3653 = vadd.f32 0.0, %v3652
        %v3654 = vpop.f32.mrb[0].mxu0
        %v3655 = vpop.f32.mrb[0].mxu0
        %v3656 = vpop.f32.mrb[0].mxu0
        %3657 = vdwg.mxu0
        %v3658 = vadd.f32 %v3389, %v3572
        %v3659 = vadd.f32 %v3390, %v3575
        %v3660 = vadd.f32 %v3391, %v3582
        %v3661 = vadd.f32 %v3392, %v3587
        %v3662 = vadd.f32 %v3393, %v3594
        %v3663 = vadd.f32 %v3394, %v3597
        %v3664 = vadd.f32 %v3395, %v3604
        %v3665 = vadd.f32 %v3396, %v3609
        %v3666 = vadd.f32 %v3397, %v3616
        %v3667 = vadd.f32 %v3398, %v3619
        %v3668 = vadd.f32 %v3399, %v3626
        %v3669 = vadd.f32 %v3400, %v3631
        %v3670 = vadd.f32 %v3401, %v3638
        %v3671 = vadd.f32 %v3402, %v3641
        %v3672 = vadd.f32 %v3403, %v3648
        %v3673 = vadd.f32 %v3404, %v3653
        %v3674 = vld [vmem:[#allocation18] sm:$0x1]
        %v3676 = vlaneseq
        %v3677 = vshrl.u32 %v3676, 7
        %v3678 = vsub.s32 0, %v3677
        %v3679 = vrot.slane %v3674, %v3678
        %v3681 = vmul.f32 %v3658, %v3679
        %v3682 = vmul.f32 %v3659, %v3679
        %v3683 = vmul.f32 %v3660, %v3679
        %v3684 = vmul.f32 %v3661, %v3679
        %v3685 = vmul.f32 %v3662, %v3679
        %v3686 = vmul.f32 %v3663, %v3679
        %v3687 = vmul.f32 %v3664, %v3679
        %v3688 = vmul.f32 %v3665, %v3679
        %v3689 = vmul.f32 %v3666, %v3679
        %v3690 = vmul.f32 %v3667, %v3679
        %v3691 = vmul.f32 %v3668, %v3679
        %v3692 = vmul.f32 %v3669, %v3679
        %v3693 = vmul.f32 %v3670, %v3679
        %v3694 = vmul.f32 %v3671, %v3679
        %v3695 = vmul.f32 %v3672, %v3679
        %v3696 = vmul.f32 %v3673, %v3679
        %v3697 = vld [vmem:[#allocation19] sm:$0x1]
        %v3699 = vlaneseq
        %v3700 = vshrl.u32 %v3699, 7
        %v3701 = vsub.s32 0, %v3700
        %v3702 = vrot.slane %v3697, %v3701
        %v3704 = vadd.f32 %v3681, %v3702
        %v3705 = vadd.f32 %v3682, %v3702
        %v3706 = vadd.f32 %v3683, %v3702
        %v3707 = vadd.f32 %v3684, %v3702
        %v3708 = vadd.f32 %v3685, %v3702
        %v3709 = vadd.f32 %v3686, %v3702
        %v3710 = vadd.f32 %v3687, %v3702
        %v3711 = vadd.f32 %v3688, %v3702
        %v3712 = vadd.f32 %v3689, %v3702
        %v3713 = vadd.f32 %v3690, %v3702
        %v3714 = vadd.f32 %v3691, %v3702
        %v3715 = vadd.f32 %v3692, %v3702
        %v3716 = vadd.f32 %v3693, %v3702
        %v3717 = vadd.f32 %v3694, %v3702
        %v3718 = vadd.f32 %v3695, %v3702
        %v3719 = vadd.f32 %v3696, %v3702
        %v3720 = vmax.f32 %v3704, 0.0
        %v3721 = vmax.f32 %v3705, 0.0
        %v3722 = vmax.f32 %v3706, 0.0
        %v3723 = vmax.f32 %v3707, 0.0
        %v3724 = vmax.f32 %v3708, 0.0
        %v3725 = vmax.f32 %v3709, 0.0
        %v3726 = vmax.f32 %v3710, 0.0
        %v3727 = vmax.f32 %v3711, 0.0
        %v3728 = vmax.f32 %v3712, 0.0
        %v3729 = vmax.f32 %v3713, 0.0
        %v3730 = vmax.f32 %v3714, 0.0
        %v3731 = vmax.f32 %v3715, 0.0
        %v3732 = vmax.f32 %v3716, 0.0
        %v3733 = vmax.f32 %v3717, 0.0
        %v3734 = vmax.f32 %v3718, 0.0
        %v3735 = vmax.f32 %v3719, 0.0
        %v3736 = vpack.c.bf16 %v3721, %v3720
        %v3737 = vpack.c.bf16 %v3723, %v3722
        %v3738 = vpack.c.bf16 %v3725, %v3724
        %v3739 = vpack.c.bf16 %v3727, %v3726
        %v3740 = vpack.c.bf16 %v3729, %v3728
        %v3741 = vpack.c.bf16 %v3731, %v3730
        %v3742 = vpack.c.bf16 %v3733, %v3732
        %v3743 = vpack.c.bf16 %v3735, %v3734
        %v3752 = vunpack.c.l.b16 %v3736
        %v3753 = vunpack.c.h.b16 %v3736
        %v3754 = vunpack.c.l.b16 %v3737
        %v3755 = vunpack.c.h.b16 %v3737
        %v3756 = vunpack.c.l.b16 %v3738
        %v3757 = vunpack.c.h.b16 %v3738
        %v3758 = vunpack.c.l.b16 %v3739
        %v3759 = vunpack.c.h.b16 %v3739
        %v3760 = vunpack.c.l.b16 %v3740
        %v3761 = vunpack.c.h.b16 %v3740
        %v3762 = vunpack.c.l.b16 %v3741
        %v3763 = vunpack.c.h.b16 %v3741
        %v3764 = vunpack.c.l.b16 %v3742
        %v3765 = vunpack.c.h.b16 %v3742
        %v3766 = vunpack.c.l.b16 %v3743
        %v3767 = vunpack.c.h.b16 %v3743
        %v3768 = vpack.c.b16 %v3752, %v3752
        %v3769 = vpack.c.b16 %v3753, %v3753
        %v3770 = vpack.c.b16 %v3754, %v3754
        %v3771 = vpack.c.b16 %v3755, %v3755
        %v3772 = vpack.c.b16 %v3756, %v3756
        %v3773 = vpack.c.b16 %v3757, %v3757
        %v3774 = vpack.c.b16 %v3758, %v3758
        %v3775 = vpack.c.b16 %v3759, %v3759
        %v3776 = vpack.c.b16 %v3760, %v3760
        %v3777 = vpack.c.b16 %v3761, %v3761
        %v3778 = vpack.c.b16 %v3762, %v3762
        %v3779 = vpack.c.b16 %v3763, %v3763
        %v3780 = vpack.c.b16 %v3764, %v3764
        %v3781 = vpack.c.b16 %v3765, %v3765
        %v3782 = vpack.c.b16 %v3766, %v3766
        %v3783 = vpack.c.b16 %v3767, %v3767
        %vm3800 = vcmask 27648
        %3801 = vst.msk [vmem:[%s750] sm:$0xf] %vm3800, %v3768
        %3802 = vst.msk [vmem:[%s750 + $0x4] sm:$0xf] %vm3800, %v3769
        %3803 = vst.msk [vmem:[%s750 + $0x8] sm:$0xf] %vm3800, %v3770
        %3804 = vst.msk [vmem:[%s750 + $0xc] sm:$0xf] %vm3800, %v3771
        %3805 = vst.msk [vmem:[%s750 + $0x10] sm:$0xf] %vm3800, %v3772
        %3806 = vst.msk [vmem:[%s750 + $0x14] sm:$0xf] %vm3800, %v3773
        %3807 = vst.msk [vmem:[%s750 + $0x18] sm:$0xf] %vm3800, %v3774
        %3808 = vst.msk [vmem:[%s750 + $0x1c] sm:$0xf] %vm3800, %v3775
        %3809 = vst.msk [vmem:[%s750 + $0x20] sm:$0xf] %vm3800, %v3776
        %3810 = vst.msk [vmem:[%s750 + $0x24] sm:$0xf] %vm3800, %v3777
        %3811 = vst.msk [vmem:[%s750 + $0x28] sm:$0xf] %vm3800, %v3778
        %3812 = vst.msk [vmem:[%s750 + $0x2c] sm:$0xf] %vm3800, %v3779
        %3813 = vst.msk [vmem:[%s750 + $0x30] sm:$0xf] %vm3800, %v3780
        %3814 = vst.msk [vmem:[%s750 + $0x34] sm:$0xf] %vm3800, %v3781
        %3815 = vst.msk [vmem:[%s750 + $0x38] sm:$0xf] %vm3800, %v3782
        %3816 = vst.msk [vmem:[%s750 + $0x3c] sm:$0xf] %vm3800, %v3783
        %s3817 = sand.u32 %s373, 1
        %s3818 = scalar_lea.sflag [#allocation6], %s3817
        %s3819 = sand.u32 %s373, 1
        %s3820 = smul.addr %s3819, 64
        %s3821 = scalar_lea.vmem [#allocation21], %s3820
        // Predicated region
        $region105: #{upconv_forward.6} parent=59 // pred_check
          %p3822 = pneg %p383
        $region106: #{upconv_forward.6} parent=59 // pred_check_branch
          %3824 = sbr.rel (%p3822) target = $region108
        $region107: #{upconv_forward.6} parent=59 // pred_region
          %s3825 = smul.u32 8, %s44
          %s3827 = ssub.s32 1024, 1024
          %3828 = vsyncadd %s3818, %s3827
          %s3829 = smul.addr %s3825, 2
          %s3830 = sadd.s32 %s45, %s3829
          %s3831 = smul.addr %s43, 32
          %s3832 = sadd.s32 %s3830, %s3831
          %s3833 = smul.addr %s3832, 64
          %s3834 = scalar_lea.hbm %s10, %s3833
          %s3835 = sshll.u32 %s3821, 4
          %s3836 = int_to_ptr.vmem [resolvable:$true] %s3835
          %3841 = dma.vmem_to_hbm [thread:$0]  %s3836, 1024, %s3834, %s3818, 64, 64, 4
        $region108: #{upconv_forward.6} parent=59 // pred_fallthru
          _
      $region60: #{upconv_forward.6} parent=5 // pred_fallthru
        _
      %p3842 = scmp.le.s32.totalorder 2, %s33
      // Predicated region
      $region109: #{upconv_forward.6} parent=5 // pred_check
        %p3843 = pneg %p3842
      $region110: #{upconv_forward.6} parent=5 // pred_check_branch
        %3845 = sbr.rel (%p3843) target = $region112
      $region111: #{upconv_forward.6} parent=5 // pred_region
        %s3846 = ssub.s32 %s33, 2
        // Predicated region
        $region113: #{upconv_forward.6} parent=111 // pred_check
          %p3847 = pneg %p389
        $region114: #{upconv_forward.6} parent=111 // pred_check_branch
          %3849 = sbr.rel (%p3847) target = $region116
        $region115: #{upconv_forward.6} parent=111 // pred_region
          %s3850 = sand.u32 %s374, 1
          %s3851 = scalar_lea.sflag [#allocation6], %s3850
          %s3852 = sand.u32 %s374, 1
          %s3853 = smul.addr %s3852, 64
          %s3854 = scalar_lea.vmem [#allocation21], %s3853
          %3855 = dma.done %s3851, 1024
        $region116: #{upconv_forward.6} parent=111 // pred_fallthru
          _
      $region112: #{upconv_forward.6} parent=5 // pred_fallthru
        _
    $region6: #{upconv_forward.6} parent=1 // loop_footer
      %s37 = sadd.s32 1, %s33
    $region7: #{upconv_forward.6} parent=1 // loop_footer_branch
      %32 = sbr.rel target = $region3
    $region8: #{upconv_forward.6} parent=1 // loop_exit
      _
    %3856 = vsyncpa [#allocation5], 1
    %s3857 = scalar_lea.sflag [#allocation5], 1
    %3858 = vsyncpa %s3857, 1
    %3859 = vsyncpa [#allocation8], 1
    %s3860 = scalar_lea.sflag [#allocation8], 1
    %3861 = vsyncpa %s3860, 1
    %3862 = vsyncpa [#allocation11], 1
    %s3863 = scalar_lea.sflag [#allocation11], 1
    %3864 = vsyncpa %s3863, 1
    %3865 = vsyncpa [#allocation14], 1
    %s3866 = scalar_lea.sflag [#allocation14], 1
    %3867 = vsyncpa %s3866, 1
    %3868 = vsyncpa [#allocation17], 1
    %3869 = vsyncpa [#allocation20], 1
    %3870 = vsyncpa [#allocation6], 1
    %s3871 = scalar_lea.sflag [#allocation6], 1
    %3872 = vsyncpa %s3871, 1

</llo_original>
